<compile_context>
chip_gen: v6e
topology: v6e:2x2x1
jax: 0.10.0
libtpu: 0.0.40
codegen_flags: <defaults>
</compile_context>

<pallas_src>
import functools

import jax
import jax.numpy as jnp
from jax.experimental import pallas as pl
from jax.experimental.pallas import tpu as pltpu


# ---------------------------------------------------------------------------
# Layer plan (mirrors Decoder.block() for data='RMNIST')
# ---------------------------------------------------------------------------
def make_layer_plan(out_channels, depth, C):
    """Returns [(spatial_in, cin, cout, upsample_after_conv), ...]."""
    block_defs = [
        (out_channels[0], out_channels[1], False),   # block 1: upsampling='none'
        (out_channels[1], out_channels[2], True),    # block 2: 'upsample'
        (out_channels[2], C, True),                  # block 3: 'upsample', last
    ]
    plan = []
    spatial = 7
    for cin, cout, ups in block_defs:
        for i in range(depth):
            if i == 0:
                plan.append((spatial, cin, cout, ups))
                if ups:
                    spatial *= 2
            else:
                plan.append((spatial, cout, cout, False))
    return plan


def linear_layout(oc0):
    """Static column layout of the fused linear weight:
    [49*oc0 y_mmd cols | pad to 128 | 7 x (7*oc0 permuted cols + pad to 128)]."""
    lin_cols = 49 * oc0
    row_w = 7 * oc0
    pad0 = (-lin_cols) % 128
    grp = row_w + ((-row_w) % 128)
    base = lin_cols + pad0
    lout = base + 7 * grp
    return lin_cols, row_w, base, grp, lout


# ---------------------------------------------------------------------------
# One-time host-side packing (NOT inside the per-forward jit)
# ---------------------------------------------------------------------------
def _pack_conv_dy(w, b, S, ups):
    """Pack (3,3,cin,cout) conv weights into 3 per-dy band matrices with the
    dx shift (and, when `ups`, the nearest-upsample column duplication) folded
    in:  W3[dy, x_in*cin+ci, z*cout+co] = w[dy, x_in-x_out+1, ci, co]
    for every conv output column x_out mapping to packed output column z."""
    cin, cout = w.shape[2], w.shape[3]
    xi = jnp.arange(S)[:, None]       # x_in
    xo = jnp.arange(S)[None, :]       # x_out
    sel = jnp.stack([(xi == xo + dx - 1) for dx in range(3)], axis=0).astype(jnp.float32)
    if ups:                           # duplicate output column x_out -> 2x, 2x+1
        dup = jnp.repeat(jnp.eye(S, dtype=jnp.float32), 2, axis=1)          # (S, 2S)
        sel = jnp.einsum("txo,oz->txz", sel, dup)
    s_out = sel.shape[-1]
    wf = w.astype(jnp.float32)                                              # (dy,dx,ci,co)
    W3 = jnp.einsum("txz,ytio->yxizo", sel, wf).reshape(3, S * cin, s_out * cout)
    bias = jnp.tile(b.astype(jnp.float32), s_out)[None, :]                  # (1, s_out*cout)
    return W3, bias


def pack_params(params, out_channels, depth, C):
    """Pack raw decoder params once into the kernel layouts (bf16 matmul
    weights, f32 biases).  Call once; pass the result to every forward."""
    plan = make_layer_plan(out_channels, depth, C)
    oc0 = out_channels[0]
    lin_cols, row_w, base, grp, _lout = linear_layout(oc0)

    lw = params["lin_w"].astype(jnp.float32)            # (F, 49*oc0)
    lb = params["lin_b"].astype(jnp.float32)            # (49*oc0,)
    F = lw.shape[0]
    # Permuted columns so the conv input comes out in (y, x, c)-flattened order:
    # new col y*7*oc0 + x*oc0 + c  <-  old col c*49 + y*7 + x   (torch .view NCHW)
    perm = jnp.transpose(jnp.arange(lin_cols).reshape(oc0, 7, 7), (1, 2, 0)).reshape(-1)
    lw2, lb2 = lw[:, perm], lb[perm]

    wp = [lw, jnp.zeros((F, base - lin_cols), jnp.float32)]
    bp = [lb, jnp.zeros((base - lin_cols,), jnp.float32)]
    for yy in range(7):
        wp += [lw2[:, yy * row_w:(yy + 1) * row_w],
               jnp.zeros((F, grp - row_w), jnp.float32)]
        bp += [lb2[yy * row_w:(yy + 1) * row_w],
               jnp.zeros((grp - row_w,), jnp.float32)]

    packed = {
        "lin_w": jnp.concatenate(wp, axis=1).astype(jnp.bfloat16),   # (F, lout)
        "lin_b": jnp.concatenate(bp)[None, :].astype(jnp.float32),   # (1, lout)
    }
    for idx, (S, _cin, _cout, ups) in enumerate(plan):
        W3, bias = _pack_conv_dy(params[f"conv{idx}_w"], params[f"conv{idx}_b"], S, ups)
        packed[f"w{idx}"] = W3.astype(jnp.bfloat16)
        packed[f"b{idx}"] = bias
    return packed


# ---------------------------------------------------------------------------
# Fused decoder forward: single pallas_call
# ---------------------------------------------------------------------------
def decoder_forward(packed, codes, domains, contents, out_channels, depth, C):
    assert C == 1, "RMNIST decoder (C=1) only"
    plan = make_layer_plan(out_channels, depth, C)
    n_layers = len(plan)
    S_last, _, cout_last, ups_last = plan[-1]
    HW = 2 * S_last if ups_last else S_last
    assert HW == 28 and cout_last == C

    oc0 = out_channels[0]
    lin_cols, row_w, base, grp, _lout = linear_layout(oc0)

    x = jnp.concatenate([codes, domains, contents], axis=1).astype(jnp.float32)
    B, _F = x.shape

    lin_w, lin_b = packed["lin_w"], packed["lin_b"]
    conv_w = [packed[f"w{i}"] for i in range(n_layers)]
    conv_b = [packed[f"b{i}"] for i in range(n_layers)]

    def kernel(*refs):
        it = iter(refs)
        x_ref = next(it)
        lb_ref = next(it)
        bias_refs = [next(it) for _ in range(n_layers)]
        lw_hbm = next(it)
        w_hbm = [next(it) for _ in range(n_layers)]
        recon_ref = next(it)
        ymmd_ref = next(it)
        lw_vmem = next(it)
        w_vmem = [next(it) for _ in range(n_layers)]
        sem = next(it)
        bufs = [next(it) for _ in range(n_layers)]

        # Start every weight DMA up front; wait right before each use so the
        # HBM->VMEM weight traffic overlaps with compute.
        lin_cp = pltpu.make_async_copy(lw_hbm, lw_vmem, sem.at[0])
        conv_cps = [pltpu.make_async_copy(w_hbm[i], w_vmem[i], sem.at[1 + i])
                    for i in range(n_layers)]
        lin_cp.start()
        for cp in conv_cps:
            cp.start()

        # Zero only the top/bottom dy-padding rows (interiors are fully written).
        for li, (S, cin, _cout, _ups) in enumerate(plan):
            z = jnp.zeros((B, 1, S * cin), jnp.float32)
            bufs[li][:, 0:1, :] = z
            bufs[li][:, S + 1:S + 2, :] = z

        # ---- fused Linear + ReLU: ONE matmul yields y_mmd (original column
        # order) and the permuted (y, x, c)-flattened first conv input --------
        lin_cp.wait()
        xb = x_ref[...].astype(jnp.bfloat16)
        y_all = jnp.dot(xb, lw_vmem[...], preferred_element_type=jnp.float32) + lb_ref[...]
        y_all = jnp.maximum(y_all, 0.0)                       # (B, lout) f32
        ymmd_ref[...] = y_all[:, :lin_cols]
        for yy in range(7):
            c0 = base + yy * grp
            for bi in range(B):
                bufs[0][bi, 1 + yy:2 + yy, :] = y_all[bi:bi + 1, c0:c0 + row_w]

        # ---- conv stack: 3 lane-aligned matmuls per (layer, batch) -----------
        # TODO(synk): if a bundle dump ever shows spills, switch the bi loop to
        # lax.fori_loop; B=2 unrolled compiles fine here.
        for li, (S, cin, cout, ups) in enumerate(plan):
            src = bufs[li]
            conv_cps[li].wait()
            wv = w_vmem[li]                                    # (3, S*cin, n_out) bf16
            br = bias_refs[li]                                 # (1, n_out) f32
            last = li == n_layers - 1
            for bi in range(B):
                acc = jnp.dot(src[bi, 0:S, :].astype(jnp.bfloat16), wv[0],
                              preferred_element_type=jnp.float32)
                acc = acc + jnp.dot(src[bi, 1:1 + S, :].astype(jnp.bfloat16), wv[1],
                                    preferred_element_type=jnp.float32)
                acc = acc + jnp.dot(src[bi, 2:2 + S, :].astype(jnp.bfloat16), wv[2],
                                    preferred_element_type=jnp.float32)
                out = jnp.maximum(acc + br[...], 0.0)          # (S, n_out)

                if last:
                    if ups:   # only reachable for depth == 1 configs
                        for yy in range(S):
                            row = out[yy:yy + 1, :]
                            recon_ref[bi, 2 * yy:2 * yy + 1, :] = row
                            recon_ref[bi, 2 * yy + 1:2 * yy + 2, :] = row
                    else:
                        recon_ref[bi, :, :] = out
                else:
                    dst = bufs[li + 1]
                    if ups:                                    # nearest row duplication
                        for yy in range(S):
                            row = out[yy:yy + 1, :]
                            dst[bi, 1 + 2 * yy:2 + 2 * yy, :] = row
                            dst[bi, 2 + 2 * yy:3 + 2 * yy, :] = row
                    else:
                        dst[bi, 1:1 + S, :] = out

    in_specs = ([pl.BlockSpec(memory_space=pltpu.MemorySpace.VMEM)] * (2 + n_layers)
                + [pl.BlockSpec(memory_space=pl.ANY)] * (1 + n_layers))
    out_shape = (jax.ShapeDtypeStruct((B, HW, HW), jnp.float32),
                 jax.ShapeDtypeStruct((B, lin_cols), jnp.float32))
    out_specs = (pl.BlockSpec(memory_space=pltpu.MemorySpace.VMEM),
                 pl.BlockSpec(memory_space=pltpu.MemorySpace.VMEM))
    scratch_shapes = (
        [pltpu.VMEM(lin_w.shape, jnp.bfloat16)]
        + [pltpu.VMEM(conv_w[i].shape, jnp.bfloat16) for i in range(n_layers)]
        + [pltpu.SemaphoreType.DMA((n_layers + 1,))]
        + [pltpu.VMEM((B, S + 2, S * cin), jnp.float32) for (S, cin, _c, _u) in plan]
    )

    # TODO(synk): on v7x (2 TensorCores) a leading batch grid axis with
    # dimension_semantics=("parallel",) would use both cores; skipped because
    # it re-DMAs the (now small) weights per core and regresses v5e/v6e.
    recon, y_mmd = pl.pallas_call(
        kernel,
        out_shape=out_shape,
        in_specs=in_specs,
        out_specs=out_specs,
        scratch_shapes=scratch_shapes,
    )(x, lin_b, *conv_b, lin_w, *conv_w)

    return recon.reshape(B, C, HW, HW), y_mmd   # NCHW, like torch

# TODO(synk): BatchNorm2d / Dropout2d / ConvTranspose ('stride' upsampling) /
# non-ReLU activations and the PACS config are not exercised by this config
# (batch_norm=False, dropout=False, upsampling='upsample', ReLU, RMNIST) and
# are therefore not implemented.


# ---------------------------------------------------------------------------
# Parameter init (weights generated directly in (3,3,Cin,Cout) JAX layout;
# porting a torch checkpoint would require (Cout,Cin,3,3)->(3,3,Cin,Cout) and
# transposing the linear weight).
# ---------------------------------------------------------------------------
def init_params(key, latent_size, num_domains, num_contents, out_channels, depth, C):
    params = {}
    feat = latent_size + num_domains + num_contents
    lin_out = 49 * out_channels[0]
    key, kw, kb = jax.random.split(key, 3)
    params["lin_w"] = jax.random.normal(kw, (feat, lin_out), jnp.float32) / jnp.sqrt(feat)
    params["lin_b"] = 0.01 * jax.random.normal(kb, (lin_out,), jnp.float32)
    for idx, (_S, cin, cout, _ups) in enumerate(make_layer_plan(out_channels, depth, C)):
        key, kw, kb = jax.random.split(key, 3)
        params[f"conv{idx}_w"] = (jax.random.normal(kw, (3, 3, cin, cout), jnp.float32)
                                  / jnp.sqrt(9.0 * cin))
        params[f"conv{idx}_b"] = 0.01 * jax.random.normal(kb, (cout,), jnp.float32)
    return params


# ---------------------------------------------------------------------------
# Pure-XLA reference (for self-check), uses the RAW (unpacked) params
# ---------------------------------------------------------------------------
def reference_forward(params, codes, domains, contents, out_channels, depth, C):
    x = jnp.concatenate([codes, domains, contents], axis=1).astype(jnp.float32)
    y_mmd = jax.nn.relu(
        jnp.dot(x, params["lin_w"], precision=jax.lax.Precision.HIGHEST)
        + params["lin_b"])
    B = x.shape[0]
    h = y_mmd.reshape(B, out_channels[0], 7, 7)          # NCHW (torch .view)
    h = jnp.transpose(h, (0, 2, 3, 1))                   # NHWC
    for idx, (_S, _cin, _cout, ups) in enumerate(make_layer_plan(out_channels, depth, C)):
        h = jax.lax.conv_general_dilated(
            h, params[f"conv{idx}_w"], window_strides=(1, 1), padding="SAME",
            dimension_numbers=("NHWC", "HWIO", "NHWC"),
            precision=jax.lax.Precision.HIGHEST)
        h = jax.nn.relu(h + params[f"conv{idx}_b"])
        if ups:
            h = jnp.repeat(jnp.repeat(h, 2, axis=1), 2, axis=2)
    return jnp.transpose(h, (0, 3, 1, 2)), y_mmd


if __name__ == "__main__":
    B = 2
    latent_size, num_domains, num_contents = 16, 3, 5
    out_channels = (16, 16, 8)
    depth = 2
    C = 1                         # RMNIST

    key = jax.random.PRNGKey(0)
    kp, kc, kd, kn = jax.random.split(key, 4)
    params = init_params(kp, latent_size, num_domains, num_contents,
                         out_channels, depth, C)
    # One-time packing (outside the per-forward jit).
    packed = pack_params(params, out_channels, depth, C)
    packed = jax.tree_util.tree_map(jax.block_until_ready, packed)

    codes = jax.random.normal(kc, (B, latent_size), jnp.float32)
    domains = jax.nn.one_hot(
        jax.random.randint(kd, (B,), 0, num_domains), num_domains, dtype=jnp.float32)
    contents = jax.nn.one_hot(
        jax.random.randint(kn, (B,), 0, num_contents), num_contents, dtype=jnp.float32)

    fwd = jax.jit(functools.partial(decoder_forward, out_channels=out_channels,
                                    depth=depth, C=C))
    recon, y_mmd = fwd(packed, codes, domains, contents)
    jax.block_until_ready((recon, y_mmd))

    assert recon.shape == (B, C, 28, 28), recon.shape
    assert y_mmd.shape == (B, 49 * out_channels[0]), y_mmd.shape
    assert bool(jnp.all(jnp.isfinite(recon))) and bool(jnp.all(jnp.isfinite(y_mmd)))

    ref_fwd = jax.jit(functools.partial(reference_forward, out_channels=out_channels,
                                        depth=depth, C=C))
    ref_recon, ref_y = ref_fwd(params, codes, domains, contents)
    jax.block_until_ready((ref_recon, ref_y))
    # Tolerance covers bf16 weights/activations with f32 accumulation.
    assert jnp.allclose(y_mmd, ref_y, atol=5e-2, rtol=5e-2), \
        float(jnp.max(jnp.abs(y_mmd - ref_y)))
    assert jnp.allclose(recon, ref_recon, atol=5e-2, rtol=5e-2), \
        float(jnp.max(jnp.abs(recon - ref_recon)))

    print("KERNEL_OK")
</pallas_src>

<mosaic_0001>
module attributes {stable_mosaic.version = 11 : i64} {
  func.func @kernel(%arg0: memref<2x24xf32, #tpu.memory_space<vmem>>, %arg1: memref<1x1792xf32, #tpu.memory_space<vmem>>, %arg2: memref<1x112xf32, #tpu.memory_space<vmem>>, %arg3: memref<1x112xf32, #tpu.memory_space<vmem>>, %arg4: memref<1x112xf32, #tpu.memory_space<vmem>>, %arg5: memref<1x112xf32, #tpu.memory_space<vmem>>, %arg6: memref<1x28xf32, #tpu.memory_space<vmem>>, %arg7: memref<1x28xf32, #tpu.memory_space<vmem>>, %arg8: memref<24x1792xbf16, #tpu.memory_space<any>>, %arg9: memref<3x112x112xbf16, #tpu.memory_space<any>>, %arg10: memref<3x112x112xbf16, #tpu.memory_space<any>>, %arg11: memref<3x112x112xbf16, #tpu.memory_space<any>>, %arg12: memref<3x112x112xbf16, #tpu.memory_space<any>>, %arg13: memref<3x112x28xbf16, #tpu.memory_space<any>>, %arg14: memref<3x28x28xbf16, #tpu.memory_space<any>>, %arg15: memref<2x28x28xf32, #tpu.memory_space<vmem>>, %arg16: memref<2x784xf32, #tpu.memory_space<vmem>>, %arg17: memref<24x1792xbf16, #tpu.memory_space<vmem>>, %arg18: memref<3x112x112xbf16, #tpu.memory_space<vmem>>, %arg19: memref<3x112x112xbf16, #tpu.memory_space<vmem>>, %arg20: memref<3x112x112xbf16, #tpu.memory_space<vmem>>, %arg21: memref<3x112x112xbf16, #tpu.memory_space<vmem>>, %arg22: memref<3x112x28xbf16, #tpu.memory_space<vmem>>, %arg23: memref<3x28x28xbf16, #tpu.memory_space<vmem>>, %arg24: memref<7x!tpu.dma_semaphore, #tpu.memory_space<semaphore_mem>>, %arg25: memref<2x9x112xf32, #tpu.memory_space<vmem>>, %arg26: memref<2x9x112xf32, #tpu.memory_space<vmem>>, %arg27: memref<2x9x112xf32, #tpu.memory_space<vmem>>, %arg28: memref<2x16x112xf32, #tpu.memory_space<vmem>>, %arg29: memref<2x16x112xf32, #tpu.memory_space<vmem>>, %arg30: memref<2x30x28xf32, #tpu.memory_space<vmem>>) attributes {dimension_semantics = [], scalar_prefetch = 0 : i64, scratch_operands = 14 : i64, tpu.core_type = #tpu.core_type<tc>} {
    %c0_i32 = arith.constant 0 : i32
    %0 = tpu.memref_slice %arg24[%c0_i32] : memref<7x!tpu.dma_semaphore, #tpu.memory_space<semaphore_mem>> -> memref<1x!tpu.dma_semaphore, #tpu.memory_space<semaphore_mem>>
    %1 = tpu.memref_squeeze %0 : memref<1x!tpu.dma_semaphore, #tpu.memory_space<semaphore_mem>> -> memref<!tpu.dma_semaphore, #tpu.memory_space<semaphore_mem>>
    tpu.enqueue_dma source(%arg8 : memref<24x1792xbf16, #tpu.memory_space<any>>) target(%arg17 : memref<24x1792xbf16, #tpu.memory_space<vmem>>) target_semaphore(%1 : memref<!tpu.dma_semaphore, #tpu.memory_space<semaphore_mem>>)
    %c1_i32 = arith.constant 1 : i32
    %2 = tpu.memref_slice %arg24[%c1_i32] : memref<7x!tpu.dma_semaphore, #tpu.memory_space<semaphore_mem>> -> memref<1x!tpu.dma_semaphore, #tpu.memory_space<semaphore_mem>>
    %3 = tpu.memref_squeeze %2 : memref<1x!tpu.dma_semaphore, #tpu.memory_space<semaphore_mem>> -> memref<!tpu.dma_semaphore, #tpu.memory_space<semaphore_mem>>
    tpu.enqueue_dma source(%arg9 : memref<3x112x112xbf16, #tpu.memory_space<any>>) target(%arg18 : memref<3x112x112xbf16, #tpu.memory_space<vmem>>) target_semaphore(%3 : memref<!tpu.dma_semaphore, #tpu.memory_space<semaphore_mem>>)
    %c2_i32 = arith.constant 2 : i32
    %4 = tpu.memref_slice %arg24[%c2_i32] : memref<7x!tpu.dma_semaphore, #tpu.memory_space<semaphore_mem>> -> memref<1x!tpu.dma_semaphore, #tpu.memory_space<semaphore_mem>>
    %5 = tpu.memref_squeeze %4 : memref<1x!tpu.dma_semaphore, #tpu.memory_space<semaphore_mem>> -> memref<!tpu.dma_semaphore, #tpu.memory_space<semaphore_mem>>
    tpu.enqueue_dma source(%arg10 : memref<3x112x112xbf16, #tpu.memory_space<any>>) target(%arg19 : memref<3x112x112xbf16, #tpu.memory_space<vmem>>) target_semaphore(%5 : memref<!tpu.dma_semaphore, #tpu.memory_space<semaphore_mem>>)
    %c3_i32 = arith.constant 3 : i32
    %6 = tpu.memref_slice %arg24[%c3_i32] : memref<7x!tpu.dma_semaphore, #tpu.memory_space<semaphore_mem>> -> memref<1x!tpu.dma_semaphore, #tpu.memory_space<semaphore_mem>>
    %7 = tpu.memref_squeeze %6 : memref<1x!tpu.dma_semaphore, #tpu.memory_space<semaphore_mem>> -> memref<!tpu.dma_semaphore, #tpu.memory_space<semaphore_mem>>
    tpu.enqueue_dma source(%arg11 : memref<3x112x112xbf16, #tpu.memory_space<any>>) target(%arg20 : memref<3x112x112xbf16, #tpu.memory_space<vmem>>) target_semaphore(%7 : memref<!tpu.dma_semaphore, #tpu.memory_space<semaphore_mem>>)
    %c4_i32 = arith.constant 4 : i32
    %8 = tpu.memref_slice %arg24[%c4_i32] : memref<7x!tpu.dma_semaphore, #tpu.memory_space<semaphore_mem>> -> memref<1x!tpu.dma_semaphore, #tpu.memory_space<semaphore_mem>>
    %9 = tpu.memref_squeeze %8 : memref<1x!tpu.dma_semaphore, #tpu.memory_space<semaphore_mem>> -> memref<!tpu.dma_semaphore, #tpu.memory_space<semaphore_mem>>
    tpu.enqueue_dma source(%arg12 : memref<3x112x112xbf16, #tpu.memory_space<any>>) target(%arg21 : memref<3x112x112xbf16, #tpu.memory_space<vmem>>) target_semaphore(%9 : memref<!tpu.dma_semaphore, #tpu.memory_space<semaphore_mem>>)
    %c5_i32 = arith.constant 5 : i32
    %10 = tpu.memref_slice %arg24[%c5_i32] : memref<7x!tpu.dma_semaphore, #tpu.memory_space<semaphore_mem>> -> memref<1x!tpu.dma_semaphore, #tpu.memory_space<semaphore_mem>>
    %11 = tpu.memref_squeeze %10 : memref<1x!tpu.dma_semaphore, #tpu.memory_space<semaphore_mem>> -> memref<!tpu.dma_semaphore, #tpu.memory_space<semaphore_mem>>
    tpu.enqueue_dma source(%arg13 : memref<3x112x28xbf16, #tpu.memory_space<any>>) target(%arg22 : memref<3x112x28xbf16, #tpu.memory_space<vmem>>) target_semaphore(%11 : memref<!tpu.dma_semaphore, #tpu.memory_space<semaphore_mem>>)
    %c6_i32 = arith.constant 6 : i32
    %12 = tpu.memref_slice %arg24[%c6_i32] : memref<7x!tpu.dma_semaphore, #tpu.memory_space<semaphore_mem>> -> memref<1x!tpu.dma_semaphore, #tpu.memory_space<semaphore_mem>>
    %13 = tpu.memref_squeeze %12 : memref<1x!tpu.dma_semaphore, #tpu.memory_space<semaphore_mem>> -> memref<!tpu.dma_semaphore, #tpu.memory_space<semaphore_mem>>
    tpu.enqueue_dma source(%arg14 : memref<3x28x28xbf16, #tpu.memory_space<any>>) target(%arg23 : memref<3x28x28xbf16, #tpu.memory_space<vmem>>) target_semaphore(%13 : memref<!tpu.dma_semaphore, #tpu.memory_space<semaphore_mem>>)
    %cst = arith.constant 0.000000e+00 : f32
    %14 = vector.broadcast %cst : f32 to vector<2x1x112xf32>
    %c0 = arith.constant 0 : index
    %c0_0 = arith.constant 0 : index
    %c0_1 = arith.constant 0 : index
    %15 = vector.load %arg25[%c0, %c0_0, %c0_1] : memref<2x9x112xf32, #tpu.memory_space<vmem>>, vector<2x1x112xf32>
    tpu.vector_store %arg25[%c0, %c0_0, %c0_1], %14 {strides = array<i32>} : memref<2x9x112xf32, #tpu.memory_space<vmem>>, vector<2x1x112xf32>,
    %c0_2 = arith.constant 0 : index
    %c8 = arith.constant 8 : index
    %c0_3 = arith.constant 0 : index
    %16 = vector.load %arg25[%c0_2, %c8, %c0_3] : memref<2x9x112xf32, #tpu.memory_space<vmem>>, vector<2x1x112xf32>
    tpu.vector_store %arg25[%c0_2, %c8, %c0_3], %14 {strides = array<i32>} : memref<2x9x112xf32, #tpu.memory_space<vmem>>, vector<2x1x112xf32>,
    %cst_4 = arith.constant 0.000000e+00 : f32
    %17 = vector.broadcast %cst_4 : f32 to vector<2x1x112xf32>
    %c0_5 = arith.constant 0 : index
    %c0_6 = arith.constant 0 : index
    %c0_7 = arith.constant 0 : index
    %18 = vector.load %arg26[%c0_5, %c0_6, %c0_7] : memref<2x9x112xf32, #tpu.memory_space<vmem>>, vector<2x1x112xf32>
    tpu.vector_store %arg26[%c0_5, %c0_6, %c0_7], %17 {strides = array<i32>} : memref<2x9x112xf32, #tpu.memory_space<vmem>>, vector<2x1x112xf32>,
    %c0_8 = arith.constant 0 : index
    %c8_9 = arith.constant 8 : index
    %c0_10 = arith.constant 0 : index
    %19 = vector.load %arg26[%c0_8, %c8_9, %c0_10] : memref<2x9x112xf32, #tpu.memory_space<vmem>>, vector<2x1x112xf32>
    tpu.vector_store %arg26[%c0_8, %c8_9, %c0_10], %17 {strides = array<i32>} : memref<2x9x112xf32, #tpu.memory_space<vmem>>, vector<2x1x112xf32>,
    %cst_11 = arith.constant 0.000000e+00 : f32
    %20 = vector.broadcast %cst_11 : f32 to vector<2x1x112xf32>
    %c0_12 = arith.constant 0 : index
    %c0_13 = arith.constant 0 : index
    %c0_14 = arith.constant 0 : index
    %21 = vector.load %arg27[%c0_12, %c0_13, %c0_14] : memref<2x9x112xf32, #tpu.memory_space<vmem>>, vector<2x1x112xf32>
    tpu.vector_store %arg27[%c0_12, %c0_13, %c0_14], %20 {strides = array<i32>} : memref<2x9x112xf32, #tpu.memory_space<vmem>>, vector<2x1x112xf32>,
    %c0_15 = arith.constant 0 : index
    %c8_16 = arith.constant 8 : index
    %c0_17 = arith.constant 0 : index
    %22 = vector.load %arg27[%c0_15, %c8_16, %c0_17] : memref<2x9x112xf32, #tpu.memory_space<vmem>>, vector<2x1x112xf32>
    tpu.vector_store %arg27[%c0_15, %c8_16, %c0_17], %20 {strides = array<i32>} : memref<2x9x112xf32, #tpu.memory_space<vmem>>, vector<2x1x112xf32>,
    %cst_18 = arith.constant 0.000000e+00 : f32
    %23 = vector.broadcast %cst_18 : f32 to vector<2x1x112xf32>
    %c0_19 = arith.constant 0 : index
    %c0_20 = arith.constant 0 : index
    %c0_21 = arith.constant 0 : index
    %24 = vector.load %arg28[%c0_19, %c0_20, %c0_21] : memref<2x16x112xf32, #tpu.memory_space<vmem>>, vector<2x1x112xf32>
    tpu.vector_store %arg28[%c0_19, %c0_20, %c0_21], %23 {strides = array<i32>} : memref<2x16x112xf32, #tpu.memory_space<vmem>>, vector<2x1x112xf32>,
    %c0_22 = arith.constant 0 : index
    %c15 = arith.constant 15 : index
    %c0_23 = arith.constant 0 : index
    %25 = vector.load %arg28[%c0_22, %c15, %c0_23] : memref<2x16x112xf32, #tpu.memory_space<vmem>>, vector<2x1x112xf32>
    tpu.vector_store %arg28[%c0_22, %c15, %c0_23], %23 {strides = array<i32>} : memref<2x16x112xf32, #tpu.memory_space<vmem>>, vector<2x1x112xf32>,
    %cst_24 = arith.constant 0.000000e+00 : f32
    %26 = vector.broadcast %cst_24 : f32 to vector<2x1x112xf32>
    %c0_25 = arith.constant 0 : index
    %c0_26 = arith.constant 0 : index
    %c0_27 = arith.constant 0 : index
    %27 = vector.load %arg29[%c0_25, %c0_26, %c0_27] : memref<2x16x112xf32, #tpu.memory_space<vmem>>, vector<2x1x112xf32>
    tpu.vector_store %arg29[%c0_25, %c0_26, %c0_27], %26 {strides = array<i32>} : memref<2x16x112xf32, #tpu.memory_space<vmem>>, vector<2x1x112xf32>,
    %c0_28 = arith.constant 0 : index
    %c15_29 = arith.constant 15 : index
    %c0_30 = arith.constant 0 : index
    %28 = vector.load %arg29[%c0_28, %c15_29, %c0_30] : memref<2x16x112xf32, #tpu.memory_space<vmem>>, vector<2x1x112xf32>
    tpu.vector_store %arg29[%c0_28, %c15_29, %c0_30], %26 {strides = array<i32>} : memref<2x16x112xf32, #tpu.memory_space<vmem>>, vector<2x1x112xf32>,
    %cst_31 = arith.constant 0.000000e+00 : f32
    %29 = vector.broadcast %cst_31 : f32 to vector<2x1x28xf32>
    %c0_32 = arith.constant 0 : index
    %c0_33 = arith.constant 0 : index
    %c0_34 = arith.constant 0 : index
    %30 = vector.load %arg30[%c0_32, %c0_33, %c0_34] : memref<2x30x28xf32, #tpu.memory_space<vmem>>, vector<2x1x28xf32>
    tpu.vector_store %arg30[%c0_32, %c0_33, %c0_34], %29 {strides = array<i32>} : memref<2x30x28xf32, #tpu.memory_space<vmem>>, vector<2x1x28xf32>,
    %c0_35 = arith.constant 0 : index
    %c29 = arith.constant 29 : index
    %c0_36 = arith.constant 0 : index
    %31 = vector.load %arg30[%c0_35, %c29, %c0_36] : memref<2x30x28xf32, #tpu.memory_space<vmem>>, vector<2x1x28xf32>
    tpu.vector_store %arg30[%c0_35, %c29, %c0_36], %29 {strides = array<i32>} : memref<2x30x28xf32, #tpu.memory_space<vmem>>, vector<2x1x28xf32>,
    %c0_i32_37 = arith.constant 0 : i32
    %32 = tpu.memref_slice %arg24[%c0_i32_37] : memref<7x!tpu.dma_semaphore, #tpu.memory_space<semaphore_mem>> -> memref<1x!tpu.dma_semaphore, #tpu.memory_space<semaphore_mem>>
    %33 = tpu.memref_squeeze %32 : memref<1x!tpu.dma_semaphore, #tpu.memory_space<semaphore_mem>> -> memref<!tpu.dma_semaphore, #tpu.memory_space<semaphore_mem>>
    tpu.wait_dma2 semaphore(%33 : memref<!tpu.dma_semaphore, #tpu.memory_space<semaphore_mem>>) src(%arg8 : memref<24x1792xbf16, #tpu.memory_space<any>>) dst(%arg17 : memref<24x1792xbf16, #tpu.memory_space<vmem>>)
    %c0_38 = arith.constant 0 : index
    %c0_39 = arith.constant 0 : index
    %34 = vector.load %arg0[%c0_38, %c0_39] : memref<2x24xf32, #tpu.memory_space<vmem>>, vector<2x24xf32>
    %35 = arith.truncf %34 : vector<2x24xf32> to vector<2x24xbf16>
    %c0_40 = arith.constant 0 : index
    %c0_41 = arith.constant 0 : index
    %36 = vector.load %arg17[%c0_40, %c0_41] : memref<24x1792xbf16, #tpu.memory_space<vmem>>, vector<24x1792xbf16>
    %cst_42 = arith.constant dense<0.000000e+00> : vector<2x1792xf32>
    %37 = tpu.matmul %35, %36, %cst_42 {dimension_numbers = #tpu.dot_dimension_numbers<[1], [0], [0], [1], [0, 0, 1, 1], [], []>} : vector<2x24xbf16>, vector<24x1792xbf16>, vector<2x1792xf32> -> vector<2x1792xf32>
    %c0_43 = arith.constant 0 : index
    %c0_44 = arith.constant 0 : index
    %38 = vector.load %arg1[%c0_43, %c0_44] : memref<1x1792xf32, #tpu.memory_space<vmem>>, vector<1x1792xf32>
    %39 = vector.broadcast %38 : vector<1x1792xf32> to vector<2x1792xf32>
    %40 = arith.addf %37, %39 : vector<2x1792xf32>
    %cst_45 = arith.constant 0.000000e+00 : f32
    %41 = vector.broadcast %cst_45 : f32 to vector<2x1792xf32>
    %42 = arith.maximumf %40, %41 : vector<2x1792xf32>
    %43 = vector.extract_strided_slice %42 {offsets = [0, 0], sizes = [2, 784], strides = [1, 1]} : vector<2x1792xf32> to vector<2x784xf32>
    %c0_46 = arith.constant 0 : index
    %c0_47 = arith.constant 0 : index
    %44 = vector.load %arg16[%c0_46, %c0_47] : memref<2x784xf32, #tpu.memory_space<vmem>>, vector<2x784xf32>
    tpu.vector_store %arg16[%c0_46, %c0_47], %43 {strides = array<i32>} : memref<2x784xf32, #tpu.memory_space<vmem>>, vector<2x784xf32>,
    %45 = vector.extract_strided_slice %42 {offsets = [0, 896], sizes = [1, 112], strides = [1, 1]} : vector<2x1792xf32> to vector<1x112xf32>
    %c0_48 = arith.constant 0 : index
    %c1 = arith.constant 1 : index
    %c0_49 = arith.constant 0 : index
    %46 = vector.load %arg25[%c0_48, %c1, %c0_49] : memref<2x9x112xf32, #tpu.memory_space<vmem>>, vector<1x1x112xf32>
    %47 = vector.shape_cast %46 : vector<1x1x112xf32> to vector<1x112xf32>
    %48 = vector.shape_cast %45 : vector<1x112xf32> to vector<1x1x112xf32>
    tpu.vector_store %arg25[%c0_48, %c1, %c0_49], %48 {strides = array<i32>} : memref<2x9x112xf32, #tpu.memory_space<vmem>>, vector<1x1x112xf32>,
    %49 = vector.extract_strided_slice %42 {offsets = [1, 896], sizes = [1, 112], strides = [1, 1]} : vector<2x1792xf32> to vector<1x112xf32>
    %c1_50 = arith.constant 1 : index
    %c1_51 = arith.constant 1 : index
    %c0_52 = arith.constant 0 : index
    %50 = vector.load %arg25[%c1_50, %c1_51, %c0_52] : memref<2x9x112xf32, #tpu.memory_space<vmem>>, vector<1x1x112xf32>
    %51 = vector.shape_cast %50 : vector<1x1x112xf32> to vector<1x112xf32>
    %52 = vector.shape_cast %49 : vector<1x112xf32> to vector<1x1x112xf32>
    tpu.vector_store %arg25[%c1_50, %c1_51, %c0_52], %52 {strides = array<i32>} : memref<2x9x112xf32, #tpu.memory_space<vmem>>, vector<1x1x112xf32>,
    %53 = vector.extract_strided_slice %42 {offsets = [0, 1024], sizes = [1, 112], strides = [1, 1]} : vector<2x1792xf32> to vector<1x112xf32>
    %c0_53 = arith.constant 0 : index
    %c2 = arith.constant 2 : index
    %c0_54 = arith.constant 0 : index
    %54 = vector.load %arg25[%c0_53, %c2, %c0_54] : memref<2x9x112xf32, #tpu.memory_space<vmem>>, vector<1x1x112xf32>
    %55 = vector.shape_cast %54 : vector<1x1x112xf32> to vector<1x112xf32>
    %56 = vector.shape_cast %53 : vector<1x112xf32> to vector<1x1x112xf32>
    tpu.vector_store %arg25[%c0_53, %c2, %c0_54], %56 {strides = array<i32>} : memref<2x9x112xf32, #tpu.memory_space<vmem>>, vector<1x1x112xf32>,
    %57 = vector.extract_strided_slice %42 {offsets = [1, 1024], sizes = [1, 112], strides = [1, 1]} : vector<2x1792xf32> to vector<1x112xf32>
    %c1_55 = arith.constant 1 : index
    %c2_56 = arith.constant 2 : index
    %c0_57 = arith.constant 0 : index
    %58 = vector.load %arg25[%c1_55, %c2_56, %c0_57] : memref<2x9x112xf32, #tpu.memory_space<vmem>>, vector<1x1x112xf32>
    %59 = vector.shape_cast %58 : vector<1x1x112xf32> to vector<1x112xf32>
    %60 = vector.shape_cast %57 : vector<1x112xf32> to vector<1x1x112xf32>
    tpu.vector_store %arg25[%c1_55, %c2_56, %c0_57], %60 {strides = array<i32>} : memref<2x9x112xf32, #tpu.memory_space<vmem>>, vector<1x1x112xf32>,
    %61 = vector.extract_strided_slice %42 {offsets = [0, 1152], sizes = [1, 112], strides = [1, 1]} : vector<2x1792xf32> to vector<1x112xf32>
    %c0_58 = arith.constant 0 : index
    %c3 = arith.constant 3 : index
    %c0_59 = arith.constant 0 : index
    %62 = vector.load %arg25[%c0_58, %c3, %c0_59] : memref<2x9x112xf32, #tpu.memory_space<vmem>>, vector<1x1x112xf32>
    %63 = vector.shape_cast %62 : vector<1x1x112xf32> to vector<1x112xf32>
    %64 = vector.shape_cast %61 : vector<1x112xf32> to vector<1x1x112xf32>
    tpu.vector_store %arg25[%c0_58, %c3, %c0_59], %64 {strides = array<i32>} : memref<2x9x112xf32, #tpu.memory_space<vmem>>, vector<1x1x112xf32>,
    %65 = vector.extract_strided_slice %42 {offsets = [1, 1152], sizes = [1, 112], strides = [1, 1]} : vector<2x1792xf32> to vector<1x112xf32>
    %c1_60 = arith.constant 1 : index
    %c3_61 = arith.constant 3 : index
    %c0_62 = arith.constant 0 : index
    %66 = vector.load %arg25[%c1_60, %c3_61, %c0_62] : memref<2x9x112xf32, #tpu.memory_space<vmem>>, vector<1x1x112xf32>
    %67 = vector.shape_cast %66 : vector<1x1x112xf32> to vector<1x112xf32>
    %68 = vector.shape_cast %65 : vector<1x112xf32> to vector<1x1x112xf32>
    tpu.vector_store %arg25[%c1_60, %c3_61, %c0_62], %68 {strides = array<i32>} : memref<2x9x112xf32, #tpu.memory_space<vmem>>, vector<1x1x112xf32>,
    %69 = vector.extract_strided_slice %42 {offsets = [0, 1280], sizes = [1, 112], strides = [1, 1]} : vector<2x1792xf32> to vector<1x112xf32>
    %c0_63 = arith.constant 0 : index
    %c4 = arith.constant 4 : index
    %c0_64 = arith.constant 0 : index
    %70 = vector.load %arg25[%c0_63, %c4, %c0_64] : memref<2x9x112xf32, #tpu.memory_space<vmem>>, vector<1x1x112xf32>
    %71 = vector.shape_cast %70 : vector<1x1x112xf32> to vector<1x112xf32>
    %72 = vector.shape_cast %69 : vector<1x112xf32> to vector<1x1x112xf32>
    tpu.vector_store %arg25[%c0_63, %c4, %c0_64], %72 {strides = array<i32>} : memref<2x9x112xf32, #tpu.memory_space<vmem>>, vector<1x1x112xf32>,
    %73 = vector.extract_strided_slice %42 {offsets = [1, 1280], sizes = [1, 112], strides = [1, 1]} : vector<2x1792xf32> to vector<1x112xf32>
    %c1_65 = arith.constant 1 : index
    %c4_66 = arith.constant 4 : index
    %c0_67 = arith.constant 0 : index
    %74 = vector.load %arg25[%c1_65, %c4_66, %c0_67] : memref<2x9x112xf32, #tpu.memory_space<vmem>>, vector<1x1x112xf32>
    %75 = vector.shape_cast %74 : vector<1x1x112xf32> to vector<1x112xf32>
    %76 = vector.shape_cast %73 : vector<1x112xf32> to vector<1x1x112xf32>
    tpu.vector_store %arg25[%c1_65, %c4_66, %c0_67], %76 {strides = array<i32>} : memref<2x9x112xf32, #tpu.memory_space<vmem>>, vector<1x1x112xf32>,
    %77 = vector.extract_strided_slice %42 {offsets = [0, 1408], sizes = [1, 112], strides = [1, 1]} : vector<2x1792xf32> to vector<1x112xf32>
    %c0_68 = arith.constant 0 : index
    %c5 = arith.constant 5 : index
    %c0_69 = arith.constant 0 : index
    %78 = vector.load %arg25[%c0_68, %c5, %c0_69] : memref<2x9x112xf32, #tpu.memory_space<vmem>>, vector<1x1x112xf32>
    %79 = vector.shape_cast %78 : vector<1x1x112xf32> to vector<1x112xf32>
    %80 = vector.shape_cast %77 : vector<1x112xf32> to vector<1x1x112xf32>
    tpu.vector_store %arg25[%c0_68, %c5, %c0_69], %80 {strides = array<i32>} : memref<2x9x112xf32, #tpu.memory_space<vmem>>, vector<1x1x112xf32>,
    %81 = vector.extract_strided_slice %42 {offsets = [1, 1408], sizes = [1, 112], strides = [1, 1]} : vector<2x1792xf32> to vector<1x112xf32>
    %c1_70 = arith.constant 1 : index
    %c5_71 = arith.constant 5 : index
    %c0_72 = arith.constant 0 : index
    %82 = vector.load %arg25[%c1_70, %c5_71, %c0_72] : memref<2x9x112xf32, #tpu.memory_space<vmem>>, vector<1x1x112xf32>
    %83 = vector.shape_cast %82 : vector<1x1x112xf32> to vector<1x112xf32>
    %84 = vector.shape_cast %81 : vector<1x112xf32> to vector<1x1x112xf32>
    tpu.vector_store %arg25[%c1_70, %c5_71, %c0_72], %84 {strides = array<i32>} : memref<2x9x112xf32, #tpu.memory_space<vmem>>, vector<1x1x112xf32>,
    %85 = vector.extract_strided_slice %42 {offsets = [0, 1536], sizes = [1, 112], strides = [1, 1]} : vector<2x1792xf32> to vector<1x112xf32>
    %c0_73 = arith.constant 0 : index
    %c6 = arith.constant 6 : index
    %c0_74 = arith.constant 0 : index
    %86 = vector.load %arg25[%c0_73, %c6, %c0_74] : memref<2x9x112xf32, #tpu.memory_space<vmem>>, vector<1x1x112xf32>
    %87 = vector.shape_cast %86 : vector<1x1x112xf32> to vector<1x112xf32>
    %88 = vector.shape_cast %85 : vector<1x112xf32> to vector<1x1x112xf32>
    tpu.vector_store %arg25[%c0_73, %c6, %c0_74], %88 {strides = array<i32>} : memref<2x9x112xf32, #tpu.memory_space<vmem>>, vector<1x1x112xf32>,
    %89 = vector.extract_strided_slice %42 {offsets = [1, 1536], sizes = [1, 112], strides = [1, 1]} : vector<2x1792xf32> to vector<1x112xf32>
    %c1_75 = arith.constant 1 : index
    %c6_76 = arith.constant 6 : index
    %c0_77 = arith.constant 0 : index
    %90 = vector.load %arg25[%c1_75, %c6_76, %c0_77] : memref<2x9x112xf32, #tpu.memory_space<vmem>>, vector<1x1x112xf32>
    %91 = vector.shape_cast %90 : vector<1x1x112xf32> to vector<1x112xf32>
    %92 = vector.shape_cast %89 : vector<1x112xf32> to vector<1x1x112xf32>
    tpu.vector_store %arg25[%c1_75, %c6_76, %c0_77], %92 {strides = array<i32>} : memref<2x9x112xf32, #tpu.memory_space<vmem>>, vector<1x1x112xf32>,
    %93 = vector.extract_strided_slice %42 {offsets = [0, 1664], sizes = [1, 112], strides = [1, 1]} : vector<2x1792xf32> to vector<1x112xf32>
    %c0_78 = arith.constant 0 : index
    %c7 = arith.constant 7 : index
    %c0_79 = arith.constant 0 : index
    %94 = vector.load %arg25[%c0_78, %c7, %c0_79] : memref<2x9x112xf32, #tpu.memory_space<vmem>>, vector<1x1x112xf32>
    %95 = vector.shape_cast %94 : vector<1x1x112xf32> to vector<1x112xf32>
    %96 = vector.shape_cast %93 : vector<1x112xf32> to vector<1x1x112xf32>
    tpu.vector_store %arg25[%c0_78, %c7, %c0_79], %96 {strides = array<i32>} : memref<2x9x112xf32, #tpu.memory_space<vmem>>, vector<1x1x112xf32>,
    %97 = vector.extract_strided_slice %42 {offsets = [1, 1664], sizes = [1, 112], strides = [1, 1]} : vector<2x1792xf32> to vector<1x112xf32>
    %c1_80 = arith.constant 1 : index
    %c7_81 = arith.constant 7 : index
    %c0_82 = arith.constant 0 : index
    %98 = vector.load %arg25[%c1_80, %c7_81, %c0_82] : memref<2x9x112xf32, #tpu.memory_space<vmem>>, vector<1x1x112xf32>
    %99 = vector.shape_cast %98 : vector<1x1x112xf32> to vector<1x112xf32>
    %100 = vector.shape_cast %97 : vector<1x112xf32> to vector<1x1x112xf32>
    tpu.vector_store %arg25[%c1_80, %c7_81, %c0_82], %100 {strides = array<i32>} : memref<2x9x112xf32, #tpu.memory_space<vmem>>, vector<1x1x112xf32>,
    %c1_i32_83 = arith.constant 1 : i32
    %101 = tpu.memref_slice %arg24[%c1_i32_83] : memref<7x!tpu.dma_semaphore, #tpu.memory_space<semaphore_mem>> -> memref<1x!tpu.dma_semaphore, #tpu.memory_space<semaphore_mem>>
    %102 = tpu.memref_squeeze %101 : memref<1x!tpu.dma_semaphore, #tpu.memory_space<semaphore_mem>> -> memref<!tpu.dma_semaphore, #tpu.memory_space<semaphore_mem>>
    tpu.wait_dma2 semaphore(%102 : memref<!tpu.dma_semaphore, #tpu.memory_space<semaphore_mem>>) src(%arg9 : memref<3x112x112xbf16, #tpu.memory_space<any>>) dst(%arg18 : memref<3x112x112xbf16, #tpu.memory_space<vmem>>)
    %c0_84 = arith.constant 0 : index
    %c0_85 = arith.constant 0 : index
    %c0_86 = arith.constant 0 : index
    %103 = vector.load %arg25[%c0_84, %c0_85, %c0_86] : memref<2x9x112xf32, #tpu.memory_space<vmem>>, vector<1x7x112xf32>
    %104 = vector.shape_cast %103 : vector<1x7x112xf32> to vector<7x112xf32>
    %105 = arith.truncf %104 : vector<7x112xf32> to vector<7x112xbf16>
    %c0_87 = arith.constant 0 : index
    %c0_88 = arith.constant 0 : index
    %c0_89 = arith.constant 0 : index
    %106 = vector.load %arg18[%c0_87, %c0_88, %c0_89] : memref<3x112x112xbf16, #tpu.memory_space<vmem>>, vector<1x112x112xbf16>
    %107 = vector.shape_cast %106 : vector<1x112x112xbf16> to vector<112x112xbf16>
    %cst_90 = arith.constant dense<0.000000e+00> : vector<7x112xf32>
    %108 = tpu.matmul %105, %107, %cst_90 {dimension_numbers = #tpu.dot_dimension_numbers<[1], [0], [0], [1], [0, 0, 1, 1], [], []>} : vector<7x112xbf16>, vector<112x112xbf16>, vector<7x112xf32> -> vector<7x112xf32>
    %c0_91 = arith.constant 0 : index
    %c1_92 = arith.constant 1 : index
    %c0_93 = arith.constant 0 : index
    %109 = vector.load %arg25[%c0_91, %c1_92, %c0_93] : memref<2x9x112xf32, #tpu.memory_space<vmem>>, vector<1x7x112xf32>
    %110 = vector.shape_cast %109 : vector<1x7x112xf32> to vector<7x112xf32>
    %111 = arith.truncf %110 : vector<7x112xf32> to vector<7x112xbf16>
    %c1_94 = arith.constant 1 : index
    %c0_95 = arith.constant 0 : index
    %c0_96 = arith.constant 0 : index
    %112 = vector.load %arg18[%c1_94, %c0_95, %c0_96] : memref<3x112x112xbf16, #tpu.memory_space<vmem>>, vector<1x112x112xbf16>
    %113 = vector.shape_cast %112 : vector<1x112x112xbf16> to vector<112x112xbf16>
    %cst_97 = arith.constant dense<0.000000e+00> : vector<7x112xf32>
    %114 = tpu.matmul %111, %113, %cst_97 {dimension_numbers = #tpu.dot_dimension_numbers<[1], [0], [0], [1], [0, 0, 1, 1], [], []>} : vector<7x112xbf16>, vector<112x112xbf16>, vector<7x112xf32> -> vector<7x112xf32>
    %115 = arith.addf %108, %114 : vector<7x112xf32>
    %c0_98 = arith.constant 0 : index
    %c2_99 = arith.constant 2 : index
    %c0_100 = arith.constant 0 : index
    %116 = vector.load %arg25[%c0_98, %c2_99, %c0_100] : memref<2x9x112xf32, #tpu.memory_space<vmem>>, vector<1x7x112xf32>
    %117 = vector.shape_cast %116 : vector<1x7x112xf32> to vector<7x112xf32>
    %118 = arith.truncf %117 : vector<7x112xf32> to vector<7x112xbf16>
    %c2_101 = arith.constant 2 : index
    %c0_102 = arith.constant 0 : index
    %c0_103 = arith.constant 0 : index
    %119 = vector.load %arg18[%c2_101, %c0_102, %c0_103] : memref<3x112x112xbf16, #tpu.memory_space<vmem>>, vector<1x112x112xbf16>
    %120 = vector.shape_cast %119 : vector<1x112x112xbf16> to vector<112x112xbf16>
    %cst_104 = arith.constant dense<0.000000e+00> : vector<7x112xf32>
    %121 = tpu.matmul %118, %120, %cst_104 {dimension_numbers = #tpu.dot_dimension_numbers<[1], [0], [0], [1], [0, 0, 1, 1], [], []>} : vector<7x112xbf16>, vector<112x112xbf16>, vector<7x112xf32> -> vector<7x112xf32>
    %122 = arith.addf %115, %121 : vector<7x112xf32>
    %c0_105 = arith.constant 0 : index
    %c0_106 = arith.constant 0 : index
    %123 = vector.load %arg2[%c0_105, %c0_106] : memref<1x112xf32, #tpu.memory_space<vmem>>, vector<1x112xf32>
    %124 = vector.broadcast %123 : vector<1x112xf32> to vector<7x112xf32>
    %125 = arith.addf %122, %124 : vector<7x112xf32>
    %cst_107 = arith.constant 0.000000e+00 : f32
    %126 = vector.broadcast %cst_107 : f32 to vector<7x112xf32>
    %127 = arith.maximumf %125, %126 : vector<7x112xf32>
    %c0_108 = arith.constant 0 : index
    %c1_109 = arith.constant 1 : index
    %c0_110 = arith.constant 0 : index
    %128 = vector.load %arg26[%c0_108, %c1_109, %c0_110] : memref<2x9x112xf32, #tpu.memory_space<vmem>>, vector<1x7x112xf32>
    %129 = vector.shape_cast %128 : vector<1x7x112xf32> to vector<7x112xf32>
    %130 = vector.shape_cast %127 : vector<7x112xf32> to vector<1x7x112xf32>
    tpu.vector_store %arg26[%c0_108, %c1_109, %c0_110], %130 {strides = array<i32>} : memref<2x9x112xf32, #tpu.memory_space<vmem>>, vector<1x7x112xf32>,
    %c1_111 = arith.constant 1 : index
    %c0_112 = arith.constant 0 : index
    %c0_113 = arith.constant 0 : index
    %131 = vector.load %arg25[%c1_111, %c0_112, %c0_113] : memref<2x9x112xf32, #tpu.memory_space<vmem>>, vector<1x7x112xf32>
    %132 = vector.shape_cast %131 : vector<1x7x112xf32> to vector<7x112xf32>
    %133 = arith.truncf %132 : vector<7x112xf32> to vector<7x112xbf16>
    %c0_114 = arith.constant 0 : index
    %c0_115 = arith.constant 0 : index
    %c0_116 = arith.constant 0 : index
    %134 = vector.load %arg18[%c0_114, %c0_115, %c0_116] : memref<3x112x112xbf16, #tpu.memory_space<vmem>>, vector<1x112x112xbf16>
    %135 = vector.shape_cast %134 : vector<1x112x112xbf16> to vector<112x112xbf16>
    %cst_117 = arith.constant dense<0.000000e+00> : vector<7x112xf32>
    %136 = tpu.matmul %133, %135, %cst_117 {dimension_numbers = #tpu.dot_dimension_numbers<[1], [0], [0], [1], [0, 0, 1, 1], [], []>} : vector<7x112xbf16>, vector<112x112xbf16>, vector<7x112xf32> -> vector<7x112xf32>
    %c1_118 = arith.constant 1 : index
    %c1_119 = arith.constant 1 : index
    %c0_120 = arith.constant 0 : index
    %137 = vector.load %arg25[%c1_118, %c1_119, %c0_120] : memref<2x9x112xf32, #tpu.memory_space<vmem>>, vector<1x7x112xf32>
    %138 = vector.shape_cast %137 : vector<1x7x112xf32> to vector<7x112xf32>
    %139 = arith.truncf %138 : vector<7x112xf32> to vector<7x112xbf16>
    %c1_121 = arith.constant 1 : index
    %c0_122 = arith.constant 0 : index
    %c0_123 = arith.constant 0 : index
    %140 = vector.load %arg18[%c1_121, %c0_122, %c0_123] : memref<3x112x112xbf16, #tpu.memory_space<vmem>>, vector<1x112x112xbf16>
    %141 = vector.shape_cast %140 : vector<1x112x112xbf16> to vector<112x112xbf16>
    %cst_124 = arith.constant dense<0.000000e+00> : vector<7x112xf32>
    %142 = tpu.matmul %139, %141, %cst_124 {dimension_numbers = #tpu.dot_dimension_numbers<[1], [0], [0], [1], [0, 0, 1, 1], [], []>} : vector<7x112xbf16>, vector<112x112xbf16>, vector<7x112xf32> -> vector<7x112xf32>
    %143 = arith.addf %136, %142 : vector<7x112xf32>
    %c1_125 = arith.constant 1 : index
    %c2_126 = arith.constant 2 : index
    %c0_127 = arith.constant 0 : index
    %144 = vector.load %arg25[%c1_125, %c2_126, %c0_127] : memref<2x9x112xf32, #tpu.memory_space<vmem>>, vector<1x7x112xf32>
    %145 = vector.shape_cast %144 : vector<1x7x112xf32> to vector<7x112xf32>
    %146 = arith.truncf %145 : vector<7x112xf32> to vector<7x112xbf16>
    %c2_128 = arith.constant 2 : index
    %c0_129 = arith.constant 0 : index
    %c0_130 = arith.constant 0 : index
    %147 = vector.load %arg18[%c2_128, %c0_129, %c0_130] : memref<3x112x112xbf16, #tpu.memory_space<vmem>>, vector<1x112x112xbf16>
    %148 = vector.shape_cast %147 : vector<1x112x112xbf16> to vector<112x112xbf16>
    %cst_131 = arith.constant dense<0.000000e+00> : vector<7x112xf32>
    %149 = tpu.matmul %146, %148, %cst_131 {dimension_numbers = #tpu.dot_dimension_numbers<[1], [0], [0], [1], [0, 0, 1, 1], [], []>} : vector<7x112xbf16>, vector<112x112xbf16>, vector<7x112xf32> -> vector<7x112xf32>
    %150 = arith.addf %143, %149 : vector<7x112xf32>
    %c0_132 = arith.constant 0 : index
    %c0_133 = arith.constant 0 : index
    %151 = vector.load %arg2[%c0_132, %c0_133] : memref<1x112xf32, #tpu.memory_space<vmem>>, vector<1x112xf32>
    %152 = vector.broadcast %151 : vector<1x112xf32> to vector<7x112xf32>
    %153 = arith.addf %150, %152 : vector<7x112xf32>
    %cst_134 = arith.constant 0.000000e+00 : f32
    %154 = vector.broadcast %cst_134 : f32 to vector<7x112xf32>
    %155 = arith.maximumf %153, %154 : vector<7x112xf32>
    %c1_135 = arith.constant 1 : index
    %c1_136 = arith.constant 1 : index
    %c0_137 = arith.constant 0 : index
    %156 = vector.load %arg26[%c1_135, %c1_136, %c0_137] : memref<2x9x112xf32, #tpu.memory_space<vmem>>, vector<1x7x112xf32>
    %157 = vector.shape_cast %156 : vector<1x7x112xf32> to vector<7x112xf32>
    %158 = vector.shape_cast %155 : vector<7x112xf32> to vector<1x7x112xf32>
    tpu.vector_store %arg26[%c1_135, %c1_136, %c0_137], %158 {strides = array<i32>} : memref<2x9x112xf32, #tpu.memory_space<vmem>>, vector<1x7x112xf32>,
    %c2_i32_138 = arith.constant 2 : i32
    %159 = tpu.memref_slice %arg24[%c2_i32_138] : memref<7x!tpu.dma_semaphore, #tpu.memory_space<semaphore_mem>> -> memref<1x!tpu.dma_semaphore, #tpu.memory_space<semaphore_mem>>
    %160 = tpu.memref_squeeze %159 : memref<1x!tpu.dma_semaphore, #tpu.memory_space<semaphore_mem>> -> memref<!tpu.dma_semaphore, #tpu.memory_space<semaphore_mem>>
    tpu.wait_dma2 semaphore(%160 : memref<!tpu.dma_semaphore, #tpu.memory_space<semaphore_mem>>) src(%arg10 : memref<3x112x112xbf16, #tpu.memory_space<any>>) dst(%arg19 : memref<3x112x112xbf16, #tpu.memory_space<vmem>>)
    %c0_139 = arith.constant 0 : index
    %c0_140 = arith.constant 0 : index
    %c0_141 = arith.constant 0 : index
    %161 = vector.load %arg26[%c0_139, %c0_140, %c0_141] : memref<2x9x112xf32, #tpu.memory_space<vmem>>, vector<1x7x112xf32>
    %162 = vector.shape_cast %161 : vector<1x7x112xf32> to vector<7x112xf32>
    %163 = arith.truncf %162 : vector<7x112xf32> to vector<7x112xbf16>
    %c0_142 = arith.constant 0 : index
    %c0_143 = arith.constant 0 : index
    %c0_144 = arith.constant 0 : index
    %164 = vector.load %arg19[%c0_142, %c0_143, %c0_144] : memref<3x112x112xbf16, #tpu.memory_space<vmem>>, vector<1x112x112xbf16>
    %165 = vector.shape_cast %164 : vector<1x112x112xbf16> to vector<112x112xbf16>
    %cst_145 = arith.constant dense<0.000000e+00> : vector<7x112xf32>
    %166 = tpu.matmul %163, %165, %cst_145 {dimension_numbers = #tpu.dot_dimension_numbers<[1], [0], [0], [1], [0, 0, 1, 1], [], []>} : vector<7x112xbf16>, vector<112x112xbf16>, vector<7x112xf32> -> vector<7x112xf32>
    %c0_146 = arith.constant 0 : index
    %c1_147 = arith.constant 1 : index
    %c0_148 = arith.constant 0 : index
    %167 = vector.load %arg26[%c0_146, %c1_147, %c0_148] : memref<2x9x112xf32, #tpu.memory_space<vmem>>, vector<1x7x112xf32>
    %168 = vector.shape_cast %167 : vector<1x7x112xf32> to vector<7x112xf32>
    %169 = arith.truncf %168 : vector<7x112xf32> to vector<7x112xbf16>
    %c1_149 = arith.constant 1 : index
    %c0_150 = arith.constant 0 : index
    %c0_151 = arith.constant 0 : index
    %170 = vector.load %arg19[%c1_149, %c0_150, %c0_151] : memref<3x112x112xbf16, #tpu.memory_space<vmem>>, vector<1x112x112xbf16>
    %171 = vector.shape_cast %170 : vector<1x112x112xbf16> to vector<112x112xbf16>
    %cst_152 = arith.constant dense<0.000000e+00> : vector<7x112xf32>
    %172 = tpu.matmul %169, %171, %cst_152 {dimension_numbers = #tpu.dot_dimension_numbers<[1], [0], [0], [1], [0, 0, 1, 1], [], []>} : vector<7x112xbf16>, vector<112x112xbf16>, vector<7x112xf32> -> vector<7x112xf32>
    %173 = arith.addf %166, %172 : vector<7x112xf32>
    %c0_153 = arith.constant 0 : index
    %c2_154 = arith.constant 2 : index
    %c0_155 = arith.constant 0 : index
    %174 = vector.load %arg26[%c0_153, %c2_154, %c0_155] : memref<2x9x112xf32, #tpu.memory_space<vmem>>, vector<1x7x112xf32>
    %175 = vector.shape_cast %174 : vector<1x7x112xf32> to vector<7x112xf32>
    %176 = arith.truncf %175 : vector<7x112xf32> to vector<7x112xbf16>
    %c2_156 = arith.constant 2 : index
    %c0_157 = arith.constant 0 : index
    %c0_158 = arith.constant 0 : index
    %177 = vector.load %arg19[%c2_156, %c0_157, %c0_158] : memref<3x112x112xbf16, #tpu.memory_space<vmem>>, vector<1x112x112xbf16>
    %178 = vector.shape_cast %177 : vector<1x112x112xbf16> to vector<112x112xbf16>
    %cst_159 = arith.constant dense<0.000000e+00> : vector<7x112xf32>
    %179 = tpu.matmul %176, %178, %cst_159 {dimension_numbers = #tpu.dot_dimension_numbers<[1], [0], [0], [1], [0, 0, 1, 1], [], []>} : vector<7x112xbf16>, vector<112x112xbf16>, vector<7x112xf32> -> vector<7x112xf32>
    %180 = arith.addf %173, %179 : vector<7x112xf32>
    %c0_160 = arith.constant 0 : index
    %c0_161 = arith.constant 0 : index
    %181 = vector.load %arg3[%c0_160, %c0_161] : memref<1x112xf32, #tpu.memory_space<vmem>>, vector<1x112xf32>
    %182 = vector.broadcast %181 : vector<1x112xf32> to vector<7x112xf32>
    %183 = arith.addf %180, %182 : vector<7x112xf32>
    %cst_162 = arith.constant 0.000000e+00 : f32
    %184 = vector.broadcast %cst_162 : f32 to vector<7x112xf32>
    %185 = arith.maximumf %183, %184 : vector<7x112xf32>
    %c0_163 = arith.constant 0 : index
    %c1_164 = arith.constant 1 : index
    %c0_165 = arith.constant 0 : index
    %186 = vector.load %arg27[%c0_163, %c1_164, %c0_165] : memref<2x9x112xf32, #tpu.memory_space<vmem>>, vector<1x7x112xf32>
    %187 = vector.shape_cast %186 : vector<1x7x112xf32> to vector<7x112xf32>
    %188 = vector.shape_cast %185 : vector<7x112xf32> to vector<1x7x112xf32>
    tpu.vector_store %arg27[%c0_163, %c1_164, %c0_165], %188 {strides = array<i32>} : memref<2x9x112xf32, #tpu.memory_space<vmem>>, vector<1x7x112xf32>,
    %c1_166 = arith.constant 1 : index
    %c0_167 = arith.constant 0 : index
    %c0_168 = arith.constant 0 : index
    %189 = vector.load %arg26[%c1_166, %c0_167, %c0_168] : memref<2x9x112xf32, #tpu.memory_space<vmem>>, vector<1x7x112xf32>
    %190 = vector.shape_cast %189 : vector<1x7x112xf32> to vector<7x112xf32>
    %191 = arith.truncf %190 : vector<7x112xf32> to vector<7x112xbf16>
    %c0_169 = arith.constant 0 : index
    %c0_170 = arith.constant 0 : index
    %c0_171 = arith.constant 0 : index
    %192 = vector.load %arg19[%c0_169, %c0_170, %c0_171] : memref<3x112x112xbf16, #tpu.memory_space<vmem>>, vector<1x112x112xbf16>
    %193 = vector.shape_cast %192 : vector<1x112x112xbf16> to vector<112x112xbf16>
    %cst_172 = arith.constant dense<0.000000e+00> : vector<7x112xf32>
    %194 = tpu.matmul %191, %193, %cst_172 {dimension_numbers = #tpu.dot_dimension_numbers<[1], [0], [0], [1], [0, 0, 1, 1], [], []>} : vector<7x112xbf16>, vector<112x112xbf16>, vector<7x112xf32> -> vector<7x112xf32>
    %c1_173 = arith.constant 1 : index
    %c1_174 = arith.constant 1 : index
    %c0_175 = arith.constant 0 : index
    %195 = vector.load %arg26[%c1_173, %c1_174, %c0_175] : memref<2x9x112xf32, #tpu.memory_space<vmem>>, vector<1x7x112xf32>
    %196 = vector.shape_cast %195 : vector<1x7x112xf32> to vector<7x112xf32>
    %197 = arith.truncf %196 : vector<7x112xf32> to vector<7x112xbf16>
    %c1_176 = arith.constant 1 : index
    %c0_177 = arith.constant 0 : index
    %c0_178 = arith.constant 0 : index
    %198 = vector.load %arg19[%c1_176, %c0_177, %c0_178] : memref<3x112x112xbf16, #tpu.memory_space<vmem>>, vector<1x112x112xbf16>
    %199 = vector.shape_cast %198 : vector<1x112x112xbf16> to vector<112x112xbf16>
    %cst_179 = arith.constant dense<0.000000e+00> : vector<7x112xf32>
    %200 = tpu.matmul %197, %199, %cst_179 {dimension_numbers = #tpu.dot_dimension_numbers<[1], [0], [0], [1], [0, 0, 1, 1], [], []>} : vector<7x112xbf16>, vector<112x112xbf16>, vector<7x112xf32> -> vector<7x112xf32>
    %201 = arith.addf %194, %200 : vector<7x112xf32>
    %c1_180 = arith.constant 1 : index
    %c2_181 = arith.constant 2 : index
    %c0_182 = arith.constant 0 : index
    %202 = vector.load %arg26[%c1_180, %c2_181, %c0_182] : memref<2x9x112xf32, #tpu.memory_space<vmem>>, vector<1x7x112xf32>
    %203 = vector.shape_cast %202 : vector<1x7x112xf32> to vector<7x112xf32>
    %204 = arith.truncf %203 : vector<7x112xf32> to vector<7x112xbf16>
    %c2_183 = arith.constant 2 : index
    %c0_184 = arith.constant 0 : index
    %c0_185 = arith.constant 0 : index
    %205 = vector.load %arg19[%c2_183, %c0_184, %c0_185] : memref<3x112x112xbf16, #tpu.memory_space<vmem>>, vector<1x112x112xbf16>
    %206 = vector.shape_cast %205 : vector<1x112x112xbf16> to vector<112x112xbf16>
    %cst_186 = arith.constant dense<0.000000e+00> : vector<7x112xf32>
    %207 = tpu.matmul %204, %206, %cst_186 {dimension_numbers = #tpu.dot_dimension_numbers<[1], [0], [0], [1], [0, 0, 1, 1], [], []>} : vector<7x112xbf16>, vector<112x112xbf16>, vector<7x112xf32> -> vector<7x112xf32>
    %208 = arith.addf %201, %207 : vector<7x112xf32>
    %c0_187 = arith.constant 0 : index
    %c0_188 = arith.constant 0 : index
    %209 = vector.load %arg3[%c0_187, %c0_188] : memref<1x112xf32, #tpu.memory_space<vmem>>, vector<1x112xf32>
    %210 = vector.broadcast %209 : vector<1x112xf32> to vector<7x112xf32>
    %211 = arith.addf %208, %210 : vector<7x112xf32>
    %cst_189 = arith.constant 0.000000e+00 : f32
    %212 = vector.broadcast %cst_189 : f32 to vector<7x112xf32>
    %213 = arith.maximumf %211, %212 : vector<7x112xf32>
    %c1_190 = arith.constant 1 : index
    %c1_191 = arith.constant 1 : index
    %c0_192 = arith.constant 0 : index
    %214 = vector.load %arg27[%c1_190, %c1_191, %c0_192] : memref<2x9x112xf32, #tpu.memory_space<vmem>>, vector<1x7x112xf32>
    %215 = vector.shape_cast %214 : vector<1x7x112xf32> to vector<7x112xf32>
    %216 = vector.shape_cast %213 : vector<7x112xf32> to vector<1x7x112xf32>
    tpu.vector_store %arg27[%c1_190, %c1_191, %c0_192], %216 {strides = array<i32>} : memref<2x9x112xf32, #tpu.memory_space<vmem>>, vector<1x7x112xf32>,
    %c3_i32_193 = arith.constant 3 : i32
    %217 = tpu.memref_slice %arg24[%c3_i32_193] : memref<7x!tpu.dma_semaphore, #tpu.memory_space<semaphore_mem>> -> memref<1x!tpu.dma_semaphore, #tpu.memory_space<semaphore_mem>>
    %218 = tpu.memref_squeeze %217 : memref<1x!tpu.dma_semaphore, #tpu.memory_space<semaphore_mem>> -> memref<!tpu.dma_semaphore, #tpu.memory_space<semaphore_mem>>
    tpu.wait_dma2 semaphore(%218 : memref<!tpu.dma_semaphore, #tpu.memory_space<semaphore_mem>>) src(%arg11 : memref<3x112x112xbf16, #tpu.memory_space<any>>) dst(%arg20 : memref<3x112x112xbf16, #tpu.memory_space<vmem>>)
    %c0_194 = arith.constant 0 : index
    %c0_195 = arith.constant 0 : index
    %c0_196 = arith.constant 0 : index
    %219 = vector.load %arg27[%c0_194, %c0_195, %c0_196] : memref<2x9x112xf32, #tpu.memory_space<vmem>>, vector<1x7x112xf32>
    %220 = vector.shape_cast %219 : vector<1x7x112xf32> to vector<7x112xf32>
    %221 = arith.truncf %220 : vector<7x112xf32> to vector<7x112xbf16>
    %c0_197 = arith.constant 0 : index
    %c0_198 = arith.constant 0 : index
    %c0_199 = arith.constant 0 : index
    %222 = vector.load %arg20[%c0_197, %c0_198, %c0_199] : memref<3x112x112xbf16, #tpu.memory_space<vmem>>, vector<1x112x112xbf16>
    %223 = vector.shape_cast %222 : vector<1x112x112xbf16> to vector<112x112xbf16>
    %cst_200 = arith.constant dense<0.000000e+00> : vector<7x112xf32>
    %224 = tpu.matmul %221, %223, %cst_200 {dimension_numbers = #tpu.dot_dimension_numbers<[1], [0], [0], [1], [0, 0, 1, 1], [], []>} : vector<7x112xbf16>, vector<112x112xbf16>, vector<7x112xf32> -> vector<7x112xf32>
    %c0_201 = arith.constant 0 : index
    %c1_202 = arith.constant 1 : index
    %c0_203 = arith.constant 0 : index
    %225 = vector.load %arg27[%c0_201, %c1_202, %c0_203] : memref<2x9x112xf32, #tpu.memory_space<vmem>>, vector<1x7x112xf32>
    %226 = vector.shape_cast %225 : vector<1x7x112xf32> to vector<7x112xf32>
    %227 = arith.truncf %226 : vector<7x112xf32> to vector<7x112xbf16>
    %c1_204 = arith.constant 1 : index
    %c0_205 = arith.constant 0 : index
    %c0_206 = arith.constant 0 : index
    %228 = vector.load %arg20[%c1_204, %c0_205, %c0_206] : memref<3x112x112xbf16, #tpu.memory_space<vmem>>, vector<1x112x112xbf16>
    %229 = vector.shape_cast %228 : vector<1x112x112xbf16> to vector<112x112xbf16>
    %cst_207 = arith.constant dense<0.000000e+00> : vector<7x112xf32>
    %230 = tpu.matmul %227, %229, %cst_207 {dimension_numbers = #tpu.dot_dimension_numbers<[1], [0], [0], [1], [0, 0, 1, 1], [], []>} : vector<7x112xbf16>, vector<112x112xbf16>, vector<7x112xf32> -> vector<7x112xf32>
    %231 = arith.addf %224, %230 : vector<7x112xf32>
    %c0_208 = arith.constant 0 : index
    %c2_209 = arith.constant 2 : index
    %c0_210 = arith.constant 0 : index
    %232 = vector.load %arg27[%c0_208, %c2_209, %c0_210] : memref<2x9x112xf32, #tpu.memory_space<vmem>>, vector<1x7x112xf32>
    %233 = vector.shape_cast %232 : vector<1x7x112xf32> to vector<7x112xf32>
    %234 = arith.truncf %233 : vector<7x112xf32> to vector<7x112xbf16>
    %c2_211 = arith.constant 2 : index
    %c0_212 = arith.constant 0 : index
    %c0_213 = arith.constant 0 : index
    %235 = vector.load %arg20[%c2_211, %c0_212, %c0_213] : memref<3x112x112xbf16, #tpu.memory_space<vmem>>, vector<1x112x112xbf16>
    %236 = vector.shape_cast %235 : vector<1x112x112xbf16> to vector<112x112xbf16>
    %cst_214 = arith.constant dense<0.000000e+00> : vector<7x112xf32>
    %237 = tpu.matmul %234, %236, %cst_214 {dimension_numbers = #tpu.dot_dimension_numbers<[1], [0], [0], [1], [0, 0, 1, 1], [], []>} : vector<7x112xbf16>, vector<112x112xbf16>, vector<7x112xf32> -> vector<7x112xf32>
    %238 = arith.addf %231, %237 : vector<7x112xf32>
    %c0_215 = arith.constant 0 : index
    %c0_216 = arith.constant 0 : index
    %239 = vector.load %arg4[%c0_215, %c0_216] : memref<1x112xf32, #tpu.memory_space<vmem>>, vector<1x112xf32>
    %240 = vector.broadcast %239 : vector<1x112xf32> to vector<7x112xf32>
    %241 = arith.addf %238, %240 : vector<7x112xf32>
    %cst_217 = arith.constant 0.000000e+00 : f32
    %242 = vector.broadcast %cst_217 : f32 to vector<7x112xf32>
    %243 = arith.maximumf %241, %242 : vector<7x112xf32>
    %244 = vector.extract_strided_slice %243 {offsets = [0, 0], sizes = [1, 112], strides = [1, 1]} : vector<7x112xf32> to vector<1x112xf32>
    %c0_218 = arith.constant 0 : index
    %c1_219 = arith.constant 1 : index
    %c0_220 = arith.constant 0 : index
    %245 = vector.load %arg28[%c0_218, %c1_219, %c0_220] : memref<2x16x112xf32, #tpu.memory_space<vmem>>, vector<1x1x112xf32>
    %246 = vector.shape_cast %245 : vector<1x1x112xf32> to vector<1x112xf32>
    %247 = vector.shape_cast %244 : vector<1x112xf32> to vector<1x1x112xf32>
    tpu.vector_store %arg28[%c0_218, %c1_219, %c0_220], %247 {strides = array<i32>} : memref<2x16x112xf32, #tpu.memory_space<vmem>>, vector<1x1x112xf32>,
    %c0_221 = arith.constant 0 : index
    %c2_222 = arith.constant 2 : index
    %c0_223 = arith.constant 0 : index
    %248 = vector.load %arg28[%c0_221, %c2_222, %c0_223] : memref<2x16x112xf32, #tpu.memory_space<vmem>>, vector<1x1x112xf32>
    %249 = vector.shape_cast %248 : vector<1x1x112xf32> to vector<1x112xf32>
    %250 = vector.shape_cast %244 : vector<1x112xf32> to vector<1x1x112xf32>
    tpu.vector_store %arg28[%c0_221, %c2_222, %c0_223], %250 {strides = array<i32>} : memref<2x16x112xf32, #tpu.memory_space<vmem>>, vector<1x1x112xf32>,
    %251 = vector.extract_strided_slice %243 {offsets = [1, 0], sizes = [1, 112], strides = [1, 1]} : vector<7x112xf32> to vector<1x112xf32>
    %c0_224 = arith.constant 0 : index
    %c3_225 = arith.constant 3 : index
    %c0_226 = arith.constant 0 : index
    %252 = vector.load %arg28[%c0_224, %c3_225, %c0_226] : memref<2x16x112xf32, #tpu.memory_space<vmem>>, vector<1x1x112xf32>
    %253 = vector.shape_cast %252 : vector<1x1x112xf32> to vector<1x112xf32>
    %254 = vector.shape_cast %251 : vector<1x112xf32> to vector<1x1x112xf32>
    tpu.vector_store %arg28[%c0_224, %c3_225, %c0_226], %254 {strides = array<i32>} : memref<2x16x112xf32, #tpu.memory_space<vmem>>, vector<1x1x112xf32>,
    %c0_227 = arith.constant 0 : index
    %c4_228 = arith.constant 4 : index
    %c0_229 = arith.constant 0 : index
    %255 = vector.load %arg28[%c0_227, %c4_228, %c0_229] : memref<2x16x112xf32, #tpu.memory_space<vmem>>, vector<1x1x112xf32>
    %256 = vector.shape_cast %255 : vector<1x1x112xf32> to vector<1x112xf32>
    %257 = vector.shape_cast %251 : vector<1x112xf32> to vector<1x1x112xf32>
    tpu.vector_store %arg28[%c0_227, %c4_228, %c0_229], %257 {strides = array<i32>} : memref<2x16x112xf32, #tpu.memory_space<vmem>>, vector<1x1x112xf32>,
    %258 = vector.extract_strided_slice %243 {offsets = [2, 0], sizes = [1, 112], strides = [1, 1]} : vector<7x112xf32> to vector<1x112xf32>
    %c0_230 = arith.constant 0 : index
    %c5_231 = arith.constant 5 : index
    %c0_232 = arith.constant 0 : index
    %259 = vector.load %arg28[%c0_230, %c5_231, %c0_232] : memref<2x16x112xf32, #tpu.memory_space<vmem>>, vector<1x1x112xf32>
    %260 = vector.shape_cast %259 : vector<1x1x112xf32> to vector<1x112xf32>
    %261 = vector.shape_cast %258 : vector<1x112xf32> to vector<1x1x112xf32>
    tpu.vector_store %arg28[%c0_230, %c5_231, %c0_232], %261 {strides = array<i32>} : memref<2x16x112xf32, #tpu.memory_space<vmem>>, vector<1x1x112xf32>,
    %c0_233 = arith.constant 0 : index
    %c6_234 = arith.constant 6 : index
    %c0_235 = arith.constant 0 : index
    %262 = vector.load %arg28[%c0_233, %c6_234, %c0_235] : memref<2x16x112xf32, #tpu.memory_space<vmem>>, vector<1x1x112xf32>
    %263 = vector.shape_cast %262 : vector<1x1x112xf32> to vector<1x112xf32>
    %264 = vector.shape_cast %258 : vector<1x112xf32> to vector<1x1x112xf32>
    tpu.vector_store %arg28[%c0_233, %c6_234, %c0_235], %264 {strides = array<i32>} : memref<2x16x112xf32, #tpu.memory_space<vmem>>, vector<1x1x112xf32>,
    %265 = vector.extract_strided_slice %243 {offsets = [3, 0], sizes = [1, 112], strides = [1, 1]} : vector<7x112xf32> to vector<1x112xf32>
    %c0_236 = arith.constant 0 : index
    %c7_237 = arith.constant 7 : index
    %c0_238 = arith.constant 0 : index
    %266 = vector.load %arg28[%c0_236, %c7_237, %c0_238] : memref<2x16x112xf32, #tpu.memory_space<vmem>>, vector<1x1x112xf32>
    %267 = vector.shape_cast %266 : vector<1x1x112xf32> to vector<1x112xf32>
    %268 = vector.shape_cast %265 : vector<1x112xf32> to vector<1x1x112xf32>
    tpu.vector_store %arg28[%c0_236, %c7_237, %c0_238], %268 {strides = array<i32>} : memref<2x16x112xf32, #tpu.memory_space<vmem>>, vector<1x1x112xf32>,
    %c0_239 = arith.constant 0 : index
    %c8_240 = arith.constant 8 : index
    %c0_241 = arith.constant 0 : index
    %269 = vector.load %arg28[%c0_239, %c8_240, %c0_241] : memref<2x16x112xf32, #tpu.memory_space<vmem>>, vector<1x1x112xf32>
    %270 = vector.shape_cast %269 : vector<1x1x112xf32> to vector<1x112xf32>
    %271 = vector.shape_cast %265 : vector<1x112xf32> to vector<1x1x112xf32>
    tpu.vector_store %arg28[%c0_239, %c8_240, %c0_241], %271 {strides = array<i32>} : memref<2x16x112xf32, #tpu.memory_space<vmem>>, vector<1x1x112xf32>,
    %272 = vector.extract_strided_slice %243 {offsets = [4, 0], sizes = [1, 112], strides = [1, 1]} : vector<7x112xf32> to vector<1x112xf32>
    %c0_242 = arith.constant 0 : index
    %c9 = arith.constant 9 : index
    %c0_243 = arith.constant 0 : index
    %273 = vector.load %arg28[%c0_242, %c9, %c0_243] : memref<2x16x112xf32, #tpu.memory_space<vmem>>, vector<1x1x112xf32>
    %274 = vector.shape_cast %273 : vector<1x1x112xf32> to vector<1x112xf32>
    %275 = vector.shape_cast %272 : vector<1x112xf32> to vector<1x1x112xf32>
    tpu.vector_store %arg28[%c0_242, %c9, %c0_243], %275 {strides = array<i32>} : memref<2x16x112xf32, #tpu.memory_space<vmem>>, vector<1x1x112xf32>,
    %c0_244 = arith.constant 0 : index
    %c10 = arith.constant 10 : index
    %c0_245 = arith.constant 0 : index
    %276 = vector.load %arg28[%c0_244, %c10, %c0_245] : memref<2x16x112xf32, #tpu.memory_space<vmem>>, vector<1x1x112xf32>
    %277 = vector.shape_cast %276 : vector<1x1x112xf32> to vector<1x112xf32>
    %278 = vector.shape_cast %272 : vector<1x112xf32> to vector<1x1x112xf32>
    tpu.vector_store %arg28[%c0_244, %c10, %c0_245], %278 {strides = array<i32>} : memref<2x16x112xf32, #tpu.memory_space<vmem>>, vector<1x1x112xf32>,
    %279 = vector.extract_strided_slice %243 {offsets = [5, 0], sizes = [1, 112], strides = [1, 1]} : vector<7x112xf32> to vector<1x112xf32>
    %c0_246 = arith.constant 0 : index
    %c11 = arith.constant 11 : index
    %c0_247 = arith.constant 0 : index
    %280 = vector.load %arg28[%c0_246, %c11, %c0_247] : memref<2x16x112xf32, #tpu.memory_space<vmem>>, vector<1x1x112xf32>
    %281 = vector.shape_cast %280 : vector<1x1x112xf32> to vector<1x112xf32>
    %282 = vector.shape_cast %279 : vector<1x112xf32> to vector<1x1x112xf32>
    tpu.vector_store %arg28[%c0_246, %c11, %c0_247], %282 {strides = array<i32>} : memref<2x16x112xf32, #tpu.memory_space<vmem>>, vector<1x1x112xf32>,
    %c0_248 = arith.constant 0 : index
    %c12 = arith.constant 12 : index
    %c0_249 = arith.constant 0 : index
    %283 = vector.load %arg28[%c0_248, %c12, %c0_249] : memref<2x16x112xf32, #tpu.memory_space<vmem>>, vector<1x1x112xf32>
    %284 = vector.shape_cast %283 : vector<1x1x112xf32> to vector<1x112xf32>
    %285 = vector.shape_cast %279 : vector<1x112xf32> to vector<1x1x112xf32>
    tpu.vector_store %arg28[%c0_248, %c12, %c0_249], %285 {strides = array<i32>} : memref<2x16x112xf32, #tpu.memory_space<vmem>>, vector<1x1x112xf32>,
    %286 = vector.extract_strided_slice %243 {offsets = [6, 0], sizes = [1, 112], strides = [1, 1]} : vector<7x112xf32> to vector<1x112xf32>
    %c0_250 = arith.constant 0 : index
    %c13 = arith.constant 13 : index
    %c0_251 = arith.constant 0 : index
    %287 = vector.load %arg28[%c0_250, %c13, %c0_251] : memref<2x16x112xf32, #tpu.memory_space<vmem>>, vector<1x1x112xf32>
    %288 = vector.shape_cast %287 : vector<1x1x112xf32> to vector<1x112xf32>
    %289 = vector.shape_cast %286 : vector<1x112xf32> to vector<1x1x112xf32>
    tpu.vector_store %arg28[%c0_250, %c13, %c0_251], %289 {strides = array<i32>} : memref<2x16x112xf32, #tpu.memory_space<vmem>>, vector<1x1x112xf32>,
    %c0_252 = arith.constant 0 : index
    %c14 = arith.constant 14 : index
    %c0_253 = arith.constant 0 : index
    %290 = vector.load %arg28[%c0_252, %c14, %c0_253] : memref<2x16x112xf32, #tpu.memory_space<vmem>>, vector<1x1x112xf32>
    %291 = vector.shape_cast %290 : vector<1x1x112xf32> to vector<1x112xf32>
    %292 = vector.shape_cast %286 : vector<1x112xf32> to vector<1x1x112xf32>
    tpu.vector_store %arg28[%c0_252, %c14, %c0_253], %292 {strides = array<i32>} : memref<2x16x112xf32, #tpu.memory_space<vmem>>, vector<1x1x112xf32>,
    %c1_254 = arith.constant 1 : index
    %c0_255 = arith.constant 0 : index
    %c0_256 = arith.constant 0 : index
    %293 = vector.load %arg27[%c1_254, %c0_255, %c0_256] : memref<2x9x112xf32, #tpu.memory_space<vmem>>, vector<1x7x112xf32>
    %294 = vector.shape_cast %293 : vector<1x7x112xf32> to vector<7x112xf32>
    %295 = arith.truncf %294 : vector<7x112xf32> to vector<7x112xbf16>
    %c0_257 = arith.constant 0 : index
    %c0_258 = arith.constant 0 : index
    %c0_259 = arith.constant 0 : index
    %296 = vector.load %arg20[%c0_257, %c0_258, %c0_259] : memref<3x112x112xbf16, #tpu.memory_space<vmem>>, vector<1x112x112xbf16>
    %297 = vector.shape_cast %296 : vector<1x112x112xbf16> to vector<112x112xbf16>
    %cst_260 = arith.constant dense<0.000000e+00> : vector<7x112xf32>
    %298 = tpu.matmul %295, %297, %cst_260 {dimension_numbers = #tpu.dot_dimension_numbers<[1], [0], [0], [1], [0, 0, 1, 1], [], []>} : vector<7x112xbf16>, vector<112x112xbf16>, vector<7x112xf32> -> vector<7x112xf32>
    %c1_261 = arith.constant 1 : index
    %c1_262 = arith.constant 1 : index
    %c0_263 = arith.constant 0 : index
    %299 = vector.load %arg27[%c1_261, %c1_262, %c0_263] : memref<2x9x112xf32, #tpu.memory_space<vmem>>, vector<1x7x112xf32>
    %300 = vector.shape_cast %299 : vector<1x7x112xf32> to vector<7x112xf32>
    %301 = arith.truncf %300 : vector<7x112xf32> to vector<7x112xbf16>
    %c1_264 = arith.constant 1 : index
    %c0_265 = arith.constant 0 : index
    %c0_266 = arith.constant 0 : index
    %302 = vector.load %arg20[%c1_264, %c0_265, %c0_266] : memref<3x112x112xbf16, #tpu.memory_space<vmem>>, vector<1x112x112xbf16>
    %303 = vector.shape_cast %302 : vector<1x112x112xbf16> to vector<112x112xbf16>
    %cst_267 = arith.constant dense<0.000000e+00> : vector<7x112xf32>
    %304 = tpu.matmul %301, %303, %cst_267 {dimension_numbers = #tpu.dot_dimension_numbers<[1], [0], [0], [1], [0, 0, 1, 1], [], []>} : vector<7x112xbf16>, vector<112x112xbf16>, vector<7x112xf32> -> vector<7x112xf32>
    %305 = arith.addf %298, %304 : vector<7x112xf32>
    %c1_268 = arith.constant 1 : index
    %c2_269 = arith.constant 2 : index
    %c0_270 = arith.constant 0 : index
    %306 = vector.load %arg27[%c1_268, %c2_269, %c0_270] : memref<2x9x112xf32, #tpu.memory_space<vmem>>, vector<1x7x112xf32>
    %307 = vector.shape_cast %306 : vector<1x7x112xf32> to vector<7x112xf32>
    %308 = arith.truncf %307 : vector<7x112xf32> to vector<7x112xbf16>
    %c2_271 = arith.constant 2 : index
    %c0_272 = arith.constant 0 : index
    %c0_273 = arith.constant 0 : index
    %309 = vector.load %arg20[%c2_271, %c0_272, %c0_273] : memref<3x112x112xbf16, #tpu.memory_space<vmem>>, vector<1x112x112xbf16>
    %310 = vector.shape_cast %309 : vector<1x112x112xbf16> to vector<112x112xbf16>
    %cst_274 = arith.constant dense<0.000000e+00> : vector<7x112xf32>
    %311 = tpu.matmul %308, %310, %cst_274 {dimension_numbers = #tpu.dot_dimension_numbers<[1], [0], [0], [1], [0, 0, 1, 1], [], []>} : vector<7x112xbf16>, vector<112x112xbf16>, vector<7x112xf32> -> vector<7x112xf32>
    %312 = arith.addf %305, %311 : vector<7x112xf32>
    %c0_275 = arith.constant 0 : index
    %c0_276 = arith.constant 0 : index
    %313 = vector.load %arg4[%c0_275, %c0_276] : memref<1x112xf32, #tpu.memory_space<vmem>>, vector<1x112xf32>
    %314 = vector.broadcast %313 : vector<1x112xf32> to vector<7x112xf32>
    %315 = arith.addf %312, %314 : vector<7x112xf32>
    %cst_277 = arith.constant 0.000000e+00 : f32
    %316 = vector.broadcast %cst_277 : f32 to vector<7x112xf32>
    %317 = arith.maximumf %315, %316 : vector<7x112xf32>
    %318 = vector.extract_strided_slice %317 {offsets = [0, 0], sizes = [1, 112], strides = [1, 1]} : vector<7x112xf32> to vector<1x112xf32>
    %c1_278 = arith.constant 1 : index
    %c1_279 = arith.constant 1 : index
    %c0_280 = arith.constant 0 : index
    %319 = vector.load %arg28[%c1_278, %c1_279, %c0_280] : memref<2x16x112xf32, #tpu.memory_space<vmem>>, vector<1x1x112xf32>
    %320 = vector.shape_cast %319 : vector<1x1x112xf32> to vector<1x112xf32>
    %321 = vector.shape_cast %318 : vector<1x112xf32> to vector<1x1x112xf32>
    tpu.vector_store %arg28[%c1_278, %c1_279, %c0_280], %321 {strides = array<i32>} : memref<2x16x112xf32, #tpu.memory_space<vmem>>, vector<1x1x112xf32>,
    %c1_281 = arith.constant 1 : index
    %c2_282 = arith.constant 2 : index
    %c0_283 = arith.constant 0 : index
    %322 = vector.load %arg28[%c1_281, %c2_282, %c0_283] : memref<2x16x112xf32, #tpu.memory_space<vmem>>, vector<1x1x112xf32>
    %323 = vector.shape_cast %322 : vector<1x1x112xf32> to vector<1x112xf32>
    %324 = vector.shape_cast %318 : vector<1x112xf32> to vector<1x1x112xf32>
    tpu.vector_store %arg28[%c1_281, %c2_282, %c0_283], %324 {strides = array<i32>} : memref<2x16x112xf32, #tpu.memory_space<vmem>>, vector<1x1x112xf32>,
    %325 = vector.extract_strided_slice %317 {offsets = [1, 0], sizes = [1, 112], strides = [1, 1]} : vector<7x112xf32> to vector<1x112xf32>
    %c1_284 = arith.constant 1 : index
    %c3_285 = arith.constant 3 : index
    %c0_286 = arith.constant 0 : index
    %326 = vector.load %arg28[%c1_284, %c3_285, %c0_286] : memref<2x16x112xf32, #tpu.memory_space<vmem>>, vector<1x1x112xf32>
    %327 = vector.shape_cast %326 : vector<1x1x112xf32> to vector<1x112xf32>
    %328 = vector.shape_cast %325 : vector<1x112xf32> to vector<1x1x112xf32>
    tpu.vector_store %arg28[%c1_284, %c3_285, %c0_286], %328 {strides = array<i32>} : memref<2x16x112xf32, #tpu.memory_space<vmem>>, vector<1x1x112xf32>,
    %c1_287 = arith.constant 1 : index
    %c4_288 = arith.constant 4 : index
    %c0_289 = arith.constant 0 : index
    %329 = vector.load %arg28[%c1_287, %c4_288, %c0_289] : memref<2x16x112xf32, #tpu.memory_space<vmem>>, vector<1x1x112xf32>
    %330 = vector.shape_cast %329 : vector<1x1x112xf32> to vector<1x112xf32>
    %331 = vector.shape_cast %325 : vector<1x112xf32> to vector<1x1x112xf32>
    tpu.vector_store %arg28[%c1_287, %c4_288, %c0_289], %331 {strides = array<i32>} : memref<2x16x112xf32, #tpu.memory_space<vmem>>, vector<1x1x112xf32>,
    %332 = vector.extract_strided_slice %317 {offsets = [2, 0], sizes = [1, 112], strides = [1, 1]} : vector<7x112xf32> to vector<1x112xf32>
    %c1_290 = arith.constant 1 : index
    %c5_291 = arith.constant 5 : index
    %c0_292 = arith.constant 0 : index
    %333 = vector.load %arg28[%c1_290, %c5_291, %c0_292] : memref<2x16x112xf32, #tpu.memory_space<vmem>>, vector<1x1x112xf32>
    %334 = vector.shape_cast %333 : vector<1x1x112xf32> to vector<1x112xf32>
    %335 = vector.shape_cast %332 : vector<1x112xf32> to vector<1x1x112xf32>
    tpu.vector_store %arg28[%c1_290, %c5_291, %c0_292], %335 {strides = array<i32>} : memref<2x16x112xf32, #tpu.memory_space<vmem>>, vector<1x1x112xf32>,
    %c1_293 = arith.constant 1 : index
    %c6_294 = arith.constant 6 : index
    %c0_295 = arith.constant 0 : index
    %336 = vector.load %arg28[%c1_293, %c6_294, %c0_295] : memref<2x16x112xf32, #tpu.memory_space<vmem>>, vector<1x1x112xf32>
    %337 = vector.shape_cast %336 : vector<1x1x112xf32> to vector<1x112xf32>
    %338 = vector.shape_cast %332 : vector<1x112xf32> to vector<1x1x112xf32>
    tpu.vector_store %arg28[%c1_293, %c6_294, %c0_295], %338 {strides = array<i32>} : memref<2x16x112xf32, #tpu.memory_space<vmem>>, vector<1x1x112xf32>,
    %339 = vector.extract_strided_slice %317 {offsets = [3, 0], sizes = [1, 112], strides = [1, 1]} : vector<7x112xf32> to vector<1x112xf32>
    %c1_296 = arith.constant 1 : index
    %c7_297 = arith.constant 7 : index
    %c0_298 = arith.constant 0 : index
    %340 = vector.load %arg28[%c1_296, %c7_297, %c0_298] : memref<2x16x112xf32, #tpu.memory_space<vmem>>, vector<1x1x112xf32>
    %341 = vector.shape_cast %340 : vector<1x1x112xf32> to vector<1x112xf32>
    %342 = vector.shape_cast %339 : vector<1x112xf32> to vector<1x1x112xf32>
    tpu.vector_store %arg28[%c1_296, %c7_297, %c0_298], %342 {strides = array<i32>} : memref<2x16x112xf32, #tpu.memory_space<vmem>>, vector<1x1x112xf32>,
    %c1_299 = arith.constant 1 : index
    %c8_300 = arith.constant 8 : index
    %c0_301 = arith.constant 0 : index
    %343 = vector.load %arg28[%c1_299, %c8_300, %c0_301] : memref<2x16x112xf32, #tpu.memory_space<vmem>>, vector<1x1x112xf32>
    %344 = vector.shape_cast %343 : vector<1x1x112xf32> to vector<1x112xf32>
    %345 = vector.shape_cast %339 : vector<1x112xf32> to vector<1x1x112xf32>
    tpu.vector_store %arg28[%c1_299, %c8_300, %c0_301], %345 {strides = array<i32>} : memref<2x16x112xf32, #tpu.memory_space<vmem>>, vector<1x1x112xf32>,
    %346 = vector.extract_strided_slice %317 {offsets = [4, 0], sizes = [1, 112], strides = [1, 1]} : vector<7x112xf32> to vector<1x112xf32>
    %c1_302 = arith.constant 1 : index
    %c9_303 = arith.constant 9 : index
    %c0_304 = arith.constant 0 : index
    %347 = vector.load %arg28[%c1_302, %c9_303, %c0_304] : memref<2x16x112xf32, #tpu.memory_space<vmem>>, vector<1x1x112xf32>
    %348 = vector.shape_cast %347 : vector<1x1x112xf32> to vector<1x112xf32>
    %349 = vector.shape_cast %346 : vector<1x112xf32> to vector<1x1x112xf32>
    tpu.vector_store %arg28[%c1_302, %c9_303, %c0_304], %349 {strides = array<i32>} : memref<2x16x112xf32, #tpu.memory_space<vmem>>, vector<1x1x112xf32>,
    %c1_305 = arith.constant 1 : index
    %c10_306 = arith.constant 10 : index
    %c0_307 = arith.constant 0 : index
    %350 = vector.load %arg28[%c1_305, %c10_306, %c0_307] : memref<2x16x112xf32, #tpu.memory_space<vmem>>, vector<1x1x112xf32>
    %351 = vector.shape_cast %350 : vector<1x1x112xf32> to vector<1x112xf32>
    %352 = vector.shape_cast %346 : vector<1x112xf32> to vector<1x1x112xf32>
    tpu.vector_store %arg28[%c1_305, %c10_306, %c0_307], %352 {strides = array<i32>} : memref<2x16x112xf32, #tpu.memory_space<vmem>>, vector<1x1x112xf32>,
    %353 = vector.extract_strided_slice %317 {offsets = [5, 0], sizes = [1, 112], strides = [1, 1]} : vector<7x112xf32> to vector<1x112xf32>
    %c1_308 = arith.constant 1 : index
    %c11_309 = arith.constant 11 : index
    %c0_310 = arith.constant 0 : index
    %354 = vector.load %arg28[%c1_308, %c11_309, %c0_310] : memref<2x16x112xf32, #tpu.memory_space<vmem>>, vector<1x1x112xf32>
    %355 = vector.shape_cast %354 : vector<1x1x112xf32> to vector<1x112xf32>
    %356 = vector.shape_cast %353 : vector<1x112xf32> to vector<1x1x112xf32>
    tpu.vector_store %arg28[%c1_308, %c11_309, %c0_310], %356 {strides = array<i32>} : memref<2x16x112xf32, #tpu.memory_space<vmem>>, vector<1x1x112xf32>,
    %c1_311 = arith.constant 1 : index
    %c12_312 = arith.constant 12 : index
    %c0_313 = arith.constant 0 : index
    %357 = vector.load %arg28[%c1_311, %c12_312, %c0_313] : memref<2x16x112xf32, #tpu.memory_space<vmem>>, vector<1x1x112xf32>
    %358 = vector.shape_cast %357 : vector<1x1x112xf32> to vector<1x112xf32>
    %359 = vector.shape_cast %353 : vector<1x112xf32> to vector<1x1x112xf32>
    tpu.vector_store %arg28[%c1_311, %c12_312, %c0_313], %359 {strides = array<i32>} : memref<2x16x112xf32, #tpu.memory_space<vmem>>, vector<1x1x112xf32>,
    %360 = vector.extract_strided_slice %317 {offsets = [6, 0], sizes = [1, 112], strides = [1, 1]} : vector<7x112xf32> to vector<1x112xf32>
    %c1_314 = arith.constant 1 : index
    %c13_315 = arith.constant 13 : index
    %c0_316 = arith.constant 0 : index
    %361 = vector.load %arg28[%c1_314, %c13_315, %c0_316] : memref<2x16x112xf32, #tpu.memory_space<vmem>>, vector<1x1x112xf32>
    %362 = vector.shape_cast %361 : vector<1x1x112xf32> to vector<1x112xf32>
    %363 = vector.shape_cast %360 : vector<1x112xf32> to vector<1x1x112xf32>
    tpu.vector_store %arg28[%c1_314, %c13_315, %c0_316], %363 {strides = array<i32>} : memref<2x16x112xf32, #tpu.memory_space<vmem>>, vector<1x1x112xf32>,
    %c1_317 = arith.constant 1 : index
    %c14_318 = arith.constant 14 : index
    %c0_319 = arith.constant 0 : index
    %364 = vector.load %arg28[%c1_317, %c14_318, %c0_319] : memref<2x16x112xf32, #tpu.memory_space<vmem>>, vector<1x1x112xf32>
    %365 = vector.shape_cast %364 : vector<1x1x112xf32> to vector<1x112xf32>
    %366 = vector.shape_cast %360 : vector<1x112xf32> to vector<1x1x112xf32>
    tpu.vector_store %arg28[%c1_317, %c14_318, %c0_319], %366 {strides = array<i32>} : memref<2x16x112xf32, #tpu.memory_space<vmem>>, vector<1x1x112xf32>,
    %c4_i32_320 = arith.constant 4 : i32
    %367 = tpu.memref_slice %arg24[%c4_i32_320] : memref<7x!tpu.dma_semaphore, #tpu.memory_space<semaphore_mem>> -> memref<1x!tpu.dma_semaphore, #tpu.memory_space<semaphore_mem>>
    %368 = tpu.memref_squeeze %367 : memref<1x!tpu.dma_semaphore, #tpu.memory_space<semaphore_mem>> -> memref<!tpu.dma_semaphore, #tpu.memory_space<semaphore_mem>>
    tpu.wait_dma2 semaphore(%368 : memref<!tpu.dma_semaphore, #tpu.memory_space<semaphore_mem>>) src(%arg12 : memref<3x112x112xbf16, #tpu.memory_space<any>>) dst(%arg21 : memref<3x112x112xbf16, #tpu.memory_space<vmem>>)
    %c0_321 = arith.constant 0 : index
    %c0_322 = arith.constant 0 : index
    %c0_323 = arith.constant 0 : index
    %369 = vector.load %arg28[%c0_321, %c0_322, %c0_323] : memref<2x16x112xf32, #tpu.memory_space<vmem>>, vector<1x14x112xf32>
    %370 = vector.shape_cast %369 : vector<1x14x112xf32> to vector<14x112xf32>
    %371 = arith.truncf %370 : vector<14x112xf32> to vector<14x112xbf16>
    %c0_324 = arith.constant 0 : index
    %c0_325 = arith.constant 0 : index
    %c0_326 = arith.constant 0 : index
    %372 = vector.load %arg21[%c0_324, %c0_325, %c0_326] : memref<3x112x112xbf16, #tpu.memory_space<vmem>>, vector<1x112x112xbf16>
    %373 = vector.shape_cast %372 : vector<1x112x112xbf16> to vector<112x112xbf16>
    %cst_327 = arith.constant dense<0.000000e+00> : vector<14x112xf32>
    %374 = tpu.matmul %371, %373, %cst_327 {dimension_numbers = #tpu.dot_dimension_numbers<[1], [0], [0], [1], [0, 0, 1, 1], [], []>} : vector<14x112xbf16>, vector<112x112xbf16>, vector<14x112xf32> -> vector<14x112xf32>
    %c0_328 = arith.constant 0 : index
    %c1_329 = arith.constant 1 : index
    %c0_330 = arith.constant 0 : index
    %375 = vector.load %arg28[%c0_328, %c1_329, %c0_330] : memref<2x16x112xf32, #tpu.memory_space<vmem>>, vector<1x14x112xf32>
    %376 = vector.shape_cast %375 : vector<1x14x112xf32> to vector<14x112xf32>
    %377 = arith.truncf %376 : vector<14x112xf32> to vector<14x112xbf16>
    %c1_331 = arith.constant 1 : index
    %c0_332 = arith.constant 0 : index
    %c0_333 = arith.constant 0 : index
    %378 = vector.load %arg21[%c1_331, %c0_332, %c0_333] : memref<3x112x112xbf16, #tpu.memory_space<vmem>>, vector<1x112x112xbf16>
    %379 = vector.shape_cast %378 : vector<1x112x112xbf16> to vector<112x112xbf16>
    %cst_334 = arith.constant dense<0.000000e+00> : vector<14x112xf32>
    %380 = tpu.matmul %377, %379, %cst_334 {dimension_numbers = #tpu.dot_dimension_numbers<[1], [0], [0], [1], [0, 0, 1, 1], [], []>} : vector<14x112xbf16>, vector<112x112xbf16>, vector<14x112xf32> -> vector<14x112xf32>
    %381 = arith.addf %374, %380 : vector<14x112xf32>
    %c0_335 = arith.constant 0 : index
    %c2_336 = arith.constant 2 : index
    %c0_337 = arith.constant 0 : index
    %382 = vector.load %arg28[%c0_335, %c2_336, %c0_337] : memref<2x16x112xf32, #tpu.memory_space<vmem>>, vector<1x14x112xf32>
    %383 = vector.shape_cast %382 : vector<1x14x112xf32> to vector<14x112xf32>
    %384 = arith.truncf %383 : vector<14x112xf32> to vector<14x112xbf16>
    %c2_338 = arith.constant 2 : index
    %c0_339 = arith.constant 0 : index
    %c0_340 = arith.constant 0 : index
    %385 = vector.load %arg21[%c2_338, %c0_339, %c0_340] : memref<3x112x112xbf16, #tpu.memory_space<vmem>>, vector<1x112x112xbf16>
    %386 = vector.shape_cast %385 : vector<1x112x112xbf16> to vector<112x112xbf16>
    %cst_341 = arith.constant dense<0.000000e+00> : vector<14x112xf32>
    %387 = tpu.matmul %384, %386, %cst_341 {dimension_numbers = #tpu.dot_dimension_numbers<[1], [0], [0], [1], [0, 0, 1, 1], [], []>} : vector<14x112xbf16>, vector<112x112xbf16>, vector<14x112xf32> -> vector<14x112xf32>
    %388 = arith.addf %381, %387 : vector<14x112xf32>
    %c0_342 = arith.constant 0 : index
    %c0_343 = arith.constant 0 : index
    %389 = vector.load %arg5[%c0_342, %c0_343] : memref<1x112xf32, #tpu.memory_space<vmem>>, vector<1x112xf32>
    %390 = vector.broadcast %389 : vector<1x112xf32> to vector<14x112xf32>
    %391 = arith.addf %388, %390 : vector<14x112xf32>
    %cst_344 = arith.constant 0.000000e+00 : f32
    %392 = vector.broadcast %cst_344 : f32 to vector<14x112xf32>
    %393 = arith.maximumf %391, %392 : vector<14x112xf32>
    %c0_345 = arith.constant 0 : index
    %c1_346 = arith.constant 1 : index
    %c0_347 = arith.constant 0 : index
    %394 = vector.load %arg29[%c0_345, %c1_346, %c0_347] : memref<2x16x112xf32, #tpu.memory_space<vmem>>, vector<1x14x112xf32>
    %395 = vector.shape_cast %394 : vector<1x14x112xf32> to vector<14x112xf32>
    %396 = vector.shape_cast %393 : vector<14x112xf32> to vector<1x14x112xf32>
    tpu.vector_store %arg29[%c0_345, %c1_346, %c0_347], %396 {strides = array<i32>} : memref<2x16x112xf32, #tpu.memory_space<vmem>>, vector<1x14x112xf32>,
    %c1_348 = arith.constant 1 : index
    %c0_349 = arith.constant 0 : index
    %c0_350 = arith.constant 0 : index
    %397 = vector.load %arg28[%c1_348, %c0_349, %c0_350] : memref<2x16x112xf32, #tpu.memory_space<vmem>>, vector<1x14x112xf32>
    %398 = vector.shape_cast %397 : vector<1x14x112xf32> to vector<14x112xf32>
    %399 = arith.truncf %398 : vector<14x112xf32> to vector<14x112xbf16>
    %c0_351 = arith.constant 0 : index
    %c0_352 = arith.constant 0 : index
    %c0_353 = arith.constant 0 : index
    %400 = vector.load %arg21[%c0_351, %c0_352, %c0_353] : memref<3x112x112xbf16, #tpu.memory_space<vmem>>, vector<1x112x112xbf16>
    %401 = vector.shape_cast %400 : vector<1x112x112xbf16> to vector<112x112xbf16>
    %cst_354 = arith.constant dense<0.000000e+00> : vector<14x112xf32>
    %402 = tpu.matmul %399, %401, %cst_354 {dimension_numbers = #tpu.dot_dimension_numbers<[1], [0], [0], [1], [0, 0, 1, 1], [], []>} : vector<14x112xbf16>, vector<112x112xbf16>, vector<14x112xf32> -> vector<14x112xf32>
    %c1_355 = arith.constant 1 : index
    %c1_356 = arith.constant 1 : index
    %c0_357 = arith.constant 0 : index
    %403 = vector.load %arg28[%c1_355, %c1_356, %c0_357] : memref<2x16x112xf32, #tpu.memory_space<vmem>>, vector<1x14x112xf32>
    %404 = vector.shape_cast %403 : vector<1x14x112xf32> to vector<14x112xf32>
    %405 = arith.truncf %404 : vector<14x112xf32> to vector<14x112xbf16>
    %c1_358 = arith.constant 1 : index
    %c0_359 = arith.constant 0 : index
    %c0_360 = arith.constant 0 : index
    %406 = vector.load %arg21[%c1_358, %c0_359, %c0_360] : memref<3x112x112xbf16, #tpu.memory_space<vmem>>, vector<1x112x112xbf16>
    %407 = vector.shape_cast %406 : vector<1x112x112xbf16> to vector<112x112xbf16>
    %cst_361 = arith.constant dense<0.000000e+00> : vector<14x112xf32>
    %408 = tpu.matmul %405, %407, %cst_361 {dimension_numbers = #tpu.dot_dimension_numbers<[1], [0], [0], [1], [0, 0, 1, 1], [], []>} : vector<14x112xbf16>, vector<112x112xbf16>, vector<14x112xf32> -> vector<14x112xf32>
    %409 = arith.addf %402, %408 : vector<14x112xf32>
    %c1_362 = arith.constant 1 : index
    %c2_363 = arith.constant 2 : index
    %c0_364 = arith.constant 0 : index
    %410 = vector.load %arg28[%c1_362, %c2_363, %c0_364] : memref<2x16x112xf32, #tpu.memory_space<vmem>>, vector<1x14x112xf32>
    %411 = vector.shape_cast %410 : vector<1x14x112xf32> to vector<14x112xf32>
    %412 = arith.truncf %411 : vector<14x112xf32> to vector<14x112xbf16>
    %c2_365 = arith.constant 2 : index
    %c0_366 = arith.constant 0 : index
    %c0_367 = arith.constant 0 : index
    %413 = vector.load %arg21[%c2_365, %c0_366, %c0_367] : memref<3x112x112xbf16, #tpu.memory_space<vmem>>, vector<1x112x112xbf16>
    %414 = vector.shape_cast %413 : vector<1x112x112xbf16> to vector<112x112xbf16>
    %cst_368 = arith.constant dense<0.000000e+00> : vector<14x112xf32>
    %415 = tpu.matmul %412, %414, %cst_368 {dimension_numbers = #tpu.dot_dimension_numbers<[1], [0], [0], [1], [0, 0, 1, 1], [], []>} : vector<14x112xbf16>, vector<112x112xbf16>, vector<14x112xf32> -> vector<14x112xf32>
    %416 = arith.addf %409, %415 : vector<14x112xf32>
    %c0_369 = arith.constant 0 : index
    %c0_370 = arith.constant 0 : index
    %417 = vector.load %arg5[%c0_369, %c0_370] : memref<1x112xf32, #tpu.memory_space<vmem>>, vector<1x112xf32>
    %418 = vector.broadcast %417 : vector<1x112xf32> to vector<14x112xf32>
    %419 = arith.addf %416, %418 : vector<14x112xf32>
    %cst_371 = arith.constant 0.000000e+00 : f32
    %420 = vector.broadcast %cst_371 : f32 to vector<14x112xf32>
    %421 = arith.maximumf %419, %420 : vector<14x112xf32>
    %c1_372 = arith.constant 1 : index
    %c1_373 = arith.constant 1 : index
    %c0_374 = arith.constant 0 : index
    %422 = vector.load %arg29[%c1_372, %c1_373, %c0_374] : memref<2x16x112xf32, #tpu.memory_space<vmem>>, vector<1x14x112xf32>
    %423 = vector.shape_cast %422 : vector<1x14x112xf32> to vector<14x112xf32>
    %424 = vector.shape_cast %421 : vector<14x112xf32> to vector<1x14x112xf32>
    tpu.vector_store %arg29[%c1_372, %c1_373, %c0_374], %424 {strides = array<i32>} : memref<2x16x112xf32, #tpu.memory_space<vmem>>, vector<1x14x112xf32>,
    %c5_i32_375 = arith.constant 5 : i32
    %425 = tpu.memref_slice %arg24[%c5_i32_375] : memref<7x!tpu.dma_semaphore, #tpu.memory_space<semaphore_mem>> -> memref<1x!tpu.dma_semaphore, #tpu.memory_space<semaphore_mem>>
    %426 = tpu.memref_squeeze %425 : memref<1x!tpu.dma_semaphore, #tpu.memory_space<semaphore_mem>> -> memref<!tpu.dma_semaphore, #tpu.memory_space<semaphore_mem>>
    tpu.wait_dma2 semaphore(%426 : memref<!tpu.dma_semaphore, #tpu.memory_space<semaphore_mem>>) src(%arg13 : memref<3x112x28xbf16, #tpu.memory_space<any>>) dst(%arg22 : memref<3x112x28xbf16, #tpu.memory_space<vmem>>)
    %c0_376 = arith.constant 0 : index
    %c0_377 = arith.constant 0 : index
    %c0_378 = arith.constant 0 : index
    %427 = vector.load %arg29[%c0_376, %c0_377, %c0_378] : memref<2x16x112xf32, #tpu.memory_space<vmem>>, vector<1x14x112xf32>
    %428 = vector.shape_cast %427 : vector<1x14x112xf32> to vector<14x112xf32>
    %429 = arith.truncf %428 : vector<14x112xf32> to vector<14x112xbf16>
    %c0_379 = arith.constant 0 : index
    %c0_380 = arith.constant 0 : index
    %c0_381 = arith.constant 0 : index
    %430 = vector.load %arg22[%c0_379, %c0_380, %c0_381] : memref<3x112x28xbf16, #tpu.memory_space<vmem>>, vector<1x112x28xbf16>
    %431 = vector.shape_cast %430 : vector<1x112x28xbf16> to vector<112x28xbf16>
    %cst_382 = arith.constant dense<0.000000e+00> : vector<14x28xf32>
    %432 = tpu.matmul %429, %431, %cst_382 {dimension_numbers = #tpu.dot_dimension_numbers<[1], [0], [0], [1], [0, 0, 1, 1], [], []>} : vector<14x112xbf16>, vector<112x28xbf16>, vector<14x28xf32> -> vector<14x28xf32>
    %c0_383 = arith.constant 0 : index
    %c1_384 = arith.constant 1 : index
    %c0_385 = arith.constant 0 : index
    %433 = vector.load %arg29[%c0_383, %c1_384, %c0_385] : memref<2x16x112xf32, #tpu.memory_space<vmem>>, vector<1x14x112xf32>
    %434 = vector.shape_cast %433 : vector<1x14x112xf32> to vector<14x112xf32>
    %435 = arith.truncf %434 : vector<14x112xf32> to vector<14x112xbf16>
    %c1_386 = arith.constant 1 : index
    %c0_387 = arith.constant 0 : index
    %c0_388 = arith.constant 0 : index
    %436 = vector.load %arg22[%c1_386, %c0_387, %c0_388] : memref<3x112x28xbf16, #tpu.memory_space<vmem>>, vector<1x112x28xbf16>
    %437 = vector.shape_cast %436 : vector<1x112x28xbf16> to vector<112x28xbf16>
    %cst_389 = arith.constant dense<0.000000e+00> : vector<14x28xf32>
    %438 = tpu.matmul %435, %437, %cst_389 {dimension_numbers = #tpu.dot_dimension_numbers<[1], [0], [0], [1], [0, 0, 1, 1], [], []>} : vector<14x112xbf16>, vector<112x28xbf16>, vector<14x28xf32> -> vector<14x28xf32>
    %439 = arith.addf %432, %438 : vector<14x28xf32>
    %c0_390 = arith.constant 0 : index
    %c2_391 = arith.constant 2 : index
    %c0_392 = arith.constant 0 : index
    %440 = vector.load %arg29[%c0_390, %c2_391, %c0_392] : memref<2x16x112xf32, #tpu.memory_space<vmem>>, vector<1x14x112xf32>
    %441 = vector.shape_cast %440 : vector<1x14x112xf32> to vector<14x112xf32>
    %442 = arith.truncf %441 : vector<14x112xf32> to vector<14x112xbf16>
    %c2_393 = arith.constant 2 : index
    %c0_394 = arith.constant 0 : index
    %c0_395 = arith.constant 0 : index
    %443 = vector.load %arg22[%c2_393, %c0_394, %c0_395] : memref<3x112x28xbf16, #tpu.memory_space<vmem>>, vector<1x112x28xbf16>
    %444 = vector.shape_cast %443 : vector<1x112x28xbf16> to vector<112x28xbf16>
    %cst_396 = arith.constant dense<0.000000e+00> : vector<14x28xf32>
    %445 = tpu.matmul %442, %444, %cst_396 {dimension_numbers = #tpu.dot_dimension_numbers<[1], [0], [0], [1], [0, 0, 1, 1], [], []>} : vector<14x112xbf16>, vector<112x28xbf16>, vector<14x28xf32> -> vector<14x28xf32>
    %446 = arith.addf %439, %445 : vector<14x28xf32>
    %c0_397 = arith.constant 0 : index
    %c0_398 = arith.constant 0 : index
    %447 = vector.load %arg6[%c0_397, %c0_398] : memref<1x28xf32, #tpu.memory_space<vmem>>, vector<1x28xf32>
    %448 = vector.broadcast %447 : vector<1x28xf32> to vector<14x28xf32>
    %449 = arith.addf %446, %448 : vector<14x28xf32>
    %cst_399 = arith.constant 0.000000e+00 : f32
    %450 = vector.broadcast %cst_399 : f32 to vector<14x28xf32>
    %451 = arith.maximumf %449, %450 : vector<14x28xf32>
    %452 = vector.extract_strided_slice %451 {offsets = [0, 0], sizes = [1, 28], strides = [1, 1]} : vector<14x28xf32> to vector<1x28xf32>
    %c0_400 = arith.constant 0 : index
    %c1_401 = arith.constant 1 : index
    %c0_402 = arith.constant 0 : index
    %453 = vector.load %arg30[%c0_400, %c1_401, %c0_402] : memref<2x30x28xf32, #tpu.memory_space<vmem>>, vector<1x1x28xf32>
    %454 = vector.shape_cast %453 : vector<1x1x28xf32> to vector<1x28xf32>
    %455 = vector.shape_cast %452 : vector<1x28xf32> to vector<1x1x28xf32>
    tpu.vector_store %arg30[%c0_400, %c1_401, %c0_402], %455 {strides = array<i32>} : memref<2x30x28xf32, #tpu.memory_space<vmem>>, vector<1x1x28xf32>,
    %c0_403 = arith.constant 0 : index
    %c2_404 = arith.constant 2 : index
    %c0_405 = arith.constant 0 : index
    %456 = vector.load %arg30[%c0_403, %c2_404, %c0_405] : memref<2x30x28xf32, #tpu.memory_space<vmem>>, vector<1x1x28xf32>
    %457 = vector.shape_cast %456 : vector<1x1x28xf32> to vector<1x28xf32>
    %458 = vector.shape_cast %452 : vector<1x28xf32> to vector<1x1x28xf32>
    tpu.vector_store %arg30[%c0_403, %c2_404, %c0_405], %458 {strides = array<i32>} : memref<2x30x28xf32, #tpu.memory_space<vmem>>, vector<1x1x28xf32>,
    %459 = vector.extract_strided_slice %451 {offsets = [1, 0], sizes = [1, 28], strides = [1, 1]} : vector<14x28xf32> to vector<1x28xf32>
    %c0_406 = arith.constant 0 : index
    %c3_407 = arith.constant 3 : index
    %c0_408 = arith.constant 0 : index
    %460 = vector.load %arg30[%c0_406, %c3_407, %c0_408] : memref<2x30x28xf32, #tpu.memory_space<vmem>>, vector<1x1x28xf32>
    %461 = vector.shape_cast %460 : vector<1x1x28xf32> to vector<1x28xf32>
    %462 = vector.shape_cast %459 : vector<1x28xf32> to vector<1x1x28xf32>
    tpu.vector_store %arg30[%c0_406, %c3_407, %c0_408], %462 {strides = array<i32>} : memref<2x30x28xf32, #tpu.memory_space<vmem>>, vector<1x1x28xf32>,
    %c0_409 = arith.constant 0 : index
    %c4_410 = arith.constant 4 : index
    %c0_411 = arith.constant 0 : index
    %463 = vector.load %arg30[%c0_409, %c4_410, %c0_411] : memref<2x30x28xf32, #tpu.memory_space<vmem>>, vector<1x1x28xf32>
    %464 = vector.shape_cast %463 : vector<1x1x28xf32> to vector<1x28xf32>
    %465 = vector.shape_cast %459 : vector<1x28xf32> to vector<1x1x28xf32>
    tpu.vector_store %arg30[%c0_409, %c4_410, %c0_411], %465 {strides = array<i32>} : memref<2x30x28xf32, #tpu.memory_space<vmem>>, vector<1x1x28xf32>,
    %466 = vector.extract_strided_slice %451 {offsets = [2, 0], sizes = [1, 28], strides = [1, 1]} : vector<14x28xf32> to vector<1x28xf32>
    %c0_412 = arith.constant 0 : index
    %c5_413 = arith.constant 5 : index
    %c0_414 = arith.constant 0 : index
    %467 = vector.load %arg30[%c0_412, %c5_413, %c0_414] : memref<2x30x28xf32, #tpu.memory_space<vmem>>, vector<1x1x28xf32>
    %468 = vector.shape_cast %467 : vector<1x1x28xf32> to vector<1x28xf32>
    %469 = vector.shape_cast %466 : vector<1x28xf32> to vector<1x1x28xf32>
    tpu.vector_store %arg30[%c0_412, %c5_413, %c0_414], %469 {strides = array<i32>} : memref<2x30x28xf32, #tpu.memory_space<vmem>>, vector<1x1x28xf32>,
    %c0_415 = arith.constant 0 : index
    %c6_416 = arith.constant 6 : index
    %c0_417 = arith.constant 0 : index
    %470 = vector.load %arg30[%c0_415, %c6_416, %c0_417] : memref<2x30x28xf32, #tpu.memory_space<vmem>>, vector<1x1x28xf32>
    %471 = vector.shape_cast %470 : vector<1x1x28xf32> to vector<1x28xf32>
    %472 = vector.shape_cast %466 : vector<1x28xf32> to vector<1x1x28xf32>
    tpu.vector_store %arg30[%c0_415, %c6_416, %c0_417], %472 {strides = array<i32>} : memref<2x30x28xf32, #tpu.memory_space<vmem>>, vector<1x1x28xf32>,
    %473 = vector.extract_strided_slice %451 {offsets = [3, 0], sizes = [1, 28], strides = [1, 1]} : vector<14x28xf32> to vector<1x28xf32>
    %c0_418 = arith.constant 0 : index
    %c7_419 = arith.constant 7 : index
    %c0_420 = arith.constant 0 : index
    %474 = vector.load %arg30[%c0_418, %c7_419, %c0_420] : memref<2x30x28xf32, #tpu.memory_space<vmem>>, vector<1x1x28xf32>
    %475 = vector.shape_cast %474 : vector<1x1x28xf32> to vector<1x28xf32>
    %476 = vector.shape_cast %473 : vector<1x28xf32> to vector<1x1x28xf32>
    tpu.vector_store %arg30[%c0_418, %c7_419, %c0_420], %476 {strides = array<i32>} : memref<2x30x28xf32, #tpu.memory_space<vmem>>, vector<1x1x28xf32>,
    %c0_421 = arith.constant 0 : index
    %c8_422 = arith.constant 8 : index
    %c0_423 = arith.constant 0 : index
    %477 = vector.load %arg30[%c0_421, %c8_422, %c0_423] : memref<2x30x28xf32, #tpu.memory_space<vmem>>, vector<1x1x28xf32>
    %478 = vector.shape_cast %477 : vector<1x1x28xf32> to vector<1x28xf32>
    %479 = vector.shape_cast %473 : vector<1x28xf32> to vector<1x1x28xf32>
    tpu.vector_store %arg30[%c0_421, %c8_422, %c0_423], %479 {strides = array<i32>} : memref<2x30x28xf32, #tpu.memory_space<vmem>>, vector<1x1x28xf32>,
    %480 = vector.extract_strided_slice %451 {offsets = [4, 0], sizes = [1, 28], strides = [1, 1]} : vector<14x28xf32> to vector<1x28xf32>
    %c0_424 = arith.constant 0 : index
    %c9_425 = arith.constant 9 : index
    %c0_426 = arith.constant 0 : index
    %481 = vector.load %arg30[%c0_424, %c9_425, %c0_426] : memref<2x30x28xf32, #tpu.memory_space<vmem>>, vector<1x1x28xf32>
    %482 = vector.shape_cast %481 : vector<1x1x28xf32> to vector<1x28xf32>
    %483 = vector.shape_cast %480 : vector<1x28xf32> to vector<1x1x28xf32>
    tpu.vector_store %arg30[%c0_424, %c9_425, %c0_426], %483 {strides = array<i32>} : memref<2x30x28xf32, #tpu.memory_space<vmem>>, vector<1x1x28xf32>,
    %c0_427 = arith.constant 0 : index
    %c10_428 = arith.constant 10 : index
    %c0_429 = arith.constant 0 : index
    %484 = vector.load %arg30[%c0_427, %c10_428, %c0_429] : memref<2x30x28xf32, #tpu.memory_space<vmem>>, vector<1x1x28xf32>
    %485 = vector.shape_cast %484 : vector<1x1x28xf32> to vector<1x28xf32>
    %486 = vector.shape_cast %480 : vector<1x28xf32> to vector<1x1x28xf32>
    tpu.vector_store %arg30[%c0_427, %c10_428, %c0_429], %486 {strides = array<i32>} : memref<2x30x28xf32, #tpu.memory_space<vmem>>, vector<1x1x28xf32>,
    %487 = vector.extract_strided_slice %451 {offsets = [5, 0], sizes = [1, 28], strides = [1, 1]} : vector<14x28xf32> to vector<1x28xf32>
    %c0_430 = arith.constant 0 : index
    %c11_431 = arith.constant 11 : index
    %c0_432 = arith.constant 0 : index
    %488 = vector.load %arg30[%c0_430, %c11_431, %c0_432] : memref<2x30x28xf32, #tpu.memory_space<vmem>>, vector<1x1x28xf32>
    %489 = vector.shape_cast %488 : vector<1x1x28xf32> to vector<1x28xf32>
    %490 = vector.shape_cast %487 : vector<1x28xf32> to vector<1x1x28xf32>
    tpu.vector_store %arg30[%c0_430, %c11_431, %c0_432], %490 {strides = array<i32>} : memref<2x30x28xf32, #tpu.memory_space<vmem>>, vector<1x1x28xf32>,
    %c0_433 = arith.constant 0 : index
    %c12_434 = arith.constant 12 : index
    %c0_435 = arith.constant 0 : index
    %491 = vector.load %arg30[%c0_433, %c12_434, %c0_435] : memref<2x30x28xf32, #tpu.memory_space<vmem>>, vector<1x1x28xf32>
    %492 = vector.shape_cast %491 : vector<1x1x28xf32> to vector<1x28xf32>
    %493 = vector.shape_cast %487 : vector<1x28xf32> to vector<1x1x28xf32>
    tpu.vector_store %arg30[%c0_433, %c12_434, %c0_435], %493 {strides = array<i32>} : memref<2x30x28xf32, #tpu.memory_space<vmem>>, vector<1x1x28xf32>,
    %494 = vector.extract_strided_slice %451 {offsets = [6, 0], sizes = [1, 28], strides = [1, 1]} : vector<14x28xf32> to vector<1x28xf32>
    %c0_436 = arith.constant 0 : index
    %c13_437 = arith.constant 13 : index
    %c0_438 = arith.constant 0 : index
    %495 = vector.load %arg30[%c0_436, %c13_437, %c0_438] : memref<2x30x28xf32, #tpu.memory_space<vmem>>, vector<1x1x28xf32>
    %496 = vector.shape_cast %495 : vector<1x1x28xf32> to vector<1x28xf32>
    %497 = vector.shape_cast %494 : vector<1x28xf32> to vector<1x1x28xf32>
    tpu.vector_store %arg30[%c0_436, %c13_437, %c0_438], %497 {strides = array<i32>} : memref<2x30x28xf32, #tpu.memory_space<vmem>>, vector<1x1x28xf32>,
    %c0_439 = arith.constant 0 : index
    %c14_440 = arith.constant 14 : index
    %c0_441 = arith.constant 0 : index
    %498 = vector.load %arg30[%c0_439, %c14_440, %c0_441] : memref<2x30x28xf32, #tpu.memory_space<vmem>>, vector<1x1x28xf32>
    %499 = vector.shape_cast %498 : vector<1x1x28xf32> to vector<1x28xf32>
    %500 = vector.shape_cast %494 : vector<1x28xf32> to vector<1x1x28xf32>
    tpu.vector_store %arg30[%c0_439, %c14_440, %c0_441], %500 {strides = array<i32>} : memref<2x30x28xf32, #tpu.memory_space<vmem>>, vector<1x1x28xf32>,
    %501 = vector.extract_strided_slice %451 {offsets = [7, 0], sizes = [1, 28], strides = [1, 1]} : vector<14x28xf32> to vector<1x28xf32>
    %c0_442 = arith.constant 0 : index
    %c15_443 = arith.constant 15 : index
    %c0_444 = arith.constant 0 : index
    %502 = vector.load %arg30[%c0_442, %c15_443, %c0_444] : memref<2x30x28xf32, #tpu.memory_space<vmem>>, vector<1x1x28xf32>
    %503 = vector.shape_cast %502 : vector<1x1x28xf32> to vector<1x28xf32>
    %504 = vector.shape_cast %501 : vector<1x28xf32> to vector<1x1x28xf32>
    tpu.vector_store %arg30[%c0_442, %c15_443, %c0_444], %504 {strides = array<i32>} : memref<2x30x28xf32, #tpu.memory_space<vmem>>, vector<1x1x28xf32>,
    %c0_445 = arith.constant 0 : index
    %c16 = arith.constant 16 : index
    %c0_446 = arith.constant 0 : index
    %505 = vector.load %arg30[%c0_445, %c16, %c0_446] : memref<2x30x28xf32, #tpu.memory_space<vmem>>, vector<1x1x28xf32>
    %506 = vector.shape_cast %505 : vector<1x1x28xf32> to vector<1x28xf32>
    %507 = vector.shape_cast %501 : vector<1x28xf32> to vector<1x1x28xf32>
    tpu.vector_store %arg30[%c0_445, %c16, %c0_446], %507 {strides = array<i32>} : memref<2x30x28xf32, #tpu.memory_space<vmem>>, vector<1x1x28xf32>,
    %508 = vector.extract_strided_slice %451 {offsets = [8, 0], sizes = [1, 28], strides = [1, 1]} : vector<14x28xf32> to vector<1x28xf32>
    %c0_447 = arith.constant 0 : index
    %c17 = arith.constant 17 : index
    %c0_448 = arith.constant 0 : index
    %509 = vector.load %arg30[%c0_447, %c17, %c0_448] : memref<2x30x28xf32, #tpu.memory_space<vmem>>, vector<1x1x28xf32>
    %510 = vector.shape_cast %509 : vector<1x1x28xf32> to vector<1x28xf32>
    %511 = vector.shape_cast %508 : vector<1x28xf32> to vector<1x1x28xf32>
    tpu.vector_store %arg30[%c0_447, %c17, %c0_448], %511 {strides = array<i32>} : memref<2x30x28xf32, #tpu.memory_space<vmem>>, vector<1x1x28xf32>,
    %c0_449 = arith.constant 0 : index
    %c18 = arith.constant 18 : index
    %c0_450 = arith.constant 0 : index
    %512 = vector.load %arg30[%c0_449, %c18, %c0_450] : memref<2x30x28xf32, #tpu.memory_space<vmem>>, vector<1x1x28xf32>
    %513 = vector.shape_cast %512 : vector<1x1x28xf32> to vector<1x28xf32>
    %514 = vector.shape_cast %508 : vector<1x28xf32> to vector<1x1x28xf32>
    tpu.vector_store %arg30[%c0_449, %c18, %c0_450], %514 {strides = array<i32>} : memref<2x30x28xf32, #tpu.memory_space<vmem>>, vector<1x1x28xf32>,
    %515 = vector.extract_strided_slice %451 {offsets = [9, 0], sizes = [1, 28], strides = [1, 1]} : vector<14x28xf32> to vector<1x28xf32>
    %c0_451 = arith.constant 0 : index
    %c19 = arith.constant 19 : index
    %c0_452 = arith.constant 0 : index
    %516 = vector.load %arg30[%c0_451, %c19, %c0_452] : memref<2x30x28xf32, #tpu.memory_space<vmem>>, vector<1x1x28xf32>
    %517 = vector.shape_cast %516 : vector<1x1x28xf32> to vector<1x28xf32>
    %518 = vector.shape_cast %515 : vector<1x28xf32> to vector<1x1x28xf32>
    tpu.vector_store %arg30[%c0_451, %c19, %c0_452], %518 {strides = array<i32>} : memref<2x30x28xf32, #tpu.memory_space<vmem>>, vector<1x1x28xf32>,
    %c0_453 = arith.constant 0 : index
    %c20 = arith.constant 20 : index
    %c0_454 = arith.constant 0 : index
    %519 = vector.load %arg30[%c0_453, %c20, %c0_454] : memref<2x30x28xf32, #tpu.memory_space<vmem>>, vector<1x1x28xf32>
    %520 = vector.shape_cast %519 : vector<1x1x28xf32> to vector<1x28xf32>
    %521 = vector.shape_cast %515 : vector<1x28xf32> to vector<1x1x28xf32>
    tpu.vector_store %arg30[%c0_453, %c20, %c0_454], %521 {strides = array<i32>} : memref<2x30x28xf32, #tpu.memory_space<vmem>>, vector<1x1x28xf32>,
    %522 = vector.extract_strided_slice %451 {offsets = [10, 0], sizes = [1, 28], strides = [1, 1]} : vector<14x28xf32> to vector<1x28xf32>
    %c0_455 = arith.constant 0 : index
    %c21 = arith.constant 21 : index
    %c0_456 = arith.constant 0 : index
    %523 = vector.load %arg30[%c0_455, %c21, %c0_456] : memref<2x30x28xf32, #tpu.memory_space<vmem>>, vector<1x1x28xf32>
    %524 = vector.shape_cast %523 : vector<1x1x28xf32> to vector<1x28xf32>
    %525 = vector.shape_cast %522 : vector<1x28xf32> to vector<1x1x28xf32>
    tpu.vector_store %arg30[%c0_455, %c21, %c0_456], %525 {strides = array<i32>} : memref<2x30x28xf32, #tpu.memory_space<vmem>>, vector<1x1x28xf32>,
    %c0_457 = arith.constant 0 : index
    %c22 = arith.constant 22 : index
    %c0_458 = arith.constant 0 : index
    %526 = vector.load %arg30[%c0_457, %c22, %c0_458] : memref<2x30x28xf32, #tpu.memory_space<vmem>>, vector<1x1x28xf32>
    %527 = vector.shape_cast %526 : vector<1x1x28xf32> to vector<1x28xf32>
    %528 = vector.shape_cast %522 : vector<1x28xf32> to vector<1x1x28xf32>
    tpu.vector_store %arg30[%c0_457, %c22, %c0_458], %528 {strides = array<i32>} : memref<2x30x28xf32, #tpu.memory_space<vmem>>, vector<1x1x28xf32>,
    %529 = vector.extract_strided_slice %451 {offsets = [11, 0], sizes = [1, 28], strides = [1, 1]} : vector<14x28xf32> to vector<1x28xf32>
    %c0_459 = arith.constant 0 : index
    %c23 = arith.constant 23 : index
    %c0_460 = arith.constant 0 : index
    %530 = vector.load %arg30[%c0_459, %c23, %c0_460] : memref<2x30x28xf32, #tpu.memory_space<vmem>>, vector<1x1x28xf32>
    %531 = vector.shape_cast %530 : vector<1x1x28xf32> to vector<1x28xf32>
    %532 = vector.shape_cast %529 : vector<1x28xf32> to vector<1x1x28xf32>
    tpu.vector_store %arg30[%c0_459, %c23, %c0_460], %532 {strides = array<i32>} : memref<2x30x28xf32, #tpu.memory_space<vmem>>, vector<1x1x28xf32>,
    %c0_461 = arith.constant 0 : index
    %c24 = arith.constant 24 : index
    %c0_462 = arith.constant 0 : index
    %533 = vector.load %arg30[%c0_461, %c24, %c0_462] : memref<2x30x28xf32, #tpu.memory_space<vmem>>, vector<1x1x28xf32>
    %534 = vector.shape_cast %533 : vector<1x1x28xf32> to vector<1x28xf32>
    %535 = vector.shape_cast %529 : vector<1x28xf32> to vector<1x1x28xf32>
    tpu.vector_store %arg30[%c0_461, %c24, %c0_462], %535 {strides = array<i32>} : memref<2x30x28xf32, #tpu.memory_space<vmem>>, vector<1x1x28xf32>,
    %536 = vector.extract_strided_slice %451 {offsets = [12, 0], sizes = [1, 28], strides = [1, 1]} : vector<14x28xf32> to vector<1x28xf32>
    %c0_463 = arith.constant 0 : index
    %c25 = arith.constant 25 : index
    %c0_464 = arith.constant 0 : index
    %537 = vector.load %arg30[%c0_463, %c25, %c0_464] : memref<2x30x28xf32, #tpu.memory_space<vmem>>, vector<1x1x28xf32>
    %538 = vector.shape_cast %537 : vector<1x1x28xf32> to vector<1x28xf32>
    %539 = vector.shape_cast %536 : vector<1x28xf32> to vector<1x1x28xf32>
    tpu.vector_store %arg30[%c0_463, %c25, %c0_464], %539 {strides = array<i32>} : memref<2x30x28xf32, #tpu.memory_space<vmem>>, vector<1x1x28xf32>,
    %c0_465 = arith.constant 0 : index
    %c26 = arith.constant 26 : index
    %c0_466 = arith.constant 0 : index
    %540 = vector.load %arg30[%c0_465, %c26, %c0_466] : memref<2x30x28xf32, #tpu.memory_space<vmem>>, vector<1x1x28xf32>
    %541 = vector.shape_cast %540 : vector<1x1x28xf32> to vector<1x28xf32>
    %542 = vector.shape_cast %536 : vector<1x28xf32> to vector<1x1x28xf32>
    tpu.vector_store %arg30[%c0_465, %c26, %c0_466], %542 {strides = array<i32>} : memref<2x30x28xf32, #tpu.memory_space<vmem>>, vector<1x1x28xf32>,
    %543 = vector.extract_strided_slice %451 {offsets = [13, 0], sizes = [1, 28], strides = [1, 1]} : vector<14x28xf32> to vector<1x28xf32>
    %c0_467 = arith.constant 0 : index
    %c27 = arith.constant 27 : index
    %c0_468 = arith.constant 0 : index
    %544 = vector.load %arg30[%c0_467, %c27, %c0_468] : memref<2x30x28xf32, #tpu.memory_space<vmem>>, vector<1x1x28xf32>
    %545 = vector.shape_cast %544 : vector<1x1x28xf32> to vector<1x28xf32>
    %546 = vector.shape_cast %543 : vector<1x28xf32> to vector<1x1x28xf32>
    tpu.vector_store %arg30[%c0_467, %c27, %c0_468], %546 {strides = array<i32>} : memref<2x30x28xf32, #tpu.memory_space<vmem>>, vector<1x1x28xf32>,
    %c0_469 = arith.constant 0 : index
    %c28 = arith.constant 28 : index
    %c0_470 = arith.constant 0 : index
    %547 = vector.load %arg30[%c0_469, %c28, %c0_470] : memref<2x30x28xf32, #tpu.memory_space<vmem>>, vector<1x1x28xf32>
    %548 = vector.shape_cast %547 : vector<1x1x28xf32> to vector<1x28xf32>
    %549 = vector.shape_cast %543 : vector<1x28xf32> to vector<1x1x28xf32>
    tpu.vector_store %arg30[%c0_469, %c28, %c0_470], %549 {strides = array<i32>} : memref<2x30x28xf32, #tpu.memory_space<vmem>>, vector<1x1x28xf32>,
    %c1_471 = arith.constant 1 : index
    %c0_472 = arith.constant 0 : index
    %c0_473 = arith.constant 0 : index
    %550 = vector.load %arg29[%c1_471, %c0_472, %c0_473] : memref<2x16x112xf32, #tpu.memory_space<vmem>>, vector<1x14x112xf32>
    %551 = vector.shape_cast %550 : vector<1x14x112xf32> to vector<14x112xf32>
    %552 = arith.truncf %551 : vector<14x112xf32> to vector<14x112xbf16>
    %c0_474 = arith.constant 0 : index
    %c0_475 = arith.constant 0 : index
    %c0_476 = arith.constant 0 : index
    %553 = vector.load %arg22[%c0_474, %c0_475, %c0_476] : memref<3x112x28xbf16, #tpu.memory_space<vmem>>, vector<1x112x28xbf16>
    %554 = vector.shape_cast %553 : vector<1x112x28xbf16> to vector<112x28xbf16>
    %cst_477 = arith.constant dense<0.000000e+00> : vector<14x28xf32>
    %555 = tpu.matmul %552, %554, %cst_477 {dimension_numbers = #tpu.dot_dimension_numbers<[1], [0], [0], [1], [0, 0, 1, 1], [], []>} : vector<14x112xbf16>, vector<112x28xbf16>, vector<14x28xf32> -> vector<14x28xf32>
    %c1_478 = arith.constant 1 : index
    %c1_479 = arith.constant 1 : index
    %c0_480 = arith.constant 0 : index
    %556 = vector.load %arg29[%c1_478, %c1_479, %c0_480] : memref<2x16x112xf32, #tpu.memory_space<vmem>>, vector<1x14x112xf32>
    %557 = vector.shape_cast %556 : vector<1x14x112xf32> to vector<14x112xf32>
    %558 = arith.truncf %557 : vector<14x112xf32> to vector<14x112xbf16>
    %c1_481 = arith.constant 1 : index
    %c0_482 = arith.constant 0 : index
    %c0_483 = arith.constant 0 : index
    %559 = vector.load %arg22[%c1_481, %c0_482, %c0_483] : memref<3x112x28xbf16, #tpu.memory_space<vmem>>, vector<1x112x28xbf16>
    %560 = vector.shape_cast %559 : vector<1x112x28xbf16> to vector<112x28xbf16>
    %cst_484 = arith.constant dense<0.000000e+00> : vector<14x28xf32>
    %561 = tpu.matmul %558, %560, %cst_484 {dimension_numbers = #tpu.dot_dimension_numbers<[1], [0], [0], [1], [0, 0, 1, 1], [], []>} : vector<14x112xbf16>, vector<112x28xbf16>, vector<14x28xf32> -> vector<14x28xf32>
    %562 = arith.addf %555, %561 : vector<14x28xf32>
    %c1_485 = arith.constant 1 : index
    %c2_486 = arith.constant 2 : index
    %c0_487 = arith.constant 0 : index
    %563 = vector.load %arg29[%c1_485, %c2_486, %c0_487] : memref<2x16x112xf32, #tpu.memory_space<vmem>>, vector<1x14x112xf32>
    %564 = vector.shape_cast %563 : vector<1x14x112xf32> to vector<14x112xf32>
    %565 = arith.truncf %564 : vector<14x112xf32> to vector<14x112xbf16>
    %c2_488 = arith.constant 2 : index
    %c0_489 = arith.constant 0 : index
    %c0_490 = arith.constant 0 : index
    %566 = vector.load %arg22[%c2_488, %c0_489, %c0_490] : memref<3x112x28xbf16, #tpu.memory_space<vmem>>, vector<1x112x28xbf16>
    %567 = vector.shape_cast %566 : vector<1x112x28xbf16> to vector<112x28xbf16>
    %cst_491 = arith.constant dense<0.000000e+00> : vector<14x28xf32>
    %568 = tpu.matmul %565, %567, %cst_491 {dimension_numbers = #tpu.dot_dimension_numbers<[1], [0], [0], [1], [0, 0, 1, 1], [], []>} : vector<14x112xbf16>, vector<112x28xbf16>, vector<14x28xf32> -> vector<14x28xf32>
    %569 = arith.addf %562, %568 : vector<14x28xf32>
    %c0_492 = arith.constant 0 : index
    %c0_493 = arith.constant 0 : index
    %570 = vector.load %arg6[%c0_492, %c0_493] : memref<1x28xf32, #tpu.memory_space<vmem>>, vector<1x28xf32>
    %571 = vector.broadcast %570 : vector<1x28xf32> to vector<14x28xf32>
    %572 = arith.addf %569, %571 : vector<14x28xf32>
    %cst_494 = arith.constant 0.000000e+00 : f32
    %573 = vector.broadcast %cst_494 : f32 to vector<14x28xf32>
    %574 = arith.maximumf %572, %573 : vector<14x28xf32>
    %575 = vector.extract_strided_slice %574 {offsets = [0, 0], sizes = [1, 28], strides = [1, 1]} : vector<14x28xf32> to vector<1x28xf32>
    %c1_495 = arith.constant 1 : index
    %c1_496 = arith.constant 1 : index
    %c0_497 = arith.constant 0 : index
    %576 = vector.load %arg30[%c1_495, %c1_496, %c0_497] : memref<2x30x28xf32, #tpu.memory_space<vmem>>, vector<1x1x28xf32>
    %577 = vector.shape_cast %576 : vector<1x1x28xf32> to vector<1x28xf32>
    %578 = vector.shape_cast %575 : vector<1x28xf32> to vector<1x1x28xf32>
    tpu.vector_store %arg30[%c1_495, %c1_496, %c0_497], %578 {strides = array<i32>} : memref<2x30x28xf32, #tpu.memory_space<vmem>>, vector<1x1x28xf32>,
    %c1_498 = arith.constant 1 : index
    %c2_499 = arith.constant 2 : index
    %c0_500 = arith.constant 0 : index
    %579 = vector.load %arg30[%c1_498, %c2_499, %c0_500] : memref<2x30x28xf32, #tpu.memory_space<vmem>>, vector<1x1x28xf32>
    %580 = vector.shape_cast %579 : vector<1x1x28xf32> to vector<1x28xf32>
    %581 = vector.shape_cast %575 : vector<1x28xf32> to vector<1x1x28xf32>
    tpu.vector_store %arg30[%c1_498, %c2_499, %c0_500], %581 {strides = array<i32>} : memref<2x30x28xf32, #tpu.memory_space<vmem>>, vector<1x1x28xf32>,
    %582 = vector.extract_strided_slice %574 {offsets = [1, 0], sizes = [1, 28], strides = [1, 1]} : vector<14x28xf32> to vector<1x28xf32>
    %c1_501 = arith.constant 1 : index
    %c3_502 = arith.constant 3 : index
    %c0_503 = arith.constant 0 : index
    %583 = vector.load %arg30[%c1_501, %c3_502, %c0_503] : memref<2x30x28xf32, #tpu.memory_space<vmem>>, vector<1x1x28xf32>
    %584 = vector.shape_cast %583 : vector<1x1x28xf32> to vector<1x28xf32>
    %585 = vector.shape_cast %582 : vector<1x28xf32> to vector<1x1x28xf32>
    tpu.vector_store %arg30[%c1_501, %c3_502, %c0_503], %585 {strides = array<i32>} : memref<2x30x28xf32, #tpu.memory_space<vmem>>, vector<1x1x28xf32>,
    %c1_504 = arith.constant 1 : index
    %c4_505 = arith.constant 4 : index
    %c0_506 = arith.constant 0 : index
    %586 = vector.load %arg30[%c1_504, %c4_505, %c0_506] : memref<2x30x28xf32, #tpu.memory_space<vmem>>, vector<1x1x28xf32>
    %587 = vector.shape_cast %586 : vector<1x1x28xf32> to vector<1x28xf32>
    %588 = vector.shape_cast %582 : vector<1x28xf32> to vector<1x1x28xf32>
    tpu.vector_store %arg30[%c1_504, %c4_505, %c0_506], %588 {strides = array<i32>} : memref<2x30x28xf32, #tpu.memory_space<vmem>>, vector<1x1x28xf32>,
    %589 = vector.extract_strided_slice %574 {offsets = [2, 0], sizes = [1, 28], strides = [1, 1]} : vector<14x28xf32> to vector<1x28xf32>
    %c1_507 = arith.constant 1 : index
    %c5_508 = arith.constant 5 : index
    %c0_509 = arith.constant 0 : index
    %590 = vector.load %arg30[%c1_507, %c5_508, %c0_509] : memref<2x30x28xf32, #tpu.memory_space<vmem>>, vector<1x1x28xf32>
    %591 = vector.shape_cast %590 : vector<1x1x28xf32> to vector<1x28xf32>
    %592 = vector.shape_cast %589 : vector<1x28xf32> to vector<1x1x28xf32>
    tpu.vector_store %arg30[%c1_507, %c5_508, %c0_509], %592 {strides = array<i32>} : memref<2x30x28xf32, #tpu.memory_space<vmem>>, vector<1x1x28xf32>,
    %c1_510 = arith.constant 1 : index
    %c6_511 = arith.constant 6 : index
    %c0_512 = arith.constant 0 : index
    %593 = vector.load %arg30[%c1_510, %c6_511, %c0_512] : memref<2x30x28xf32, #tpu.memory_space<vmem>>, vector<1x1x28xf32>
    %594 = vector.shape_cast %593 : vector<1x1x28xf32> to vector<1x28xf32>
    %595 = vector.shape_cast %589 : vector<1x28xf32> to vector<1x1x28xf32>
    tpu.vector_store %arg30[%c1_510, %c6_511, %c0_512], %595 {strides = array<i32>} : memref<2x30x28xf32, #tpu.memory_space<vmem>>, vector<1x1x28xf32>,
    %596 = vector.extract_strided_slice %574 {offsets = [3, 0], sizes = [1, 28], strides = [1, 1]} : vector<14x28xf32> to vector<1x28xf32>
    %c1_513 = arith.constant 1 : index
    %c7_514 = arith.constant 7 : index
    %c0_515 = arith.constant 0 : index
    %597 = vector.load %arg30[%c1_513, %c7_514, %c0_515] : memref<2x30x28xf32, #tpu.memory_space<vmem>>, vector<1x1x28xf32>
    %598 = vector.shape_cast %597 : vector<1x1x28xf32> to vector<1x28xf32>
    %599 = vector.shape_cast %596 : vector<1x28xf32> to vector<1x1x28xf32>
    tpu.vector_store %arg30[%c1_513, %c7_514, %c0_515], %599 {strides = array<i32>} : memref<2x30x28xf32, #tpu.memory_space<vmem>>, vector<1x1x28xf32>,
    %c1_516 = arith.constant 1 : index
    %c8_517 = arith.constant 8 : index
    %c0_518 = arith.constant 0 : index
    %600 = vector.load %arg30[%c1_516, %c8_517, %c0_518] : memref<2x30x28xf32, #tpu.memory_space<vmem>>, vector<1x1x28xf32>
    %601 = vector.shape_cast %600 : vector<1x1x28xf32> to vector<1x28xf32>
    %602 = vector.shape_cast %596 : vector<1x28xf32> to vector<1x1x28xf32>
    tpu.vector_store %arg30[%c1_516, %c8_517, %c0_518], %602 {strides = array<i32>} : memref<2x30x28xf32, #tpu.memory_space<vmem>>, vector<1x1x28xf32>,
    %603 = vector.extract_strided_slice %574 {offsets = [4, 0], sizes = [1, 28], strides = [1, 1]} : vector<14x28xf32> to vector<1x28xf32>
    %c1_519 = arith.constant 1 : index
    %c9_520 = arith.constant 9 : index
    %c0_521 = arith.constant 0 : index
    %604 = vector.load %arg30[%c1_519, %c9_520, %c0_521] : memref<2x30x28xf32, #tpu.memory_space<vmem>>, vector<1x1x28xf32>
    %605 = vector.shape_cast %604 : vector<1x1x28xf32> to vector<1x28xf32>
    %606 = vector.shape_cast %603 : vector<1x28xf32> to vector<1x1x28xf32>
    tpu.vector_store %arg30[%c1_519, %c9_520, %c0_521], %606 {strides = array<i32>} : memref<2x30x28xf32, #tpu.memory_space<vmem>>, vector<1x1x28xf32>,
    %c1_522 = arith.constant 1 : index
    %c10_523 = arith.constant 10 : index
    %c0_524 = arith.constant 0 : index
    %607 = vector.load %arg30[%c1_522, %c10_523, %c0_524] : memref<2x30x28xf32, #tpu.memory_space<vmem>>, vector<1x1x28xf32>
    %608 = vector.shape_cast %607 : vector<1x1x28xf32> to vector<1x28xf32>
    %609 = vector.shape_cast %603 : vector<1x28xf32> to vector<1x1x28xf32>
    tpu.vector_store %arg30[%c1_522, %c10_523, %c0_524], %609 {strides = array<i32>} : memref<2x30x28xf32, #tpu.memory_space<vmem>>, vector<1x1x28xf32>,
    %610 = vector.extract_strided_slice %574 {offsets = [5, 0], sizes = [1, 28], strides = [1, 1]} : vector<14x28xf32> to vector<1x28xf32>
    %c1_525 = arith.constant 1 : index
    %c11_526 = arith.constant 11 : index
    %c0_527 = arith.constant 0 : index
    %611 = vector.load %arg30[%c1_525, %c11_526, %c0_527] : memref<2x30x28xf32, #tpu.memory_space<vmem>>, vector<1x1x28xf32>
    %612 = vector.shape_cast %611 : vector<1x1x28xf32> to vector<1x28xf32>
    %613 = vector.shape_cast %610 : vector<1x28xf32> to vector<1x1x28xf32>
    tpu.vector_store %arg30[%c1_525, %c11_526, %c0_527], %613 {strides = array<i32>} : memref<2x30x28xf32, #tpu.memory_space<vmem>>, vector<1x1x28xf32>,
    %c1_528 = arith.constant 1 : index
    %c12_529 = arith.constant 12 : index
    %c0_530 = arith.constant 0 : index
    %614 = vector.load %arg30[%c1_528, %c12_529, %c0_530] : memref<2x30x28xf32, #tpu.memory_space<vmem>>, vector<1x1x28xf32>
    %615 = vector.shape_cast %614 : vector<1x1x28xf32> to vector<1x28xf32>
    %616 = vector.shape_cast %610 : vector<1x28xf32> to vector<1x1x28xf32>
    tpu.vector_store %arg30[%c1_528, %c12_529, %c0_530], %616 {strides = array<i32>} : memref<2x30x28xf32, #tpu.memory_space<vmem>>, vector<1x1x28xf32>,
    %617 = vector.extract_strided_slice %574 {offsets = [6, 0], sizes = [1, 28], strides = [1, 1]} : vector<14x28xf32> to vector<1x28xf32>
    %c1_531 = arith.constant 1 : index
    %c13_532 = arith.constant 13 : index
    %c0_533 = arith.constant 0 : index
    %618 = vector.load %arg30[%c1_531, %c13_532, %c0_533] : memref<2x30x28xf32, #tpu.memory_space<vmem>>, vector<1x1x28xf32>
    %619 = vector.shape_cast %618 : vector<1x1x28xf32> to vector<1x28xf32>
    %620 = vector.shape_cast %617 : vector<1x28xf32> to vector<1x1x28xf32>
    tpu.vector_store %arg30[%c1_531, %c13_532, %c0_533], %620 {strides = array<i32>} : memref<2x30x28xf32, #tpu.memory_space<vmem>>, vector<1x1x28xf32>,
    %c1_534 = arith.constant 1 : index
    %c14_535 = arith.constant 14 : index
    %c0_536 = arith.constant 0 : index
    %621 = vector.load %arg30[%c1_534, %c14_535, %c0_536] : memref<2x30x28xf32, #tpu.memory_space<vmem>>, vector<1x1x28xf32>
    %622 = vector.shape_cast %621 : vector<1x1x28xf32> to vector<1x28xf32>
    %623 = vector.shape_cast %617 : vector<1x28xf32> to vector<1x1x28xf32>
    tpu.vector_store %arg30[%c1_534, %c14_535, %c0_536], %623 {strides = array<i32>} : memref<2x30x28xf32, #tpu.memory_space<vmem>>, vector<1x1x28xf32>,
    %624 = vector.extract_strided_slice %574 {offsets = [7, 0], sizes = [1, 28], strides = [1, 1]} : vector<14x28xf32> to vector<1x28xf32>
    %c1_537 = arith.constant 1 : index
    %c15_538 = arith.constant 15 : index
    %c0_539 = arith.constant 0 : index
    %625 = vector.load %arg30[%c1_537, %c15_538, %c0_539] : memref<2x30x28xf32, #tpu.memory_space<vmem>>, vector<1x1x28xf32>
    %626 = vector.shape_cast %625 : vector<1x1x28xf32> to vector<1x28xf32>
    %627 = vector.shape_cast %624 : vector<1x28xf32> to vector<1x1x28xf32>
    tpu.vector_store %arg30[%c1_537, %c15_538, %c0_539], %627 {strides = array<i32>} : memref<2x30x28xf32, #tpu.memory_space<vmem>>, vector<1x1x28xf32>,
    %c1_540 = arith.constant 1 : index
    %c16_541 = arith.constant 16 : index
    %c0_542 = arith.constant 0 : index
    %628 = vector.load %arg30[%c1_540, %c16_541, %c0_542] : memref<2x30x28xf32, #tpu.memory_space<vmem>>, vector<1x1x28xf32>
    %629 = vector.shape_cast %628 : vector<1x1x28xf32> to vector<1x28xf32>
    %630 = vector.shape_cast %624 : vector<1x28xf32> to vector<1x1x28xf32>
    tpu.vector_store %arg30[%c1_540, %c16_541, %c0_542], %630 {strides = array<i32>} : memref<2x30x28xf32, #tpu.memory_space<vmem>>, vector<1x1x28xf32>,
    %631 = vector.extract_strided_slice %574 {offsets = [8, 0], sizes = [1, 28], strides = [1, 1]} : vector<14x28xf32> to vector<1x28xf32>
    %c1_543 = arith.constant 1 : index
    %c17_544 = arith.constant 17 : index
    %c0_545 = arith.constant 0 : index
    %632 = vector.load %arg30[%c1_543, %c17_544, %c0_545] : memref<2x30x28xf32, #tpu.memory_space<vmem>>, vector<1x1x28xf32>
    %633 = vector.shape_cast %632 : vector<1x1x28xf32> to vector<1x28xf32>
    %634 = vector.shape_cast %631 : vector<1x28xf32> to vector<1x1x28xf32>
    tpu.vector_store %arg30[%c1_543, %c17_544, %c0_545], %634 {strides = array<i32>} : memref<2x30x28xf32, #tpu.memory_space<vmem>>, vector<1x1x28xf32>,
    %c1_546 = arith.constant 1 : index
    %c18_547 = arith.constant 18 : index
    %c0_548 = arith.constant 0 : index
    %635 = vector.load %arg30[%c1_546, %c18_547, %c0_548] : memref<2x30x28xf32, #tpu.memory_space<vmem>>, vector<1x1x28xf32>
    %636 = vector.shape_cast %635 : vector<1x1x28xf32> to vector<1x28xf32>
    %637 = vector.shape_cast %631 : vector<1x28xf32> to vector<1x1x28xf32>
    tpu.vector_store %arg30[%c1_546, %c18_547, %c0_548], %637 {strides = array<i32>} : memref<2x30x28xf32, #tpu.memory_space<vmem>>, vector<1x1x28xf32>,
    %638 = vector.extract_strided_slice %574 {offsets = [9, 0], sizes = [1, 28], strides = [1, 1]} : vector<14x28xf32> to vector<1x28xf32>
    %c1_549 = arith.constant 1 : index
    %c19_550 = arith.constant 19 : index
    %c0_551 = arith.constant 0 : index
    %639 = vector.load %arg30[%c1_549, %c19_550, %c0_551] : memref<2x30x28xf32, #tpu.memory_space<vmem>>, vector<1x1x28xf32>
    %640 = vector.shape_cast %639 : vector<1x1x28xf32> to vector<1x28xf32>
    %641 = vector.shape_cast %638 : vector<1x28xf32> to vector<1x1x28xf32>
    tpu.vector_store %arg30[%c1_549, %c19_550, %c0_551], %641 {strides = array<i32>} : memref<2x30x28xf32, #tpu.memory_space<vmem>>, vector<1x1x28xf32>,
    %c1_552 = arith.constant 1 : index
    %c20_553 = arith.constant 20 : index
    %c0_554 = arith.constant 0 : index
    %642 = vector.load %arg30[%c1_552, %c20_553, %c0_554] : memref<2x30x28xf32, #tpu.memory_space<vmem>>, vector<1x1x28xf32>
    %643 = vector.shape_cast %642 : vector<1x1x28xf32> to vector<1x28xf32>
    %644 = vector.shape_cast %638 : vector<1x28xf32> to vector<1x1x28xf32>
    tpu.vector_store %arg30[%c1_552, %c20_553, %c0_554], %644 {strides = array<i32>} : memref<2x30x28xf32, #tpu.memory_space<vmem>>, vector<1x1x28xf32>,
    %645 = vector.extract_strided_slice %574 {offsets = [10, 0], sizes = [1, 28], strides = [1, 1]} : vector<14x28xf32> to vector<1x28xf32>
    %c1_555 = arith.constant 1 : index
    %c21_556 = arith.constant 21 : index
    %c0_557 = arith.constant 0 : index
    %646 = vector.load %arg30[%c1_555, %c21_556, %c0_557] : memref<2x30x28xf32, #tpu.memory_space<vmem>>, vector<1x1x28xf32>
    %647 = vector.shape_cast %646 : vector<1x1x28xf32> to vector<1x28xf32>
    %648 = vector.shape_cast %645 : vector<1x28xf32> to vector<1x1x28xf32>
    tpu.vector_store %arg30[%c1_555, %c21_556, %c0_557], %648 {strides = array<i32>} : memref<2x30x28xf32, #tpu.memory_space<vmem>>, vector<1x1x28xf32>,
    %c1_558 = arith.constant 1 : index
    %c22_559 = arith.constant 22 : index
    %c0_560 = arith.constant 0 : index
    %649 = vector.load %arg30[%c1_558, %c22_559, %c0_560] : memref<2x30x28xf32, #tpu.memory_space<vmem>>, vector<1x1x28xf32>
    %650 = vector.shape_cast %649 : vector<1x1x28xf32> to vector<1x28xf32>
    %651 = vector.shape_cast %645 : vector<1x28xf32> to vector<1x1x28xf32>
    tpu.vector_store %arg30[%c1_558, %c22_559, %c0_560], %651 {strides = array<i32>} : memref<2x30x28xf32, #tpu.memory_space<vmem>>, vector<1x1x28xf32>,
    %652 = vector.extract_strided_slice %574 {offsets = [11, 0], sizes = [1, 28], strides = [1, 1]} : vector<14x28xf32> to vector<1x28xf32>
    %c1_561 = arith.constant 1 : index
    %c23_562 = arith.constant 23 : index
    %c0_563 = arith.constant 0 : index
    %653 = vector.load %arg30[%c1_561, %c23_562, %c0_563] : memref<2x30x28xf32, #tpu.memory_space<vmem>>, vector<1x1x28xf32>
    %654 = vector.shape_cast %653 : vector<1x1x28xf32> to vector<1x28xf32>
    %655 = vector.shape_cast %652 : vector<1x28xf32> to vector<1x1x28xf32>
    tpu.vector_store %arg30[%c1_561, %c23_562, %c0_563], %655 {strides = array<i32>} : memref<2x30x28xf32, #tpu.memory_space<vmem>>, vector<1x1x28xf32>,
    %c1_564 = arith.constant 1 : index
    %c24_565 = arith.constant 24 : index
    %c0_566 = arith.constant 0 : index
    %656 = vector.load %arg30[%c1_564, %c24_565, %c0_566] : memref<2x30x28xf32, #tpu.memory_space<vmem>>, vector<1x1x28xf32>
    %657 = vector.shape_cast %656 : vector<1x1x28xf32> to vector<1x28xf32>
    %658 = vector.shape_cast %652 : vector<1x28xf32> to vector<1x1x28xf32>
    tpu.vector_store %arg30[%c1_564, %c24_565, %c0_566], %658 {strides = array<i32>} : memref<2x30x28xf32, #tpu.memory_space<vmem>>, vector<1x1x28xf32>,
    %659 = vector.extract_strided_slice %574 {offsets = [12, 0], sizes = [1, 28], strides = [1, 1]} : vector<14x28xf32> to vector<1x28xf32>
    %c1_567 = arith.constant 1 : index
    %c25_568 = arith.constant 25 : index
    %c0_569 = arith.constant 0 : index
    %660 = vector.load %arg30[%c1_567, %c25_568, %c0_569] : memref<2x30x28xf32, #tpu.memory_space<vmem>>, vector<1x1x28xf32>
    %661 = vector.shape_cast %660 : vector<1x1x28xf32> to vector<1x28xf32>
    %662 = vector.shape_cast %659 : vector<1x28xf32> to vector<1x1x28xf32>
    tpu.vector_store %arg30[%c1_567, %c25_568, %c0_569], %662 {strides = array<i32>} : memref<2x30x28xf32, #tpu.memory_space<vmem>>, vector<1x1x28xf32>,
    %c1_570 = arith.constant 1 : index
    %c26_571 = arith.constant 26 : index
    %c0_572 = arith.constant 0 : index
    %663 = vector.load %arg30[%c1_570, %c26_571, %c0_572] : memref<2x30x28xf32, #tpu.memory_space<vmem>>, vector<1x1x28xf32>
    %664 = vector.shape_cast %663 : vector<1x1x28xf32> to vector<1x28xf32>
    %665 = vector.shape_cast %659 : vector<1x28xf32> to vector<1x1x28xf32>
    tpu.vector_store %arg30[%c1_570, %c26_571, %c0_572], %665 {strides = array<i32>} : memref<2x30x28xf32, #tpu.memory_space<vmem>>, vector<1x1x28xf32>,
    %666 = vector.extract_strided_slice %574 {offsets = [13, 0], sizes = [1, 28], strides = [1, 1]} : vector<14x28xf32> to vector<1x28xf32>
    %c1_573 = arith.constant 1 : index
    %c27_574 = arith.constant 27 : index
    %c0_575 = arith.constant 0 : index
    %667 = vector.load %arg30[%c1_573, %c27_574, %c0_575] : memref<2x30x28xf32, #tpu.memory_space<vmem>>, vector<1x1x28xf32>
    %668 = vector.shape_cast %667 : vector<1x1x28xf32> to vector<1x28xf32>
    %669 = vector.shape_cast %666 : vector<1x28xf32> to vector<1x1x28xf32>
    tpu.vector_store %arg30[%c1_573, %c27_574, %c0_575], %669 {strides = array<i32>} : memref<2x30x28xf32, #tpu.memory_space<vmem>>, vector<1x1x28xf32>,
    %c1_576 = arith.constant 1 : index
    %c28_577 = arith.constant 28 : index
    %c0_578 = arith.constant 0 : index
    %670 = vector.load %arg30[%c1_576, %c28_577, %c0_578] : memref<2x30x28xf32, #tpu.memory_space<vmem>>, vector<1x1x28xf32>
    %671 = vector.shape_cast %670 : vector<1x1x28xf32> to vector<1x28xf32>
    %672 = vector.shape_cast %666 : vector<1x28xf32> to vector<1x1x28xf32>
    tpu.vector_store %arg30[%c1_576, %c28_577, %c0_578], %672 {strides = array<i32>} : memref<2x30x28xf32, #tpu.memory_space<vmem>>, vector<1x1x28xf32>,
    %c6_i32_579 = arith.constant 6 : i32
    %673 = tpu.memref_slice %arg24[%c6_i32_579] : memref<7x!tpu.dma_semaphore, #tpu.memory_space<semaphore_mem>> -> memref<1x!tpu.dma_semaphore, #tpu.memory_space<semaphore_mem>>
    %674 = tpu.memref_squeeze %673 : memref<1x!tpu.dma_semaphore, #tpu.memory_space<semaphore_mem>> -> memref<!tpu.dma_semaphore, #tpu.memory_space<semaphore_mem>>
    tpu.wait_dma2 semaphore(%674 : memref<!tpu.dma_semaphore, #tpu.memory_space<semaphore_mem>>) src(%arg14 : memref<3x28x28xbf16, #tpu.memory_space<any>>) dst(%arg23 : memref<3x28x28xbf16, #tpu.memory_space<vmem>>)
    %c0_580 = arith.constant 0 : index
    %c0_581 = arith.constant 0 : index
    %c0_582 = arith.constant 0 : index
    %675 = vector.load %arg30[%c0_580, %c0_581, %c0_582] : memref<2x30x28xf32, #tpu.memory_space<vmem>>, vector<1x28x28xf32>
    %676 = vector.shape_cast %675 : vector<1x28x28xf32> to vector<28x28xf32>
    %677 = arith.truncf %676 : vector<28x28xf32> to vector<28x28xbf16>
    %c0_583 = arith.constant 0 : index
    %c0_584 = arith.constant 0 : index
    %c0_585 = arith.constant 0 : index
    %678 = vector.load %arg23[%c0_583, %c0_584, %c0_585] : memref<3x28x28xbf16, #tpu.memory_space<vmem>>, vector<1x28x28xbf16>
    %679 = vector.shape_cast %678 : vector<1x28x28xbf16> to vector<28x28xbf16>
    %cst_586 = arith.constant dense<0.000000e+00> : vector<28x28xf32>
    %680 = tpu.matmul %677, %679, %cst_586 {dimension_numbers = #tpu.dot_dimension_numbers<[1], [0], [0], [1], [0, 0, 1, 1], [], []>} : vector<28x28xbf16>, vector<28x28xbf16>, vector<28x28xf32> -> vector<28x28xf32>
    %c0_587 = arith.constant 0 : index
    %c1_588 = arith.constant 1 : index
    %c0_589 = arith.constant 0 : index
    %681 = vector.load %arg30[%c0_587, %c1_588, %c0_589] : memref<2x30x28xf32, #tpu.memory_space<vmem>>, vector<1x28x28xf32>
    %682 = vector.shape_cast %681 : vector<1x28x28xf32> to vector<28x28xf32>
    %683 = arith.truncf %682 : vector<28x28xf32> to vector<28x28xbf16>
    %c1_590 = arith.constant 1 : index
    %c0_591 = arith.constant 0 : index
    %c0_592 = arith.constant 0 : index
    %684 = vector.load %arg23[%c1_590, %c0_591, %c0_592] : memref<3x28x28xbf16, #tpu.memory_space<vmem>>, vector<1x28x28xbf16>
    %685 = vector.shape_cast %684 : vector<1x28x28xbf16> to vector<28x28xbf16>
    %cst_593 = arith.constant dense<0.000000e+00> : vector<28x28xf32>
    %686 = tpu.matmul %683, %685, %cst_593 {dimension_numbers = #tpu.dot_dimension_numbers<[1], [0], [0], [1], [0, 0, 1, 1], [], []>} : vector<28x28xbf16>, vector<28x28xbf16>, vector<28x28xf32> -> vector<28x28xf32>
    %687 = arith.addf %680, %686 : vector<28x28xf32>
    %c0_594 = arith.constant 0 : index
    %c2_595 = arith.constant 2 : index
    %c0_596 = arith.constant 0 : index
    %688 = vector.load %arg30[%c0_594, %c2_595, %c0_596] : memref<2x30x28xf32, #tpu.memory_space<vmem>>, vector<1x28x28xf32>
    %689 = vector.shape_cast %688 : vector<1x28x28xf32> to vector<28x28xf32>
    %690 = arith.truncf %689 : vector<28x28xf32> to vector<28x28xbf16>
    %c2_597 = arith.constant 2 : index
    %c0_598 = arith.constant 0 : index
    %c0_599 = arith.constant 0 : index
    %691 = vector.load %arg23[%c2_597, %c0_598, %c0_599] : memref<3x28x28xbf16, #tpu.memory_space<vmem>>, vector<1x28x28xbf16>
    %692 = vector.shape_cast %691 : vector<1x28x28xbf16> to vector<28x28xbf16>
    %cst_600 = arith.constant dense<0.000000e+00> : vector<28x28xf32>
    %693 = tpu.matmul %690, %692, %cst_600 {dimension_numbers = #tpu.dot_dimension_numbers<[1], [0], [0], [1], [0, 0, 1, 1], [], []>} : vector<28x28xbf16>, vector<28x28xbf16>, vector<28x28xf32> -> vector<28x28xf32>
    %694 = arith.addf %687, %693 : vector<28x28xf32>
    %c0_601 = arith.constant 0 : index
    %c0_602 = arith.constant 0 : index
    %695 = vector.load %arg7[%c0_601, %c0_602] : memref<1x28xf32, #tpu.memory_space<vmem>>, vector<1x28xf32>
    %696 = vector.broadcast %695 : vector<1x28xf32> to vector<28x28xf32>
    %697 = arith.addf %694, %696 : vector<28x28xf32>
    %cst_603 = arith.constant 0.000000e+00 : f32
    %698 = vector.broadcast %cst_603 : f32 to vector<28x28xf32>
    %699 = arith.maximumf %697, %698 : vector<28x28xf32>
    %c0_604 = arith.constant 0 : index
    %c0_605 = arith.constant 0 : index
    %c0_606 = arith.constant 0 : index
    %700 = vector.load %arg15[%c0_604, %c0_605, %c0_606] : memref<2x28x28xf32, #tpu.memory_space<vmem>>, vector<1x28x28xf32>
    %701 = vector.shape_cast %700 : vector<1x28x28xf32> to vector<28x28xf32>
    %702 = vector.shape_cast %699 : vector<28x28xf32> to vector<1x28x28xf32>
    tpu.vector_store %arg15[%c0_604, %c0_605, %c0_606], %702 {strides = array<i32>} : memref<2x28x28xf32, #tpu.memory_space<vmem>>, vector<1x28x28xf32>,
    %c1_607 = arith.constant 1 : index
    %c0_608 = arith.constant 0 : index
    %c0_609 = arith.constant 0 : index
    %703 = vector.load %arg30[%c1_607, %c0_608, %c0_609] : memref<2x30x28xf32, #tpu.memory_space<vmem>>, vector<1x28x28xf32>
    %704 = vector.shape_cast %703 : vector<1x28x28xf32> to vector<28x28xf32>
    %705 = arith.truncf %704 : vector<28x28xf32> to vector<28x28xbf16>
    %c0_610 = arith.constant 0 : index
    %c0_611 = arith.constant 0 : index
    %c0_612 = arith.constant 0 : index
    %706 = vector.load %arg23[%c0_610, %c0_611, %c0_612] : memref<3x28x28xbf16, #tpu.memory_space<vmem>>, vector<1x28x28xbf16>
    %707 = vector.shape_cast %706 : vector<1x28x28xbf16> to vector<28x28xbf16>
    %cst_613 = arith.constant dense<0.000000e+00> : vector<28x28xf32>
    %708 = tpu.matmul %705, %707, %cst_613 {dimension_numbers = #tpu.dot_dimension_numbers<[1], [0], [0], [1], [0, 0, 1, 1], [], []>} : vector<28x28xbf16>, vector<28x28xbf16>, vector<28x28xf32> -> vector<28x28xf32>
    %c1_614 = arith.constant 1 : index
    %c1_615 = arith.constant 1 : index
    %c0_616 = arith.constant 0 : index
    %709 = vector.load %arg30[%c1_614, %c1_615, %c0_616] : memref<2x30x28xf32, #tpu.memory_space<vmem>>, vector<1x28x28xf32>
    %710 = vector.shape_cast %709 : vector<1x28x28xf32> to vector<28x28xf32>
    %711 = arith.truncf %710 : vector<28x28xf32> to vector<28x28xbf16>
    %c1_617 = arith.constant 1 : index
    %c0_618 = arith.constant 0 : index
    %c0_619 = arith.constant 0 : index
    %712 = vector.load %arg23[%c1_617, %c0_618, %c0_619] : memref<3x28x28xbf16, #tpu.memory_space<vmem>>, vector<1x28x28xbf16>
    %713 = vector.shape_cast %712 : vector<1x28x28xbf16> to vector<28x28xbf16>
    %cst_620 = arith.constant dense<0.000000e+00> : vector<28x28xf32>
    %714 = tpu.matmul %711, %713, %cst_620 {dimension_numbers = #tpu.dot_dimension_numbers<[1], [0], [0], [1], [0, 0, 1, 1], [], []>} : vector<28x28xbf16>, vector<28x28xbf16>, vector<28x28xf32> -> vector<28x28xf32>
    %715 = arith.addf %708, %714 : vector<28x28xf32>
    %c1_621 = arith.constant 1 : index
    %c2_622 = arith.constant 2 : index
    %c0_623 = arith.constant 0 : index
    %716 = vector.load %arg30[%c1_621, %c2_622, %c0_623] : memref<2x30x28xf32, #tpu.memory_space<vmem>>, vector<1x28x28xf32>
    %717 = vector.shape_cast %716 : vector<1x28x28xf32> to vector<28x28xf32>
    %718 = arith.truncf %717 : vector<28x28xf32> to vector<28x28xbf16>
    %c2_624 = arith.constant 2 : index
    %c0_625 = arith.constant 0 : index
    %c0_626 = arith.constant 0 : index
    %719 = vector.load %arg23[%c2_624, %c0_625, %c0_626] : memref<3x28x28xbf16, #tpu.memory_space<vmem>>, vector<1x28x28xbf16>
    %720 = vector.shape_cast %719 : vector<1x28x28xbf16> to vector<28x28xbf16>
    %cst_627 = arith.constant dense<0.000000e+00> : vector<28x28xf32>
    %721 = tpu.matmul %718, %720, %cst_627 {dimension_numbers = #tpu.dot_dimension_numbers<[1], [0], [0], [1], [0, 0, 1, 1], [], []>} : vector<28x28xbf16>, vector<28x28xbf16>, vector<28x28xf32> -> vector<28x28xf32>
    %722 = arith.addf %715, %721 : vector<28x28xf32>
    %c0_628 = arith.constant 0 : index
    %c0_629 = arith.constant 0 : index
    %723 = vector.load %arg7[%c0_628, %c0_629] : memref<1x28xf32, #tpu.memory_space<vmem>>, vector<1x28xf32>
    %724 = vector.broadcast %723 : vector<1x28xf32> to vector<28x28xf32>
    %725 = arith.addf %722, %724 : vector<28x28xf32>
    %cst_630 = arith.constant 0.000000e+00 : f32
    %726 = vector.broadcast %cst_630 : f32 to vector<28x28xf32>
    %727 = arith.maximumf %725, %726 : vector<28x28xf32>
    %c1_631 = arith.constant 1 : index
    %c0_632 = arith.constant 0 : index
    %c0_633 = arith.constant 0 : index
    %728 = vector.load %arg15[%c1_631, %c0_632, %c0_633] : memref<2x28x28xf32, #tpu.memory_space<vmem>>, vector<1x28x28xf32>
    %729 = vector.shape_cast %728 : vector<1x28x28xf32> to vector<28x28xf32>
    %730 = vector.shape_cast %727 : vector<28x28xf32> to vector<1x28x28xf32>
    tpu.vector_store %arg15[%c1_631, %c0_632, %c0_633], %730 {strides = array<i32>} : memref<2x28x28xf32, #tpu.memory_space<vmem>>, vector<1x28x28xf32>,
    return
  }
}

</mosaic_0001>

<llo_original>
// kernel: decoder_forward.1
$region0: #{decoder_forward.1}
  #allocation0 [shape = 'u32[]', space=smem, size = 0x4, offset = 0x4, fixed_abs, tag = 'smem constant byte address 0x4 - core index']
  #allocation1 [shape = 'u32[144,128]{1,0:T(1,128)}', space=vmem, size = 0x12000, scoped, tag = 'internal scratch']
  #allocation2 [shape = 'bf16[24,1792]{1,0:T(8,128)(2,1)}', space=vmem, size = 0x15000, scoped, tag = 'scratch operand']
  #allocation3 [shape = 'bf16[3,112,112]{2,1,0:T(8,128)(2,1)}', space=vmem, size = 0x15000, scoped, tag = 'scratch operand']
  #allocation4 [shape = 'bf16[3,112,112]{2,1,0:T(8,128)(2,1)}', space=vmem, size = 0x15000, scoped, tag = 'scratch operand']
  #allocation5 [shape = 'bf16[3,112,112]{2,1,0:T(8,128)(2,1)}', space=vmem, size = 0x15000, scoped, tag = 'scratch operand']
  #allocation6 [shape = 'bf16[3,112,112]{2,1,0:T(8,128)(2,1)}', space=vmem, size = 0x15000, scoped, tag = 'scratch operand']
  #allocation7 [shape = 'bf16[3,112,28]{2,1,0:T(8,128)(2,1)}', space=vmem, size = 0x15000, scoped, tag = 'scratch operand']
  #allocation8 [shape = 'bf16[3,28,28]{2,1,0:T(8,128)(2,1)}', space=vmem, size = 0x6000, scoped, tag = 'scratch operand']
  #allocation9 [shape = 's32[7]{0}', space=sflag, size = 0x1c, scoped, tag = 'scratch operand']
  #allocation10 [shape = 'f32[2,9,112]{2,1,0:T(8,128)}', space=vmem, size = 0x4000, scoped, tag = 'scratch operand']
  #allocation11 [shape = 'f32[2,9,112]{2,1,0:T(8,128)}', space=vmem, size = 0x4000, scoped, tag = 'scratch operand']
  #allocation12 [shape = 'f32[2,9,112]{2,1,0:T(8,128)}', space=vmem, size = 0x4000, scoped, tag = 'scratch operand']
  #allocation13 [shape = 'f32[2,16,112]{2,1,0:T(8,128)}', space=vmem, size = 0x4000, scoped, tag = 'scratch operand']
  #allocation14 [shape = 'f32[2,16,112]{2,1,0:T(8,128)}', space=vmem, size = 0x4000, scoped, tag = 'scratch operand']
  #allocation15 [shape = 'f32[2,30,28]{2,1,0:T(8,128)}', space=vmem, size = 0x8000, scoped, tag = 'scratch operand']
  #allocation25 [shape = 's32[]', space=sflag, size = 0x4, offset = 0, fixed_abs, tag = 'sflag constant byte address 0x0 - dummy sync flag']
  #allocation26 [shape = 's32[]', space=sflag, size = 0x4, offset = 0, fixed_abs, tag = 'sflag constant byte address 0x0 - dummy sync flag']
  #allocation27 [shape = 's32[]', space=sflag, size = 0x4, offset = 0, fixed_abs, tag = 'sflag constant byte address 0x0 - dummy sync flag']
  #allocation28 [shape = 'u32[]', space=smem, size = 0x4, offset = 0x44, fixed_abs, tag = 'smem constant byte address 0x44 - assertion arg 0']
  #allocation29 [shape = 'u32[]', space=smem, size = 0x4, offset = 0x48, fixed_abs, tag = 'smem constant byte address 0x48 - assertion arg 1']
  #allocation30 [shape = 's32[]', space=sflag, size = 0x4, offset = 0, fixed_abs, tag = 'sflag constant byte address 0x0 - dummy sync flag']
  #allocation31 [shape = 's32[]', space=sflag, size = 0x4, offset = 0, fixed_abs, tag = 'sflag constant byte address 0x0 - dummy sync flag']
  #allocation32 [shape = 's32[]', space=sflag, size = 0x4, offset = 0, fixed_abs, tag = 'sflag constant byte address 0x0 - dummy sync flag']
  #allocation33 [shape = 's32[]', space=sflag, size = 0x4, offset = 0, fixed_abs, tag = 'sflag constant byte address 0x0 - dummy sync flag']
  #allocation34 [shape = 's32[]', space=sflag, size = 0x4, offset = 0, fixed_abs, tag = 'sflag constant byte address 0x0 - dummy sync flag']
  #allocation35 [shape = 's32[]', space=sflag, size = 0x4, offset = 0, fixed_abs, tag = 'sflag constant byte address 0x0 - dummy sync flag']
  #allocation36 [shape = 's32[]', space=sflag, size = 0x4, offset = 0, fixed_abs, tag = 'sflag constant byte address 0x0 - dummy sync flag']
  #allocation37 [shape = 's32[]', space=sflag, size = 0x4, offset = 0, fixed_abs, tag = 'sflag constant byte address 0x0 - dummy sync flag']
  %s0 = inlined_call_operand.vmem [shape: f32[2,24], index: 0, kind: input, shape index: {}]
  %s1 = inlined_call_operand.vmem [shape: f32[1,1792], index: 1, kind: input, shape index: {}]
  %s2 = inlined_call_operand.vmem [shape: f32[1,112], index: 2, kind: input, shape index: {}]
  %s3 = inlined_call_operand.vmem [shape: f32[1,112], index: 3, kind: input, shape index: {}]
  %s4 = inlined_call_operand.hbm [shape: f32[1,112], index: 4, kind: input, shape index: {}]
  %s5 = inlined_call_operand.hbm [shape: f32[1,112], index: 5, kind: input, shape index: {}]
  %s6 = inlined_call_operand.hbm [shape: f32[1,28], index: 6, kind: input, shape index: {}]
  %s7 = inlined_call_operand.hbm [shape: f32[1,28], index: 7, kind: input, shape index: {}]
  %s8 = inlined_call_operand.vmem [shape: bf16[24,1792], index: 8, kind: input, shape index: {}]
  %s9 = inlined_call_operand.hbm [shape: bf16[3,112,112], index: 9, kind: input, shape index: {}]
  %s10 = inlined_call_operand.hbm [shape: bf16[3,112,112], index: 10, kind: input, shape index: {}]
  %s11 = inlined_call_operand.hbm [shape: bf16[3,112,112], index: 11, kind: input, shape index: {}]
  %s12 = inlined_call_operand.hbm [shape: bf16[3,112,112], index: 12, kind: input, shape index: {}]
  %s13 = inlined_call_operand.vmem [shape: bf16[3,112,28], index: 13, kind: input, shape index: {}]
  %s14 = inlined_call_operand.vmem [shape: bf16[3,28,28], index: 14, kind: input, shape index: {}]
  %s15 = inlined_call_operand.vmem [shape: f32[2,28,28], index: 15, kind: output, shape index: {0}]
  %s16 = inlined_call_operand.hbm [shape: f32[2,784], index: 16, kind: output, shape index: {1}]
  %17 = xla_tuple %s15, %s16
  %s18 = sld [smem:[#allocation0]]
  $region184: #{decoder_forward.1} parent=0
    _
  %s20 = ssub.s32 1, %s18
  %s21 = scalar_select 0, %s20, %s18
  $region1: #{decoder_forward.1} parent=0
    #allocation16 [shape = 'u8[512]{0}', space=vmem, size = 0x400, scoped, tag = 'input window, operand 4, single buffered']
    #allocation17 [shape = 's32[1]{0}', space=sflag, size = 0x4, scoped, tag = 'scoped memory for decoder_forward.1']
    #allocation18 [shape = 's32[1]{0}', space=sflag, size = 0x4, scoped, tag = 'scoped memory for decoder_forward.1']
    #allocation19 [shape = 'u8[512]{0}', space=vmem, size = 0x400, scoped, tag = 'input window, operand 5, single buffered']
    #allocation20 [shape = 's32[1]{0}', space=sflag, size = 0x4, scoped, tag = 'scoped memory for decoder_forward.1']
    #allocation21 [shape = 'u8[512]{0}', space=vmem, size = 0x400, scoped, tag = 'input window, operand 6, single buffered']
    #allocation22 [shape = 'u8[512]{0}', space=vmem, size = 0x400, scoped, tag = 'input window, operand 7, single buffered']
    #allocation23 [shape = 's32[1]{0}', space=sflag, size = 0x4, scoped, tag = 'scoped memory for decoder_forward.1']
    #allocation24 [shape = 'u8[7168]{0}', space=vmem, size = 0x1c00, scoped, tag = 'output window, operand 1, single buffered']
    %22 = vsyncpa [#allocation17], 0
    %23 = vsyncpa [#allocation20], 0
    %24 = vsyncpa [#allocation23], 0
    %25 = vsyncpa [#allocation18], 0
    // Predicated region
    $region2: #{decoder_forward.1} parent=1 // pred_check
      _
    $region3: #{decoder_forward.1} parent=1 // pred_check_branch
      %27 = sbr.rel (0) target = $region5
    $region4: #{decoder_forward.1} parent=1 // pred_region
      _
    $region5: #{decoder_forward.1} parent=1 // pred_fallthru
      _
    // Predicated region
    $region6: #{decoder_forward.1} parent=1 // pred_check
      _
    $region7: #{decoder_forward.1} parent=1 // pred_check_branch
      %29 = sbr.rel (0) target = $region9
    $region8: #{decoder_forward.1} parent=1 // pred_region
      _
    $region9: #{decoder_forward.1} parent=1 // pred_fallthru
      _
    // Predicated region
    $region10: #{decoder_forward.1} parent=1 // pred_check
      _
    $region11: #{decoder_forward.1} parent=1 // pred_check_branch
      %31 = sbr.rel (0) target = $region13
    $region12: #{decoder_forward.1} parent=1 // pred_region
      _
    $region13: #{decoder_forward.1} parent=1 // pred_fallthru
      _
    // Predicated region
    $region14: #{decoder_forward.1} parent=1 // pred_check
      _
    $region15: #{decoder_forward.1} parent=1 // pred_check_branch
      %33 = sbr.rel (0) target = $region17
    $region16: #{decoder_forward.1} parent=1 // pred_region
      _
    $region17: #{decoder_forward.1} parent=1 // pred_fallthru
      _
    // Predicated region
    $region18: #{decoder_forward.1} parent=1 // pred_check
      _
    $region19: #{decoder_forward.1} parent=1 // pred_check_branch
      %35 = sbr.rel (0) target = $region21
    $region20: #{decoder_forward.1} parent=1 // pred_region
      %s37 = ssub.s32 16, 16
      %38 = vsyncadd [#allocation17], %s37
      %s40 = sshll.u32 [#allocation16], 4
      %s41 = int_to_ptr.vmem [resolvable:$true] %s40
      %43 = dma.hbm_to_vmem [thread:$0]  %s4, 16, %s41, [#allocation17]
    $region21: #{decoder_forward.1} parent=1 // pred_fallthru
      _
    // Predicated region
    $region22: #{decoder_forward.1} parent=1 // pred_check
      _
    $region23: #{decoder_forward.1} parent=1 // pred_check_branch
      %45 = sbr.rel (0) target = $region25
    $region24: #{decoder_forward.1} parent=1 // pred_region
      %s47 = ssub.s32 16, 16
      %48 = vsyncadd [#allocation20], %s47
      %s50 = sshll.u32 [#allocation19], 4
      %s51 = int_to_ptr.vmem [resolvable:$true] %s50
      %53 = dma.hbm_to_vmem [thread:$0]  %s5, 16, %s51, [#allocation20]
    $region25: #{decoder_forward.1} parent=1 // pred_fallthru
      _
    // Predicated region
    $region26: #{decoder_forward.1} parent=1 // pred_check
      _
    $region27: #{decoder_forward.1} parent=1 // pred_check_branch
      %55 = sbr.rel (0) target = $region29
    $region28: #{decoder_forward.1} parent=1 // pred_region
      %s57 = ssub.s32 16, 16
      %58 = vsyncadd [#allocation20], %s57
      %s60 = sshll.u32 [#allocation21], 4
      %s61 = int_to_ptr.vmem [resolvable:$true] %s60
      %63 = dma.hbm_to_vmem [thread:$0]  %s6, 16, %s61, [#allocation20]
    $region29: #{decoder_forward.1} parent=1 // pred_fallthru
      _
    // Predicated region
    $region30: #{decoder_forward.1} parent=1 // pred_check
      _
    $region31: #{decoder_forward.1} parent=1 // pred_check_branch
      %65 = sbr.rel (0) target = $region33
    $region32: #{decoder_forward.1} parent=1 // pred_region
      %s67 = ssub.s32 16, 16
      %68 = vsyncadd [#allocation23], %s67
      %s70 = sshll.u32 [#allocation22], 4
      %s71 = int_to_ptr.vmem [resolvable:$true] %s70
      %73 = dma.hbm_to_vmem [thread:$0]  %s7, 16, %s71, [#allocation23]
    $region33: #{decoder_forward.1} parent=1 // pred_fallthru
      _
    // Predicated region
    $region34: #{decoder_forward.1} parent=1 // pred_check
      _
    $region35: #{decoder_forward.1} parent=1 // pred_check_branch
      %75 = sbr.rel (0) target = $region37
    $region36: #{decoder_forward.1} parent=1 // pred_region
      %76 = dma.done [#allocation17], 16
    $region37: #{decoder_forward.1} parent=1 // pred_fallthru
      _
    // Predicated region
    $region38: #{decoder_forward.1} parent=1 // pred_check
      _
    $region39: #{decoder_forward.1} parent=1 // pred_check_branch
      %78 = sbr.rel (0) target = $region41
    $region40: #{decoder_forward.1} parent=1 // pred_region
      %79 = dma.done [#allocation20], 16
    $region41: #{decoder_forward.1} parent=1 // pred_fallthru
      _
    // Predicated region
    $region42: #{decoder_forward.1} parent=1 // pred_check
      _
    $region43: #{decoder_forward.1} parent=1 // pred_check_branch
      %81 = sbr.rel (0) target = $region45
    $region44: #{decoder_forward.1} parent=1 // pred_region
      %82 = dma.done [#allocation20], 16
    $region45: #{decoder_forward.1} parent=1 // pred_fallthru
      _
    // Predicated region
    $region46: #{decoder_forward.1} parent=1 // pred_check
      _
    $region47: #{decoder_forward.1} parent=1 // pred_check_branch
      %84 = sbr.rel (0) target = $region49
    $region48: #{decoder_forward.1} parent=1 // pred_region
      %85 = dma.done [#allocation23], 16
    $region49: #{decoder_forward.1} parent=1 // pred_fallthru
      _
    %p88 = scmp.lt.u32.totalorder 168, 8
    %p89 = pneg %p88
    // Predicated region
    $region50: #{decoder_forward.1} parent=1 // pred_check
      _
    $region51: #{decoder_forward.1} parent=1 // pred_check_branch
      %91 = sbr.rel (%p88) target = $region53
    $region52: #{decoder_forward.1} parent=1 // pred_region
      %s107 = sand.u32 168, 7
      %p108 = scmp.eq.s32.totalorder %s107, 0
      // Predicated region
      $region65: #{decoder_forward.1} parent=52 // pred_check
        %p109 = pneg %p108
      $region66: #{decoder_forward.1} parent=52 // pred_check_branch
        %111 = sbr.rel (%p109) target = $region68
      $region67: #{decoder_forward.1} parent=52 // pred_region
        loop: start=0, step=1, limit=1
        $region69: #{decoder_forward.1} parent=67 // loop_pre_header
          _
        $region70: #{decoder_forward.1} parent=67 // loop_header
          %s113 = sphi 0, %s117
          %p114 = scmp.ge.s32.totalorder %s113, 1
          %s118 = sphi %s8, %s8
          %s119 = sphi [#allocation2], [#allocation2]
        $region71: #{decoder_forward.1} parent=67 // loop_header_branch
          %116 = sbr.rel (%p114) target = $region75
        $region72: #{decoder_forward.1} parent=67 // loop_body
          %v120 = vld [vmem:[%s118] sm:$0xff]
          %121 = vst [vmem:[%s119] sm:$0xff] %v120
          %v122 = vld [vmem:[%s118 + $0x8] sm:$0xff]
          %123 = vst [vmem:[%s119 + $0x8] sm:$0xff] %v122
          %v124 = vld [vmem:[%s118 + $0x10] sm:$0xff]
          %125 = vst [vmem:[%s119 + $0x10] sm:$0xff] %v124
          %v126 = vld [vmem:[%s118 + $0x18] sm:$0xff]
          %127 = vst [vmem:[%s119 + $0x18] sm:$0xff] %v126
          %v128 = vld [vmem:[%s118 + $0x20] sm:$0xff]
          %129 = vst [vmem:[%s119 + $0x20] sm:$0xff] %v128
          %v130 = vld [vmem:[%s118 + $0x28] sm:$0xff]
          %131 = vst [vmem:[%s119 + $0x28] sm:$0xff] %v130
          %v132 = vld [vmem:[%s118 + $0x30] sm:$0xff]
          %133 = vst [vmem:[%s119 + $0x30] sm:$0xff] %v132
          %v134 = vld [vmem:[%s118 + $0x38] sm:$0xff]
          %135 = vst [vmem:[%s119 + $0x38] sm:$0xff] %v134
          %v136 = vld [vmem:[%s118 + $0x40] sm:$0xff]
          %137 = vst [vmem:[%s119 + $0x40] sm:$0xff] %v136
          %v138 = vld [vmem:[%s118 + $0x48] sm:$0xff]
          %139 = vst [vmem:[%s119 + $0x48] sm:$0xff] %v138
          %v140 = vld [vmem:[%s118 + $0x50] sm:$0xff]
          %141 = vst [vmem:[%s119 + $0x50] sm:$0xff] %v140
          %v142 = vld [vmem:[%s118 + $0x58] sm:$0xff]
          %143 = vst [vmem:[%s119 + $0x58] sm:$0xff] %v142
          %v144 = vld [vmem:[%s118 + $0x60] sm:$0xff]
          %145 = vst [vmem:[%s119 + $0x60] sm:$0xff] %v144
          %v146 = vld [vmem:[%s118 + $0x68] sm:$0xff]
          %147 = vst [vmem:[%s119 + $0x68] sm:$0xff] %v146
          %v148 = vld [vmem:[%s118 + $0x70] sm:$0xff]
          %149 = vst [vmem:[%s119 + $0x70] sm:$0xff] %v148
          %v150 = vld [vmem:[%s118 + $0x78] sm:$0xff]
          %151 = vst [vmem:[%s119 + $0x78] sm:$0xff] %v150
          %v152 = vld [vmem:[%s118 + $0x80] sm:$0xff]
          %153 = vst [vmem:[%s119 + $0x80] sm:$0xff] %v152
          %v154 = vld [vmem:[%s118 + $0x88] sm:$0xff]
          %155 = vst [vmem:[%s119 + $0x88] sm:$0xff] %v154
          %v156 = vld [vmem:[%s118 + $0x90] sm:$0xff]
          %157 = vst [vmem:[%s119 + $0x90] sm:$0xff] %v156
          %v158 = vld [vmem:[%s118 + $0x98] sm:$0xff]
          %159 = vst [vmem:[%s119 + $0x98] sm:$0xff] %v158
          %v160 = vld [vmem:[%s118 + $0xa0] sm:$0xff]
          %161 = vst [vmem:[%s119 + $0xa0] sm:$0xff] %v160
        $region73: #{decoder_forward.1} parent=67 // loop_footer
          %s117 = sadd.s32 1, %s113
        $region74: #{decoder_forward.1} parent=67 // loop_footer_branch
          %112 = sbr.rel target = $region70
        $region75: #{decoder_forward.1} parent=67 // loop_exit
          _
      $region68: #{decoder_forward.1} parent=52 // pred_fallthru
        _
      %p162 = pneg %p108
      // Predicated region
      $region76: #{decoder_forward.1} parent=52 // pred_check
        _
      $region77: #{decoder_forward.1} parent=52 // pred_check_branch
        %164 = sbr.rel (%p108) target = $region79
      $region78: #{decoder_forward.1} parent=52 // pred_region
        %s165 = sand.u32 168, 7
      $region79: #{decoder_forward.1} parent=52 // pred_fallthru
        _
    $region53: #{decoder_forward.1} parent=1 // pred_fallthru
      _
    // Predicated region
    $region54: #{decoder_forward.1} parent=1 // pred_check
      %p92 = pneg %p88
    $region55: #{decoder_forward.1} parent=1 // pred_check_branch
      %94 = sbr.rel (%p92) target = $region57
    $region56: #{decoder_forward.1} parent=1 // pred_region
      %s95 = sshll.u32 1, 168
      %s96 = ssub.s32 %s95, 1
      loop: start=0, step=1, limit=1
      $region58: #{decoder_forward.1} parent=56 // loop_pre_header
        _
      $region59: #{decoder_forward.1} parent=56 // loop_header
        %s98 = sphi 0, %s102
        %p99 = scmp.ge.s32.totalorder %s98, 1
        %s103 = sphi %s8, %s8
        %s104 = sphi [#allocation2], [#allocation2]
      $region60: #{decoder_forward.1} parent=56 // loop_header_branch
        %101 = sbr.rel (%p99) target = $region64
      $region61: #{decoder_forward.1} parent=56 // loop_body
        %v105 = vld [vmem:[%s103] sm:%s96]
        %106 = vst [vmem:[%s104] sm:%s96] %v105
      $region62: #{decoder_forward.1} parent=56 // loop_footer
        %s102 = sadd.s32 1, %s98
      $region63: #{decoder_forward.1} parent=56 // loop_footer_branch
        %97 = sbr.rel target = $region59
      $region64: #{decoder_forward.1} parent=56 // loop_exit
        _
    $region57: #{decoder_forward.1} parent=1 // pred_fallthru
      _
    // Predicated region
    $region80: #{decoder_forward.1} parent=1 // pred_check
      _
    $region81: #{decoder_forward.1} parent=1 // pred_check_branch
      %168 = sbr.rel (0) target = $region83
    $region82: #{decoder_forward.1} parent=1 // pred_region
      %169 = vsyncadd [#allocation9], 2688
    $region83: #{decoder_forward.1} parent=1 // pred_fallthru
      _
    %s170 = scalar_lea.sflag [#allocation9], 1
    // Predicated region
    $region84: #{decoder_forward.1} parent=1 // pred_check
      _
    $region85: #{decoder_forward.1} parent=1 // pred_check_branch
      %172 = sbr.rel target = $region87
    $region86: #{decoder_forward.1} parent=1 // pred_region
      %173 = sst [smem:[#allocation28]] [#allocation27]
      %174 = sst [smem:[#allocation29]] [#allocation26]
    $region87: #{decoder_forward.1} parent=1 // pred_fallthru
      _
    %176 = shalt.err (0)
    %s178 = sshll.u32 [#allocation3], 4
    %s179 = int_to_ptr.vmem [resolvable:$true] %s178
    %181 = dma.hbm_to_vmem [thread:$0]  %s9, 2688, %s179, %s170
    %s182 = scalar_lea.sflag [#allocation9], 2
    // Predicated region
    $region88: #{decoder_forward.1} parent=1 // pred_check
      _
    $region89: #{decoder_forward.1} parent=1 // pred_check_branch
      %184 = sbr.rel target = $region91
    $region90: #{decoder_forward.1} parent=1 // pred_region
      %185 = sst [smem:[#allocation28]] [#allocation31]
      %186 = sst [smem:[#allocation29]] [#allocation30]
    $region91: #{decoder_forward.1} parent=1 // pred_fallthru
      _
    %188 = shalt.err (0)
    %s190 = sshll.u32 [#allocation4], 4
    %s191 = int_to_ptr.vmem [resolvable:$true] %s190
    %193 = dma.hbm_to_vmem [thread:$0]  %s10, 2688, %s191, %s182
    %s194 = scalar_lea.sflag [#allocation9], 3
    // Predicated region
    $region92: #{decoder_forward.1} parent=1 // pred_check
      _
    $region93: #{decoder_forward.1} parent=1 // pred_check_branch
      %196 = sbr.rel target = $region95
    $region94: #{decoder_forward.1} parent=1 // pred_region
      %197 = sst [smem:[#allocation28]] [#allocation33]
      %198 = sst [smem:[#allocation29]] [#allocation32]
    $region95: #{decoder_forward.1} parent=1 // pred_fallthru
      _
    %200 = shalt.err (0)
    %s202 = sshll.u32 [#allocation5], 4
    %s203 = int_to_ptr.vmem [resolvable:$true] %s202
    %205 = dma.hbm_to_vmem [thread:$0]  %s11, 2688, %s203, %s194
    %s206 = scalar_lea.sflag [#allocation9], 4
    // Predicated region
    $region96: #{decoder_forward.1} parent=1 // pred_check
      _
    $region97: #{decoder_forward.1} parent=1 // pred_check_branch
      %208 = sbr.rel target = $region99
    $region98: #{decoder_forward.1} parent=1 // pred_region
      %209 = sst [smem:[#allocation28]] [#allocation35]
      %210 = sst [smem:[#allocation29]] [#allocation34]
    $region99: #{decoder_forward.1} parent=1 // pred_fallthru
      _
    %212 = shalt.err (0)
    %s214 = sshll.u32 [#allocation6], 4
    %s215 = int_to_ptr.vmem [resolvable:$true] %s214
    %217 = dma.hbm_to_vmem [thread:$0]  %s12, 2688, %s215, %s206
    %s218 = scalar_lea.sflag [#allocation9], 5
    %p220 = scmp.lt.u32.totalorder 168, 8
    %p221 = pneg %p220
    // Predicated region
    $region100: #{decoder_forward.1} parent=1 // pred_check
      _
    $region101: #{decoder_forward.1} parent=1 // pred_check_branch
      %223 = sbr.rel (%p220) target = $region103
    $region102: #{decoder_forward.1} parent=1 // pred_region
      %s239 = sand.u32 168, 7
      %p240 = scmp.eq.s32.totalorder %s239, 0
      // Predicated region
      $region115: #{decoder_forward.1} parent=102 // pred_check
        %p241 = pneg %p240
      $region116: #{decoder_forward.1} parent=102 // pred_check_branch
        %243 = sbr.rel (%p241) target = $region118
      $region117: #{decoder_forward.1} parent=102 // pred_region
        loop: start=0, step=1, limit=1
        $region119: #{decoder_forward.1} parent=117 // loop_pre_header
          _
        $region120: #{decoder_forward.1} parent=117 // loop_header
          %s245 = sphi 0, %s249
          %p246 = scmp.ge.s32.totalorder %s245, 1
          %s250 = sphi %s13, %s13
          %s251 = sphi [#allocation7], [#allocation7]
        $region121: #{decoder_forward.1} parent=117 // loop_header_branch
          %248 = sbr.rel (%p246) target = $region125
        $region122: #{decoder_forward.1} parent=117 // loop_body
          %v252 = vld [vmem:[%s250] sm:$0xff]
          %253 = vst [vmem:[%s251] sm:$0xff] %v252
          %v254 = vld [vmem:[%s250 + $0x8] sm:$0xff]
          %255 = vst [vmem:[%s251 + $0x8] sm:$0xff] %v254
          %v256 = vld [vmem:[%s250 + $0x10] sm:$0xff]
          %257 = vst [vmem:[%s251 + $0x10] sm:$0xff] %v256
          %v258 = vld [vmem:[%s250 + $0x18] sm:$0xff]
          %259 = vst [vmem:[%s251 + $0x18] sm:$0xff] %v258
          %v260 = vld [vmem:[%s250 + $0x20] sm:$0xff]
          %261 = vst [vmem:[%s251 + $0x20] sm:$0xff] %v260
          %v262 = vld [vmem:[%s250 + $0x28] sm:$0xff]
          %263 = vst [vmem:[%s251 + $0x28] sm:$0xff] %v262
          %v264 = vld [vmem:[%s250 + $0x30] sm:$0xff]
          %265 = vst [vmem:[%s251 + $0x30] sm:$0xff] %v264
          %v266 = vld [vmem:[%s250 + $0x38] sm:$0xff]
          %267 = vst [vmem:[%s251 + $0x38] sm:$0xff] %v266
          %v268 = vld [vmem:[%s250 + $0x40] sm:$0xff]
          %269 = vst [vmem:[%s251 + $0x40] sm:$0xff] %v268
          %v270 = vld [vmem:[%s250 + $0x48] sm:$0xff]
          %271 = vst [vmem:[%s251 + $0x48] sm:$0xff] %v270
          %v272 = vld [vmem:[%s250 + $0x50] sm:$0xff]
          %273 = vst [vmem:[%s251 + $0x50] sm:$0xff] %v272
          %v274 = vld [vmem:[%s250 + $0x58] sm:$0xff]
          %275 = vst [vmem:[%s251 + $0x58] sm:$0xff] %v274
          %v276 = vld [vmem:[%s250 + $0x60] sm:$0xff]
          %277 = vst [vmem:[%s251 + $0x60] sm:$0xff] %v276
          %v278 = vld [vmem:[%s250 + $0x68] sm:$0xff]
          %279 = vst [vmem:[%s251 + $0x68] sm:$0xff] %v278
          %v280 = vld [vmem:[%s250 + $0x70] sm:$0xff]
          %281 = vst [vmem:[%s251 + $0x70] sm:$0xff] %v280
          %v282 = vld [vmem:[%s250 + $0x78] sm:$0xff]
          %283 = vst [vmem:[%s251 + $0x78] sm:$0xff] %v282
          %v284 = vld [vmem:[%s250 + $0x80] sm:$0xff]
          %285 = vst [vmem:[%s251 + $0x80] sm:$0xff] %v284
          %v286 = vld [vmem:[%s250 + $0x88] sm:$0xff]
          %287 = vst [vmem:[%s251 + $0x88] sm:$0xff] %v286
          %v288 = vld [vmem:[%s250 + $0x90] sm:$0xff]
          %289 = vst [vmem:[%s251 + $0x90] sm:$0xff] %v288
          %v290 = vld [vmem:[%s250 + $0x98] sm:$0xff]
          %291 = vst [vmem:[%s251 + $0x98] sm:$0xff] %v290
          %v292 = vld [vmem:[%s250 + $0xa0] sm:$0xff]
          %293 = vst [vmem:[%s251 + $0xa0] sm:$0xff] %v292
        $region123: #{decoder_forward.1} parent=117 // loop_footer
          %s249 = sadd.s32 1, %s245
        $region124: #{decoder_forward.1} parent=117 // loop_footer_branch
          %244 = sbr.rel target = $region120
        $region125: #{decoder_forward.1} parent=117 // loop_exit
          _
      $region118: #{decoder_forward.1} parent=102 // pred_fallthru
        _
      %p294 = pneg %p240
      // Predicated region
      $region126: #{decoder_forward.1} parent=102 // pred_check
        _
      $region127: #{decoder_forward.1} parent=102 // pred_check_branch
        %296 = sbr.rel (%p240) target = $region129
      $region128: #{decoder_forward.1} parent=102 // pred_region
        %s297 = sand.u32 168, 7
      $region129: #{decoder_forward.1} parent=102 // pred_fallthru
        _
    $region103: #{decoder_forward.1} parent=1 // pred_fallthru
      _
    // Predicated region
    $region104: #{decoder_forward.1} parent=1 // pred_check
      %p224 = pneg %p220
    $region105: #{decoder_forward.1} parent=1 // pred_check_branch
      %226 = sbr.rel (%p224) target = $region107
    $region106: #{decoder_forward.1} parent=1 // pred_region
      %s227 = sshll.u32 1, 168
      %s228 = ssub.s32 %s227, 1
      loop: start=0, step=1, limit=1
      $region108: #{decoder_forward.1} parent=106 // loop_pre_header
        _
      $region109: #{decoder_forward.1} parent=106 // loop_header
        %s230 = sphi 0, %s234
        %p231 = scmp.ge.s32.totalorder %s230, 1
        %s235 = sphi %s13, %s13
        %s236 = sphi [#allocation7], [#allocation7]
      $region110: #{decoder_forward.1} parent=106 // loop_header_branch
        %233 = sbr.rel (%p231) target = $region114
      $region111: #{decoder_forward.1} parent=106 // loop_body
        %v237 = vld [vmem:[%s235] sm:%s228]
        %238 = vst [vmem:[%s236] sm:%s228] %v237
      $region112: #{decoder_forward.1} parent=106 // loop_footer
        %s234 = sadd.s32 1, %s230
      $region113: #{decoder_forward.1} parent=106 // loop_footer_branch
        %229 = sbr.rel target = $region109
      $region114: #{decoder_forward.1} parent=106 // loop_exit
        _
    $region107: #{decoder_forward.1} parent=1 // pred_fallthru
      _
    // Predicated region
    $region130: #{decoder_forward.1} parent=1 // pred_check
      _
    $region131: #{decoder_forward.1} parent=1 // pred_check_branch
      %300 = sbr.rel (0) target = $region133
    $region132: #{decoder_forward.1} parent=1 // pred_region
      %301 = vsyncadd %s218, 2688
    $region133: #{decoder_forward.1} parent=1 // pred_fallthru
      _
    %s302 = scalar_lea.sflag [#allocation9], 6
    %p304 = scmp.lt.u32.totalorder 48, 8
    %p305 = pneg %p304
    // Predicated region
    $region134: #{decoder_forward.1} parent=1 // pred_check
      _
    $region135: #{decoder_forward.1} parent=1 // pred_check_branch
      %307 = sbr.rel (%p304) target = $region137
    $region136: #{decoder_forward.1} parent=1 // pred_region
      %s323 = sand.u32 48, 7
      %p324 = scmp.eq.s32.totalorder %s323, 0
      // Predicated region
      $region149: #{decoder_forward.1} parent=136 // pred_check
        %p325 = pneg %p324
      $region150: #{decoder_forward.1} parent=136 // pred_check_branch
        %327 = sbr.rel (%p325) target = $region152
      $region151: #{decoder_forward.1} parent=136 // pred_region
        loop: start=0, step=1, limit=1
        $region153: #{decoder_forward.1} parent=151 // loop_pre_header
          _
        $region154: #{decoder_forward.1} parent=151 // loop_header
          %s329 = sphi 0, %s333
          %p330 = scmp.ge.s32.totalorder %s329, 1
          %s334 = sphi %s14, %s14
          %s335 = sphi [#allocation8], [#allocation8]
        $region155: #{decoder_forward.1} parent=151 // loop_header_branch
          %332 = sbr.rel (%p330) target = $region159
        $region156: #{decoder_forward.1} parent=151 // loop_body
          %v336 = vld [vmem:[%s334] sm:$0xff]
          %337 = vst [vmem:[%s335] sm:$0xff] %v336
          %v338 = vld [vmem:[%s334 + $0x8] sm:$0xff]
          %339 = vst [vmem:[%s335 + $0x8] sm:$0xff] %v338
          %v340 = vld [vmem:[%s334 + $0x10] sm:$0xff]
          %341 = vst [vmem:[%s335 + $0x10] sm:$0xff] %v340
          %v342 = vld [vmem:[%s334 + $0x18] sm:$0xff]
          %343 = vst [vmem:[%s335 + $0x18] sm:$0xff] %v342
          %v344 = vld [vmem:[%s334 + $0x20] sm:$0xff]
          %345 = vst [vmem:[%s335 + $0x20] sm:$0xff] %v344
          %v346 = vld [vmem:[%s334 + $0x28] sm:$0xff]
          %347 = vst [vmem:[%s335 + $0x28] sm:$0xff] %v346
        $region157: #{decoder_forward.1} parent=151 // loop_footer
          %s333 = sadd.s32 1, %s329
        $region158: #{decoder_forward.1} parent=151 // loop_footer_branch
          %328 = sbr.rel target = $region154
        $region159: #{decoder_forward.1} parent=151 // loop_exit
          _
      $region152: #{decoder_forward.1} parent=136 // pred_fallthru
        _
      %p348 = pneg %p324
      // Predicated region
      $region160: #{decoder_forward.1} parent=136 // pred_check
        _
      $region161: #{decoder_forward.1} parent=136 // pred_check_branch
        %350 = sbr.rel (%p324) target = $region163
      $region162: #{decoder_forward.1} parent=136 // pred_region
        %s351 = sand.u32 48, 7
      $region163: #{decoder_forward.1} parent=136 // pred_fallthru
        _
    $region137: #{decoder_forward.1} parent=1 // pred_fallthru
      _
    // Predicated region
    $region138: #{decoder_forward.1} parent=1 // pred_check
      %p308 = pneg %p304
    $region139: #{decoder_forward.1} parent=1 // pred_check_branch
      %310 = sbr.rel (%p308) target = $region141
    $region140: #{decoder_forward.1} parent=1 // pred_region
      %s311 = sshll.u32 1, 48
      %s312 = ssub.s32 %s311, 1
      loop: start=0, step=1, limit=1
      $region142: #{decoder_forward.1} parent=140 // loop_pre_header
        _
      $region143: #{decoder_forward.1} parent=140 // loop_header
        %s314 = sphi 0, %s318
        %p315 = scmp.ge.s32.totalorder %s314, 1
        %s319 = sphi %s14, %s14
        %s320 = sphi [#allocation8], [#allocation8]
      $region144: #{decoder_forward.1} parent=140 // loop_header_branch
        %317 = sbr.rel (%p315) target = $region148
      $region145: #{decoder_forward.1} parent=140 // loop_body
        %v321 = vld [vmem:[%s319] sm:%s312]
        %322 = vst [vmem:[%s320] sm:%s312] %v321
      $region146: #{decoder_forward.1} parent=140 // loop_footer
        %s318 = sadd.s32 1, %s314
      $region147: #{decoder_forward.1} parent=140 // loop_footer_branch
        %313 = sbr.rel target = $region143
      $region148: #{decoder_forward.1} parent=140 // loop_exit
        _
    $region141: #{decoder_forward.1} parent=1 // pred_fallthru
      _
    // Predicated region
    $region164: #{decoder_forward.1} parent=1 // pred_check
      _
    $region165: #{decoder_forward.1} parent=1 // pred_check_branch
      %354 = sbr.rel (0) target = $region167
    $region166: #{decoder_forward.1} parent=1 // pred_region
      %355 = vsyncadd %s302, 768
    $region167: #{decoder_forward.1} parent=1 // pred_fallthru
      _
    %vm356 = vcmask 909312
    %357 = vst.msk [vmem:[#allocation10] sm:$0x1] %vm356, 0.0
    %358 = vst.msk [vmem:[#allocation10 + $0x10] sm:$0x1] %vm356, 0.0
    %359 = vst.msk [vmem:[#allocation10 + $0x8] sm:$0x1] %vm356, 0.0
    %360 = vst.msk [vmem:[#allocation10 + $0x18] sm:$0x1] %vm356, 0.0
    %361 = vst.msk [vmem:[#allocation11] sm:$0x1] %vm356, 0.0
    %362 = vst.msk [vmem:[#allocation11 + $0x10] sm:$0x1] %vm356, 0.0
    %363 = vst.msk [vmem:[#allocation11 + $0x8] sm:$0x1] %vm356, 0.0
    %364 = vst.msk [vmem:[#allocation11 + $0x18] sm:$0x1] %vm356, 0.0
    %365 = vst.msk [vmem:[#allocation12] sm:$0x1] %vm356, 0.0
    %366 = vst.msk [vmem:[#allocation12 + $0x10] sm:$0x1] %vm356, 0.0
    %367 = vst.msk [vmem:[#allocation12 + $0x8] sm:$0x1] %vm356, 0.0
    %368 = vst.msk [vmem:[#allocation12 + $0x18] sm:$0x1] %vm356, 0.0
    %369 = vst.msk [vmem:[#allocation13] sm:$0x1] %vm356, 0.0
    %370 = vst.msk [vmem:[#allocation13 + $0x10] sm:$0x1] %vm356, 0.0
    %371 = vst.msk [vmem:[#allocation13 + $0xf] sm:$0x1] %vm356, 0.0
    %372 = vst.msk [vmem:[#allocation13 + $0x1f] sm:$0x1] %vm356, 0.0
    %373 = vst.msk [vmem:[#allocation14] sm:$0x1] %vm356, 0.0
    %374 = vst.msk [vmem:[#allocation14 + $0x10] sm:$0x1] %vm356, 0.0
    %375 = vst.msk [vmem:[#allocation14 + $0xf] sm:$0x1] %vm356, 0.0
    %376 = vst.msk [vmem:[#allocation14 + $0x1f] sm:$0x1] %vm356, 0.0
    %vm377 = vcmask 221184
    %378 = vst.msk [vmem:[#allocation15] sm:$0x1] %vm377, 0.0
    %379 = vst.msk [vmem:[#allocation15 + $0x20] sm:$0x1] %vm377, 0.0
    %380 = vst.msk [vmem:[#allocation15 + $0x1d] sm:$0x1] %vm377, 0.0
    %381 = vst.msk [vmem:[#allocation15 + $0x3d] sm:$0x1] %vm377, 0.0
    %s382 = smul.u32 4, 3
    %s383 = smul.u32 %s382, 14
    %s384 = sshll.u32 %s383, 4
    %385 = dma.done [#allocation9], %s384
    %v386 = vld [vmem:[%s0] sm:$0x3]
    %v387 = vpack.c.bf16 %v386, %v386
    %v388 = vld [vmem:[#allocation2] sm:$0xff]
    %v389 = vld [vmem:[#allocation2 + $0x8] sm:$0xff]
    %v390 = vld [vmem:[#allocation2 + $0x10] sm:$0xff]
    %v391 = vld [vmem:[#allocation2 + $0x18] sm:$0xff]
    %v392 = vld [vmem:[#allocation2 + $0x20] sm:$0xff]
    %v393 = vld [vmem:[#allocation2 + $0x28] sm:$0xff]
    %v394 = vld [vmem:[#allocation2 + $0x30] sm:$0xff]
    %v395 = vld [vmem:[#allocation2 + $0x38] sm:$0xff]
    %v396 = vld [vmem:[#allocation2 + $0x40] sm:$0xff]
    %v397 = vld [vmem:[#allocation2 + $0x48] sm:$0xff]
    %v398 = vld [vmem:[#allocation2 + $0x50] sm:$0xff]
    %v399 = vld [vmem:[#allocation2 + $0x58] sm:$0xff]
    %v400 = vld [vmem:[#allocation2 + $0x60] sm:$0xff]
    %v401 = vld [vmem:[#allocation2 + $0x68] sm:$0xff]
    %v402 = vld [vmem:[#allocation2 + $0x70] sm:$0xff]
    %v403 = vld [vmem:[#allocation2 + $0x78] sm:$0xff]
    %v404 = vld [vmem:[#allocation2 + $0x80] sm:$0xff]
    %v405 = vld [vmem:[#allocation2 + $0x88] sm:$0xff]
    %v406 = vld [vmem:[#allocation2 + $0x90] sm:$0xff]
    %v407 = vld [vmem:[#allocation2 + $0x98] sm:$0xff]
    %v408 = vld [vmem:[#allocation2 + $0xa0] sm:$0xff]
    %v409 = vld [vmem:[%s1] sm:$0xff]
    %v410 = vld [vmem:[%s1 + $0x8] sm:$0x3f]
    %v413 = vlaneseq
    %v414 = vshrl.u32 %v413, 7
    %v415 = vsub.s32 0, %v414
    %v416 = vrot.slane %v409, %v415
    %v417 = vlaneseq
    %v418 = vshrl.u32 %v417, 7
    %v419 = vsub.s32 1, %v418
    %v420 = vrot.slane %v409, %v419
    %v421 = vlaneseq
    %v422 = vshrl.u32 %v421, 7
    %v423 = vsub.s32 2, %v422
    %v424 = vrot.slane %v409, %v423
    %v425 = vlaneseq
    %v426 = vshrl.u32 %v425, 7
    %v427 = vsub.s32 3, %v426
    %v428 = vrot.slane %v409, %v427
    %v429 = vlaneseq
    %v430 = vshrl.u32 %v429, 7
    %v431 = vsub.s32 4, %v430
    %v432 = vrot.slane %v409, %v431
    %v433 = vlaneseq
    %v434 = vshrl.u32 %v433, 7
    %v435 = vsub.s32 5, %v434
    %v436 = vrot.slane %v409, %v435
    %v437 = vlaneseq
    %v438 = vshrl.u32 %v437, 7
    %v439 = vsub.s32 6, %v438
    %v440 = vrot.slane %v409, %v439
    %v441 = vlaneseq
    %v442 = vshrl.u32 %v441, 7
    %v443 = vsub.s32 7, %v442
    %v444 = vrot.slane %v409, %v443
    %v445 = vlaneseq
    %v446 = vshrl.u32 %v445, 7
    %v447 = vsub.s32 0, %v446
    %v448 = vrot.slane %v410, %v447
    %v449 = vlaneseq
    %v450 = vshrl.u32 %v449, 7
    %v451 = vsub.s32 1, %v450
    %v452 = vrot.slane %v410, %v451
    %v453 = vlaneseq
    %v454 = vshrl.u32 %v453, 7
    %v455 = vsub.s32 2, %v454
    %v456 = vrot.slane %v410, %v455
    %v457 = vlaneseq
    %v458 = vshrl.u32 %v457, 7
    %v459 = vsub.s32 3, %v458
    %v460 = vrot.slane %v410, %v459
    %v461 = vlaneseq
    %v462 = vshrl.u32 %v461, 7
    %v463 = vsub.s32 4, %v462
    %v464 = vrot.slane %v410, %v463
    %v465 = vlaneseq
    %v466 = vshrl.u32 %v465, 7
    %v467 = vsub.s32 5, %v466
    %v468 = vrot.slane %v410, %v467
    %v504 = vunpack.c.l.b16 %v388
    %v505 = vunpack.c.h.b16 %v388
    %v506 = vunpack.c.l.b16 %v389
    %v507 = vunpack.c.h.b16 %v389
    %v508 = vunpack.c.l.b16 %v390
    %v509 = vunpack.c.h.b16 %v390
    %v510 = vunpack.c.l.b16 %v391
    %v511 = vunpack.c.h.b16 %v391
    %v512 = vunpack.c.l.b16 %v392
    %v513 = vunpack.c.h.b16 %v392
    %v514 = vunpack.c.l.b16 %v393
    %v515 = vunpack.c.h.b16 %v393
    %v516 = vunpack.c.l.b16 %v394
    %v517 = vunpack.c.h.b16 %v394
    %v518 = vunpack.c.l.b16 %v395
    %v519 = vunpack.c.h.b16 %v395
    %v520 = vunpack.c.l.b16 %v396
    %v521 = vunpack.c.h.b16 %v396
    %v522 = vunpack.c.l.b16 %v397
    %v523 = vunpack.c.h.b16 %v397
    %v524 = vunpack.c.l.b16 %v398
    %v525 = vunpack.c.h.b16 %v398
    %v526 = vunpack.c.l.b16 %v399
    %v527 = vunpack.c.h.b16 %v399
    %v528 = vunpack.c.l.b16 %v400
    %v529 = vunpack.c.h.b16 %v400
    %v530 = vunpack.c.l.b16 %v401
    %v531 = vunpack.c.h.b16 %v401
    %v532 = vunpack.c.l.b16 %v402
    %v533 = vunpack.c.h.b16 %v402
    %v534 = vunpack.c.l.b16 %v403
    %v535 = vunpack.c.h.b16 %v403
    %v536 = vunpack.c.l.b16 %v404
    %v537 = vunpack.c.h.b16 %v404
    %v538 = vunpack.c.l.b16 %v405
    %v539 = vunpack.c.h.b16 %v405
    %v540 = vunpack.c.l.b16 %v406
    %v541 = vunpack.c.h.b16 %v406
    %v542 = vunpack.c.l.b16 %v407
    %v543 = vunpack.c.h.b16 %v407
    %v544 = vunpack.c.l.b16 %v408
    %v545 = vunpack.c.h.b16 %v408
    %v546 = vpack.c.b16 %v518, %v504
    %v547 = vpack.c.b16 %v519, %v505
    %v548 = vpack.c.b16 %v520, %v506
    %v549 = vpack.c.b16 %v521, %v507
    %v550 = vpack.c.b16 %v522, %v508
    %v551 = vpack.c.b16 %v523, %v509
    %v552 = vpack.c.b16 %v524, %v510
    %v553 = vpack.c.b16 %v525, %v511
    %v554 = vpack.c.b16 %v526, %v512
    %v555 = vpack.c.b16 %v527, %v513
    %v556 = vpack.c.b16 %v528, %v514
    %v557 = vpack.c.b16 %v529, %v515
    %v558 = vpack.c.b16 %v530, %v516
    %v559 = vpack.c.b16 %v531, %v517
    %v560 = vpack.c.b16 %v532, %v532
    %v561 = vpack.c.b16 %v533, %v533
    %v562 = vpack.c.b16 %v534, %v534
    %v563 = vpack.c.b16 %v535, %v535
    %v564 = vpack.c.b16 %v536, %v536
    %v565 = vpack.c.b16 %v537, %v537
    %v566 = vpack.c.b16 %v538, %v538
    %v567 = vpack.c.b16 %v539, %v539
    %v568 = vpack.c.b16 %v540, %v540
    %v569 = vpack.c.b16 %v541, %v541
    %v570 = vpack.c.b16 %v542, %v542
    %v571 = vpack.c.b16 %v543, %v543
    %v572 = vpack.c.b16 %v544, %v544
    %v573 = vpack.c.b16 %v545, %v545
    %vm588 = vcmask 195584
    %v590 = vsel %vm588, %v387, 0
    %vm592 = vcmask 1043456
    %v594 = vsel %vm592, %v560, 0
    %v597 = vsel %vm592, %v561, 0
    %v600 = vsel %vm592, %v562, 0
    %v603 = vsel %vm592, %v563, 0
    %v606 = vsel %vm592, %v564, 0
    %v609 = vsel %vm592, %v565, 0
    %v612 = vsel %vm592, %v566, 0
    %v615 = vsel %vm592, %v567, 0
    %v618 = vsel %vm592, %v568, 0
    %v621 = vsel %vm592, %v569, 0
    %v624 = vsel %vm592, %v570, 0
    %v627 = vsel %vm592, %v571, 0
    %v630 = vsel %vm592, %v572, 0
    %v633 = vsel %vm592, %v573, 0
    %635 = vmatprep.subr.bf16.mxu0 0
    %636 = vmatpush1.bf16.msra.mxu0 0
    %637 = vmatprep.subr.bf16.mxu0 0
    %638 = vmatpush1.bf16.msra.mxu0 0
    %639 = vmatprep.subr.bf16.mxu0 0
    %640 = vmatpush1.bf16.msra.mxu0 0
    %641 = vmatprep.subr.bf16.mxu0 0
    %642 = vmatpush1.bf16.msra.mxu0 0
    %643 = vmatprep.subr.bf16.mxu0 0
    %644 = vmatpush1.bf16.msra.mxu0 0
    %645 = vmatprep.subr.bf16.mxu0 0
    %646 = vmatpush1.bf16.msra.mxu0 0
    %647 = vmatprep.subr.bf16.mxu0 %v597
    %648 = vmatpush1.bf16.msra.mxu0 %v594
    %649 = vmatprep.subr.bf16.mxu0 %v547
    %650 = vmatpush1.bf16.msra.mxu0 %v546
    %651 = vmatprep.subr.bf16.mxu0 0
    %652 = vmatpush2.bf16.msra.mxu0 0
    %653 = vmatprep.subr.bf16.mxu0 0
    %654 = vmatpush2.bf16.msra.mxu0 0
    %655 = vmatprep.subr.bf16.mxu0 0
    %656 = vmatpush2.bf16.msra.mxu0 0
    %657 = vmatprep.subr.bf16.mxu0 0
    %658 = vmatpush2.bf16.msra.mxu0 0
    %659 = vmatprep.subr.bf16.mxu0 0
    %660 = vmatpush2.bf16.msra.mxu0 0
    %661 = vmatprep.subr.bf16.mxu0 0
    %662 = vmatpush2.bf16.msra.mxu0 0
    %663 = vmatprep.subr.bf16.mxu0 0
    %664 = vmatpush2.bf16.msra.mxu0 0
    %665 = vmatprep.subr.bf16.mxu0 0
    %666 = vmatpush2.bf16.msra.mxu0 0
    %667 = vmatprep.mubr.bf16.mxu0 0
    %668 = vmatmul.mubr.bf16.gmra.mxu0 %v590
    %v669 = vpop.f32.mrf.mxu0
    %v670 = vadd.f32 %v416, %v669
    %v671 = vpop.f32.mrf.mxu0
    %v672 = vadd.f32 %v420, %v671
    %v673 = vpop.f32.mrf.mxu0
    %v674 = vpop.f32.mrf.mxu0
    %675 = vdwg.mxu0
    %676 = vmatprep.subr.bf16.mxu0 0
    %677 = vmatpush1.bf16.msra.mxu0 0
    %678 = vmatprep.subr.bf16.mxu0 0
    %679 = vmatpush1.bf16.msra.mxu0 0
    %680 = vmatprep.subr.bf16.mxu0 0
    %681 = vmatpush1.bf16.msra.mxu0 0
    %682 = vmatprep.subr.bf16.mxu0 0
    %683 = vmatpush1.bf16.msra.mxu0 0
    %684 = vmatprep.subr.bf16.mxu0 0
    %685 = vmatpush1.bf16.msra.mxu0 0
    %686 = vmatprep.subr.bf16.mxu0 0
    %687 = vmatpush1.bf16.msra.mxu0 0
    %688 = vmatprep.subr.bf16.mxu0 %v603
    %689 = vmatpush1.bf16.msra.mxu0 %v600
    %690 = vmatprep.subr.bf16.mxu0 %v549
    %691 = vmatpush1.bf16.msra.mxu0 %v548
    %692 = vmatprep.subr.bf16.mxu0 0
    %693 = vmatpush2.bf16.msra.mxu0 0
    %694 = vmatprep.subr.bf16.mxu0 0
    %695 = vmatpush2.bf16.msra.mxu0 0
    %696 = vmatprep.subr.bf16.mxu0 0
    %697 = vmatpush2.bf16.msra.mxu0 0
    %698 = vmatprep.subr.bf16.mxu0 0
    %699 = vmatpush2.bf16.msra.mxu0 0
    %700 = vmatprep.subr.bf16.mxu0 0
    %701 = vmatpush2.bf16.msra.mxu0 0
    %702 = vmatprep.subr.bf16.mxu0 0
    %703 = vmatpush2.bf16.msra.mxu0 0
    %704 = vmatprep.subr.bf16.mxu0 0
    %705 = vmatpush2.bf16.msra.mxu0 0
    %706 = vmatprep.subr.bf16.mxu0 0
    %707 = vmatpush2.bf16.msra.mxu0 0
    %708 = vmatprep.mubr.bf16.mxu0 0
    %709 = vmatmul.mubr.bf16.gmra.mxu0 %v590
    %v710 = vpop.f32.mrf.mxu0
    %v711 = vadd.f32 %v424, %v710
    %v712 = vpop.f32.mrf.mxu0
    %v713 = vadd.f32 %v428, %v712
    %v714 = vpop.f32.mrf.mxu0
    %v715 = vpop.f32.mrf.mxu0
    %716 = vdwg.mxu0
    %717 = vmatprep.subr.bf16.mxu0 0
    %718 = vmatpush1.bf16.msra.mxu0 0
    %719 = vmatprep.subr.bf16.mxu0 0
    %720 = vmatpush1.bf16.msra.mxu0 0
    %721 = vmatprep.subr.bf16.mxu0 0
    %722 = vmatpush1.bf16.msra.mxu0 0
    %723 = vmatprep.subr.bf16.mxu0 0
    %724 = vmatpush1.bf16.msra.mxu0 0
    %725 = vmatprep.subr.bf16.mxu0 0
    %726 = vmatpush1.bf16.msra.mxu0 0
    %727 = vmatprep.subr.bf16.mxu0 0
    %728 = vmatpush1.bf16.msra.mxu0 0
    %729 = vmatprep.subr.bf16.mxu0 %v609
    %730 = vmatpush1.bf16.msra.mxu0 %v606
    %731 = vmatprep.subr.bf16.mxu0 %v551
    %732 = vmatpush1.bf16.msra.mxu0 %v550
    %733 = vmatprep.subr.bf16.mxu0 0
    %734 = vmatpush2.bf16.msra.mxu0 0
    %735 = vmatprep.subr.bf16.mxu0 0
    %736 = vmatpush2.bf16.msra.mxu0 0
    %737 = vmatprep.subr.bf16.mxu0 0
    %738 = vmatpush2.bf16.msra.mxu0 0
    %739 = vmatprep.subr.bf16.mxu0 0
    %740 = vmatpush2.bf16.msra.mxu0 0
    %741 = vmatprep.subr.bf16.mxu0 0
    %742 = vmatpush2.bf16.msra.mxu0 0
    %743 = vmatprep.subr.bf16.mxu0 0
    %744 = vmatpush2.bf16.msra.mxu0 0
    %745 = vmatprep.subr.bf16.mxu0 0
    %746 = vmatpush2.bf16.msra.mxu0 0
    %747 = vmatprep.subr.bf16.mxu0 0
    %748 = vmatpush2.bf16.msra.mxu0 0
    %749 = vmatprep.mubr.bf16.mxu0 0
    %750 = vmatmul.mubr.bf16.gmra.mxu0 %v590
    %v751 = vpop.f32.mrf.mxu0
    %v752 = vadd.f32 %v432, %v751
    %v753 = vpop.f32.mrf.mxu0
    %v754 = vadd.f32 %v436, %v753
    %v755 = vpop.f32.mrf.mxu0
    %v756 = vpop.f32.mrf.mxu0
    %757 = vdwg.mxu0
    %758 = vmatprep.subr.bf16.mxu0 0
    %759 = vmatpush1.bf16.msra.mxu0 0
    %760 = vmatprep.subr.bf16.mxu0 0
    %761 = vmatpush1.bf16.msra.mxu0 0
    %762 = vmatprep.subr.bf16.mxu0 0
    %763 = vmatpush1.bf16.msra.mxu0 0
    %764 = vmatprep.subr.bf16.mxu0 0
    %765 = vmatpush1.bf16.msra.mxu0 0
    %766 = vmatprep.subr.bf16.mxu0 0
    %767 = vmatpush1.bf16.msra.mxu0 0
    %768 = vmatprep.subr.bf16.mxu0 0
    %769 = vmatpush1.bf16.msra.mxu0 0
    %770 = vmatprep.subr.bf16.mxu0 %v615
    %771 = vmatpush1.bf16.msra.mxu0 %v612
    %772 = vmatprep.subr.bf16.mxu0 %v553
    %773 = vmatpush1.bf16.msra.mxu0 %v552
    %774 = vmatprep.subr.bf16.mxu0 0
    %775 = vmatpush2.bf16.msra.mxu0 0
    %776 = vmatprep.subr.bf16.mxu0 0
    %777 = vmatpush2.bf16.msra.mxu0 0
    %778 = vmatprep.subr.bf16.mxu0 0
    %779 = vmatpush2.bf16.msra.mxu0 0
    %780 = vmatprep.subr.bf16.mxu0 0
    %781 = vmatpush2.bf16.msra.mxu0 0
    %782 = vmatprep.subr.bf16.mxu0 0
    %783 = vmatpush2.bf16.msra.mxu0 0
    %784 = vmatprep.subr.bf16.mxu0 0
    %785 = vmatpush2.bf16.msra.mxu0 0
    %786 = vmatprep.subr.bf16.mxu0 0
    %787 = vmatpush2.bf16.msra.mxu0 0
    %788 = vmatprep.subr.bf16.mxu0 0
    %789 = vmatpush2.bf16.msra.mxu0 0
    %790 = vmatprep.mubr.bf16.mxu0 0
    %791 = vmatmul.mubr.bf16.gmra.mxu0 %v590
    %v792 = vpop.f32.mrf.mxu0
    %v793 = vadd.f32 %v440, %v792
    %v794 = vpop.f32.mrf.mxu0
    %v795 = vadd.f32 %v444, %v794
    %v796 = vpop.f32.mrf.mxu0
    %v797 = vpop.f32.mrf.mxu0
    %798 = vdwg.mxu0
    %799 = vmatprep.subr.bf16.mxu0 0
    %800 = vmatpush1.bf16.msra.mxu0 0
    %801 = vmatprep.subr.bf16.mxu0 0
    %802 = vmatpush1.bf16.msra.mxu0 0
    %803 = vmatprep.subr.bf16.mxu0 0
    %804 = vmatpush1.bf16.msra.mxu0 0
    %805 = vmatprep.subr.bf16.mxu0 0
    %806 = vmatpush1.bf16.msra.mxu0 0
    %807 = vmatprep.subr.bf16.mxu0 0
    %808 = vmatpush1.bf16.msra.mxu0 0
    %809 = vmatprep.subr.bf16.mxu0 0
    %810 = vmatpush1.bf16.msra.mxu0 0
    %811 = vmatprep.subr.bf16.mxu0 %v621
    %812 = vmatpush1.bf16.msra.mxu0 %v618
    %813 = vmatprep.subr.bf16.mxu0 %v555
    %814 = vmatpush1.bf16.msra.mxu0 %v554
    %815 = vmatprep.subr.bf16.mxu0 0
    %816 = vmatpush2.bf16.msra.mxu0 0
    %817 = vmatprep.subr.bf16.mxu0 0
    %818 = vmatpush2.bf16.msra.mxu0 0
    %819 = vmatprep.subr.bf16.mxu0 0
    %820 = vmatpush2.bf16.msra.mxu0 0
    %821 = vmatprep.subr.bf16.mxu0 0
    %822 = vmatpush2.bf16.msra.mxu0 0
    %823 = vmatprep.subr.bf16.mxu0 0
    %824 = vmatpush2.bf16.msra.mxu0 0
    %825 = vmatprep.subr.bf16.mxu0 0
    %826 = vmatpush2.bf16.msra.mxu0 0
    %827 = vmatprep.subr.bf16.mxu0 0
    %828 = vmatpush2.bf16.msra.mxu0 0
    %829 = vmatprep.subr.bf16.mxu0 0
    %830 = vmatpush2.bf16.msra.mxu0 0
    %831 = vmatprep.mubr.bf16.mxu0 0
    %832 = vmatmul.mubr.bf16.gmra.mxu0 %v590
    %v833 = vpop.f32.mrf.mxu0
    %v834 = vadd.f32 %v448, %v833
    %v835 = vpop.f32.mrf.mxu0
    %v836 = vadd.f32 %v452, %v835
    %v837 = vpop.f32.mrf.mxu0
    %v838 = vpop.f32.mrf.mxu0
    %839 = vdwg.mxu0
    %840 = vmatprep.subr.bf16.mxu0 0
    %841 = vmatpush1.bf16.msra.mxu0 0
    %842 = vmatprep.subr.bf16.mxu0 0
    %843 = vmatpush1.bf16.msra.mxu0 0
    %844 = vmatprep.subr.bf16.mxu0 0
    %845 = vmatpush1.bf16.msra.mxu0 0
    %846 = vmatprep.subr.bf16.mxu0 0
    %847 = vmatpush1.bf16.msra.mxu0 0
    %848 = vmatprep.subr.bf16.mxu0 0
    %849 = vmatpush1.bf16.msra.mxu0 0
    %850 = vmatprep.subr.bf16.mxu0 0
    %851 = vmatpush1.bf16.msra.mxu0 0
    %852 = vmatprep.subr.bf16.mxu0 %v627
    %853 = vmatpush1.bf16.msra.mxu0 %v624
    %854 = vmatprep.subr.bf16.mxu0 %v557
    %855 = vmatpush1.bf16.msra.mxu0 %v556
    %856 = vmatprep.subr.bf16.mxu0 0
    %857 = vmatpush2.bf16.msra.mxu0 0
    %858 = vmatprep.subr.bf16.mxu0 0
    %859 = vmatpush2.bf16.msra.mxu0 0
    %860 = vmatprep.subr.bf16.mxu0 0
    %861 = vmatpush2.bf16.msra.mxu0 0
    %862 = vmatprep.subr.bf16.mxu0 0
    %863 = vmatpush2.bf16.msra.mxu0 0
    %864 = vmatprep.subr.bf16.mxu0 0
    %865 = vmatpush2.bf16.msra.mxu0 0
    %866 = vmatprep.subr.bf16.mxu0 0
    %867 = vmatpush2.bf16.msra.mxu0 0
    %868 = vmatprep.subr.bf16.mxu0 0
    %869 = vmatpush2.bf16.msra.mxu0 0
    %870 = vmatprep.subr.bf16.mxu0 0
    %871 = vmatpush2.bf16.msra.mxu0 0
    %872 = vmatprep.mubr.bf16.mxu0 0
    %873 = vmatmul.mubr.bf16.gmra.mxu0 %v590
    %v874 = vpop.f32.mrf.mxu0
    %v875 = vadd.f32 %v456, %v874
    %v876 = vpop.f32.mrf.mxu0
    %v877 = vadd.f32 %v460, %v876
    %v878 = vpop.f32.mrf.mxu0
    %v879 = vpop.f32.mrf.mxu0
    %880 = vdwg.mxu0
    %881 = vmatprep.subr.bf16.mxu0 0
    %882 = vmatpush1.bf16.msra.mxu0 0
    %883 = vmatprep.subr.bf16.mxu0 0
    %884 = vmatpush1.bf16.msra.mxu0 0
    %885 = vmatprep.subr.bf16.mxu0 0
    %886 = vmatpush1.bf16.msra.mxu0 0
    %887 = vmatprep.subr.bf16.mxu0 0
    %888 = vmatpush1.bf16.msra.mxu0 0
    %889 = vmatprep.subr.bf16.mxu0 0
    %890 = vmatpush1.bf16.msra.mxu0 0
    %891 = vmatprep.subr.bf16.mxu0 0
    %892 = vmatpush1.bf16.msra.mxu0 0
    %893 = vmatprep.subr.bf16.mxu0 %v633
    %894 = vmatpush1.bf16.msra.mxu0 %v630
    %895 = vmatprep.subr.bf16.mxu0 %v559
    %896 = vmatpush1.bf16.msra.mxu0 %v558
    %897 = vmatprep.subr.bf16.mxu0 0
    %898 = vmatpush2.bf16.msra.mxu0 0
    %899 = vmatprep.subr.bf16.mxu0 0
    %900 = vmatpush2.bf16.msra.mxu0 0
    %901 = vmatprep.subr.bf16.mxu0 0
    %902 = vmatpush2.bf16.msra.mxu0 0
    %903 = vmatprep.subr.bf16.mxu0 0
    %904 = vmatpush2.bf16.msra.mxu0 0
    %905 = vmatprep.subr.bf16.mxu0 0
    %906 = vmatpush2.bf16.msra.mxu0 0
    %907 = vmatprep.subr.bf16.mxu0 0
    %908 = vmatpush2.bf16.msra.mxu0 0
    %909 = vmatprep.subr.bf16.mxu0 0
    %910 = vmatpush2.bf16.msra.mxu0 0
    %911 = vmatprep.subr.bf16.mxu0 0
    %912 = vmatpush2.bf16.msra.mxu0 0
    %913 = vmatprep.mubr.bf16.mxu0 0
    %914 = vmatmul.mubr.bf16.gmra.mxu0 %v590
    %v915 = vpop.f32.mrf.mxu0
    %v916 = vadd.f32 %v464, %v915
    %v917 = vpop.f32.mrf.mxu0
    %v918 = vadd.f32 %v468, %v917
    %v919 = vpop.f32.mrf.mxu0
    %v920 = vpop.f32.mrf.mxu0
    %921 = vdwg.mxu0
    %v922 = vmax.f32 %v670, 0.0
    %v923 = vmax.f32 %v672, 0.0
    %v924 = vmax.f32 %v711, 0.0
    %v925 = vmax.f32 %v713, 0.0
    %v926 = vmax.f32 %v752, 0.0
    %v927 = vmax.f32 %v754, 0.0
    %v928 = vmax.f32 %v793, 0.0
    %v929 = vmax.f32 %v795, 0.0
    %v930 = vmax.f32 %v834, 0.0
    %v931 = vmax.f32 %v836, 0.0
    %v932 = vmax.f32 %v875, 0.0
    %v933 = vmax.f32 %v877, 0.0
    %v934 = vmax.f32 %v916, 0.0
    %v935 = vmax.f32 %v918, 0.0
    %v943 = vcombine.low %v922, %v923
    %v944 = vcombine.low %v924, %v925
    %v946 = vunpack.c.l.s4 1983009808
    %v947 = vunpack.c.0.s8 %v946
    %v948 = vlaneseq
    %v949 = vshrl.u32 %v948, 7
    %v950 = vsub.s32 %v947, %v949
    %v951 = vrot.slane %v943, %v950
    %v953 = vunpack.c.l.s4 1983009808
    %v954 = vunpack.c.0.s8 %v953
    %v955 = vlaneseq
    %v956 = vshrl.u32 %v955, 7
    %v957 = vsub.s32 %v954, %v956
    %v958 = vrot.slane %v944, %v957
    %v959 = vcombine.low %v951, %v958
    %v960 = vcombine.low %v926, %v927
    %v962 = vunpack.c.l.s4 1983009808
    %v963 = vunpack.c.0.s8 %v962
    %v964 = vlaneseq
    %v965 = vshrl.u32 %v964, 7
    %v966 = vsub.s32 %v963, %v965
    %v967 = vrot.slane %v960, %v966
    %v969 = vunpack.c.l.s4 1983009808
    %v970 = vunpack.c.0.s8 %v969
    %v971 = vlaneseq
    %v972 = vshrl.u32 %v971, 7
    %v973 = vsub.s32 %v970, %v972
    %v974 = vrot.slane %v928, %v973
    %v975 = vcombine.low %v967, %v974
    %978 = vst [vmem:[#allocation24] sm:$0xff] %v959
    %vm979 = vcmask 1041408
    %vm980 = vcmask 1043458
    %vm981 = vmor %vm980, %vm979
    %vm982 = vcmask 128004
    %vm983 = vmor %vm982, %vm981
    %984 = vst.msk [vmem:[#allocation24 + $0x8] sm:$0x3f] %vm983, %v975
    %985 = vst.msk [vmem:[#allocation10 + $0x1] sm:$0x1] %vm356, %v929
    %s986 = scalar_lea.vmem [#allocation10], 16
    %vm987 = vcmask 910337
    %988 = vst.msk [vmem:[%s986] sm:$0x2] %vm987, %v929
    %989 = vst.msk [vmem:[#allocation10 + $0x2] sm:$0x1] %vm356, %v930
    %990 = vst.msk [vmem:[%s986 + $0x1] sm:$0x2] %vm987, %v930
    %991 = vst.msk [vmem:[#allocation10 + $0x3] sm:$0x1] %vm356, %v931
    %992 = vst.msk [vmem:[%s986 + $0x2] sm:$0x2] %vm987, %v931
    %993 = vst.msk [vmem:[#allocation10 + $0x4] sm:$0x1] %vm356, %v932
    %994 = vst.msk [vmem:[%s986 + $0x3] sm:$0x2] %vm987, %v932
    %995 = vst.msk [vmem:[#allocation10 + $0x5] sm:$0x1] %vm356, %v933
    %996 = vst.msk [vmem:[%s986 + $0x4] sm:$0x2] %vm987, %v933
    %997 = vst.msk [vmem:[#allocation10 + $0x6] sm:$0x1] %vm356, %v934
    %998 = vst.msk [vmem:[%s986 + $0x5] sm:$0x2] %vm987, %v934
    %999 = vst.msk [vmem:[#allocation10 + $0x7] sm:$0x1] %vm356, %v935
    %1000 = vst.msk [vmem:[%s986 + $0x6] sm:$0x2] %vm987, %v935
    %s1001 = smul.u32 %s383, 1
    %s1002 = sshll.u32 %s1001, 4
    %1003 = dma.done %s170, %s1002
    %v1004 = vld [vmem:[#allocation10] sm:$0x7f]
    %v1005 = vpack.c.bf16 %v1004, %v1004
    %v1006 = vld [vmem:[#allocation3] sm:$0xf]
    %v1007 = vld [vmem:[#allocation3 + $0x4] sm:$0xf]
    %v1008 = vld [vmem:[#allocation3 + $0x8] sm:$0xf]
    %v1009 = vld [vmem:[#allocation3 + $0xc] sm:$0xf]
    %v1010 = vld [vmem:[#allocation3 + $0x10] sm:$0xf]
    %v1011 = vld [vmem:[#allocation3 + $0x14] sm:$0xf]
    %v1012 = vld [vmem:[#allocation3 + $0x18] sm:$0xf]
    %v1013 = vld [vmem:[#allocation3 + $0x1c] sm:$0xf]
    %v1014 = vld [vmem:[#allocation3 + $0x20] sm:$0xf]
    %v1015 = vld [vmem:[#allocation3 + $0x24] sm:$0xf]
    %v1016 = vld [vmem:[#allocation3 + $0x28] sm:$0xf]
    %v1017 = vld [vmem:[#allocation3 + $0x2c] sm:$0xf]
    %v1018 = vld [vmem:[#allocation3 + $0x30] sm:$0xf]
    %v1019 = vld [vmem:[#allocation3 + $0x34] sm:$0xf]
    %v1020 = vld [vmem:[#allocation10 + $0x1] sm:$0x7f]
    %v1021 = vpack.c.bf16 %v1020, %v1020
    %s1022 = scalar_lea.vmem [#allocation3], 56
    %v1023 = vld [vmem:[%s1022] sm:$0xf]
    %v1024 = vld [vmem:[%s1022 + $0x4] sm:$0xf]
    %v1025 = vld [vmem:[%s1022 + $0x8] sm:$0xf]
    %v1026 = vld [vmem:[%s1022 + $0xc] sm:$0xf]
    %v1027 = vld [vmem:[%s1022 + $0x10] sm:$0xf]
    %v1028 = vld [vmem:[%s1022 + $0x14] sm:$0xf]
    %v1029 = vld [vmem:[%s1022 + $0x18] sm:$0xf]
    %v1030 = vld [vmem:[%s1022 + $0x1c] sm:$0xf]
    %v1031 = vld [vmem:[%s1022 + $0x20] sm:$0xf]
    %v1032 = vld [vmem:[%s1022 + $0x24] sm:$0xf]
    %v1033 = vld [vmem:[%s1022 + $0x28] sm:$0xf]
    %v1034 = vld [vmem:[%s1022 + $0x2c] sm:$0xf]
    %v1035 = vld [vmem:[%s1022 + $0x30] sm:$0xf]
    %v1036 = vld [vmem:[%s1022 + $0x34] sm:$0xf]
    %v1051 = vunpack.c.l.b16 %v1023
    %v1052 = vunpack.c.l.b16 %v1024
    %v1053 = vunpack.c.l.b16 %v1025
    %v1054 = vunpack.c.l.b16 %v1026
    %v1055 = vunpack.c.l.b16 %v1027
    %v1056 = vunpack.c.l.b16 %v1028
    %v1057 = vunpack.c.l.b16 %v1029
    %v1058 = vunpack.c.l.b16 %v1030
    %v1059 = vunpack.c.l.b16 %v1031
    %v1060 = vunpack.c.l.b16 %v1032
    %v1061 = vunpack.c.l.b16 %v1033
    %v1062 = vunpack.c.l.b16 %v1034
    %v1063 = vunpack.c.l.b16 %v1035
    %v1064 = vunpack.c.l.b16 %v1036
    %v1065 = vpack.c.b16 %v1052, %v1051
    %v1066 = vpack.c.b16 %v1054, %v1053
    %v1067 = vpack.c.b16 %v1056, %v1055
    %v1068 = vpack.c.b16 %v1058, %v1057
    %v1069 = vpack.c.b16 %v1060, %v1059
    %v1070 = vpack.c.b16 %v1062, %v1061
    %v1071 = vpack.c.b16 %v1064, %v1063
    %vm1079 = vcmask 916480
    %v1081 = vsel %vm1079, %v1021, 0
    %1083 = vmatprep.subr.bf16.mxu0 0
    %1084 = vmatpush1.bf16.msra.mxu0 0
    %1085 = vmatprep.subr.bf16.mxu0 0
    %1086 = vmatpush1.bf16.msra.mxu0 %v1071
    %1087 = vmatprep.subr.bf16.mxu0 0
    %1088 = vmatpush1.bf16.msra.mxu0 %v1070
    %1089 = vmatprep.subr.bf16.mxu0 0
    %1090 = vmatpush1.bf16.msra.mxu0 %v1069
    %1091 = vmatprep.subr.bf16.mxu0 0
    %1092 = vmatpush1.bf16.msra.mxu0 %v1068
    %1093 = vmatprep.subr.bf16.mxu0 0
    %1094 = vmatpush1.bf16.msra.mxu0 %v1067
    %1095 = vmatprep.subr.bf16.mxu0 0
    %1096 = vmatpush1.bf16.msra.mxu0 %v1066
    %1097 = vmatprep.subr.bf16.mxu0 0
    %1098 = vmatpush1.bf16.msra.mxu0 %v1065
    %1099 = vmatprep.subr.bf16.mxu0 0
    %1100 = vmatpush2.bf16.msra.mxu0 0
    %1101 = vmatprep.subr.bf16.mxu0 0
    %1102 = vmatpush2.bf16.msra.mxu0 0
    %1103 = vmatprep.subr.bf16.mxu0 0
    %1104 = vmatpush2.bf16.msra.mxu0 0
    %1105 = vmatprep.subr.bf16.mxu0 0
    %1106 = vmatpush2.bf16.msra.mxu0 0
    %1107 = vmatprep.subr.bf16.mxu0 0
    %1108 = vmatpush2.bf16.msra.mxu0 0
    %1109 = vmatprep.subr.bf16.mxu0 0
    %1110 = vmatpush2.bf16.msra.mxu0 0
    %1111 = vmatprep.subr.bf16.mxu0 0
    %1112 = vmatpush2.bf16.msra.mxu0 0
    %1113 = vmatprep.subr.bf16.mxu0 0
    %1114 = vmatpush2.bf16.msra.mxu0 0
    %1115 = vmatprep.mubr.bf16.mxu0 0
    %1116 = vmatmul.mubr.bf16.gmra.mxu0 %v1081
    %v1117 = vpop.f32.mrf.mxu0
    %v1118 = vadd.f32 0.0, %v1117
    %v1119 = vpop.f32.mrf.mxu0
    %v1120 = vpop.f32.mrf.mxu0
    %v1121 = vpop.f32.mrf.mxu0
    %1122 = vdwg.mxu0
    %v1137 = vunpack.c.l.b16 %v1006
    %v1138 = vunpack.c.l.b16 %v1007
    %v1139 = vunpack.c.l.b16 %v1008
    %v1140 = vunpack.c.l.b16 %v1009
    %v1141 = vunpack.c.l.b16 %v1010
    %v1142 = vunpack.c.l.b16 %v1011
    %v1143 = vunpack.c.l.b16 %v1012
    %v1144 = vunpack.c.l.b16 %v1013
    %v1145 = vunpack.c.l.b16 %v1014
    %v1146 = vunpack.c.l.b16 %v1015
    %v1147 = vunpack.c.l.b16 %v1016
    %v1148 = vunpack.c.l.b16 %v1017
    %v1149 = vunpack.c.l.b16 %v1018
    %v1150 = vunpack.c.l.b16 %v1019
    %v1151 = vpack.c.b16 %v1138, %v1137
    %v1152 = vpack.c.b16 %v1140, %v1139
    %v1153 = vpack.c.b16 %v1142, %v1141
    %v1154 = vpack.c.b16 %v1144, %v1143
    %v1155 = vpack.c.b16 %v1146, %v1145
    %v1156 = vpack.c.b16 %v1148, %v1147
    %v1157 = vpack.c.b16 %v1150, %v1149
    %v1166 = vsel %vm1079, %v1005, 0
    %1168 = vmatprep.subr.bf16.mxu0 0
    %1169 = vmatpush1.bf16.msra.mxu0 0
    %1170 = vmatprep.subr.bf16.mxu0 0
    %1171 = vmatpush1.bf16.msra.mxu0 %v1157
    %1172 = vmatprep.subr.bf16.mxu0 0
    %1173 = vmatpush1.bf16.msra.mxu0 %v1156
    %1174 = vmatprep.subr.bf16.mxu0 0
    %1175 = vmatpush1.bf16.msra.mxu0 %v1155
    %1176 = vmatprep.subr.bf16.mxu0 0
    %1177 = vmatpush1.bf16.msra.mxu0 %v1154
    %1178 = vmatprep.subr.bf16.mxu0 0
    %1179 = vmatpush1.bf16.msra.mxu0 %v1153
    %1180 = vmatprep.subr.bf16.mxu0 0
    %1181 = vmatpush1.bf16.msra.mxu0 %v1152
    %1182 = vmatprep.subr.bf16.mxu0 0
    %1183 = vmatpush1.bf16.msra.mxu0 %v1151
    %1184 = vmatprep.subr.bf16.mxu0 0
    %1185 = vmatpush2.bf16.msra.mxu0 0
    %1186 = vmatprep.subr.bf16.mxu0 0
    %1187 = vmatpush2.bf16.msra.mxu0 0
    %1188 = vmatprep.subr.bf16.mxu0 0
    %1189 = vmatpush2.bf16.msra.mxu0 0
    %1190 = vmatprep.subr.bf16.mxu0 0
    %1191 = vmatpush2.bf16.msra.mxu0 0
    %1192 = vmatprep.subr.bf16.mxu0 0
    %1193 = vmatpush2.bf16.msra.mxu0 0
    %1194 = vmatprep.subr.bf16.mxu0 0
    %1195 = vmatpush2.bf16.msra.mxu0 0
    %1196 = vmatprep.subr.bf16.mxu0 0
    %1197 = vmatpush2.bf16.msra.mxu0 0
    %1198 = vmatprep.subr.bf16.mxu0 0
    %1199 = vmatpush2.bf16.msra.mxu0 0
    %1200 = vmatprep.mubr.bf16.mxu0 0
    %1201 = vmatmul.mubr.bf16.gmra.mxu0 %v1166
    %v1202 = vpop.f32.mrf.mxu0
    %v1203 = vadd.f32 %v1118, %v1202
    %v1204 = vpop.f32.mrf.mxu0
    %v1205 = vpop.f32.mrf.mxu0
    %v1206 = vpop.f32.mrf.mxu0
    %1207 = vdwg.mxu0
    %v1208 = vld [vmem:[#allocation10 + $0x2] sm:$0x7f]
    %v1209 = vpack.c.bf16 %v1208, %v1208
    %s1210 = scalar_lea.vmem [#allocation3], 112
    %v1211 = vld [vmem:[%s1210] sm:$0xf]
    %v1212 = vld [vmem:[%s1210 + $0x4] sm:$0xf]
    %v1213 = vld [vmem:[%s1210 + $0x8] sm:$0xf]
    %v1214 = vld [vmem:[%s1210 + $0xc] sm:$0xf]
    %v1215 = vld [vmem:[%s1210 + $0x10] sm:$0xf]
    %v1216 = vld [vmem:[%s1210 + $0x14] sm:$0xf]
    %v1217 = vld [vmem:[%s1210 + $0x18] sm:$0xf]
    %v1218 = vld [vmem:[%s1210 + $0x1c] sm:$0xf]
    %v1219 = vld [vmem:[%s1210 + $0x20] sm:$0xf]
    %v1220 = vld [vmem:[%s1210 + $0x24] sm:$0xf]
    %v1221 = vld [vmem:[%s1210 + $0x28] sm:$0xf]
    %v1222 = vld [vmem:[%s1210 + $0x2c] sm:$0xf]
    %v1223 = vld [vmem:[%s1210 + $0x30] sm:$0xf]
    %v1224 = vld [vmem:[%s1210 + $0x34] sm:$0xf]
    %v1239 = vunpack.c.l.b16 %v1211
    %v1240 = vunpack.c.l.b16 %v1212
    %v1241 = vunpack.c.l.b16 %v1213
    %v1242 = vunpack.c.l.b16 %v1214
    %v1243 = vunpack.c.l.b16 %v1215
    %v1244 = vunpack.c.l.b16 %v1216
    %v1245 = vunpack.c.l.b16 %v1217
    %v1246 = vunpack.c.l.b16 %v1218
    %v1247 = vunpack.c.l.b16 %v1219
    %v1248 = vunpack.c.l.b16 %v1220
    %v1249 = vunpack.c.l.b16 %v1221
    %v1250 = vunpack.c.l.b16 %v1222
    %v1251 = vunpack.c.l.b16 %v1223
    %v1252 = vunpack.c.l.b16 %v1224
    %v1253 = vpack.c.b16 %v1240, %v1239
    %v1254 = vpack.c.b16 %v1242, %v1241
    %v1255 = vpack.c.b16 %v1244, %v1243
    %v1256 = vpack.c.b16 %v1246, %v1245
    %v1257 = vpack.c.b16 %v1248, %v1247
    %v1258 = vpack.c.b16 %v1250, %v1249
    %v1259 = vpack.c.b16 %v1252, %v1251
    %v1268 = vsel %vm1079, %v1209, 0
    %1270 = vmatprep.subr.bf16.mxu0 0
    %1271 = vmatpush1.bf16.msra.mxu0 0
    %1272 = vmatprep.subr.bf16.mxu0 0
    %1273 = vmatpush1.bf16.msra.mxu0 %v1259
    %1274 = vmatprep.subr.bf16.mxu0 0
    %1275 = vmatpush1.bf16.msra.mxu0 %v1258
    %1276 = vmatprep.subr.bf16.mxu0 0
    %1277 = vmatpush1.bf16.msra.mxu0 %v1257
    %1278 = vmatprep.subr.bf16.mxu0 0
    %1279 = vmatpush1.bf16.msra.mxu0 %v1256
    %1280 = vmatprep.subr.bf16.mxu0 0
    %1281 = vmatpush1.bf16.msra.mxu0 %v1255
    %1282 = vmatprep.subr.bf16.mxu0 0
    %1283 = vmatpush1.bf16.msra.mxu0 %v1254
    %1284 = vmatprep.subr.bf16.mxu0 0
    %1285 = vmatpush1.bf16.msra.mxu0 %v1253
    %1286 = vmatprep.subr.bf16.mxu0 0
    %1287 = vmatpush2.bf16.msra.mxu0 0
    %1288 = vmatprep.subr.bf16.mxu0 0
    %1289 = vmatpush2.bf16.msra.mxu0 0
    %1290 = vmatprep.subr.bf16.mxu0 0
    %1291 = vmatpush2.bf16.msra.mxu0 0
    %1292 = vmatprep.subr.bf16.mxu0 0
    %1293 = vmatpush2.bf16.msra.mxu0 0
    %1294 = vmatprep.subr.bf16.mxu0 0
    %1295 = vmatpush2.bf16.msra.mxu0 0
    %1296 = vmatprep.subr.bf16.mxu0 0
    %1297 = vmatpush2.bf16.msra.mxu0 0
    %1298 = vmatprep.subr.bf16.mxu0 0
    %1299 = vmatpush2.bf16.msra.mxu0 0
    %1300 = vmatprep.subr.bf16.mxu0 0
    %1301 = vmatpush2.bf16.msra.mxu0 0
    %1302 = vmatprep.mubr.bf16.mxu0 0
    %1303 = vmatmul.mubr.bf16.gmra.mxu0 %v1268
    %v1304 = vpop.f32.mrf.mxu0
    %v1305 = vadd.f32 0.0, %v1304
    %v1306 = vpop.f32.mrf.mxu0
    %v1307 = vpop.f32.mrf.mxu0
    %v1308 = vpop.f32.mrf.mxu0
    %1309 = vdwg.mxu0
    %v1310 = vadd.f32 %v1203, %v1305
    %v1311 = vld [vmem:[%s2] sm:$0x1]
    %v1313 = vlaneseq
    %v1314 = vshrl.u32 %v1313, 7
    %v1315 = vsub.s32 0, %v1314
    %v1316 = vrot.slane %v1311, %v1315
    %v1318 = vadd.f32 %v1310, %v1316
    %v1319 = vmax.f32 %v1318, 0.0
    %vm1320 = vcmask 915456
    %1321 = vst.msk [vmem:[#allocation11 + $0x1] sm:$0x7f] %vm1320, %v1319
    %v1322 = vld [vmem:[%s986] sm:$0x7f]
    %v1323 = vpack.c.bf16 %v1322, %v1322
    %v1324 = vld [vmem:[#allocation3] sm:$0xf]
    %v1325 = vld [vmem:[#allocation3 + $0x4] sm:$0xf]
    %v1326 = vld [vmem:[#allocation3 + $0x8] sm:$0xf]
    %v1327 = vld [vmem:[#allocation3 + $0xc] sm:$0xf]
    %v1328 = vld [vmem:[#allocation3 + $0x10] sm:$0xf]
    %v1329 = vld [vmem:[#allocation3 + $0x14] sm:$0xf]
    %v1330 = vld [vmem:[#allocation3 + $0x18] sm:$0xf]
    %v1331 = vld [vmem:[#allocation3 + $0x1c] sm:$0xf]
    %v1332 = vld [vmem:[#allocation3 + $0x20] sm:$0xf]
    %v1333 = vld [vmem:[#allocation3 + $0x24] sm:$0xf]
    %v1334 = vld [vmem:[#allocation3 + $0x28] sm:$0xf]
    %v1335 = vld [vmem:[#allocation3 + $0x2c] sm:$0xf]
    %v1336 = vld [vmem:[#allocation3 + $0x30] sm:$0xf]
    %v1337 = vld [vmem:[#allocation3 + $0x34] sm:$0xf]
    %v1338 = vld [vmem:[%s986 + $0x1] sm:$0x7f]
    %v1339 = vpack.c.bf16 %v1338, %v1338
    %v1340 = vld [vmem:[%s1022] sm:$0xf]
    %v1341 = vld [vmem:[%s1022 + $0x4] sm:$0xf]
    %v1342 = vld [vmem:[%s1022 + $0x8] sm:$0xf]
    %v1343 = vld [vmem:[%s1022 + $0xc] sm:$0xf]
    %v1344 = vld [vmem:[%s1022 + $0x10] sm:$0xf]
    %v1345 = vld [vmem:[%s1022 + $0x14] sm:$0xf]
    %v1346 = vld [vmem:[%s1022 + $0x18] sm:$0xf]
    %v1347 = vld [vmem:[%s1022 + $0x1c] sm:$0xf]
    %v1348 = vld [vmem:[%s1022 + $0x20] sm:$0xf]
    %v1349 = vld [vmem:[%s1022 + $0x24] sm:$0xf]
    %v1350 = vld [vmem:[%s1022 + $0x28] sm:$0xf]
    %v1351 = vld [vmem:[%s1022 + $0x2c] sm:$0xf]
    %v1352 = vld [vmem:[%s1022 + $0x30] sm:$0xf]
    %v1353 = vld [vmem:[%s1022 + $0x34] sm:$0xf]
    %v1368 = vunpack.c.l.b16 %v1340
    %v1369 = vunpack.c.l.b16 %v1341
    %v1370 = vunpack.c.l.b16 %v1342
    %v1371 = vunpack.c.l.b16 %v1343
    %v1372 = vunpack.c.l.b16 %v1344
    %v1373 = vunpack.c.l.b16 %v1345
    %v1374 = vunpack.c.l.b16 %v1346
    %v1375 = vunpack.c.l.b16 %v1347
    %v1376 = vunpack.c.l.b16 %v1348
    %v1377 = vunpack.c.l.b16 %v1349
    %v1378 = vunpack.c.l.b16 %v1350
    %v1379 = vunpack.c.l.b16 %v1351
    %v1380 = vunpack.c.l.b16 %v1352
    %v1381 = vunpack.c.l.b16 %v1353
    %v1382 = vpack.c.b16 %v1369, %v1368
    %v1383 = vpack.c.b16 %v1371, %v1370
    %v1384 = vpack.c.b16 %v1373, %v1372
    %v1385 = vpack.c.b16 %v1375, %v1374
    %v1386 = vpack.c.b16 %v1377, %v1376
    %v1387 = vpack.c.b16 %v1379, %v1378
    %v1388 = vpack.c.b16 %v1381, %v1380
    %v1397 = vsel %vm1079, %v1339, 0
    %1399 = vmatprep.subr.bf16.mxu0 0
    %1400 = vmatpush1.bf16.msra.mxu0 0
    %1401 = vmatprep.subr.bf16.mxu0 0
    %1402 = vmatpush1.bf16.msra.mxu0 %v1388
    %1403 = vmatprep.subr.bf16.mxu0 0
    %1404 = vmatpush1.bf16.msra.mxu0 %v1387
    %1405 = vmatprep.subr.bf16.mxu0 0
    %1406 = vmatpush1.bf16.msra.mxu0 %v1386
    %1407 = vmatprep.subr.bf16.mxu0 0
    %1408 = vmatpush1.bf16.msra.mxu0 %v1385
    %1409 = vmatprep.subr.bf16.mxu0 0
    %1410 = vmatpush1.bf16.msra.mxu0 %v1384
    %1411 = vmatprep.subr.bf16.mxu0 0
    %1412 = vmatpush1.bf16.msra.mxu0 %v1383
    %1413 = vmatprep.subr.bf16.mxu0 0
    %1414 = vmatpush1.bf16.msra.mxu0 %v1382
    %1415 = vmatprep.subr.bf16.mxu0 0
    %1416 = vmatpush2.bf16.msra.mxu0 0
    %1417 = vmatprep.subr.bf16.mxu0 0
    %1418 = vmatpush2.bf16.msra.mxu0 0
    %1419 = vmatprep.subr.bf16.mxu0 0
    %1420 = vmatpush2.bf16.msra.mxu0 0
    %1421 = vmatprep.subr.bf16.mxu0 0
    %1422 = vmatpush2.bf16.msra.mxu0 0
    %1423 = vmatprep.subr.bf16.mxu0 0
    %1424 = vmatpush2.bf16.msra.mxu0 0
    %1425 = vmatprep.subr.bf16.mxu0 0
    %1426 = vmatpush2.bf16.msra.mxu0 0
    %1427 = vmatprep.subr.bf16.mxu0 0
    %1428 = vmatpush2.bf16.msra.mxu0 0
    %1429 = vmatprep.subr.bf16.mxu0 0
    %1430 = vmatpush2.bf16.msra.mxu0 0
    %1431 = vmatprep.mubr.bf16.mxu0 0
    %1432 = vmatmul.mubr.bf16.gmra.mxu0 %v1397
    %v1433 = vpop.f32.mrf.mxu0
    %v1434 = vadd.f32 0.0, %v1433
    %v1435 = vpop.f32.mrf.mxu0
    %v1436 = vpop.f32.mrf.mxu0
    %v1437 = vpop.f32.mrf.mxu0
    %1438 = vdwg.mxu0
    %v1453 = vunpack.c.l.b16 %v1324
    %v1454 = vunpack.c.l.b16 %v1325
    %v1455 = vunpack.c.l.b16 %v1326
    %v1456 = vunpack.c.l.b16 %v1327
    %v1457 = vunpack.c.l.b16 %v1328
    %v1458 = vunpack.c.l.b16 %v1329
    %v1459 = vunpack.c.l.b16 %v1330
    %v1460 = vunpack.c.l.b16 %v1331
    %v1461 = vunpack.c.l.b16 %v1332
    %v1462 = vunpack.c.l.b16 %v1333
    %v1463 = vunpack.c.l.b16 %v1334
    %v1464 = vunpack.c.l.b16 %v1335
    %v1465 = vunpack.c.l.b16 %v1336
    %v1466 = vunpack.c.l.b16 %v1337
    %v1467 = vpack.c.b16 %v1454, %v1453
    %v1468 = vpack.c.b16 %v1456, %v1455
    %v1469 = vpack.c.b16 %v1458, %v1457
    %v1470 = vpack.c.b16 %v1460, %v1459
    %v1471 = vpack.c.b16 %v1462, %v1461
    %v1472 = vpack.c.b16 %v1464, %v1463
    %v1473 = vpack.c.b16 %v1466, %v1465
    %v1482 = vsel %vm1079, %v1323, 0
    %1484 = vmatprep.subr.bf16.mxu0 0
    %1485 = vmatpush1.bf16.msra.mxu0 0
    %1486 = vmatprep.subr.bf16.mxu0 0
    %1487 = vmatpush1.bf16.msra.mxu0 %v1473
    %1488 = vmatprep.subr.bf16.mxu0 0
    %1489 = vmatpush1.bf16.msra.mxu0 %v1472
    %1490 = vmatprep.subr.bf16.mxu0 0
    %1491 = vmatpush1.bf16.msra.mxu0 %v1471
    %1492 = vmatprep.subr.bf16.mxu0 0
    %1493 = vmatpush1.bf16.msra.mxu0 %v1470
    %1494 = vmatprep.subr.bf16.mxu0 0
    %1495 = vmatpush1.bf16.msra.mxu0 %v1469
    %1496 = vmatprep.subr.bf16.mxu0 0
    %1497 = vmatpush1.bf16.msra.mxu0 %v1468
    %1498 = vmatprep.subr.bf16.mxu0 0
    %1499 = vmatpush1.bf16.msra.mxu0 %v1467
    %1500 = vmatprep.subr.bf16.mxu0 0
    %1501 = vmatpush2.bf16.msra.mxu0 0
    %1502 = vmatprep.subr.bf16.mxu0 0
    %1503 = vmatpush2.bf16.msra.mxu0 0
    %1504 = vmatprep.subr.bf16.mxu0 0
    %1505 = vmatpush2.bf16.msra.mxu0 0
    %1506 = vmatprep.subr.bf16.mxu0 0
    %1507 = vmatpush2.bf16.msra.mxu0 0
    %1508 = vmatprep.subr.bf16.mxu0 0
    %1509 = vmatpush2.bf16.msra.mxu0 0
    %1510 = vmatprep.subr.bf16.mxu0 0
    %1511 = vmatpush2.bf16.msra.mxu0 0
    %1512 = vmatprep.subr.bf16.mxu0 0
    %1513 = vmatpush2.bf16.msra.mxu0 0
    %1514 = vmatprep.subr.bf16.mxu0 0
    %1515 = vmatpush2.bf16.msra.mxu0 0
    %1516 = vmatprep.mubr.bf16.mxu0 0
    %1517 = vmatmul.mubr.bf16.gmra.mxu0 %v1482
    %v1518 = vpop.f32.mrf.mxu0
    %v1519 = vadd.f32 %v1434, %v1518
    %v1520 = vpop.f32.mrf.mxu0
    %v1521 = vpop.f32.mrf.mxu0
    %v1522 = vpop.f32.mrf.mxu0
    %1523 = vdwg.mxu0
    %v1524 = vld [vmem:[%s986 + $0x2] sm:$0x7f]
    %v1525 = vpack.c.bf16 %v1524, %v1524
    %v1526 = vld [vmem:[%s1210] sm:$0xf]
    %v1527 = vld [vmem:[%s1210 + $0x4] sm:$0xf]
    %v1528 = vld [vmem:[%s1210 + $0x8] sm:$0xf]
    %v1529 = vld [vmem:[%s1210 + $0xc] sm:$0xf]
    %v1530 = vld [vmem:[%s1210 + $0x10] sm:$0xf]
    %v1531 = vld [vmem:[%s1210 + $0x14] sm:$0xf]
    %v1532 = vld [vmem:[%s1210 + $0x18] sm:$0xf]
    %v1533 = vld [vmem:[%s1210 + $0x1c] sm:$0xf]
    %v1534 = vld [vmem:[%s1210 + $0x20] sm:$0xf]
    %v1535 = vld [vmem:[%s1210 + $0x24] sm:$0xf]
    %v1536 = vld [vmem:[%s1210 + $0x28] sm:$0xf]
    %v1537 = vld [vmem:[%s1210 + $0x2c] sm:$0xf]
    %v1538 = vld [vmem:[%s1210 + $0x30] sm:$0xf]
    %v1539 = vld [vmem:[%s1210 + $0x34] sm:$0xf]
    %v1554 = vunpack.c.l.b16 %v1526
    %v1555 = vunpack.c.l.b16 %v1527
    %v1556 = vunpack.c.l.b16 %v1528
    %v1557 = vunpack.c.l.b16 %v1529
    %v1558 = vunpack.c.l.b16 %v1530
    %v1559 = vunpack.c.l.b16 %v1531
    %v1560 = vunpack.c.l.b16 %v1532
    %v1561 = vunpack.c.l.b16 %v1533
    %v1562 = vunpack.c.l.b16 %v1534
    %v1563 = vunpack.c.l.b16 %v1535
    %v1564 = vunpack.c.l.b16 %v1536
    %v1565 = vunpack.c.l.b16 %v1537
    %v1566 = vunpack.c.l.b16 %v1538
    %v1567 = vunpack.c.l.b16 %v1539
    %v1568 = vpack.c.b16 %v1555, %v1554
    %v1569 = vpack.c.b16 %v1557, %v1556
    %v1570 = vpack.c.b16 %v1559, %v1558
    %v1571 = vpack.c.b16 %v1561, %v1560
    %v1572 = vpack.c.b16 %v1563, %v1562
    %v1573 = vpack.c.b16 %v1565, %v1564
    %v1574 = vpack.c.b16 %v1567, %v1566
    %v1583 = vsel %vm1079, %v1525, 0
    %1585 = vmatprep.subr.bf16.mxu0 0
    %1586 = vmatpush1.bf16.msra.mxu0 0
    %1587 = vmatprep.subr.bf16.mxu0 0
    %1588 = vmatpush1.bf16.msra.mxu0 %v1574
    %1589 = vmatprep.subr.bf16.mxu0 0
    %1590 = vmatpush1.bf16.msra.mxu0 %v1573
    %1591 = vmatprep.subr.bf16.mxu0 0
    %1592 = vmatpush1.bf16.msra.mxu0 %v1572
    %1593 = vmatprep.subr.bf16.mxu0 0
    %1594 = vmatpush1.bf16.msra.mxu0 %v1571
    %1595 = vmatprep.subr.bf16.mxu0 0
    %1596 = vmatpush1.bf16.msra.mxu0 %v1570
    %1597 = vmatprep.subr.bf16.mxu0 0
    %1598 = vmatpush1.bf16.msra.mxu0 %v1569
    %1599 = vmatprep.subr.bf16.mxu0 0
    %1600 = vmatpush1.bf16.msra.mxu0 %v1568
    %1601 = vmatprep.subr.bf16.mxu0 0
    %1602 = vmatpush2.bf16.msra.mxu0 0
    %1603 = vmatprep.subr.bf16.mxu0 0
    %1604 = vmatpush2.bf16.msra.mxu0 0
    %1605 = vmatprep.subr.bf16.mxu0 0
    %1606 = vmatpush2.bf16.msra.mxu0 0
    %1607 = vmatprep.subr.bf16.mxu0 0
    %1608 = vmatpush2.bf16.msra.mxu0 0
    %1609 = vmatprep.subr.bf16.mxu0 0
    %1610 = vmatpush2.bf16.msra.mxu0 0
    %1611 = vmatprep.subr.bf16.mxu0 0
    %1612 = vmatpush2.bf16.msra.mxu0 0
    %1613 = vmatprep.subr.bf16.mxu0 0
    %1614 = vmatpush2.bf16.msra.mxu0 0
    %1615 = vmatprep.subr.bf16.mxu0 0
    %1616 = vmatpush2.bf16.msra.mxu0 0
    %1617 = vmatprep.mubr.bf16.mxu0 0
    %1618 = vmatmul.mubr.bf16.gmra.mxu0 %v1583
    %v1619 = vpop.f32.mrf.mxu0
    %v1620 = vadd.f32 0.0, %v1619
    %v1621 = vpop.f32.mrf.mxu0
    %v1622 = vpop.f32.mrf.mxu0
    %v1623 = vpop.f32.mrf.mxu0
    %1624 = vdwg.mxu0
    %v1625 = vadd.f32 %v1519, %v1620
    %v1626 = vld [vmem:[%s2] sm:$0x1]
    %v1628 = vlaneseq
    %v1629 = vshrl.u32 %v1628, 7
    %v1630 = vsub.s32 0, %v1629
    %v1631 = vrot.slane %v1626, %v1630
    %v1633 = vadd.f32 %v1625, %v1631
    %v1634 = vmax.f32 %v1633, 0.0
    %s1635 = scalar_lea.vmem [#allocation11], 16
    %1636 = vst.msk [vmem:[%s1635 + $0x1] sm:$0x7f] %vm1320, %v1634
    %s1637 = sshll.u32 %s1001, 4
    %1638 = dma.done %s182, %s1637
    %v1639 = vld [vmem:[#allocation11] sm:$0x7f]
    %v1640 = vpack.c.bf16 %v1639, %v1639
    %v1641 = vld [vmem:[#allocation4] sm:$0xf]
    %v1642 = vld [vmem:[#allocation4 + $0x4] sm:$0xf]
    %v1643 = vld [vmem:[#allocation4 + $0x8] sm:$0xf]
    %v1644 = vld [vmem:[#allocation4 + $0xc] sm:$0xf]
    %v1645 = vld [vmem:[#allocation4 + $0x10] sm:$0xf]
    %v1646 = vld [vmem:[#allocation4 + $0x14] sm:$0xf]
    %v1647 = vld [vmem:[#allocation4 + $0x18] sm:$0xf]
    %v1648 = vld [vmem:[#allocation4 + $0x1c] sm:$0xf]
    %v1649 = vld [vmem:[#allocation4 + $0x20] sm:$0xf]
    %v1650 = vld [vmem:[#allocation4 + $0x24] sm:$0xf]
    %v1651 = vld [vmem:[#allocation4 + $0x28] sm:$0xf]
    %v1652 = vld [vmem:[#allocation4 + $0x2c] sm:$0xf]
    %v1653 = vld [vmem:[#allocation4 + $0x30] sm:$0xf]
    %v1654 = vld [vmem:[#allocation4 + $0x34] sm:$0xf]
    %v1655 = vld [vmem:[#allocation11 + $0x1] sm:$0x7f]
    %v1656 = vpack.c.bf16 %v1655, %v1655
    %s1657 = scalar_lea.vmem [#allocation4], 56
    %v1658 = vld [vmem:[%s1657] sm:$0xf]
    %v1659 = vld [vmem:[%s1657 + $0x4] sm:$0xf]
    %v1660 = vld [vmem:[%s1657 + $0x8] sm:$0xf]
    %v1661 = vld [vmem:[%s1657 + $0xc] sm:$0xf]
    %v1662 = vld [vmem:[%s1657 + $0x10] sm:$0xf]
    %v1663 = vld [vmem:[%s1657 + $0x14] sm:$0xf]
    %v1664 = vld [vmem:[%s1657 + $0x18] sm:$0xf]
    %v1665 = vld [vmem:[%s1657 + $0x1c] sm:$0xf]
    %v1666 = vld [vmem:[%s1657 + $0x20] sm:$0xf]
    %v1667 = vld [vmem:[%s1657 + $0x24] sm:$0xf]
    %v1668 = vld [vmem:[%s1657 + $0x28] sm:$0xf]
    %v1669 = vld [vmem:[%s1657 + $0x2c] sm:$0xf]
    %v1670 = vld [vmem:[%s1657 + $0x30] sm:$0xf]
    %v1671 = vld [vmem:[%s1657 + $0x34] sm:$0xf]
    %v1686 = vunpack.c.l.b16 %v1658
    %v1687 = vunpack.c.l.b16 %v1659
    %v1688 = vunpack.c.l.b16 %v1660
    %v1689 = vunpack.c.l.b16 %v1661
    %v1690 = vunpack.c.l.b16 %v1662
    %v1691 = vunpack.c.l.b16 %v1663
    %v1692 = vunpack.c.l.b16 %v1664
    %v1693 = vunpack.c.l.b16 %v1665
    %v1694 = vunpack.c.l.b16 %v1666
    %v1695 = vunpack.c.l.b16 %v1667
    %v1696 = vunpack.c.l.b16 %v1668
    %v1697 = vunpack.c.l.b16 %v1669
    %v1698 = vunpack.c.l.b16 %v1670
    %v1699 = vunpack.c.l.b16 %v1671
    %v1700 = vpack.c.b16 %v1687, %v1686
    %v1701 = vpack.c.b16 %v1689, %v1688
    %v1702 = vpack.c.b16 %v1691, %v1690
    %v1703 = vpack.c.b16 %v1693, %v1692
    %v1704 = vpack.c.b16 %v1695, %v1694
    %v1705 = vpack.c.b16 %v1697, %v1696
    %v1706 = vpack.c.b16 %v1699, %v1698
    %v1715 = vsel %vm1079, %v1656, 0
    %1717 = vmatprep.subr.bf16.mxu0 0
    %1718 = vmatpush1.bf16.msra.mxu0 0
    %1719 = vmatprep.subr.bf16.mxu0 0
    %1720 = vmatpush1.bf16.msra.mxu0 %v1706
    %1721 = vmatprep.subr.bf16.mxu0 0
    %1722 = vmatpush1.bf16.msra.mxu0 %v1705
    %1723 = vmatprep.subr.bf16.mxu0 0
    %1724 = vmatpush1.bf16.msra.mxu0 %v1704
    %1725 = vmatprep.subr.bf16.mxu0 0
    %1726 = vmatpush1.bf16.msra.mxu0 %v1703
    %1727 = vmatprep.subr.bf16.mxu0 0
    %1728 = vmatpush1.bf16.msra.mxu0 %v1702
    %1729 = vmatprep.subr.bf16.mxu0 0
    %1730 = vmatpush1.bf16.msra.mxu0 %v1701
    %1731 = vmatprep.subr.bf16.mxu0 0
    %1732 = vmatpush1.bf16.msra.mxu0 %v1700
    %1733 = vmatprep.subr.bf16.mxu0 0
    %1734 = vmatpush2.bf16.msra.mxu0 0
    %1735 = vmatprep.subr.bf16.mxu0 0
    %1736 = vmatpush2.bf16.msra.mxu0 0
    %1737 = vmatprep.subr.bf16.mxu0 0
    %1738 = vmatpush2.bf16.msra.mxu0 0
    %1739 = vmatprep.subr.bf16.mxu0 0
    %1740 = vmatpush2.bf16.msra.mxu0 0
    %1741 = vmatprep.subr.bf16.mxu0 0
    %1742 = vmatpush2.bf16.msra.mxu0 0
    %1743 = vmatprep.subr.bf16.mxu0 0
    %1744 = vmatpush2.bf16.msra.mxu0 0
    %1745 = vmatprep.subr.bf16.mxu0 0
    %1746 = vmatpush2.bf16.msra.mxu0 0
    %1747 = vmatprep.subr.bf16.mxu0 0
    %1748 = vmatpush2.bf16.msra.mxu0 0
    %1749 = vmatprep.mubr.bf16.mxu0 0
    %1750 = vmatmul.mubr.bf16.gmra.mxu0 %v1715
    %v1751 = vpop.f32.mrf.mxu0
    %v1752 = vadd.f32 0.0, %v1751
    %v1753 = vpop.f32.mrf.mxu0
    %v1754 = vpop.f32.mrf.mxu0
    %v1755 = vpop.f32.mrf.mxu0
    %1756 = vdwg.mxu0
    %v1771 = vunpack.c.l.b16 %v1641
    %v1772 = vunpack.c.l.b16 %v1642
    %v1773 = vunpack.c.l.b16 %v1643
    %v1774 = vunpack.c.l.b16 %v1644
    %v1775 = vunpack.c.l.b16 %v1645
    %v1776 = vunpack.c.l.b16 %v1646
    %v1777 = vunpack.c.l.b16 %v1647
    %v1778 = vunpack.c.l.b16 %v1648
    %v1779 = vunpack.c.l.b16 %v1649
    %v1780 = vunpack.c.l.b16 %v1650
    %v1781 = vunpack.c.l.b16 %v1651
    %v1782 = vunpack.c.l.b16 %v1652
    %v1783 = vunpack.c.l.b16 %v1653
    %v1784 = vunpack.c.l.b16 %v1654
    %v1785 = vpack.c.b16 %v1772, %v1771
    %v1786 = vpack.c.b16 %v1774, %v1773
    %v1787 = vpack.c.b16 %v1776, %v1775
    %v1788 = vpack.c.b16 %v1778, %v1777
    %v1789 = vpack.c.b16 %v1780, %v1779
    %v1790 = vpack.c.b16 %v1782, %v1781
    %v1791 = vpack.c.b16 %v1784, %v1783
    %v1800 = vsel %vm1079, %v1640, 0
    %1802 = vmatprep.subr.bf16.mxu0 0
    %1803 = vmatpush1.bf16.msra.mxu0 0
    %1804 = vmatprep.subr.bf16.mxu0 0
    %1805 = vmatpush1.bf16.msra.mxu0 %v1791
    %1806 = vmatprep.subr.bf16.mxu0 0
    %1807 = vmatpush1.bf16.msra.mxu0 %v1790
    %1808 = vmatprep.subr.bf16.mxu0 0
    %1809 = vmatpush1.bf16.msra.mxu0 %v1789
    %1810 = vmatprep.subr.bf16.mxu0 0
    %1811 = vmatpush1.bf16.msra.mxu0 %v1788
    %1812 = vmatprep.subr.bf16.mxu0 0
    %1813 = vmatpush1.bf16.msra.mxu0 %v1787
    %1814 = vmatprep.subr.bf16.mxu0 0
    %1815 = vmatpush1.bf16.msra.mxu0 %v1786
    %1816 = vmatprep.subr.bf16.mxu0 0
    %1817 = vmatpush1.bf16.msra.mxu0 %v1785
    %1818 = vmatprep.subr.bf16.mxu0 0
    %1819 = vmatpush2.bf16.msra.mxu0 0
    %1820 = vmatprep.subr.bf16.mxu0 0
    %1821 = vmatpush2.bf16.msra.mxu0 0
    %1822 = vmatprep.subr.bf16.mxu0 0
    %1823 = vmatpush2.bf16.msra.mxu0 0
    %1824 = vmatprep.subr.bf16.mxu0 0
    %1825 = vmatpush2.bf16.msra.mxu0 0
    %1826 = vmatprep.subr.bf16.mxu0 0
    %1827 = vmatpush2.bf16.msra.mxu0 0
    %1828 = vmatprep.subr.bf16.mxu0 0
    %1829 = vmatpush2.bf16.msra.mxu0 0
    %1830 = vmatprep.subr.bf16.mxu0 0
    %1831 = vmatpush2.bf16.msra.mxu0 0
    %1832 = vmatprep.subr.bf16.mxu0 0
    %1833 = vmatpush2.bf16.msra.mxu0 0
    %1834 = vmatprep.mubr.bf16.mxu0 0
    %1835 = vmatmul.mubr.bf16.gmra.mxu0 %v1800
    %v1836 = vpop.f32.mrf.mxu0
    %v1837 = vadd.f32 %v1752, %v1836
    %v1838 = vpop.f32.mrf.mxu0
    %v1839 = vpop.f32.mrf.mxu0
    %v1840 = vpop.f32.mrf.mxu0
    %1841 = vdwg.mxu0
    %v1842 = vld [vmem:[#allocation11 + $0x2] sm:$0x7f]
    %v1843 = vpack.c.bf16 %v1842, %v1842
    %s1844 = scalar_lea.vmem [#allocation4], 112
    %v1845 = vld [vmem:[%s1844] sm:$0xf]
    %v1846 = vld [vmem:[%s1844 + $0x4] sm:$0xf]
    %v1847 = vld [vmem:[%s1844 + $0x8] sm:$0xf]
    %v1848 = vld [vmem:[%s1844 + $0xc] sm:$0xf]
    %v1849 = vld [vmem:[%s1844 + $0x10] sm:$0xf]
    %v1850 = vld [vmem:[%s1844 + $0x14] sm:$0xf]
    %v1851 = vld [vmem:[%s1844 + $0x18] sm:$0xf]
    %v1852 = vld [vmem:[%s1844 + $0x1c] sm:$0xf]
    %v1853 = vld [vmem:[%s1844 + $0x20] sm:$0xf]
    %v1854 = vld [vmem:[%s1844 + $0x24] sm:$0xf]
    %v1855 = vld [vmem:[%s1844 + $0x28] sm:$0xf]
    %v1856 = vld [vmem:[%s1844 + $0x2c] sm:$0xf]
    %v1857 = vld [vmem:[%s1844 + $0x30] sm:$0xf]
    %v1858 = vld [vmem:[%s1844 + $0x34] sm:$0xf]
    %v1873 = vunpack.c.l.b16 %v1845
    %v1874 = vunpack.c.l.b16 %v1846
    %v1875 = vunpack.c.l.b16 %v1847
    %v1876 = vunpack.c.l.b16 %v1848
    %v1877 = vunpack.c.l.b16 %v1849
    %v1878 = vunpack.c.l.b16 %v1850
    %v1879 = vunpack.c.l.b16 %v1851
    %v1880 = vunpack.c.l.b16 %v1852
    %v1881 = vunpack.c.l.b16 %v1853
    %v1882 = vunpack.c.l.b16 %v1854
    %v1883 = vunpack.c.l.b16 %v1855
    %v1884 = vunpack.c.l.b16 %v1856
    %v1885 = vunpack.c.l.b16 %v1857
    %v1886 = vunpack.c.l.b16 %v1858
    %v1887 = vpack.c.b16 %v1874, %v1873
    %v1888 = vpack.c.b16 %v1876, %v1875
    %v1889 = vpack.c.b16 %v1878, %v1877
    %v1890 = vpack.c.b16 %v1880, %v1879
    %v1891 = vpack.c.b16 %v1882, %v1881
    %v1892 = vpack.c.b16 %v1884, %v1883
    %v1893 = vpack.c.b16 %v1886, %v1885
    %v1902 = vsel %vm1079, %v1843, 0
    %1904 = vmatprep.subr.bf16.mxu0 0
    %1905 = vmatpush1.bf16.msra.mxu0 0
    %1906 = vmatprep.subr.bf16.mxu0 0
    %1907 = vmatpush1.bf16.msra.mxu0 %v1893
    %1908 = vmatprep.subr.bf16.mxu0 0
    %1909 = vmatpush1.bf16.msra.mxu0 %v1892
    %1910 = vmatprep.subr.bf16.mxu0 0
    %1911 = vmatpush1.bf16.msra.mxu0 %v1891
    %1912 = vmatprep.subr.bf16.mxu0 0
    %1913 = vmatpush1.bf16.msra.mxu0 %v1890
    %1914 = vmatprep.subr.bf16.mxu0 0
    %1915 = vmatpush1.bf16.msra.mxu0 %v1889
    %1916 = vmatprep.subr.bf16.mxu0 0
    %1917 = vmatpush1.bf16.msra.mxu0 %v1888
    %1918 = vmatprep.subr.bf16.mxu0 0
    %1919 = vmatpush1.bf16.msra.mxu0 %v1887
    %1920 = vmatprep.subr.bf16.mxu0 0
    %1921 = vmatpush2.bf16.msra.mxu0 0
    %1922 = vmatprep.subr.bf16.mxu0 0
    %1923 = vmatpush2.bf16.msra.mxu0 0
    %1924 = vmatprep.subr.bf16.mxu0 0
    %1925 = vmatpush2.bf16.msra.mxu0 0
    %1926 = vmatprep.subr.bf16.mxu0 0
    %1927 = vmatpush2.bf16.msra.mxu0 0
    %1928 = vmatprep.subr.bf16.mxu0 0
    %1929 = vmatpush2.bf16.msra.mxu0 0
    %1930 = vmatprep.subr.bf16.mxu0 0
    %1931 = vmatpush2.bf16.msra.mxu0 0
    %1932 = vmatprep.subr.bf16.mxu0 0
    %1933 = vmatpush2.bf16.msra.mxu0 0
    %1934 = vmatprep.subr.bf16.mxu0 0
    %1935 = vmatpush2.bf16.msra.mxu0 0
    %1936 = vmatprep.mubr.bf16.mxu0 0
    %1937 = vmatmul.mubr.bf16.gmra.mxu0 %v1902
    %v1938 = vpop.f32.mrf.mxu0
    %v1939 = vadd.f32 0.0, %v1938
    %v1940 = vpop.f32.mrf.mxu0
    %v1941 = vpop.f32.mrf.mxu0
    %v1942 = vpop.f32.mrf.mxu0
    %1943 = vdwg.mxu0
    %v1944 = vadd.f32 %v1837, %v1939
    %v1945 = vld [vmem:[%s3] sm:$0x1]
    %v1947 = vlaneseq
    %v1948 = vshrl.u32 %v1947, 7
    %v1949 = vsub.s32 0, %v1948
    %v1950 = vrot.slane %v1945, %v1949
    %v1952 = vadd.f32 %v1944, %v1950
    %v1953 = vmax.f32 %v1952, 0.0
    %1954 = vst.msk [vmem:[#allocation12 + $0x1] sm:$0x7f] %vm1320, %v1953
    %v1955 = vld [vmem:[%s1635] sm:$0x7f]
    %v1956 = vpack.c.bf16 %v1955, %v1955
    %v1957 = vld [vmem:[#allocation4] sm:$0xf]
    %v1958 = vld [vmem:[#allocation4 + $0x4] sm:$0xf]
    %v1959 = vld [vmem:[#allocation4 + $0x8] sm:$0xf]
    %v1960 = vld [vmem:[#allocation4 + $0xc] sm:$0xf]
    %v1961 = vld [vmem:[#allocation4 + $0x10] sm:$0xf]
    %v1962 = vld [vmem:[#allocation4 + $0x14] sm:$0xf]
    %v1963 = vld [vmem:[#allocation4 + $0x18] sm:$0xf]
    %v1964 = vld [vmem:[#allocation4 + $0x1c] sm:$0xf]
    %v1965 = vld [vmem:[#allocation4 + $0x20] sm:$0xf]
    %v1966 = vld [vmem:[#allocation4 + $0x24] sm:$0xf]
    %v1967 = vld [vmem:[#allocation4 + $0x28] sm:$0xf]
    %v1968 = vld [vmem:[#allocation4 + $0x2c] sm:$0xf]
    %v1969 = vld [vmem:[#allocation4 + $0x30] sm:$0xf]
    %v1970 = vld [vmem:[#allocation4 + $0x34] sm:$0xf]
    %v1971 = vld [vmem:[%s1635 + $0x1] sm:$0x7f]
    %v1972 = vpack.c.bf16 %v1971, %v1971
    %v1973 = vld [vmem:[%s1657] sm:$0xf]
    %v1974 = vld [vmem:[%s1657 + $0x4] sm:$0xf]
    %v1975 = vld [vmem:[%s1657 + $0x8] sm:$0xf]
    %v1976 = vld [vmem:[%s1657 + $0xc] sm:$0xf]
    %v1977 = vld [vmem:[%s1657 + $0x10] sm:$0xf]
    %v1978 = vld [vmem:[%s1657 + $0x14] sm:$0xf]
    %v1979 = vld [vmem:[%s1657 + $0x18] sm:$0xf]
    %v1980 = vld [vmem:[%s1657 + $0x1c] sm:$0xf]
    %v1981 = vld [vmem:[%s1657 + $0x20] sm:$0xf]
    %v1982 = vld [vmem:[%s1657 + $0x24] sm:$0xf]
    %v1983 = vld [vmem:[%s1657 + $0x28] sm:$0xf]
    %v1984 = vld [vmem:[%s1657 + $0x2c] sm:$0xf]
    %v1985 = vld [vmem:[%s1657 + $0x30] sm:$0xf]
    %v1986 = vld [vmem:[%s1657 + $0x34] sm:$0xf]
    %v2001 = vunpack.c.l.b16 %v1973
    %v2002 = vunpack.c.l.b16 %v1974
    %v2003 = vunpack.c.l.b16 %v1975
    %v2004 = vunpack.c.l.b16 %v1976
    %v2005 = vunpack.c.l.b16 %v1977
    %v2006 = vunpack.c.l.b16 %v1978
    %v2007 = vunpack.c.l.b16 %v1979
    %v2008 = vunpack.c.l.b16 %v1980
    %v2009 = vunpack.c.l.b16 %v1981
    %v2010 = vunpack.c.l.b16 %v1982
    %v2011 = vunpack.c.l.b16 %v1983
    %v2012 = vunpack.c.l.b16 %v1984
    %v2013 = vunpack.c.l.b16 %v1985
    %v2014 = vunpack.c.l.b16 %v1986
    %v2015 = vpack.c.b16 %v2002, %v2001
    %v2016 = vpack.c.b16 %v2004, %v2003
    %v2017 = vpack.c.b16 %v2006, %v2005
    %v2018 = vpack.c.b16 %v2008, %v2007
    %v2019 = vpack.c.b16 %v2010, %v2009
    %v2020 = vpack.c.b16 %v2012, %v2011
    %v2021 = vpack.c.b16 %v2014, %v2013
    %v2030 = vsel %vm1079, %v1972, 0
    %2032 = vmatprep.subr.bf16.mxu0 0
    %2033 = vmatpush1.bf16.msra.mxu0 0
    %2034 = vmatprep.subr.bf16.mxu0 0
    %2035 = vmatpush1.bf16.msra.mxu0 %v2021
    %2036 = vmatprep.subr.bf16.mxu0 0
    %2037 = vmatpush1.bf16.msra.mxu0 %v2020
    %2038 = vmatprep.subr.bf16.mxu0 0
    %2039 = vmatpush1.bf16.msra.mxu0 %v2019
    %2040 = vmatprep.subr.bf16.mxu0 0
    %2041 = vmatpush1.bf16.msra.mxu0 %v2018
    %2042 = vmatprep.subr.bf16.mxu0 0
    %2043 = vmatpush1.bf16.msra.mxu0 %v2017
    %2044 = vmatprep.subr.bf16.mxu0 0
    %2045 = vmatpush1.bf16.msra.mxu0 %v2016
    %2046 = vmatprep.subr.bf16.mxu0 0
    %2047 = vmatpush1.bf16.msra.mxu0 %v2015
    %2048 = vmatprep.subr.bf16.mxu0 0
    %2049 = vmatpush2.bf16.msra.mxu0 0
    %2050 = vmatprep.subr.bf16.mxu0 0
    %2051 = vmatpush2.bf16.msra.mxu0 0
    %2052 = vmatprep.subr.bf16.mxu0 0
    %2053 = vmatpush2.bf16.msra.mxu0 0
    %2054 = vmatprep.subr.bf16.mxu0 0
    %2055 = vmatpush2.bf16.msra.mxu0 0
    %2056 = vmatprep.subr.bf16.mxu0 0
    %2057 = vmatpush2.bf16.msra.mxu0 0
    %2058 = vmatprep.subr.bf16.mxu0 0
    %2059 = vmatpush2.bf16.msra.mxu0 0
    %2060 = vmatprep.subr.bf16.mxu0 0
    %2061 = vmatpush2.bf16.msra.mxu0 0
    %2062 = vmatprep.subr.bf16.mxu0 0
    %2063 = vmatpush2.bf16.msra.mxu0 0
    %2064 = vmatprep.mubr.bf16.mxu0 0
    %2065 = vmatmul.mubr.bf16.gmra.mxu0 %v2030
    %v2066 = vpop.f32.mrf.mxu0
    %v2067 = vadd.f32 0.0, %v2066
    %v2068 = vpop.f32.mrf.mxu0
    %v2069 = vpop.f32.mrf.mxu0
    %v2070 = vpop.f32.mrf.mxu0
    %2071 = vdwg.mxu0
    %v2086 = vunpack.c.l.b16 %v1957
    %v2087 = vunpack.c.l.b16 %v1958
    %v2088 = vunpack.c.l.b16 %v1959
    %v2089 = vunpack.c.l.b16 %v1960
    %v2090 = vunpack.c.l.b16 %v1961
    %v2091 = vunpack.c.l.b16 %v1962
    %v2092 = vunpack.c.l.b16 %v1963
    %v2093 = vunpack.c.l.b16 %v1964
    %v2094 = vunpack.c.l.b16 %v1965
    %v2095 = vunpack.c.l.b16 %v1966
    %v2096 = vunpack.c.l.b16 %v1967
    %v2097 = vunpack.c.l.b16 %v1968
    %v2098 = vunpack.c.l.b16 %v1969
    %v2099 = vunpack.c.l.b16 %v1970
    %v2100 = vpack.c.b16 %v2087, %v2086
    %v2101 = vpack.c.b16 %v2089, %v2088
    %v2102 = vpack.c.b16 %v2091, %v2090
    %v2103 = vpack.c.b16 %v2093, %v2092
    %v2104 = vpack.c.b16 %v2095, %v2094
    %v2105 = vpack.c.b16 %v2097, %v2096
    %v2106 = vpack.c.b16 %v2099, %v2098
    %v2115 = vsel %vm1079, %v1956, 0
    %2117 = vmatprep.subr.bf16.mxu0 0
    %2118 = vmatpush1.bf16.msra.mxu0 0
    %2119 = vmatprep.subr.bf16.mxu0 0
    %2120 = vmatpush1.bf16.msra.mxu0 %v2106
    %2121 = vmatprep.subr.bf16.mxu0 0
    %2122 = vmatpush1.bf16.msra.mxu0 %v2105
    %2123 = vmatprep.subr.bf16.mxu0 0
    %2124 = vmatpush1.bf16.msra.mxu0 %v2104
    %2125 = vmatprep.subr.bf16.mxu0 0
    %2126 = vmatpush1.bf16.msra.mxu0 %v2103
    %2127 = vmatprep.subr.bf16.mxu0 0
    %2128 = vmatpush1.bf16.msra.mxu0 %v2102
    %2129 = vmatprep.subr.bf16.mxu0 0
    %2130 = vmatpush1.bf16.msra.mxu0 %v2101
    %2131 = vmatprep.subr.bf16.mxu0 0
    %2132 = vmatpush1.bf16.msra.mxu0 %v2100
    %2133 = vmatprep.subr.bf16.mxu0 0
    %2134 = vmatpush2.bf16.msra.mxu0 0
    %2135 = vmatprep.subr.bf16.mxu0 0
    %2136 = vmatpush2.bf16.msra.mxu0 0
    %2137 = vmatprep.subr.bf16.mxu0 0
    %2138 = vmatpush2.bf16.msra.mxu0 0
    %2139 = vmatprep.subr.bf16.mxu0 0
    %2140 = vmatpush2.bf16.msra.mxu0 0
    %2141 = vmatprep.subr.bf16.mxu0 0
    %2142 = vmatpush2.bf16.msra.mxu0 0
    %2143 = vmatprep.subr.bf16.mxu0 0
    %2144 = vmatpush2.bf16.msra.mxu0 0
    %2145 = vmatprep.subr.bf16.mxu0 0
    %2146 = vmatpush2.bf16.msra.mxu0 0
    %2147 = vmatprep.subr.bf16.mxu0 0
    %2148 = vmatpush2.bf16.msra.mxu0 0
    %2149 = vmatprep.mubr.bf16.mxu0 0
    %2150 = vmatmul.mubr.bf16.gmra.mxu0 %v2115
    %v2151 = vpop.f32.mrf.mxu0
    %v2152 = vadd.f32 %v2067, %v2151
    %v2153 = vpop.f32.mrf.mxu0
    %v2154 = vpop.f32.mrf.mxu0
    %v2155 = vpop.f32.mrf.mxu0
    %2156 = vdwg.mxu0
    %v2157 = vld [vmem:[%s1635 + $0x2] sm:$0x7f]
    %v2158 = vpack.c.bf16 %v2157, %v2157
    %v2159 = vld [vmem:[%s1844] sm:$0xf]
    %v2160 = vld [vmem:[%s1844 + $0x4] sm:$0xf]
    %v2161 = vld [vmem:[%s1844 + $0x8] sm:$0xf]
    %v2162 = vld [vmem:[%s1844 + $0xc] sm:$0xf]
    %v2163 = vld [vmem:[%s1844 + $0x10] sm:$0xf]
    %v2164 = vld [vmem:[%s1844 + $0x14] sm:$0xf]
    %v2165 = vld [vmem:[%s1844 + $0x18] sm:$0xf]
    %v2166 = vld [vmem:[%s1844 + $0x1c] sm:$0xf]
    %v2167 = vld [vmem:[%s1844 + $0x20] sm:$0xf]
    %v2168 = vld [vmem:[%s1844 + $0x24] sm:$0xf]
    %v2169 = vld [vmem:[%s1844 + $0x28] sm:$0xf]
    %v2170 = vld [vmem:[%s1844 + $0x2c] sm:$0xf]
    %v2171 = vld [vmem:[%s1844 + $0x30] sm:$0xf]
    %v2172 = vld [vmem:[%s1844 + $0x34] sm:$0xf]
    %v2187 = vunpack.c.l.b16 %v2159
    %v2188 = vunpack.c.l.b16 %v2160
    %v2189 = vunpack.c.l.b16 %v2161
    %v2190 = vunpack.c.l.b16 %v2162
    %v2191 = vunpack.c.l.b16 %v2163
    %v2192 = vunpack.c.l.b16 %v2164
    %v2193 = vunpack.c.l.b16 %v2165
    %v2194 = vunpack.c.l.b16 %v2166
    %v2195 = vunpack.c.l.b16 %v2167
    %v2196 = vunpack.c.l.b16 %v2168
    %v2197 = vunpack.c.l.b16 %v2169
    %v2198 = vunpack.c.l.b16 %v2170
    %v2199 = vunpack.c.l.b16 %v2171
    %v2200 = vunpack.c.l.b16 %v2172
    %v2201 = vpack.c.b16 %v2188, %v2187
    %v2202 = vpack.c.b16 %v2190, %v2189
    %v2203 = vpack.c.b16 %v2192, %v2191
    %v2204 = vpack.c.b16 %v2194, %v2193
    %v2205 = vpack.c.b16 %v2196, %v2195
    %v2206 = vpack.c.b16 %v2198, %v2197
    %v2207 = vpack.c.b16 %v2200, %v2199
    %v2216 = vsel %vm1079, %v2158, 0
    %2218 = vmatprep.subr.bf16.mxu0 0
    %2219 = vmatpush1.bf16.msra.mxu0 0
    %2220 = vmatprep.subr.bf16.mxu0 0
    %2221 = vmatpush1.bf16.msra.mxu0 %v2207
    %2222 = vmatprep.subr.bf16.mxu0 0
    %2223 = vmatpush1.bf16.msra.mxu0 %v2206
    %2224 = vmatprep.subr.bf16.mxu0 0
    %2225 = vmatpush1.bf16.msra.mxu0 %v2205
    %2226 = vmatprep.subr.bf16.mxu0 0
    %2227 = vmatpush1.bf16.msra.mxu0 %v2204
    %2228 = vmatprep.subr.bf16.mxu0 0
    %2229 = vmatpush1.bf16.msra.mxu0 %v2203
    %2230 = vmatprep.subr.bf16.mxu0 0
    %2231 = vmatpush1.bf16.msra.mxu0 %v2202
    %2232 = vmatprep.subr.bf16.mxu0 0
    %2233 = vmatpush1.bf16.msra.mxu0 %v2201
    %2234 = vmatprep.subr.bf16.mxu0 0
    %2235 = vmatpush2.bf16.msra.mxu0 0
    %2236 = vmatprep.subr.bf16.mxu0 0
    %2237 = vmatpush2.bf16.msra.mxu0 0
    %2238 = vmatprep.subr.bf16.mxu0 0
    %2239 = vmatpush2.bf16.msra.mxu0 0
    %2240 = vmatprep.subr.bf16.mxu0 0
    %2241 = vmatpush2.bf16.msra.mxu0 0
    %2242 = vmatprep.subr.bf16.mxu0 0
    %2243 = vmatpush2.bf16.msra.mxu0 0
    %2244 = vmatprep.subr.bf16.mxu0 0
    %2245 = vmatpush2.bf16.msra.mxu0 0
    %2246 = vmatprep.subr.bf16.mxu0 0
    %2247 = vmatpush2.bf16.msra.mxu0 0
    %2248 = vmatprep.subr.bf16.mxu0 0
    %2249 = vmatpush2.bf16.msra.mxu0 0
    %2250 = vmatprep.mubr.bf16.mxu0 0
    %2251 = vmatmul.mubr.bf16.gmra.mxu0 %v2216
    %v2252 = vpop.f32.mrf.mxu0
    %v2253 = vadd.f32 0.0, %v2252
    %v2254 = vpop.f32.mrf.mxu0
    %v2255 = vpop.f32.mrf.mxu0
    %v2256 = vpop.f32.mrf.mxu0
    %2257 = vdwg.mxu0
    %v2258 = vadd.f32 %v2152, %v2253
    %v2259 = vld [vmem:[%s3] sm:$0x1]
    %v2261 = vlaneseq
    %v2262 = vshrl.u32 %v2261, 7
    %v2263 = vsub.s32 0, %v2262
    %v2264 = vrot.slane %v2259, %v2263
    %v2266 = vadd.f32 %v2258, %v2264
    %v2267 = vmax.f32 %v2266, 0.0
    %s2268 = scalar_lea.vmem [#allocation12], 16
    %2269 = vst.msk [vmem:[%s2268 + $0x1] sm:$0x7f] %vm1320, %v2267
    %s2270 = sshll.u32 %s1001, 4
    %2271 = dma.done %s194, %s2270
    %v2272 = vld [vmem:[#allocation12] sm:$0x7f]
    %v2273 = vpack.c.bf16 %v2272, %v2272
    %v2274 = vld [vmem:[#allocation5] sm:$0xf]
    %v2275 = vld [vmem:[#allocation5 + $0x4] sm:$0xf]
    %v2276 = vld [vmem:[#allocation5 + $0x8] sm:$0xf]
    %v2277 = vld [vmem:[#allocation5 + $0xc] sm:$0xf]
    %v2278 = vld [vmem:[#allocation5 + $0x10] sm:$0xf]
    %v2279 = vld [vmem:[#allocation5 + $0x14] sm:$0xf]
    %v2280 = vld [vmem:[#allocation5 + $0x18] sm:$0xf]
    %v2281 = vld [vmem:[#allocation5 + $0x1c] sm:$0xf]
    %v2282 = vld [vmem:[#allocation5 + $0x20] sm:$0xf]
    %v2283 = vld [vmem:[#allocation5 + $0x24] sm:$0xf]
    %v2284 = vld [vmem:[#allocation5 + $0x28] sm:$0xf]
    %v2285 = vld [vmem:[#allocation5 + $0x2c] sm:$0xf]
    %v2286 = vld [vmem:[#allocation5 + $0x30] sm:$0xf]
    %v2287 = vld [vmem:[#allocation5 + $0x34] sm:$0xf]
    %v2288 = vld [vmem:[#allocation12 + $0x1] sm:$0x7f]
    %v2289 = vpack.c.bf16 %v2288, %v2288
    %s2290 = scalar_lea.vmem [#allocation5], 56
    %v2291 = vld [vmem:[%s2290] sm:$0xf]
    %v2292 = vld [vmem:[%s2290 + $0x4] sm:$0xf]
    %v2293 = vld [vmem:[%s2290 + $0x8] sm:$0xf]
    %v2294 = vld [vmem:[%s2290 + $0xc] sm:$0xf]
    %v2295 = vld [vmem:[%s2290 + $0x10] sm:$0xf]
    %v2296 = vld [vmem:[%s2290 + $0x14] sm:$0xf]
    %v2297 = vld [vmem:[%s2290 + $0x18] sm:$0xf]
    %v2298 = vld [vmem:[%s2290 + $0x1c] sm:$0xf]
    %v2299 = vld [vmem:[%s2290 + $0x20] sm:$0xf]
    %v2300 = vld [vmem:[%s2290 + $0x24] sm:$0xf]
    %v2301 = vld [vmem:[%s2290 + $0x28] sm:$0xf]
    %v2302 = vld [vmem:[%s2290 + $0x2c] sm:$0xf]
    %v2303 = vld [vmem:[%s2290 + $0x30] sm:$0xf]
    %v2304 = vld [vmem:[%s2290 + $0x34] sm:$0xf]
    %v2319 = vunpack.c.l.b16 %v2291
    %v2320 = vunpack.c.l.b16 %v2292
    %v2321 = vunpack.c.l.b16 %v2293
    %v2322 = vunpack.c.l.b16 %v2294
    %v2323 = vunpack.c.l.b16 %v2295
    %v2324 = vunpack.c.l.b16 %v2296
    %v2325 = vunpack.c.l.b16 %v2297
    %v2326 = vunpack.c.l.b16 %v2298
    %v2327 = vunpack.c.l.b16 %v2299
    %v2328 = vunpack.c.l.b16 %v2300
    %v2329 = vunpack.c.l.b16 %v2301
    %v2330 = vunpack.c.l.b16 %v2302
    %v2331 = vunpack.c.l.b16 %v2303
    %v2332 = vunpack.c.l.b16 %v2304
    %v2333 = vpack.c.b16 %v2320, %v2319
    %v2334 = vpack.c.b16 %v2322, %v2321
    %v2335 = vpack.c.b16 %v2324, %v2323
    %v2336 = vpack.c.b16 %v2326, %v2325
    %v2337 = vpack.c.b16 %v2328, %v2327
    %v2338 = vpack.c.b16 %v2330, %v2329
    %v2339 = vpack.c.b16 %v2332, %v2331
    %v2348 = vsel %vm1079, %v2289, 0
    %2350 = vmatprep.subr.bf16.mxu0 0
    %2351 = vmatpush1.bf16.msra.mxu0 0
    %2352 = vmatprep.subr.bf16.mxu0 0
    %2353 = vmatpush1.bf16.msra.mxu0 %v2339
    %2354 = vmatprep.subr.bf16.mxu0 0
    %2355 = vmatpush1.bf16.msra.mxu0 %v2338
    %2356 = vmatprep.subr.bf16.mxu0 0
    %2357 = vmatpush1.bf16.msra.mxu0 %v2337
    %2358 = vmatprep.subr.bf16.mxu0 0
    %2359 = vmatpush1.bf16.msra.mxu0 %v2336
    %2360 = vmatprep.subr.bf16.mxu0 0
    %2361 = vmatpush1.bf16.msra.mxu0 %v2335
    %2362 = vmatprep.subr.bf16.mxu0 0
    %2363 = vmatpush1.bf16.msra.mxu0 %v2334
    %2364 = vmatprep.subr.bf16.mxu0 0
    %2365 = vmatpush1.bf16.msra.mxu0 %v2333
    %2366 = vmatprep.subr.bf16.mxu0 0
    %2367 = vmatpush2.bf16.msra.mxu0 0
    %2368 = vmatprep.subr.bf16.mxu0 0
    %2369 = vmatpush2.bf16.msra.mxu0 0
    %2370 = vmatprep.subr.bf16.mxu0 0
    %2371 = vmatpush2.bf16.msra.mxu0 0
    %2372 = vmatprep.subr.bf16.mxu0 0
    %2373 = vmatpush2.bf16.msra.mxu0 0
    %2374 = vmatprep.subr.bf16.mxu0 0
    %2375 = vmatpush2.bf16.msra.mxu0 0
    %2376 = vmatprep.subr.bf16.mxu0 0
    %2377 = vmatpush2.bf16.msra.mxu0 0
    %2378 = vmatprep.subr.bf16.mxu0 0
    %2379 = vmatpush2.bf16.msra.mxu0 0
    %2380 = vmatprep.subr.bf16.mxu0 0
    %2381 = vmatpush2.bf16.msra.mxu0 0
    %2382 = vmatprep.mubr.bf16.mxu0 0
    %2383 = vmatmul.mubr.bf16.gmra.mxu0 %v2348
    %v2384 = vpop.f32.mrf.mxu0
    %v2385 = vadd.f32 0.0, %v2384
    %v2386 = vpop.f32.mrf.mxu0
    %v2387 = vpop.f32.mrf.mxu0
    %v2388 = vpop.f32.mrf.mxu0
    %2389 = vdwg.mxu0
    %v2404 = vunpack.c.l.b16 %v2274
    %v2405 = vunpack.c.l.b16 %v2275
    %v2406 = vunpack.c.l.b16 %v2276
    %v2407 = vunpack.c.l.b16 %v2277
    %v2408 = vunpack.c.l.b16 %v2278
    %v2409 = vunpack.c.l.b16 %v2279
    %v2410 = vunpack.c.l.b16 %v2280
    %v2411 = vunpack.c.l.b16 %v2281
    %v2412 = vunpack.c.l.b16 %v2282
    %v2413 = vunpack.c.l.b16 %v2283
    %v2414 = vunpack.c.l.b16 %v2284
    %v2415 = vunpack.c.l.b16 %v2285
    %v2416 = vunpack.c.l.b16 %v2286
    %v2417 = vunpack.c.l.b16 %v2287
    %v2418 = vpack.c.b16 %v2405, %v2404
    %v2419 = vpack.c.b16 %v2407, %v2406
    %v2420 = vpack.c.b16 %v2409, %v2408
    %v2421 = vpack.c.b16 %v2411, %v2410
    %v2422 = vpack.c.b16 %v2413, %v2412
    %v2423 = vpack.c.b16 %v2415, %v2414
    %v2424 = vpack.c.b16 %v2417, %v2416
    %v2433 = vsel %vm1079, %v2273, 0
    %2435 = vmatprep.subr.bf16.mxu0 0
    %2436 = vmatpush1.bf16.msra.mxu0 0
    %2437 = vmatprep.subr.bf16.mxu0 0
    %2438 = vmatpush1.bf16.msra.mxu0 %v2424
    %2439 = vmatprep.subr.bf16.mxu0 0
    %2440 = vmatpush1.bf16.msra.mxu0 %v2423
    %2441 = vmatprep.subr.bf16.mxu0 0
    %2442 = vmatpush1.bf16.msra.mxu0 %v2422
    %2443 = vmatprep.subr.bf16.mxu0 0
    %2444 = vmatpush1.bf16.msra.mxu0 %v2421
    %2445 = vmatprep.subr.bf16.mxu0 0
    %2446 = vmatpush1.bf16.msra.mxu0 %v2420
    %2447 = vmatprep.subr.bf16.mxu0 0
    %2448 = vmatpush1.bf16.msra.mxu0 %v2419
    %2449 = vmatprep.subr.bf16.mxu0 0
    %2450 = vmatpush1.bf16.msra.mxu0 %v2418
    %2451 = vmatprep.subr.bf16.mxu0 0
    %2452 = vmatpush2.bf16.msra.mxu0 0
    %2453 = vmatprep.subr.bf16.mxu0 0
    %2454 = vmatpush2.bf16.msra.mxu0 0
    %2455 = vmatprep.subr.bf16.mxu0 0
    %2456 = vmatpush2.bf16.msra.mxu0 0
    %2457 = vmatprep.subr.bf16.mxu0 0
    %2458 = vmatpush2.bf16.msra.mxu0 0
    %2459 = vmatprep.subr.bf16.mxu0 0
    %2460 = vmatpush2.bf16.msra.mxu0 0
    %2461 = vmatprep.subr.bf16.mxu0 0
    %2462 = vmatpush2.bf16.msra.mxu0 0
    %2463 = vmatprep.subr.bf16.mxu0 0
    %2464 = vmatpush2.bf16.msra.mxu0 0
    %2465 = vmatprep.subr.bf16.mxu0 0
    %2466 = vmatpush2.bf16.msra.mxu0 0
    %2467 = vmatprep.mubr.bf16.mxu0 0
    %2468 = vmatmul.mubr.bf16.gmra.mxu0 %v2433
    %v2469 = vpop.f32.mrf.mxu0
    %v2470 = vadd.f32 %v2385, %v2469
    %v2471 = vpop.f32.mrf.mxu0
    %v2472 = vpop.f32.mrf.mxu0
    %v2473 = vpop.f32.mrf.mxu0
    %2474 = vdwg.mxu0
    %v2475 = vld [vmem:[#allocation12 + $0x2] sm:$0x7f]
    %v2476 = vpack.c.bf16 %v2475, %v2475
    %s2477 = scalar_lea.vmem [#allocation5], 112
    %v2478 = vld [vmem:[%s2477] sm:$0xf]
    %v2479 = vld [vmem:[%s2477 + $0x4] sm:$0xf]
    %v2480 = vld [vmem:[%s2477 + $0x8] sm:$0xf]
    %v2481 = vld [vmem:[%s2477 + $0xc] sm:$0xf]
    %v2482 = vld [vmem:[%s2477 + $0x10] sm:$0xf]
    %v2483 = vld [vmem:[%s2477 + $0x14] sm:$0xf]
    %v2484 = vld [vmem:[%s2477 + $0x18] sm:$0xf]
    %v2485 = vld [vmem:[%s2477 + $0x1c] sm:$0xf]
    %v2486 = vld [vmem:[%s2477 + $0x20] sm:$0xf]
    %v2487 = vld [vmem:[%s2477 + $0x24] sm:$0xf]
    %v2488 = vld [vmem:[%s2477 + $0x28] sm:$0xf]
    %v2489 = vld [vmem:[%s2477 + $0x2c] sm:$0xf]
    %v2490 = vld [vmem:[%s2477 + $0x30] sm:$0xf]
    %v2491 = vld [vmem:[%s2477 + $0x34] sm:$0xf]
    %v2506 = vunpack.c.l.b16 %v2478
    %v2507 = vunpack.c.l.b16 %v2479
    %v2508 = vunpack.c.l.b16 %v2480
    %v2509 = vunpack.c.l.b16 %v2481
    %v2510 = vunpack.c.l.b16 %v2482
    %v2511 = vunpack.c.l.b16 %v2483
    %v2512 = vunpack.c.l.b16 %v2484
    %v2513 = vunpack.c.l.b16 %v2485
    %v2514 = vunpack.c.l.b16 %v2486
    %v2515 = vunpack.c.l.b16 %v2487
    %v2516 = vunpack.c.l.b16 %v2488
    %v2517 = vunpack.c.l.b16 %v2489
    %v2518 = vunpack.c.l.b16 %v2490
    %v2519 = vunpack.c.l.b16 %v2491
    %v2520 = vpack.c.b16 %v2507, %v2506
    %v2521 = vpack.c.b16 %v2509, %v2508
    %v2522 = vpack.c.b16 %v2511, %v2510
    %v2523 = vpack.c.b16 %v2513, %v2512
    %v2524 = vpack.c.b16 %v2515, %v2514
    %v2525 = vpack.c.b16 %v2517, %v2516
    %v2526 = vpack.c.b16 %v2519, %v2518
    %v2535 = vsel %vm1079, %v2476, 0
    %2537 = vmatprep.subr.bf16.mxu0 0
    %2538 = vmatpush1.bf16.msra.mxu0 0
    %2539 = vmatprep.subr.bf16.mxu0 0
    %2540 = vmatpush1.bf16.msra.mxu0 %v2526
    %2541 = vmatprep.subr.bf16.mxu0 0
    %2542 = vmatpush1.bf16.msra.mxu0 %v2525
    %2543 = vmatprep.subr.bf16.mxu0 0
    %2544 = vmatpush1.bf16.msra.mxu0 %v2524
    %2545 = vmatprep.subr.bf16.mxu0 0
    %2546 = vmatpush1.bf16.msra.mxu0 %v2523
    %2547 = vmatprep.subr.bf16.mxu0 0
    %2548 = vmatpush1.bf16.msra.mxu0 %v2522
    %2549 = vmatprep.subr.bf16.mxu0 0
    %2550 = vmatpush1.bf16.msra.mxu0 %v2521
    %2551 = vmatprep.subr.bf16.mxu0 0
    %2552 = vmatpush1.bf16.msra.mxu0 %v2520
    %2553 = vmatprep.subr.bf16.mxu0 0
    %2554 = vmatpush2.bf16.msra.mxu0 0
    %2555 = vmatprep.subr.bf16.mxu0 0
    %2556 = vmatpush2.bf16.msra.mxu0 0
    %2557 = vmatprep.subr.bf16.mxu0 0
    %2558 = vmatpush2.bf16.msra.mxu0 0
    %2559 = vmatprep.subr.bf16.mxu0 0
    %2560 = vmatpush2.bf16.msra.mxu0 0
    %2561 = vmatprep.subr.bf16.mxu0 0
    %2562 = vmatpush2.bf16.msra.mxu0 0
    %2563 = vmatprep.subr.bf16.mxu0 0
    %2564 = vmatpush2.bf16.msra.mxu0 0
    %2565 = vmatprep.subr.bf16.mxu0 0
    %2566 = vmatpush2.bf16.msra.mxu0 0
    %2567 = vmatprep.subr.bf16.mxu0 0
    %2568 = vmatpush2.bf16.msra.mxu0 0
    %2569 = vmatprep.mubr.bf16.mxu0 0
    %2570 = vmatmul.mubr.bf16.gmra.mxu0 %v2535
    %v2571 = vpop.f32.mrf.mxu0
    %v2572 = vadd.f32 0.0, %v2571
    %v2573 = vpop.f32.mrf.mxu0
    %v2574 = vpop.f32.mrf.mxu0
    %v2575 = vpop.f32.mrf.mxu0
    %2576 = vdwg.mxu0
    %v2577 = vadd.f32 %v2470, %v2572
    %v2578 = vld [vmem:[#allocation16] sm:$0x1]
    %v2580 = vlaneseq
    %v2581 = vshrl.u32 %v2580, 7
    %v2582 = vsub.s32 0, %v2581
    %v2583 = vrot.slane %v2578, %v2582
    %v2585 = vadd.f32 %v2577, %v2583
    %v2586 = vmax.f32 %v2585, 0.0
    %2587 = vst.msk [vmem:[#allocation13 + $0x1] sm:$0x1] %vm356, %v2586
    %2588 = vst.msk [vmem:[#allocation13 + $0x2] sm:$0x1] %vm356, %v2586
    %2589 = vst.msk [vmem:[#allocation13 + $0x2] sm:$0x2] %vm987, %v2586
    %2590 = vst.msk [vmem:[#allocation13 + $0x3] sm:$0x2] %vm987, %v2586
    %vm2591 = vcmask 911362
    %2592 = vst.msk [vmem:[#allocation13 + $0x3] sm:$0x4] %vm2591, %v2586
    %2593 = vst.msk [vmem:[#allocation13 + $0x4] sm:$0x4] %vm2591, %v2586
    %vm2594 = vcmask 912387
    %2595 = vst.msk [vmem:[#allocation13 + $0x4] sm:$0x8] %vm2594, %v2586
    %2596 = vst.msk [vmem:[#allocation13 + $0x5] sm:$0x8] %vm2594, %v2586
    %vm2597 = vcmask 913412
    %2598 = vst.msk [vmem:[#allocation13 + $0x5] sm:$0x10] %vm2597, %v2586
    %2599 = vst.msk [vmem:[#allocation13 + $0x6] sm:$0x10] %vm2597, %v2586
    %vm2600 = vcmask 914437
    %2601 = vst.msk [vmem:[#allocation13 + $0x6] sm:$0x20] %vm2600, %v2586
    %2602 = vst.msk [vmem:[#allocation13 + $0x7] sm:$0x20] %vm2600, %v2586
    %vm2603 = vcmask 915462
    %2604 = vst.msk [vmem:[#allocation13 + $0x7] sm:$0x40] %vm2603, %v2586
    %2605 = vst.msk [vmem:[#allocation13 + $0x8] sm:$0x40] %vm2603, %v2586
    %v2606 = vld [vmem:[%s2268] sm:$0x7f]
    %v2607 = vpack.c.bf16 %v2606, %v2606
    %v2608 = vld [vmem:[#allocation5] sm:$0xf]
    %v2609 = vld [vmem:[#allocation5 + $0x4] sm:$0xf]
    %v2610 = vld [vmem:[#allocation5 + $0x8] sm:$0xf]
    %v2611 = vld [vmem:[#allocation5 + $0xc] sm:$0xf]
    %v2612 = vld [vmem:[#allocation5 + $0x10] sm:$0xf]
    %v2613 = vld [vmem:[#allocation5 + $0x14] sm:$0xf]
    %v2614 = vld [vmem:[#allocation5 + $0x18] sm:$0xf]
    %v2615 = vld [vmem:[#allocation5 + $0x1c] sm:$0xf]
    %v2616 = vld [vmem:[#allocation5 + $0x20] sm:$0xf]
    %v2617 = vld [vmem:[#allocation5 + $0x24] sm:$0xf]
    %v2618 = vld [vmem:[#allocation5 + $0x28] sm:$0xf]
    %v2619 = vld [vmem:[#allocation5 + $0x2c] sm:$0xf]
    %v2620 = vld [vmem:[#allocation5 + $0x30] sm:$0xf]
    %v2621 = vld [vmem:[#allocation5 + $0x34] sm:$0xf]
    %v2622 = vld [vmem:[%s2268 + $0x1] sm:$0x7f]
    %v2623 = vpack.c.bf16 %v2622, %v2622
    %v2624 = vld [vmem:[%s2290] sm:$0xf]
    %v2625 = vld [vmem:[%s2290 + $0x4] sm:$0xf]
    %v2626 = vld [vmem:[%s2290 + $0x8] sm:$0xf]
    %v2627 = vld [vmem:[%s2290 + $0xc] sm:$0xf]
    %v2628 = vld [vmem:[%s2290 + $0x10] sm:$0xf]
    %v2629 = vld [vmem:[%s2290 + $0x14] sm:$0xf]
    %v2630 = vld [vmem:[%s2290 + $0x18] sm:$0xf]
    %v2631 = vld [vmem:[%s2290 + $0x1c] sm:$0xf]
    %v2632 = vld [vmem:[%s2290 + $0x20] sm:$0xf]
    %v2633 = vld [vmem:[%s2290 + $0x24] sm:$0xf]
    %v2634 = vld [vmem:[%s2290 + $0x28] sm:$0xf]
    %v2635 = vld [vmem:[%s2290 + $0x2c] sm:$0xf]
    %v2636 = vld [vmem:[%s2290 + $0x30] sm:$0xf]
    %v2637 = vld [vmem:[%s2290 + $0x34] sm:$0xf]
    %v2652 = vunpack.c.l.b16 %v2624
    %v2653 = vunpack.c.l.b16 %v2625
    %v2654 = vunpack.c.l.b16 %v2626
    %v2655 = vunpack.c.l.b16 %v2627
    %v2656 = vunpack.c.l.b16 %v2628
    %v2657 = vunpack.c.l.b16 %v2629
    %v2658 = vunpack.c.l.b16 %v2630
    %v2659 = vunpack.c.l.b16 %v2631
    %v2660 = vunpack.c.l.b16 %v2632
    %v2661 = vunpack.c.l.b16 %v2633
    %v2662 = vunpack.c.l.b16 %v2634
    %v2663 = vunpack.c.l.b16 %v2635
    %v2664 = vunpack.c.l.b16 %v2636
    %v2665 = vunpack.c.l.b16 %v2637
    %v2666 = vpack.c.b16 %v2653, %v2652
    %v2667 = vpack.c.b16 %v2655, %v2654
    %v2668 = vpack.c.b16 %v2657, %v2656
    %v2669 = vpack.c.b16 %v2659, %v2658
    %v2670 = vpack.c.b16 %v2661, %v2660
    %v2671 = vpack.c.b16 %v2663, %v2662
    %v2672 = vpack.c.b16 %v2665, %v2664
    %v2681 = vsel %vm1079, %v2623, 0
    %2683 = vmatprep.subr.bf16.mxu0 0
    %2684 = vmatpush1.bf16.msra.mxu0 0
    %2685 = vmatprep.subr.bf16.mxu0 0
    %2686 = vmatpush1.bf16.msra.mxu0 %v2672
    %2687 = vmatprep.subr.bf16.mxu0 0
    %2688 = vmatpush1.bf16.msra.mxu0 %v2671
    %2689 = vmatprep.subr.bf16.mxu0 0
    %2690 = vmatpush1.bf16.msra.mxu0 %v2670
    %2691 = vmatprep.subr.bf16.mxu0 0
    %2692 = vmatpush1.bf16.msra.mxu0 %v2669
    %2693 = vmatprep.subr.bf16.mxu0 0
    %2694 = vmatpush1.bf16.msra.mxu0 %v2668
    %2695 = vmatprep.subr.bf16.mxu0 0
    %2696 = vmatpush1.bf16.msra.mxu0 %v2667
    %2697 = vmatprep.subr.bf16.mxu0 0
    %2698 = vmatpush1.bf16.msra.mxu0 %v2666
    %2699 = vmatprep.subr.bf16.mxu0 0
    %2700 = vmatpush2.bf16.msra.mxu0 0
    %2701 = vmatprep.subr.bf16.mxu0 0
    %2702 = vmatpush2.bf16.msra.mxu0 0
    %2703 = vmatprep.subr.bf16.mxu0 0
    %2704 = vmatpush2.bf16.msra.mxu0 0
    %2705 = vmatprep.subr.bf16.mxu0 0
    %2706 = vmatpush2.bf16.msra.mxu0 0
    %2707 = vmatprep.subr.bf16.mxu0 0
    %2708 = vmatpush2.bf16.msra.mxu0 0
    %2709 = vmatprep.subr.bf16.mxu0 0
    %2710 = vmatpush2.bf16.msra.mxu0 0
    %2711 = vmatprep.subr.bf16.mxu0 0
    %2712 = vmatpush2.bf16.msra.mxu0 0
    %2713 = vmatprep.subr.bf16.mxu0 0
    %2714 = vmatpush2.bf16.msra.mxu0 0
    %2715 = vmatprep.mubr.bf16.mxu0 0
    %2716 = vmatmul.mubr.bf16.gmra.mxu0 %v2681
    %v2717 = vpop.f32.mrf.mxu0
    %v2718 = vadd.f32 0.0, %v2717
    %v2719 = vpop.f32.mrf.mxu0
    %v2720 = vpop.f32.mrf.mxu0
    %v2721 = vpop.f32.mrf.mxu0
    %2722 = vdwg.mxu0
    %v2737 = vunpack.c.l.b16 %v2608
    %v2738 = vunpack.c.l.b16 %v2609
    %v2739 = vunpack.c.l.b16 %v2610
    %v2740 = vunpack.c.l.b16 %v2611
    %v2741 = vunpack.c.l.b16 %v2612
    %v2742 = vunpack.c.l.b16 %v2613
    %v2743 = vunpack.c.l.b16 %v2614
    %v2744 = vunpack.c.l.b16 %v2615
    %v2745 = vunpack.c.l.b16 %v2616
    %v2746 = vunpack.c.l.b16 %v2617
    %v2747 = vunpack.c.l.b16 %v2618
    %v2748 = vunpack.c.l.b16 %v2619
    %v2749 = vunpack.c.l.b16 %v2620
    %v2750 = vunpack.c.l.b16 %v2621
    %v2751 = vpack.c.b16 %v2738, %v2737
    %v2752 = vpack.c.b16 %v2740, %v2739
    %v2753 = vpack.c.b16 %v2742, %v2741
    %v2754 = vpack.c.b16 %v2744, %v2743
    %v2755 = vpack.c.b16 %v2746, %v2745
    %v2756 = vpack.c.b16 %v2748, %v2747
    %v2757 = vpack.c.b16 %v2750, %v2749
    %v2766 = vsel %vm1079, %v2607, 0
    %2768 = vmatprep.subr.bf16.mxu0 0
    %2769 = vmatpush1.bf16.msra.mxu0 0
    %2770 = vmatprep.subr.bf16.mxu0 0
    %2771 = vmatpush1.bf16.msra.mxu0 %v2757
    %2772 = vmatprep.subr.bf16.mxu0 0
    %2773 = vmatpush1.bf16.msra.mxu0 %v2756
    %2774 = vmatprep.subr.bf16.mxu0 0
    %2775 = vmatpush1.bf16.msra.mxu0 %v2755
    %2776 = vmatprep.subr.bf16.mxu0 0
    %2777 = vmatpush1.bf16.msra.mxu0 %v2754
    %2778 = vmatprep.subr.bf16.mxu0 0
    %2779 = vmatpush1.bf16.msra.mxu0 %v2753
    %2780 = vmatprep.subr.bf16.mxu0 0
    %2781 = vmatpush1.bf16.msra.mxu0 %v2752
    %2782 = vmatprep.subr.bf16.mxu0 0
    %2783 = vmatpush1.bf16.msra.mxu0 %v2751
    %2784 = vmatprep.subr.bf16.mxu0 0
    %2785 = vmatpush2.bf16.msra.mxu0 0
    %2786 = vmatprep.subr.bf16.mxu0 0
    %2787 = vmatpush2.bf16.msra.mxu0 0
    %2788 = vmatprep.subr.bf16.mxu0 0
    %2789 = vmatpush2.bf16.msra.mxu0 0
    %2790 = vmatprep.subr.bf16.mxu0 0
    %2791 = vmatpush2.bf16.msra.mxu0 0
    %2792 = vmatprep.subr.bf16.mxu0 0
    %2793 = vmatpush2.bf16.msra.mxu0 0
    %2794 = vmatprep.subr.bf16.mxu0 0
    %2795 = vmatpush2.bf16.msra.mxu0 0
    %2796 = vmatprep.subr.bf16.mxu0 0
    %2797 = vmatpush2.bf16.msra.mxu0 0
    %2798 = vmatprep.subr.bf16.mxu0 0
    %2799 = vmatpush2.bf16.msra.mxu0 0
    %2800 = vmatprep.mubr.bf16.mxu0 0
    %2801 = vmatmul.mubr.bf16.gmra.mxu0 %v2766
    %v2802 = vpop.f32.mrf.mxu0
    %v2803 = vadd.f32 %v2718, %v2802
    %v2804 = vpop.f32.mrf.mxu0
    %v2805 = vpop.f32.mrf.mxu0
    %v2806 = vpop.f32.mrf.mxu0
    %2807 = vdwg.mxu0
    %v2808 = vld [vmem:[%s2268 + $0x2] sm:$0x7f]
    %v2809 = vpack.c.bf16 %v2808, %v2808
    %v2810 = vld [vmem:[%s2477] sm:$0xf]
    %v2811 = vld [vmem:[%s2477 + $0x4] sm:$0xf]
    %v2812 = vld [vmem:[%s2477 + $0x8] sm:$0xf]
    %v2813 = vld [vmem:[%s2477 + $0xc] sm:$0xf]
    %v2814 = vld [vmem:[%s2477 + $0x10] sm:$0xf]
    %v2815 = vld [vmem:[%s2477 + $0x14] sm:$0xf]
    %v2816 = vld [vmem:[%s2477 + $0x18] sm:$0xf]
    %v2817 = vld [vmem:[%s2477 + $0x1c] sm:$0xf]
    %v2818 = vld [vmem:[%s2477 + $0x20] sm:$0xf]
    %v2819 = vld [vmem:[%s2477 + $0x24] sm:$0xf]
    %v2820 = vld [vmem:[%s2477 + $0x28] sm:$0xf]
    %v2821 = vld [vmem:[%s2477 + $0x2c] sm:$0xf]
    %v2822 = vld [vmem:[%s2477 + $0x30] sm:$0xf]
    %v2823 = vld [vmem:[%s2477 + $0x34] sm:$0xf]
    %v2838 = vunpack.c.l.b16 %v2810
    %v2839 = vunpack.c.l.b16 %v2811
    %v2840 = vunpack.c.l.b16 %v2812
    %v2841 = vunpack.c.l.b16 %v2813
    %v2842 = vunpack.c.l.b16 %v2814
    %v2843 = vunpack.c.l.b16 %v2815
    %v2844 = vunpack.c.l.b16 %v2816
    %v2845 = vunpack.c.l.b16 %v2817
    %v2846 = vunpack.c.l.b16 %v2818
    %v2847 = vunpack.c.l.b16 %v2819
    %v2848 = vunpack.c.l.b16 %v2820
    %v2849 = vunpack.c.l.b16 %v2821
    %v2850 = vunpack.c.l.b16 %v2822
    %v2851 = vunpack.c.l.b16 %v2823
    %v2852 = vpack.c.b16 %v2839, %v2838
    %v2853 = vpack.c.b16 %v2841, %v2840
    %v2854 = vpack.c.b16 %v2843, %v2842
    %v2855 = vpack.c.b16 %v2845, %v2844
    %v2856 = vpack.c.b16 %v2847, %v2846
    %v2857 = vpack.c.b16 %v2849, %v2848
    %v2858 = vpack.c.b16 %v2851, %v2850
    %v2867 = vsel %vm1079, %v2809, 0
    %2869 = vmatprep.subr.bf16.mxu0 0
    %2870 = vmatpush1.bf16.msra.mxu0 0
    %2871 = vmatprep.subr.bf16.mxu0 0
    %2872 = vmatpush1.bf16.msra.mxu0 %v2858
    %2873 = vmatprep.subr.bf16.mxu0 0
    %2874 = vmatpush1.bf16.msra.mxu0 %v2857
    %2875 = vmatprep.subr.bf16.mxu0 0
    %2876 = vmatpush1.bf16.msra.mxu0 %v2856
    %2877 = vmatprep.subr.bf16.mxu0 0
    %2878 = vmatpush1.bf16.msra.mxu0 %v2855
    %2879 = vmatprep.subr.bf16.mxu0 0
    %2880 = vmatpush1.bf16.msra.mxu0 %v2854
    %2881 = vmatprep.subr.bf16.mxu0 0
    %2882 = vmatpush1.bf16.msra.mxu0 %v2853
    %2883 = vmatprep.subr.bf16.mxu0 0
    %2884 = vmatpush1.bf16.msra.mxu0 %v2852
    %2885 = vmatprep.subr.bf16.mxu0 0
    %2886 = vmatpush2.bf16.msra.mxu0 0
    %2887 = vmatprep.subr.bf16.mxu0 0
    %2888 = vmatpush2.bf16.msra.mxu0 0
    %2889 = vmatprep.subr.bf16.mxu0 0
    %2890 = vmatpush2.bf16.msra.mxu0 0
    %2891 = vmatprep.subr.bf16.mxu0 0
    %2892 = vmatpush2.bf16.msra.mxu0 0
    %2893 = vmatprep.subr.bf16.mxu0 0
    %2894 = vmatpush2.bf16.msra.mxu0 0
    %2895 = vmatprep.subr.bf16.mxu0 0
    %2896 = vmatpush2.bf16.msra.mxu0 0
    %2897 = vmatprep.subr.bf16.mxu0 0
    %2898 = vmatpush2.bf16.msra.mxu0 0
    %2899 = vmatprep.subr.bf16.mxu0 0
    %2900 = vmatpush2.bf16.msra.mxu0 0
    %2901 = vmatprep.mubr.bf16.mxu0 0
    %2902 = vmatmul.mubr.bf16.gmra.mxu0 %v2867
    %v2903 = vpop.f32.mrf.mxu0
    %v2904 = vadd.f32 0.0, %v2903
    %v2905 = vpop.f32.mrf.mxu0
    %v2906 = vpop.f32.mrf.mxu0
    %v2907 = vpop.f32.mrf.mxu0
    %2908 = vdwg.mxu0
    %v2909 = vadd.f32 %v2803, %v2904
    %v2910 = vld [vmem:[#allocation16] sm:$0x1]
    %v2912 = vlaneseq
    %v2913 = vshrl.u32 %v2912, 7
    %v2914 = vsub.s32 0, %v2913
    %v2915 = vrot.slane %v2910, %v2914
    %v2917 = vadd.f32 %v2909, %v2915
    %v2918 = vmax.f32 %v2917, 0.0
    %s2919 = scalar_lea.vmem [#allocation13], 16
    %2920 = vst.msk [vmem:[%s2919 + $0x1] sm:$0x1] %vm356, %v2918
    %2921 = vst.msk [vmem:[%s2919 + $0x2] sm:$0x1] %vm356, %v2918
    %2922 = vst.msk [vmem:[%s2919 + $0x2] sm:$0x2] %vm987, %v2918
    %2923 = vst.msk [vmem:[%s2919 + $0x3] sm:$0x2] %vm987, %v2918
    %2924 = vst.msk [vmem:[%s2919 + $0x3] sm:$0x4] %vm2591, %v2918
    %2925 = vst.msk [vmem:[%s2919 + $0x4] sm:$0x4] %vm2591, %v2918
    %2926 = vst.msk [vmem:[%s2919 + $0x4] sm:$0x8] %vm2594, %v2918
    %2927 = vst.msk [vmem:[%s2919 + $0x5] sm:$0x8] %vm2594, %v2918
    %2928 = vst.msk [vmem:[%s2919 + $0x5] sm:$0x10] %vm2597, %v2918
    %2929 = vst.msk [vmem:[%s2919 + $0x6] sm:$0x10] %vm2597, %v2918
    %2930 = vst.msk [vmem:[%s2919 + $0x6] sm:$0x20] %vm2600, %v2918
    %2931 = vst.msk [vmem:[%s2919 + $0x7] sm:$0x20] %vm2600, %v2918
    %2932 = vst.msk [vmem:[%s2919 + $0x7] sm:$0x40] %vm2603, %v2918
    %2933 = vst.msk [vmem:[%s2919 + $0x8] sm:$0x40] %vm2603, %v2918
    %s2934 = sshll.u32 %s1001, 4
    %2935 = dma.done %s206, %s2934
    %v2936 = vld [vmem:[#allocation13] sm:$0xff]
    %v2937 = vld [vmem:[#allocation13 + $0x8] sm:$0x3f]
    %v2938 = vpack.c.bf16 %v2937, %v2936
    %v2939 = vld [vmem:[#allocation6] sm:$0xf]
    %v2940 = vld [vmem:[#allocation6 + $0x4] sm:$0xf]
    %v2941 = vld [vmem:[#allocation6 + $0x8] sm:$0xf]
    %v2942 = vld [vmem:[#allocation6 + $0xc] sm:$0xf]
    %v2943 = vld [vmem:[#allocation6 + $0x10] sm:$0xf]
    %v2944 = vld [vmem:[#allocation6 + $0x14] sm:$0xf]
    %v2945 = vld [vmem:[#allocation6 + $0x18] sm:$0xf]
    %v2946 = vld [vmem:[#allocation6 + $0x1c] sm:$0xf]
    %v2947 = vld [vmem:[#allocation6 + $0x20] sm:$0xf]
    %v2948 = vld [vmem:[#allocation6 + $0x24] sm:$0xf]
    %v2949 = vld [vmem:[#allocation6 + $0x28] sm:$0xf]
    %v2950 = vld [vmem:[#allocation6 + $0x2c] sm:$0xf]
    %v2951 = vld [vmem:[#allocation6 + $0x30] sm:$0xf]
    %v2952 = vld [vmem:[#allocation6 + $0x34] sm:$0xf]
    %v2953 = vld [vmem:[#allocation13 + $0x1] sm:$0xff]
    %v2954 = vld [vmem:[#allocation13 + $0x9] sm:$0x3f]
    %v2955 = vpack.c.bf16 %v2954, %v2953
    %s2956 = scalar_lea.vmem [#allocation6], 56
    %v2957 = vld [vmem:[%s2956] sm:$0xf]
    %v2958 = vld [vmem:[%s2956 + $0x4] sm:$0xf]
    %v2959 = vld [vmem:[%s2956 + $0x8] sm:$0xf]
    %v2960 = vld [vmem:[%s2956 + $0xc] sm:$0xf]
    %v2961 = vld [vmem:[%s2956 + $0x10] sm:$0xf]
    %v2962 = vld [vmem:[%s2956 + $0x14] sm:$0xf]
    %v2963 = vld [vmem:[%s2956 + $0x18] sm:$0xf]
    %v2964 = vld [vmem:[%s2956 + $0x1c] sm:$0xf]
    %v2965 = vld [vmem:[%s2956 + $0x20] sm:$0xf]
    %v2966 = vld [vmem:[%s2956 + $0x24] sm:$0xf]
    %v2967 = vld [vmem:[%s2956 + $0x28] sm:$0xf]
    %v2968 = vld [vmem:[%s2956 + $0x2c] sm:$0xf]
    %v2969 = vld [vmem:[%s2956 + $0x30] sm:$0xf]
    %v2970 = vld [vmem:[%s2956 + $0x34] sm:$0xf]
    %v2985 = vunpack.c.l.b16 %v2957
    %v2986 = vunpack.c.l.b16 %v2958
    %v2987 = vunpack.c.l.b16 %v2959
    %v2988 = vunpack.c.l.b16 %v2960
    %v2989 = vunpack.c.l.b16 %v2961
    %v2990 = vunpack.c.l.b16 %v2962
    %v2991 = vunpack.c.l.b16 %v2963
    %v2992 = vunpack.c.l.b16 %v2964
    %v2993 = vunpack.c.l.b16 %v2965
    %v2994 = vunpack.c.l.b16 %v2966
    %v2995 = vunpack.c.l.b16 %v2967
    %v2996 = vunpack.c.l.b16 %v2968
    %v2997 = vunpack.c.l.b16 %v2969
    %v2998 = vunpack.c.l.b16 %v2970
    %v2999 = vpack.c.b16 %v2986, %v2985
    %v3000 = vpack.c.b16 %v2988, %v2987
    %v3001 = vpack.c.b16 %v2990, %v2989
    %v3002 = vpack.c.b16 %v2992, %v2991
    %v3003 = vpack.c.b16 %v2994, %v2993
    %v3004 = vpack.c.b16 %v2996, %v2995
    %v3005 = vpack.c.b16 %v2998, %v2997
    %v3014 = vsel %vm1079, %v2955, 0
    %3016 = vmatprep.subr.bf16.mxu0 0
    %3017 = vmatpush1.bf16.msra.mxu0 0
    %3018 = vmatprep.subr.bf16.mxu0 0
    %3019 = vmatpush1.bf16.msra.mxu0 %v3005
    %3020 = vmatprep.subr.bf16.mxu0 0
    %3021 = vmatpush1.bf16.msra.mxu0 %v3004
    %3022 = vmatprep.subr.bf16.mxu0 0
    %3023 = vmatpush1.bf16.msra.mxu0 %v3003
    %3024 = vmatprep.subr.bf16.mxu0 0
    %3025 = vmatpush1.bf16.msra.mxu0 %v3002
    %3026 = vmatprep.subr.bf16.mxu0 0
    %3027 = vmatpush1.bf16.msra.mxu0 %v3001
    %3028 = vmatprep.subr.bf16.mxu0 0
    %3029 = vmatpush1.bf16.msra.mxu0 %v3000
    %3030 = vmatprep.subr.bf16.mxu0 0
    %3031 = vmatpush1.bf16.msra.mxu0 %v2999
    %3032 = vmatprep.subr.bf16.mxu0 0
    %3033 = vmatpush2.bf16.msra.mxu0 0
    %3034 = vmatprep.subr.bf16.mxu0 0
    %3035 = vmatpush2.bf16.msra.mxu0 0
    %3036 = vmatprep.subr.bf16.mxu0 0
    %3037 = vmatpush2.bf16.msra.mxu0 0
    %3038 = vmatprep.subr.bf16.mxu0 0
    %3039 = vmatpush2.bf16.msra.mxu0 0
    %3040 = vmatprep.subr.bf16.mxu0 0
    %3041 = vmatpush2.bf16.msra.mxu0 0
    %3042 = vmatprep.subr.bf16.mxu0 0
    %3043 = vmatpush2.bf16.msra.mxu0 0
    %3044 = vmatprep.subr.bf16.mxu0 0
    %3045 = vmatpush2.bf16.msra.mxu0 0
    %3046 = vmatprep.subr.bf16.mxu0 0
    %3047 = vmatpush2.bf16.msra.mxu0 0
    %3048 = vmatprep.mubr.bf16.mxu0 0
    %3049 = vmatmul.mubr.bf16.gmra.mxu0 %v3014
    %v3050 = vpop.f32.mrf.mxu0
    %v3051 = vadd.f32 0.0, %v3050
    %v3052 = vpop.f32.mrf.mxu0
    %v3053 = vpop.f32.mrf.mxu0
    %v3054 = vadd.f32 0.0, %v3053
    %v3055 = vpop.f32.mrf.mxu0
    %3056 = vdwg.mxu0
    %v3071 = vunpack.c.l.b16 %v2939
    %v3072 = vunpack.c.l.b16 %v2940
    %v3073 = vunpack.c.l.b16 %v2941
    %v3074 = vunpack.c.l.b16 %v2942
    %v3075 = vunpack.c.l.b16 %v2943
    %v3076 = vunpack.c.l.b16 %v2944
    %v3077 = vunpack.c.l.b16 %v2945
    %v3078 = vunpack.c.l.b16 %v2946
    %v3079 = vunpack.c.l.b16 %v2947
    %v3080 = vunpack.c.l.b16 %v2948
    %v3081 = vunpack.c.l.b16 %v2949
    %v3082 = vunpack.c.l.b16 %v2950
    %v3083 = vunpack.c.l.b16 %v2951
    %v3084 = vunpack.c.l.b16 %v2952
    %v3085 = vpack.c.b16 %v3072, %v3071
    %v3086 = vpack.c.b16 %v3074, %v3073
    %v3087 = vpack.c.b16 %v3076, %v3075
    %v3088 = vpack.c.b16 %v3078, %v3077
    %v3089 = vpack.c.b16 %v3080, %v3079
    %v3090 = vpack.c.b16 %v3082, %v3081
    %v3091 = vpack.c.b16 %v3084, %v3083
    %v3100 = vsel %vm1079, %v2938, 0
    %3102 = vmatprep.subr.bf16.mxu0 0
    %3103 = vmatpush1.bf16.msra.mxu0 0
    %3104 = vmatprep.subr.bf16.mxu0 0
    %3105 = vmatpush1.bf16.msra.mxu0 %v3091
    %3106 = vmatprep.subr.bf16.mxu0 0
    %3107 = vmatpush1.bf16.msra.mxu0 %v3090
    %3108 = vmatprep.subr.bf16.mxu0 0
    %3109 = vmatpush1.bf16.msra.mxu0 %v3089
    %3110 = vmatprep.subr.bf16.mxu0 0
    %3111 = vmatpush1.bf16.msra.mxu0 %v3088
    %3112 = vmatprep.subr.bf16.mxu0 0
    %3113 = vmatpush1.bf16.msra.mxu0 %v3087
    %3114 = vmatprep.subr.bf16.mxu0 0
    %3115 = vmatpush1.bf16.msra.mxu0 %v3086
    %3116 = vmatprep.subr.bf16.mxu0 0
    %3117 = vmatpush1.bf16.msra.mxu0 %v3085
    %3118 = vmatprep.subr.bf16.mxu0 0
    %3119 = vmatpush2.bf16.msra.mxu0 0
    %3120 = vmatprep.subr.bf16.mxu0 0
    %3121 = vmatpush2.bf16.msra.mxu0 0
    %3122 = vmatprep.subr.bf16.mxu0 0
    %3123 = vmatpush2.bf16.msra.mxu0 0
    %3124 = vmatprep.subr.bf16.mxu0 0
    %3125 = vmatpush2.bf16.msra.mxu0 0
    %3126 = vmatprep.subr.bf16.mxu0 0
    %3127 = vmatpush2.bf16.msra.mxu0 0
    %3128 = vmatprep.subr.bf16.mxu0 0
    %3129 = vmatpush2.bf16.msra.mxu0 0
    %3130 = vmatprep.subr.bf16.mxu0 0
    %3131 = vmatpush2.bf16.msra.mxu0 0
    %3132 = vmatprep.subr.bf16.mxu0 0
    %3133 = vmatpush2.bf16.msra.mxu0 0
    %3134 = vmatprep.mubr.bf16.mxu0 0
    %3135 = vmatmul.mubr.bf16.gmra.mxu0 %v3100
    %v3136 = vpop.f32.mrf.mxu0
    %v3137 = vadd.f32 %v3051, %v3136
    %v3138 = vpop.f32.mrf.mxu0
    %v3139 = vpop.f32.mrf.mxu0
    %v3140 = vadd.f32 %v3054, %v3139
    %v3141 = vpop.f32.mrf.mxu0
    %3142 = vdwg.mxu0
    %v3143 = vld [vmem:[#allocation13 + $0x2] sm:$0xff]
    %v3144 = vld [vmem:[#allocation13 + $0xa] sm:$0x3f]
    %v3145 = vpack.c.bf16 %v3144, %v3143
    %s3146 = scalar_lea.vmem [#allocation6], 112
    %v3147 = vld [vmem:[%s3146] sm:$0xf]
    %v3148 = vld [vmem:[%s3146 + $0x4] sm:$0xf]
    %v3149 = vld [vmem:[%s3146 + $0x8] sm:$0xf]
    %v3150 = vld [vmem:[%s3146 + $0xc] sm:$0xf]
    %v3151 = vld [vmem:[%s3146 + $0x10] sm:$0xf]
    %v3152 = vld [vmem:[%s3146 + $0x14] sm:$0xf]
    %v3153 = vld [vmem:[%s3146 + $0x18] sm:$0xf]
    %v3154 = vld [vmem:[%s3146 + $0x1c] sm:$0xf]
    %v3155 = vld [vmem:[%s3146 + $0x20] sm:$0xf]
    %v3156 = vld [vmem:[%s3146 + $0x24] sm:$0xf]
    %v3157 = vld [vmem:[%s3146 + $0x28] sm:$0xf]
    %v3158 = vld [vmem:[%s3146 + $0x2c] sm:$0xf]
    %v3159 = vld [vmem:[%s3146 + $0x30] sm:$0xf]
    %v3160 = vld [vmem:[%s3146 + $0x34] sm:$0xf]
    %v3175 = vunpack.c.l.b16 %v3147
    %v3176 = vunpack.c.l.b16 %v3148
    %v3177 = vunpack.c.l.b16 %v3149
    %v3178 = vunpack.c.l.b16 %v3150
    %v3179 = vunpack.c.l.b16 %v3151
    %v3180 = vunpack.c.l.b16 %v3152
    %v3181 = vunpack.c.l.b16 %v3153
    %v3182 = vunpack.c.l.b16 %v3154
    %v3183 = vunpack.c.l.b16 %v3155
    %v3184 = vunpack.c.l.b16 %v3156
    %v3185 = vunpack.c.l.b16 %v3157
    %v3186 = vunpack.c.l.b16 %v3158
    %v3187 = vunpack.c.l.b16 %v3159
    %v3188 = vunpack.c.l.b16 %v3160
    %v3189 = vpack.c.b16 %v3176, %v3175
    %v3190 = vpack.c.b16 %v3178, %v3177
    %v3191 = vpack.c.b16 %v3180, %v3179
    %v3192 = vpack.c.b16 %v3182, %v3181
    %v3193 = vpack.c.b16 %v3184, %v3183
    %v3194 = vpack.c.b16 %v3186, %v3185
    %v3195 = vpack.c.b16 %v3188, %v3187
    %v3204 = vsel %vm1079, %v3145, 0
    %3206 = vmatprep.subr.bf16.mxu0 0
    %3207 = vmatpush1.bf16.msra.mxu0 0
    %3208 = vmatprep.subr.bf16.mxu0 0
    %3209 = vmatpush1.bf16.msra.mxu0 %v3195
    %3210 = vmatprep.subr.bf16.mxu0 0
    %3211 = vmatpush1.bf16.msra.mxu0 %v3194
    %3212 = vmatprep.subr.bf16.mxu0 0
    %3213 = vmatpush1.bf16.msra.mxu0 %v3193
    %3214 = vmatprep.subr.bf16.mxu0 0
    %3215 = vmatpush1.bf16.msra.mxu0 %v3192
    %3216 = vmatprep.subr.bf16.mxu0 0
    %3217 = vmatpush1.bf16.msra.mxu0 %v3191
    %3218 = vmatprep.subr.bf16.mxu0 0
    %3219 = vmatpush1.bf16.msra.mxu0 %v3190
    %3220 = vmatprep.subr.bf16.mxu0 0
    %3221 = vmatpush1.bf16.msra.mxu0 %v3189
    %3222 = vmatprep.subr.bf16.mxu0 0
    %3223 = vmatpush2.bf16.msra.mxu0 0
    %3224 = vmatprep.subr.bf16.mxu0 0
    %3225 = vmatpush2.bf16.msra.mxu0 0
    %3226 = vmatprep.subr.bf16.mxu0 0
    %3227 = vmatpush2.bf16.msra.mxu0 0
    %3228 = vmatprep.subr.bf16.mxu0 0
    %3229 = vmatpush2.bf16.msra.mxu0 0
    %3230 = vmatprep.subr.bf16.mxu0 0
    %3231 = vmatpush2.bf16.msra.mxu0 0
    %3232 = vmatprep.subr.bf16.mxu0 0
    %3233 = vmatpush2.bf16.msra.mxu0 0
    %3234 = vmatprep.subr.bf16.mxu0 0
    %3235 = vmatpush2.bf16.msra.mxu0 0
    %3236 = vmatprep.subr.bf16.mxu0 0
    %3237 = vmatpush2.bf16.msra.mxu0 0
    %3238 = vmatprep.mubr.bf16.mxu0 0
    %3239 = vmatmul.mubr.bf16.gmra.mxu0 %v3204
    %v3240 = vpop.f32.mrf.mxu0
    %v3241 = vadd.f32 0.0, %v3240
    %v3242 = vpop.f32.mrf.mxu0
    %v3243 = vpop.f32.mrf.mxu0
    %v3244 = vadd.f32 0.0, %v3243
    %v3245 = vpop.f32.mrf.mxu0
    %3246 = vdwg.mxu0
    %v3247 = vadd.f32 %v3137, %v3241
    %v3248 = vadd.f32 %v3140, %v3244
    %v3249 = vld [vmem:[#allocation19] sm:$0x1]
    %v3251 = vlaneseq
    %v3252 = vshrl.u32 %v3251, 7
    %v3253 = vsub.s32 0, %v3252
    %v3254 = vrot.slane %v3249, %v3253
    %v3256 = vadd.f32 %v3247, %v3254
    %v3257 = vadd.f32 %v3248, %v3254
    %v3258 = vmax.f32 %v3256, 0.0
    %v3259 = vmax.f32 %v3257, 0.0
    %3260 = vst.msk [vmem:[#allocation14 + $0x1] sm:$0xff] %vm1079, %v3258
    %vm3261 = vcmask 914432
    %3262 = vst.msk [vmem:[#allocation14 + $0x9] sm:$0x3f] %vm3261, %v3259
    %v3263 = vld [vmem:[%s2919] sm:$0xff]
    %v3264 = vld [vmem:[%s2919 + $0x8] sm:$0x3f]
    %v3265 = vpack.c.bf16 %v3264, %v3263
    %v3266 = vld [vmem:[#allocation6] sm:$0xf]
    %v3267 = vld [vmem:[#allocation6 + $0x4] sm:$0xf]
    %v3268 = vld [vmem:[#allocation6 + $0x8] sm:$0xf]
    %v3269 = vld [vmem:[#allocation6 + $0xc] sm:$0xf]
    %v3270 = vld [vmem:[#allocation6 + $0x10] sm:$0xf]
    %v3271 = vld [vmem:[#allocation6 + $0x14] sm:$0xf]
    %v3272 = vld [vmem:[#allocation6 + $0x18] sm:$0xf]
    %v3273 = vld [vmem:[#allocation6 + $0x1c] sm:$0xf]
    %v3274 = vld [vmem:[#allocation6 + $0x20] sm:$0xf]
    %v3275 = vld [vmem:[#allocation6 + $0x24] sm:$0xf]
    %v3276 = vld [vmem:[#allocation6 + $0x28] sm:$0xf]
    %v3277 = vld [vmem:[#allocation6 + $0x2c] sm:$0xf]
    %v3278 = vld [vmem:[#allocation6 + $0x30] sm:$0xf]
    %v3279 = vld [vmem:[#allocation6 + $0x34] sm:$0xf]
    %v3280 = vld [vmem:[%s2919 + $0x1] sm:$0xff]
    %v3281 = vld [vmem:[%s2919 + $0x9] sm:$0x3f]
    %v3282 = vpack.c.bf16 %v3281, %v3280
    %v3283 = vld [vmem:[%s2956] sm:$0xf]
    %v3284 = vld [vmem:[%s2956 + $0x4] sm:$0xf]
    %v3285 = vld [vmem:[%s2956 + $0x8] sm:$0xf]
    %v3286 = vld [vmem:[%s2956 + $0xc] sm:$0xf]
    %v3287 = vld [vmem:[%s2956 + $0x10] sm:$0xf]
    %v3288 = vld [vmem:[%s2956 + $0x14] sm:$0xf]
    %v3289 = vld [vmem:[%s2956 + $0x18] sm:$0xf]
    %v3290 = vld [vmem:[%s2956 + $0x1c] sm:$0xf]
    %v3291 = vld [vmem:[%s2956 + $0x20] sm:$0xf]
    %v3292 = vld [vmem:[%s2956 + $0x24] sm:$0xf]
    %v3293 = vld [vmem:[%s2956 + $0x28] sm:$0xf]
    %v3294 = vld [vmem:[%s2956 + $0x2c] sm:$0xf]
    %v3295 = vld [vmem:[%s2956 + $0x30] sm:$0xf]
    %v3296 = vld [vmem:[%s2956 + $0x34] sm:$0xf]
    %v3311 = vunpack.c.l.b16 %v3283
    %v3312 = vunpack.c.l.b16 %v3284
    %v3313 = vunpack.c.l.b16 %v3285
    %v3314 = vunpack.c.l.b16 %v3286
    %v3315 = vunpack.c.l.b16 %v3287
    %v3316 = vunpack.c.l.b16 %v3288
    %v3317 = vunpack.c.l.b16 %v3289
    %v3318 = vunpack.c.l.b16 %v3290
    %v3319 = vunpack.c.l.b16 %v3291
    %v3320 = vunpack.c.l.b16 %v3292
    %v3321 = vunpack.c.l.b16 %v3293
    %v3322 = vunpack.c.l.b16 %v3294
    %v3323 = vunpack.c.l.b16 %v3295
    %v3324 = vunpack.c.l.b16 %v3296
    %v3325 = vpack.c.b16 %v3312, %v3311
    %v3326 = vpack.c.b16 %v3314, %v3313
    %v3327 = vpack.c.b16 %v3316, %v3315
    %v3328 = vpack.c.b16 %v3318, %v3317
    %v3329 = vpack.c.b16 %v3320, %v3319
    %v3330 = vpack.c.b16 %v3322, %v3321
    %v3331 = vpack.c.b16 %v3324, %v3323
    %v3340 = vsel %vm1079, %v3282, 0
    %3342 = vmatprep.subr.bf16.mxu0 0
    %3343 = vmatpush1.bf16.msra.mxu0 0
    %3344 = vmatprep.subr.bf16.mxu0 0
    %3345 = vmatpush1.bf16.msra.mxu0 %v3331
    %3346 = vmatprep.subr.bf16.mxu0 0
    %3347 = vmatpush1.bf16.msra.mxu0 %v3330
    %3348 = vmatprep.subr.bf16.mxu0 0
    %3349 = vmatpush1.bf16.msra.mxu0 %v3329
    %3350 = vmatprep.subr.bf16.mxu0 0
    %3351 = vmatpush1.bf16.msra.mxu0 %v3328
    %3352 = vmatprep.subr.bf16.mxu0 0
    %3353 = vmatpush1.bf16.msra.mxu0 %v3327
    %3354 = vmatprep.subr.bf16.mxu0 0
    %3355 = vmatpush1.bf16.msra.mxu0 %v3326
    %3356 = vmatprep.subr.bf16.mxu0 0
    %3357 = vmatpush1.bf16.msra.mxu0 %v3325
    %3358 = vmatprep.subr.bf16.mxu0 0
    %3359 = vmatpush2.bf16.msra.mxu0 0
    %3360 = vmatprep.subr.bf16.mxu0 0
    %3361 = vmatpush2.bf16.msra.mxu0 0
    %3362 = vmatprep.subr.bf16.mxu0 0
    %3363 = vmatpush2.bf16.msra.mxu0 0
    %3364 = vmatprep.subr.bf16.mxu0 0
    %3365 = vmatpush2.bf16.msra.mxu0 0
    %3366 = vmatprep.subr.bf16.mxu0 0
    %3367 = vmatpush2.bf16.msra.mxu0 0
    %3368 = vmatprep.subr.bf16.mxu0 0
    %3369 = vmatpush2.bf16.msra.mxu0 0
    %3370 = vmatprep.subr.bf16.mxu0 0
    %3371 = vmatpush2.bf16.msra.mxu0 0
    %3372 = vmatprep.subr.bf16.mxu0 0
    %3373 = vmatpush2.bf16.msra.mxu0 0
    %3374 = vmatprep.mubr.bf16.mxu0 0
    %3375 = vmatmul.mubr.bf16.gmra.mxu0 %v3340
    %v3376 = vpop.f32.mrf.mxu0
    %v3377 = vadd.f32 0.0, %v3376
    %v3378 = vpop.f32.mrf.mxu0
    %v3379 = vpop.f32.mrf.mxu0
    %v3380 = vadd.f32 0.0, %v3379
    %v3381 = vpop.f32.mrf.mxu0
    %3382 = vdwg.mxu0
    %v3397 = vunpack.c.l.b16 %v3266
    %v3398 = vunpack.c.l.b16 %v3267
    %v3399 = vunpack.c.l.b16 %v3268
    %v3400 = vunpack.c.l.b16 %v3269
    %v3401 = vunpack.c.l.b16 %v3270
    %v3402 = vunpack.c.l.b16 %v3271
    %v3403 = vunpack.c.l.b16 %v3272
    %v3404 = vunpack.c.l.b16 %v3273
    %v3405 = vunpack.c.l.b16 %v3274
    %v3406 = vunpack.c.l.b16 %v3275
    %v3407 = vunpack.c.l.b16 %v3276
    %v3408 = vunpack.c.l.b16 %v3277
    %v3409 = vunpack.c.l.b16 %v3278
    %v3410 = vunpack.c.l.b16 %v3279
    %v3411 = vpack.c.b16 %v3398, %v3397
    %v3412 = vpack.c.b16 %v3400, %v3399
    %v3413 = vpack.c.b16 %v3402, %v3401
    %v3414 = vpack.c.b16 %v3404, %v3403
    %v3415 = vpack.c.b16 %v3406, %v3405
    %v3416 = vpack.c.b16 %v3408, %v3407
    %v3417 = vpack.c.b16 %v3410, %v3409
    %v3426 = vsel %vm1079, %v3265, 0
    %3428 = vmatprep.subr.bf16.mxu0 0
    %3429 = vmatpush1.bf16.msra.mxu0 0
    %3430 = vmatprep.subr.bf16.mxu0 0
    %3431 = vmatpush1.bf16.msra.mxu0 %v3417
    %3432 = vmatprep.subr.bf16.mxu0 0
    %3433 = vmatpush1.bf16.msra.mxu0 %v3416
    %3434 = vmatprep.subr.bf16.mxu0 0
    %3435 = vmatpush1.bf16.msra.mxu0 %v3415
    %3436 = vmatprep.subr.bf16.mxu0 0
    %3437 = vmatpush1.bf16.msra.mxu0 %v3414
    %3438 = vmatprep.subr.bf16.mxu0 0
    %3439 = vmatpush1.bf16.msra.mxu0 %v3413
    %3440 = vmatprep.subr.bf16.mxu0 0
    %3441 = vmatpush1.bf16.msra.mxu0 %v3412
    %3442 = vmatprep.subr.bf16.mxu0 0
    %3443 = vmatpush1.bf16.msra.mxu0 %v3411
    %3444 = vmatprep.subr.bf16.mxu0 0
    %3445 = vmatpush2.bf16.msra.mxu0 0
    %3446 = vmatprep.subr.bf16.mxu0 0
    %3447 = vmatpush2.bf16.msra.mxu0 0
    %3448 = vmatprep.subr.bf16.mxu0 0
    %3449 = vmatpush2.bf16.msra.mxu0 0
    %3450 = vmatprep.subr.bf16.mxu0 0
    %3451 = vmatpush2.bf16.msra.mxu0 0
    %3452 = vmatprep.subr.bf16.mxu0 0
    %3453 = vmatpush2.bf16.msra.mxu0 0
    %3454 = vmatprep.subr.bf16.mxu0 0
    %3455 = vmatpush2.bf16.msra.mxu0 0
    %3456 = vmatprep.subr.bf16.mxu0 0
    %3457 = vmatpush2.bf16.msra.mxu0 0
    %3458 = vmatprep.subr.bf16.mxu0 0
    %3459 = vmatpush2.bf16.msra.mxu0 0
    %3460 = vmatprep.mubr.bf16.mxu0 0
    %3461 = vmatmul.mubr.bf16.gmra.mxu0 %v3426
    %v3462 = vpop.f32.mrf.mxu0
    %v3463 = vadd.f32 %v3377, %v3462
    %v3464 = vpop.f32.mrf.mxu0
    %v3465 = vpop.f32.mrf.mxu0
    %v3466 = vadd.f32 %v3380, %v3465
    %v3467 = vpop.f32.mrf.mxu0
    %3468 = vdwg.mxu0
    %v3469 = vld [vmem:[%s2919 + $0x2] sm:$0xff]
    %v3470 = vld [vmem:[%s2919 + $0xa] sm:$0x3f]
    %v3471 = vpack.c.bf16 %v3470, %v3469
    %v3472 = vld [vmem:[%s3146] sm:$0xf]
    %v3473 = vld [vmem:[%s3146 + $0x4] sm:$0xf]
    %v3474 = vld [vmem:[%s3146 + $0x8] sm:$0xf]
    %v3475 = vld [vmem:[%s3146 + $0xc] sm:$0xf]
    %v3476 = vld [vmem:[%s3146 + $0x10] sm:$0xf]
    %v3477 = vld [vmem:[%s3146 + $0x14] sm:$0xf]
    %v3478 = vld [vmem:[%s3146 + $0x18] sm:$0xf]
    %v3479 = vld [vmem:[%s3146 + $0x1c] sm:$0xf]
    %v3480 = vld [vmem:[%s3146 + $0x20] sm:$0xf]
    %v3481 = vld [vmem:[%s3146 + $0x24] sm:$0xf]
    %v3482 = vld [vmem:[%s3146 + $0x28] sm:$0xf]
    %v3483 = vld [vmem:[%s3146 + $0x2c] sm:$0xf]
    %v3484 = vld [vmem:[%s3146 + $0x30] sm:$0xf]
    %v3485 = vld [vmem:[%s3146 + $0x34] sm:$0xf]
    %v3500 = vunpack.c.l.b16 %v3472
    %v3501 = vunpack.c.l.b16 %v3473
    %v3502 = vunpack.c.l.b16 %v3474
    %v3503 = vunpack.c.l.b16 %v3475
    %v3504 = vunpack.c.l.b16 %v3476
    %v3505 = vunpack.c.l.b16 %v3477
    %v3506 = vunpack.c.l.b16 %v3478
    %v3507 = vunpack.c.l.b16 %v3479
    %v3508 = vunpack.c.l.b16 %v3480
    %v3509 = vunpack.c.l.b16 %v3481
    %v3510 = vunpack.c.l.b16 %v3482
    %v3511 = vunpack.c.l.b16 %v3483
    %v3512 = vunpack.c.l.b16 %v3484
    %v3513 = vunpack.c.l.b16 %v3485
    %v3514 = vpack.c.b16 %v3501, %v3500
    %v3515 = vpack.c.b16 %v3503, %v3502
    %v3516 = vpack.c.b16 %v3505, %v3504
    %v3517 = vpack.c.b16 %v3507, %v3506
    %v3518 = vpack.c.b16 %v3509, %v3508
    %v3519 = vpack.c.b16 %v3511, %v3510
    %v3520 = vpack.c.b16 %v3513, %v3512
    %v3529 = vsel %vm1079, %v3471, 0
    %3531 = vmatprep.subr.bf16.mxu0 0
    %3532 = vmatpush1.bf16.msra.mxu0 0
    %3533 = vmatprep.subr.bf16.mxu0 0
    %3534 = vmatpush1.bf16.msra.mxu0 %v3520
    %3535 = vmatprep.subr.bf16.mxu0 0
    %3536 = vmatpush1.bf16.msra.mxu0 %v3519
    %3537 = vmatprep.subr.bf16.mxu0 0
    %3538 = vmatpush1.bf16.msra.mxu0 %v3518
    %3539 = vmatprep.subr.bf16.mxu0 0
    %3540 = vmatpush1.bf16.msra.mxu0 %v3517
    %3541 = vmatprep.subr.bf16.mxu0 0
    %3542 = vmatpush1.bf16.msra.mxu0 %v3516
    %3543 = vmatprep.subr.bf16.mxu0 0
    %3544 = vmatpush1.bf16.msra.mxu0 %v3515
    %3545 = vmatprep.subr.bf16.mxu0 0
    %3546 = vmatpush1.bf16.msra.mxu0 %v3514
    %3547 = vmatprep.subr.bf16.mxu0 0
    %3548 = vmatpush2.bf16.msra.mxu0 0
    %3549 = vmatprep.subr.bf16.mxu0 0
    %3550 = vmatpush2.bf16.msra.mxu0 0
    %3551 = vmatprep.subr.bf16.mxu0 0
    %3552 = vmatpush2.bf16.msra.mxu0 0
    %3553 = vmatprep.subr.bf16.mxu0 0
    %3554 = vmatpush2.bf16.msra.mxu0 0
    %3555 = vmatprep.subr.bf16.mxu0 0
    %3556 = vmatpush2.bf16.msra.mxu0 0
    %3557 = vmatprep.subr.bf16.mxu0 0
    %3558 = vmatpush2.bf16.msra.mxu0 0
    %3559 = vmatprep.subr.bf16.mxu0 0
    %3560 = vmatpush2.bf16.msra.mxu0 0
    %3561 = vmatprep.subr.bf16.mxu0 0
    %3562 = vmatpush2.bf16.msra.mxu0 0
    %3563 = vmatprep.mubr.bf16.mxu0 0
    %3564 = vmatmul.mubr.bf16.gmra.mxu0 %v3529
    %v3565 = vpop.f32.mrf.mxu0
    %v3566 = vadd.f32 0.0, %v3565
    %v3567 = vpop.f32.mrf.mxu0
    %v3568 = vpop.f32.mrf.mxu0
    %v3569 = vadd.f32 0.0, %v3568
    %v3570 = vpop.f32.mrf.mxu0
    %3571 = vdwg.mxu0
    %v3572 = vadd.f32 %v3463, %v3566
    %v3573 = vadd.f32 %v3466, %v3569
    %v3574 = vld [vmem:[#allocation19] sm:$0x1]
    %v3576 = vlaneseq
    %v3577 = vshrl.u32 %v3576, 7
    %v3578 = vsub.s32 0, %v3577
    %v3579 = vrot.slane %v3574, %v3578
    %v3581 = vadd.f32 %v3572, %v3579
    %v3582 = vadd.f32 %v3573, %v3579
    %v3583 = vmax.f32 %v3581, 0.0
    %v3584 = vmax.f32 %v3582, 0.0
    %s3585 = scalar_lea.vmem [#allocation14], 16
    %3586 = vst.msk [vmem:[%s3585 + $0x1] sm:$0xff] %vm1079, %v3583
    %3587 = vst.msk [vmem:[%s3585 + $0x9] sm:$0x3f] %vm3261, %v3584
    %s3588 = sshll.u32 %s1001, 4
    %3589 = dma.done %s218, %s3588
    %v3590 = vld [vmem:[#allocation14] sm:$0xff]
    %v3591 = vld [vmem:[#allocation14 + $0x8] sm:$0x3f]
    %v3592 = vpack.c.bf16 %v3591, %v3590
    %v3593 = vld [vmem:[#allocation7] sm:$0xf]
    %v3594 = vld [vmem:[#allocation7 + $0x4] sm:$0xf]
    %v3595 = vld [vmem:[#allocation7 + $0x8] sm:$0xf]
    %v3596 = vld [vmem:[#allocation7 + $0xc] sm:$0xf]
    %v3597 = vld [vmem:[#allocation7 + $0x10] sm:$0xf]
    %v3598 = vld [vmem:[#allocation7 + $0x14] sm:$0xf]
    %v3599 = vld [vmem:[#allocation7 + $0x18] sm:$0xf]
    %v3600 = vld [vmem:[#allocation7 + $0x1c] sm:$0xf]
    %v3601 = vld [vmem:[#allocation7 + $0x20] sm:$0xf]
    %v3602 = vld [vmem:[#allocation7 + $0x24] sm:$0xf]
    %v3603 = vld [vmem:[#allocation7 + $0x28] sm:$0xf]
    %v3604 = vld [vmem:[#allocation7 + $0x2c] sm:$0xf]
    %v3605 = vld [vmem:[#allocation7 + $0x30] sm:$0xf]
    %v3606 = vld [vmem:[#allocation7 + $0x34] sm:$0xf]
    %v3607 = vld [vmem:[#allocation14 + $0x1] sm:$0xff]
    %v3608 = vld [vmem:[#allocation14 + $0x9] sm:$0x3f]
    %v3609 = vpack.c.bf16 %v3608, %v3607
    %s3610 = scalar_lea.vmem [#allocation7], 56
    %v3611 = vld [vmem:[%s3610] sm:$0xf]
    %v3612 = vld [vmem:[%s3610 + $0x4] sm:$0xf]
    %v3613 = vld [vmem:[%s3610 + $0x8] sm:$0xf]
    %v3614 = vld [vmem:[%s3610 + $0xc] sm:$0xf]
    %v3615 = vld [vmem:[%s3610 + $0x10] sm:$0xf]
    %v3616 = vld [vmem:[%s3610 + $0x14] sm:$0xf]
    %v3617 = vld [vmem:[%s3610 + $0x18] sm:$0xf]
    %v3618 = vld [vmem:[%s3610 + $0x1c] sm:$0xf]
    %v3619 = vld [vmem:[%s3610 + $0x20] sm:$0xf]
    %v3620 = vld [vmem:[%s3610 + $0x24] sm:$0xf]
    %v3621 = vld [vmem:[%s3610 + $0x28] sm:$0xf]
    %v3622 = vld [vmem:[%s3610 + $0x2c] sm:$0xf]
    %v3623 = vld [vmem:[%s3610 + $0x30] sm:$0xf]
    %v3624 = vld [vmem:[%s3610 + $0x34] sm:$0xf]
    %v3639 = vunpack.c.l.b16 %v3611
    %v3640 = vunpack.c.l.b16 %v3612
    %v3641 = vunpack.c.l.b16 %v3613
    %v3642 = vunpack.c.l.b16 %v3614
    %v3643 = vunpack.c.l.b16 %v3615
    %v3644 = vunpack.c.l.b16 %v3616
    %v3645 = vunpack.c.l.b16 %v3617
    %v3646 = vunpack.c.l.b16 %v3618
    %v3647 = vunpack.c.l.b16 %v3619
    %v3648 = vunpack.c.l.b16 %v3620
    %v3649 = vunpack.c.l.b16 %v3621
    %v3650 = vunpack.c.l.b16 %v3622
    %v3651 = vunpack.c.l.b16 %v3623
    %v3652 = vunpack.c.l.b16 %v3624
    %v3653 = vpack.c.b16 %v3640, %v3639
    %v3654 = vpack.c.b16 %v3642, %v3641
    %v3655 = vpack.c.b16 %v3644, %v3643
    %v3656 = vpack.c.b16 %v3646, %v3645
    %v3657 = vpack.c.b16 %v3648, %v3647
    %v3658 = vpack.c.b16 %v3650, %v3649
    %v3659 = vpack.c.b16 %v3652, %v3651
    %v3668 = vsel %vm1079, %v3609, 0
    %3670 = vmatprep.subr.bf16.mxu0 0
    %3671 = vmatpush1.bf16.msra.mxu0 0
    %3672 = vmatprep.subr.bf16.mxu0 0
    %3673 = vmatpush1.bf16.msra.mxu0 %v3659
    %3674 = vmatprep.subr.bf16.mxu0 0
    %3675 = vmatpush1.bf16.msra.mxu0 %v3658
    %3676 = vmatprep.subr.bf16.mxu0 0
    %3677 = vmatpush1.bf16.msra.mxu0 %v3657
    %3678 = vmatprep.subr.bf16.mxu0 0
    %3679 = vmatpush1.bf16.msra.mxu0 %v3656
    %3680 = vmatprep.subr.bf16.mxu0 0
    %3681 = vmatpush1.bf16.msra.mxu0 %v3655
    %3682 = vmatprep.subr.bf16.mxu0 0
    %3683 = vmatpush1.bf16.msra.mxu0 %v3654
    %3684 = vmatprep.subr.bf16.mxu0 0
    %3685 = vmatpush1.bf16.msra.mxu0 %v3653
    %3686 = vmatprep.subr.bf16.mxu0 0
    %3687 = vmatpush2.bf16.msra.mxu0 0
    %3688 = vmatprep.subr.bf16.mxu0 0
    %3689 = vmatpush2.bf16.msra.mxu0 0
    %3690 = vmatprep.subr.bf16.mxu0 0
    %3691 = vmatpush2.bf16.msra.mxu0 0
    %3692 = vmatprep.subr.bf16.mxu0 0
    %3693 = vmatpush2.bf16.msra.mxu0 0
    %3694 = vmatprep.subr.bf16.mxu0 0
    %3695 = vmatpush2.bf16.msra.mxu0 0
    %3696 = vmatprep.subr.bf16.mxu0 0
    %3697 = vmatpush2.bf16.msra.mxu0 0
    %3698 = vmatprep.subr.bf16.mxu0 0
    %3699 = vmatpush2.bf16.msra.mxu0 0
    %3700 = vmatprep.subr.bf16.mxu0 0
    %3701 = vmatpush2.bf16.msra.mxu0 0
    %3702 = vmatprep.mubr.bf16.mxu0 0
    %3703 = vmatmul.mubr.bf16.gmra.mxu0 %v3668
    %v3704 = vpop.f32.mrf.mxu0
    %v3705 = vadd.f32 0.0, %v3704
    %v3706 = vpop.f32.mrf.mxu0
    %v3707 = vpop.f32.mrf.mxu0
    %v3708 = vadd.f32 0.0, %v3707
    %v3709 = vpop.f32.mrf.mxu0
    %3710 = vdwg.mxu0
    %v3725 = vunpack.c.l.b16 %v3593
    %v3726 = vunpack.c.l.b16 %v3594
    %v3727 = vunpack.c.l.b16 %v3595
    %v3728 = vunpack.c.l.b16 %v3596
    %v3729 = vunpack.c.l.b16 %v3597
    %v3730 = vunpack.c.l.b16 %v3598
    %v3731 = vunpack.c.l.b16 %v3599
    %v3732 = vunpack.c.l.b16 %v3600
    %v3733 = vunpack.c.l.b16 %v3601
    %v3734 = vunpack.c.l.b16 %v3602
    %v3735 = vunpack.c.l.b16 %v3603
    %v3736 = vunpack.c.l.b16 %v3604
    %v3737 = vunpack.c.l.b16 %v3605
    %v3738 = vunpack.c.l.b16 %v3606
    %v3739 = vpack.c.b16 %v3726, %v3725
    %v3740 = vpack.c.b16 %v3728, %v3727
    %v3741 = vpack.c.b16 %v3730, %v3729
    %v3742 = vpack.c.b16 %v3732, %v3731
    %v3743 = vpack.c.b16 %v3734, %v3733
    %v3744 = vpack.c.b16 %v3736, %v3735
    %v3745 = vpack.c.b16 %v3738, %v3737
    %v3754 = vsel %vm1079, %v3592, 0
    %3756 = vmatprep.subr.bf16.mxu0 0
    %3757 = vmatpush1.bf16.msra.mxu0 0
    %3758 = vmatprep.subr.bf16.mxu0 0
    %3759 = vmatpush1.bf16.msra.mxu0 %v3745
    %3760 = vmatprep.subr.bf16.mxu0 0
    %3761 = vmatpush1.bf16.msra.mxu0 %v3744
    %3762 = vmatprep.subr.bf16.mxu0 0
    %3763 = vmatpush1.bf16.msra.mxu0 %v3743
    %3764 = vmatprep.subr.bf16.mxu0 0
    %3765 = vmatpush1.bf16.msra.mxu0 %v3742
    %3766 = vmatprep.subr.bf16.mxu0 0
    %3767 = vmatpush1.bf16.msra.mxu0 %v3741
    %3768 = vmatprep.subr.bf16.mxu0 0
    %3769 = vmatpush1.bf16.msra.mxu0 %v3740
    %3770 = vmatprep.subr.bf16.mxu0 0
    %3771 = vmatpush1.bf16.msra.mxu0 %v3739
    %3772 = vmatprep.subr.bf16.mxu0 0
    %3773 = vmatpush2.bf16.msra.mxu0 0
    %3774 = vmatprep.subr.bf16.mxu0 0
    %3775 = vmatpush2.bf16.msra.mxu0 0
    %3776 = vmatprep.subr.bf16.mxu0 0
    %3777 = vmatpush2.bf16.msra.mxu0 0
    %3778 = vmatprep.subr.bf16.mxu0 0
    %3779 = vmatpush2.bf16.msra.mxu0 0
    %3780 = vmatprep.subr.bf16.mxu0 0
    %3781 = vmatpush2.bf16.msra.mxu0 0
    %3782 = vmatprep.subr.bf16.mxu0 0
    %3783 = vmatpush2.bf16.msra.mxu0 0
    %3784 = vmatprep.subr.bf16.mxu0 0
    %3785 = vmatpush2.bf16.msra.mxu0 0
    %3786 = vmatprep.subr.bf16.mxu0 0
    %3787 = vmatpush2.bf16.msra.mxu0 0
    %3788 = vmatprep.mubr.bf16.mxu0 0
    %3789 = vmatmul.mubr.bf16.gmra.mxu0 %v3754
    %v3790 = vpop.f32.mrf.mxu0
    %v3791 = vadd.f32 %v3705, %v3790
    %v3792 = vpop.f32.mrf.mxu0
    %v3793 = vpop.f32.mrf.mxu0
    %v3794 = vadd.f32 %v3708, %v3793
    %v3795 = vpop.f32.mrf.mxu0
    %3796 = vdwg.mxu0
    %v3797 = vld [vmem:[#allocation14 + $0x2] sm:$0xff]
    %v3798 = vld [vmem:[#allocation14 + $0xa] sm:$0x3f]
    %v3799 = vpack.c.bf16 %v3798, %v3797
    %s3800 = scalar_lea.vmem [#allocation7], 112
    %v3801 = vld [vmem:[%s3800] sm:$0xf]
    %v3802 = vld [vmem:[%s3800 + $0x4] sm:$0xf]
    %v3803 = vld [vmem:[%s3800 + $0x8] sm:$0xf]
    %v3804 = vld [vmem:[%s3800 + $0xc] sm:$0xf]
    %v3805 = vld [vmem:[%s3800 + $0x10] sm:$0xf]
    %v3806 = vld [vmem:[%s3800 + $0x14] sm:$0xf]
    %v3807 = vld [vmem:[%s3800 + $0x18] sm:$0xf]
    %v3808 = vld [vmem:[%s3800 + $0x1c] sm:$0xf]
    %v3809 = vld [vmem:[%s3800 + $0x20] sm:$0xf]
    %v3810 = vld [vmem:[%s3800 + $0x24] sm:$0xf]
    %v3811 = vld [vmem:[%s3800 + $0x28] sm:$0xf]
    %v3812 = vld [vmem:[%s3800 + $0x2c] sm:$0xf]
    %v3813 = vld [vmem:[%s3800 + $0x30] sm:$0xf]
    %v3814 = vld [vmem:[%s3800 + $0x34] sm:$0xf]
    %v3829 = vunpack.c.l.b16 %v3801
    %v3830 = vunpack.c.l.b16 %v3802
    %v3831 = vunpack.c.l.b16 %v3803
    %v3832 = vunpack.c.l.b16 %v3804
    %v3833 = vunpack.c.l.b16 %v3805
    %v3834 = vunpack.c.l.b16 %v3806
    %v3835 = vunpack.c.l.b16 %v3807
    %v3836 = vunpack.c.l.b16 %v3808
    %v3837 = vunpack.c.l.b16 %v3809
    %v3838 = vunpack.c.l.b16 %v3810
    %v3839 = vunpack.c.l.b16 %v3811
    %v3840 = vunpack.c.l.b16 %v3812
    %v3841 = vunpack.c.l.b16 %v3813
    %v3842 = vunpack.c.l.b16 %v3814
    %v3843 = vpack.c.b16 %v3830, %v3829
    %v3844 = vpack.c.b16 %v3832, %v3831
    %v3845 = vpack.c.b16 %v3834, %v3833
    %v3846 = vpack.c.b16 %v3836, %v3835
    %v3847 = vpack.c.b16 %v3838, %v3837
    %v3848 = vpack.c.b16 %v3840, %v3839
    %v3849 = vpack.c.b16 %v3842, %v3841
    %v3858 = vsel %vm1079, %v3799, 0
    %3860 = vmatprep.subr.bf16.mxu0 0
    %3861 = vmatpush1.bf16.msra.mxu0 0
    %3862 = vmatprep.subr.bf16.mxu0 0
    %3863 = vmatpush1.bf16.msra.mxu0 %v3849
    %3864 = vmatprep.subr.bf16.mxu0 0
    %3865 = vmatpush1.bf16.msra.mxu0 %v3848
    %3866 = vmatprep.subr.bf16.mxu0 0
    %3867 = vmatpush1.bf16.msra.mxu0 %v3847
    %3868 = vmatprep.subr.bf16.mxu0 0
    %3869 = vmatpush1.bf16.msra.mxu0 %v3846
    %3870 = vmatprep.subr.bf16.mxu0 0
    %3871 = vmatpush1.bf16.msra.mxu0 %v3845
    %3872 = vmatprep.subr.bf16.mxu0 0
    %3873 = vmatpush1.bf16.msra.mxu0 %v3844
    %3874 = vmatprep.subr.bf16.mxu0 0
    %3875 = vmatpush1.bf16.msra.mxu0 %v3843
    %3876 = vmatprep.subr.bf16.mxu0 0
    %3877 = vmatpush2.bf16.msra.mxu0 0
    %3878 = vmatprep.subr.bf16.mxu0 0
    %3879 = vmatpush2.bf16.msra.mxu0 0
    %3880 = vmatprep.subr.bf16.mxu0 0
    %3881 = vmatpush2.bf16.msra.mxu0 0
    %3882 = vmatprep.subr.bf16.mxu0 0
    %3883 = vmatpush2.bf16.msra.mxu0 0
    %3884 = vmatprep.subr.bf16.mxu0 0
    %3885 = vmatpush2.bf16.msra.mxu0 0
    %3886 = vmatprep.subr.bf16.mxu0 0
    %3887 = vmatpush2.bf16.msra.mxu0 0
    %3888 = vmatprep.subr.bf16.mxu0 0
    %3889 = vmatpush2.bf16.msra.mxu0 0
    %3890 = vmatprep.subr.bf16.mxu0 0
    %3891 = vmatpush2.bf16.msra.mxu0 0
    %3892 = vmatprep.mubr.bf16.mxu0 0
    %3893 = vmatmul.mubr.bf16.gmra.mxu0 %v3858
    %v3894 = vpop.f32.mrf.mxu0
    %v3895 = vadd.f32 0.0, %v3894
    %v3896 = vpop.f32.mrf.mxu0
    %v3897 = vpop.f32.mrf.mxu0
    %v3898 = vadd.f32 0.0, %v3897
    %v3899 = vpop.f32.mrf.mxu0
    %3900 = vdwg.mxu0
    %v3901 = vadd.f32 %v3791, %v3895
    %v3902 = vadd.f32 %v3794, %v3898
    %v3903 = vld [vmem:[#allocation21] sm:$0x1]
    %v3905 = vlaneseq
    %v3906 = vshrl.u32 %v3905, 7
    %v3907 = vsub.s32 0, %v3906
    %v3908 = vrot.slane %v3903, %v3907
    %v3910 = vadd.f32 %v3901, %v3908
    %v3911 = vadd.f32 %v3902, %v3908
    %v3912 = vmax.f32 %v3910, 0.0
    %v3913 = vmax.f32 %v3911, 0.0
    %3914 = vst.msk [vmem:[#allocation15 + $0x1] sm:$0x1] %vm377, %v3912
    %3915 = vst.msk [vmem:[#allocation15 + $0x2] sm:$0x1] %vm377, %v3912
    %vm3916 = vcmask 222209
    %3917 = vst.msk [vmem:[#allocation15 + $0x2] sm:$0x2] %vm3916, %v3912
    %3918 = vst.msk [vmem:[#allocation15 + $0x3] sm:$0x2] %vm3916, %v3912
    %vm3919 = vcmask 223234
    %3920 = vst.msk [vmem:[#allocation15 + $0x3] sm:$0x4] %vm3919, %v3912
    %3921 = vst.msk [vmem:[#allocation15 + $0x4] sm:$0x4] %vm3919, %v3912
    %vm3922 = vcmask 224259
    %3923 = vst.msk [vmem:[#allocation15 + $0x4] sm:$0x8] %vm3922, %v3912
    %3924 = vst.msk [vmem:[#allocation15 + $0x5] sm:$0x8] %vm3922, %v3912
    %vm3925 = vcmask 225284
    %3926 = vst.msk [vmem:[#allocation15 + $0x5] sm:$0x10] %vm3925, %v3912
    %3927 = vst.msk [vmem:[#allocation15 + $0x6] sm:$0x10] %vm3925, %v3912
    %vm3928 = vcmask 226309
    %3929 = vst.msk [vmem:[#allocation15 + $0x6] sm:$0x20] %vm3928, %v3912
    %3930 = vst.msk [vmem:[#allocation15 + $0x7] sm:$0x20] %vm3928, %v3912
    %vm3931 = vcmask 227334
    %3932 = vst.msk [vmem:[#allocation15 + $0x7] sm:$0x40] %vm3931, %v3912
    %3933 = vst.msk [vmem:[#allocation15 + $0x8] sm:$0x40] %vm3931, %v3912
    %vm3934 = vcmask 228359
    %3935 = vst.msk [vmem:[#allocation15 + $0x8] sm:$0x80] %vm3934, %v3912
    %3936 = vst.msk [vmem:[#allocation15 + $0x9] sm:$0x80] %vm3934, %v3912
    %3937 = vst.msk [vmem:[#allocation15 + $0x11] sm:$0x1] %vm377, %v3913
    %3938 = vst.msk [vmem:[#allocation15 + $0x12] sm:$0x1] %vm377, %v3913
    %3939 = vst.msk [vmem:[#allocation15 + $0x12] sm:$0x2] %vm3916, %v3913
    %3940 = vst.msk [vmem:[#allocation15 + $0x13] sm:$0x2] %vm3916, %v3913
    %3941 = vst.msk [vmem:[#allocation15 + $0x13] sm:$0x4] %vm3919, %v3913
    %3942 = vst.msk [vmem:[#allocation15 + $0x14] sm:$0x4] %vm3919, %v3913
    %3943 = vst.msk [vmem:[#allocation15 + $0x14] sm:$0x8] %vm3922, %v3913
    %3944 = vst.msk [vmem:[#allocation15 + $0x15] sm:$0x8] %vm3922, %v3913
    %3945 = vst.msk [vmem:[#allocation15 + $0x15] sm:$0x10] %vm3925, %v3913
    %3946 = vst.msk [vmem:[#allocation15 + $0x16] sm:$0x10] %vm3925, %v3913
    %3947 = vst.msk [vmem:[#allocation15 + $0x16] sm:$0x20] %vm3928, %v3913
    %3948 = vst.msk [vmem:[#allocation15 + $0x17] sm:$0x20] %vm3928, %v3913
    %v3949 = vld [vmem:[%s3585] sm:$0xff]
    %v3950 = vld [vmem:[%s3585 + $0x8] sm:$0x3f]
    %v3951 = vpack.c.bf16 %v3950, %v3949
    %v3952 = vld [vmem:[#allocation7] sm:$0xf]
    %v3953 = vld [vmem:[#allocation7 + $0x4] sm:$0xf]
    %v3954 = vld [vmem:[#allocation7 + $0x8] sm:$0xf]
    %v3955 = vld [vmem:[#allocation7 + $0xc] sm:$0xf]
    %v3956 = vld [vmem:[#allocation7 + $0x10] sm:$0xf]
    %v3957 = vld [vmem:[#allocation7 + $0x14] sm:$0xf]
    %v3958 = vld [vmem:[#allocation7 + $0x18] sm:$0xf]
    %v3959 = vld [vmem:[#allocation7 + $0x1c] sm:$0xf]
    %v3960 = vld [vmem:[#allocation7 + $0x20] sm:$0xf]
    %v3961 = vld [vmem:[#allocation7 + $0x24] sm:$0xf]
    %v3962 = vld [vmem:[#allocation7 + $0x28] sm:$0xf]
    %v3963 = vld [vmem:[#allocation7 + $0x2c] sm:$0xf]
    %v3964 = vld [vmem:[#allocation7 + $0x30] sm:$0xf]
    %v3965 = vld [vmem:[#allocation7 + $0x34] sm:$0xf]
    %v3966 = vld [vmem:[%s3585 + $0x1] sm:$0xff]
    %v3967 = vld [vmem:[%s3585 + $0x9] sm:$0x3f]
    %v3968 = vpack.c.bf16 %v3967, %v3966
    %v3969 = vld [vmem:[%s3610] sm:$0xf]
    %v3970 = vld [vmem:[%s3610 + $0x4] sm:$0xf]
    %v3971 = vld [vmem:[%s3610 + $0x8] sm:$0xf]
    %v3972 = vld [vmem:[%s3610 + $0xc] sm:$0xf]
    %v3973 = vld [vmem:[%s3610 + $0x10] sm:$0xf]
    %v3974 = vld [vmem:[%s3610 + $0x14] sm:$0xf]
    %v3975 = vld [vmem:[%s3610 + $0x18] sm:$0xf]
    %v3976 = vld [vmem:[%s3610 + $0x1c] sm:$0xf]
    %v3977 = vld [vmem:[%s3610 + $0x20] sm:$0xf]
    %v3978 = vld [vmem:[%s3610 + $0x24] sm:$0xf]
    %v3979 = vld [vmem:[%s3610 + $0x28] sm:$0xf]
    %v3980 = vld [vmem:[%s3610 + $0x2c] sm:$0xf]
    %v3981 = vld [vmem:[%s3610 + $0x30] sm:$0xf]
    %v3982 = vld [vmem:[%s3610 + $0x34] sm:$0xf]
    %v3997 = vunpack.c.l.b16 %v3969
    %v3998 = vunpack.c.l.b16 %v3970
    %v3999 = vunpack.c.l.b16 %v3971
    %v4000 = vunpack.c.l.b16 %v3972
    %v4001 = vunpack.c.l.b16 %v3973
    %v4002 = vunpack.c.l.b16 %v3974
    %v4003 = vunpack.c.l.b16 %v3975
    %v4004 = vunpack.c.l.b16 %v3976
    %v4005 = vunpack.c.l.b16 %v3977
    %v4006 = vunpack.c.l.b16 %v3978
    %v4007 = vunpack.c.l.b16 %v3979
    %v4008 = vunpack.c.l.b16 %v3980
    %v4009 = vunpack.c.l.b16 %v3981
    %v4010 = vunpack.c.l.b16 %v3982
    %v4011 = vpack.c.b16 %v3998, %v3997
    %v4012 = vpack.c.b16 %v4000, %v3999
    %v4013 = vpack.c.b16 %v4002, %v4001
    %v4014 = vpack.c.b16 %v4004, %v4003
    %v4015 = vpack.c.b16 %v4006, %v4005
    %v4016 = vpack.c.b16 %v4008, %v4007
    %v4017 = vpack.c.b16 %v4010, %v4009
    %v4026 = vsel %vm1079, %v3968, 0
    %4028 = vmatprep.subr.bf16.mxu0 0
    %4029 = vmatpush1.bf16.msra.mxu0 0
    %4030 = vmatprep.subr.bf16.mxu0 0
    %4031 = vmatpush1.bf16.msra.mxu0 %v4017
    %4032 = vmatprep.subr.bf16.mxu0 0
    %4033 = vmatpush1.bf16.msra.mxu0 %v4016
    %4034 = vmatprep.subr.bf16.mxu0 0
    %4035 = vmatpush1.bf16.msra.mxu0 %v4015
    %4036 = vmatprep.subr.bf16.mxu0 0
    %4037 = vmatpush1.bf16.msra.mxu0 %v4014
    %4038 = vmatprep.subr.bf16.mxu0 0
    %4039 = vmatpush1.bf16.msra.mxu0 %v4013
    %4040 = vmatprep.subr.bf16.mxu0 0
    %4041 = vmatpush1.bf16.msra.mxu0 %v4012
    %4042 = vmatprep.subr.bf16.mxu0 0
    %4043 = vmatpush1.bf16.msra.mxu0 %v4011
    %4044 = vmatprep.subr.bf16.mxu0 0
    %4045 = vmatpush2.bf16.msra.mxu0 0
    %4046 = vmatprep.subr.bf16.mxu0 0
    %4047 = vmatpush2.bf16.msra.mxu0 0
    %4048 = vmatprep.subr.bf16.mxu0 0
    %4049 = vmatpush2.bf16.msra.mxu0 0
    %4050 = vmatprep.subr.bf16.mxu0 0
    %4051 = vmatpush2.bf16.msra.mxu0 0
    %4052 = vmatprep.subr.bf16.mxu0 0
    %4053 = vmatpush2.bf16.msra.mxu0 0
    %4054 = vmatprep.subr.bf16.mxu0 0
    %4055 = vmatpush2.bf16.msra.mxu0 0
    %4056 = vmatprep.subr.bf16.mxu0 0
    %4057 = vmatpush2.bf16.msra.mxu0 0
    %4058 = vmatprep.subr.bf16.mxu0 0
    %4059 = vmatpush2.bf16.msra.mxu0 0
    %4060 = vmatprep.mubr.bf16.mxu0 0
    %4061 = vmatmul.mubr.bf16.gmra.mxu0 %v4026
    %v4062 = vpop.f32.mrf.mxu0
    %v4063 = vadd.f32 0.0, %v4062
    %v4064 = vpop.f32.mrf.mxu0
    %v4065 = vpop.f32.mrf.mxu0
    %v4066 = vadd.f32 0.0, %v4065
    %v4067 = vpop.f32.mrf.mxu0
    %4068 = vdwg.mxu0
    %v4083 = vunpack.c.l.b16 %v3952
    %v4084 = vunpack.c.l.b16 %v3953
    %v4085 = vunpack.c.l.b16 %v3954
    %v4086 = vunpack.c.l.b16 %v3955
    %v4087 = vunpack.c.l.b16 %v3956
    %v4088 = vunpack.c.l.b16 %v3957
    %v4089 = vunpack.c.l.b16 %v3958
    %v4090 = vunpack.c.l.b16 %v3959
    %v4091 = vunpack.c.l.b16 %v3960
    %v4092 = vunpack.c.l.b16 %v3961
    %v4093 = vunpack.c.l.b16 %v3962
    %v4094 = vunpack.c.l.b16 %v3963
    %v4095 = vunpack.c.l.b16 %v3964
    %v4096 = vunpack.c.l.b16 %v3965
    %v4097 = vpack.c.b16 %v4084, %v4083
    %v4098 = vpack.c.b16 %v4086, %v4085
    %v4099 = vpack.c.b16 %v4088, %v4087
    %v4100 = vpack.c.b16 %v4090, %v4089
    %v4101 = vpack.c.b16 %v4092, %v4091
    %v4102 = vpack.c.b16 %v4094, %v4093
    %v4103 = vpack.c.b16 %v4096, %v4095
    %v4112 = vsel %vm1079, %v3951, 0
    %4114 = vmatprep.subr.bf16.mxu0 0
    %4115 = vmatpush1.bf16.msra.mxu0 0
    %4116 = vmatprep.subr.bf16.mxu0 0
    %4117 = vmatpush1.bf16.msra.mxu0 %v4103
    %4118 = vmatprep.subr.bf16.mxu0 0
    %4119 = vmatpush1.bf16.msra.mxu0 %v4102
    %4120 = vmatprep.subr.bf16.mxu0 0
    %4121 = vmatpush1.bf16.msra.mxu0 %v4101
    %4122 = vmatprep.subr.bf16.mxu0 0
    %4123 = vmatpush1.bf16.msra.mxu0 %v4100
    %4124 = vmatprep.subr.bf16.mxu0 0
    %4125 = vmatpush1.bf16.msra.mxu0 %v4099
    %4126 = vmatprep.subr.bf16.mxu0 0
    %4127 = vmatpush1.bf16.msra.mxu0 %v4098
    %4128 = vmatprep.subr.bf16.mxu0 0
    %4129 = vmatpush1.bf16.msra.mxu0 %v4097
    %4130 = vmatprep.subr.bf16.mxu0 0
    %4131 = vmatpush2.bf16.msra.mxu0 0
    %4132 = vmatprep.subr.bf16.mxu0 0
    %4133 = vmatpush2.bf16.msra.mxu0 0
    %4134 = vmatprep.subr.bf16.mxu0 0
    %4135 = vmatpush2.bf16.msra.mxu0 0
    %4136 = vmatprep.subr.bf16.mxu0 0
    %4137 = vmatpush2.bf16.msra.mxu0 0
    %4138 = vmatprep.subr.bf16.mxu0 0
    %4139 = vmatpush2.bf16.msra.mxu0 0
    %4140 = vmatprep.subr.bf16.mxu0 0
    %4141 = vmatpush2.bf16.msra.mxu0 0
    %4142 = vmatprep.subr.bf16.mxu0 0
    %4143 = vmatpush2.bf16.msra.mxu0 0
    %4144 = vmatprep.subr.bf16.mxu0 0
    %4145 = vmatpush2.bf16.msra.mxu0 0
    %4146 = vmatprep.mubr.bf16.mxu0 0
    %4147 = vmatmul.mubr.bf16.gmra.mxu0 %v4112
    %v4148 = vpop.f32.mrf.mxu0
    %v4149 = vadd.f32 %v4063, %v4148
    %v4150 = vpop.f32.mrf.mxu0
    %v4151 = vpop.f32.mrf.mxu0
    %v4152 = vadd.f32 %v4066, %v4151
    %v4153 = vpop.f32.mrf.mxu0
    %4154 = vdwg.mxu0
    %v4155 = vld [vmem:[%s3585 + $0x2] sm:$0xff]
    %v4156 = vld [vmem:[%s3585 + $0xa] sm:$0x3f]
    %v4157 = vpack.c.bf16 %v4156, %v4155
    %v4158 = vld [vmem:[%s3800] sm:$0xf]
    %v4159 = vld [vmem:[%s3800 + $0x4] sm:$0xf]
    %v4160 = vld [vmem:[%s3800 + $0x8] sm:$0xf]
    %v4161 = vld [vmem:[%s3800 + $0xc] sm:$0xf]
    %v4162 = vld [vmem:[%s3800 + $0x10] sm:$0xf]
    %v4163 = vld [vmem:[%s3800 + $0x14] sm:$0xf]
    %v4164 = vld [vmem:[%s3800 + $0x18] sm:$0xf]
    %v4165 = vld [vmem:[%s3800 + $0x1c] sm:$0xf]
    %v4166 = vld [vmem:[%s3800 + $0x20] sm:$0xf]
    %v4167 = vld [vmem:[%s3800 + $0x24] sm:$0xf]
    %v4168 = vld [vmem:[%s3800 + $0x28] sm:$0xf]
    %v4169 = vld [vmem:[%s3800 + $0x2c] sm:$0xf]
    %v4170 = vld [vmem:[%s3800 + $0x30] sm:$0xf]
    %v4171 = vld [vmem:[%s3800 + $0x34] sm:$0xf]
    %v4186 = vunpack.c.l.b16 %v4158
    %v4187 = vunpack.c.l.b16 %v4159
    %v4188 = vunpack.c.l.b16 %v4160
    %v4189 = vunpack.c.l.b16 %v4161
    %v4190 = vunpack.c.l.b16 %v4162
    %v4191 = vunpack.c.l.b16 %v4163
    %v4192 = vunpack.c.l.b16 %v4164
    %v4193 = vunpack.c.l.b16 %v4165
    %v4194 = vunpack.c.l.b16 %v4166
    %v4195 = vunpack.c.l.b16 %v4167
    %v4196 = vunpack.c.l.b16 %v4168
    %v4197 = vunpack.c.l.b16 %v4169
    %v4198 = vunpack.c.l.b16 %v4170
    %v4199 = vunpack.c.l.b16 %v4171
    %v4200 = vpack.c.b16 %v4187, %v4186
    %v4201 = vpack.c.b16 %v4189, %v4188
    %v4202 = vpack.c.b16 %v4191, %v4190
    %v4203 = vpack.c.b16 %v4193, %v4192
    %v4204 = vpack.c.b16 %v4195, %v4194
    %v4205 = vpack.c.b16 %v4197, %v4196
    %v4206 = vpack.c.b16 %v4199, %v4198
    %v4215 = vsel %vm1079, %v4157, 0
    %4217 = vmatprep.subr.bf16.mxu0 0
    %4218 = vmatpush1.bf16.msra.mxu0 0
    %4219 = vmatprep.subr.bf16.mxu0 0
    %4220 = vmatpush1.bf16.msra.mxu0 %v4206
    %4221 = vmatprep.subr.bf16.mxu0 0
    %4222 = vmatpush1.bf16.msra.mxu0 %v4205
    %4223 = vmatprep.subr.bf16.mxu0 0
    %4224 = vmatpush1.bf16.msra.mxu0 %v4204
    %4225 = vmatprep.subr.bf16.mxu0 0
    %4226 = vmatpush1.bf16.msra.mxu0 %v4203
    %4227 = vmatprep.subr.bf16.mxu0 0
    %4228 = vmatpush1.bf16.msra.mxu0 %v4202
    %4229 = vmatprep.subr.bf16.mxu0 0
    %4230 = vmatpush1.bf16.msra.mxu0 %v4201
    %4231 = vmatprep.subr.bf16.mxu0 0
    %4232 = vmatpush1.bf16.msra.mxu0 %v4200
    %4233 = vmatprep.subr.bf16.mxu0 0
    %4234 = vmatpush2.bf16.msra.mxu0 0
    %4235 = vmatprep.subr.bf16.mxu0 0
    %4236 = vmatpush2.bf16.msra.mxu0 0
    %4237 = vmatprep.subr.bf16.mxu0 0
    %4238 = vmatpush2.bf16.msra.mxu0 0
    %4239 = vmatprep.subr.bf16.mxu0 0
    %4240 = vmatpush2.bf16.msra.mxu0 0
    %4241 = vmatprep.subr.bf16.mxu0 0
    %4242 = vmatpush2.bf16.msra.mxu0 0
    %4243 = vmatprep.subr.bf16.mxu0 0
    %4244 = vmatpush2.bf16.msra.mxu0 0
    %4245 = vmatprep.subr.bf16.mxu0 0
    %4246 = vmatpush2.bf16.msra.mxu0 0
    %4247 = vmatprep.subr.bf16.mxu0 0
    %4248 = vmatpush2.bf16.msra.mxu0 0
    %4249 = vmatprep.mubr.bf16.mxu0 0
    %4250 = vmatmul.mubr.bf16.gmra.mxu0 %v4215
    %v4251 = vpop.f32.mrf.mxu0
    %v4252 = vadd.f32 0.0, %v4251
    %v4253 = vpop.f32.mrf.mxu0
    %v4254 = vpop.f32.mrf.mxu0
    %v4255 = vadd.f32 0.0, %v4254
    %v4256 = vpop.f32.mrf.mxu0
    %4257 = vdwg.mxu0
    %v4258 = vadd.f32 %v4149, %v4252
    %v4259 = vadd.f32 %v4152, %v4255
    %v4260 = vld [vmem:[#allocation21] sm:$0x1]
    %v4262 = vlaneseq
    %v4263 = vshrl.u32 %v4262, 7
    %v4264 = vsub.s32 0, %v4263
    %v4265 = vrot.slane %v4260, %v4264
    %v4267 = vadd.f32 %v4258, %v4265
    %v4268 = vadd.f32 %v4259, %v4265
    %v4269 = vmax.f32 %v4267, 0.0
    %v4270 = vmax.f32 %v4268, 0.0
    %s4271 = scalar_lea.vmem [#allocation15], 32
    %4272 = vst.msk [vmem:[%s4271 + $0x1] sm:$0x1] %vm377, %v4269
    %4273 = vst.msk [vmem:[%s4271 + $0x2] sm:$0x1] %vm377, %v4269
    %4274 = vst.msk [vmem:[%s4271 + $0x2] sm:$0x2] %vm3916, %v4269
    %4275 = vst.msk [vmem:[%s4271 + $0x3] sm:$0x2] %vm3916, %v4269
    %4276 = vst.msk [vmem:[%s4271 + $0x3] sm:$0x4] %vm3919, %v4269
    %4277 = vst.msk [vmem:[%s4271 + $0x4] sm:$0x4] %vm3919, %v4269
    %4278 = vst.msk [vmem:[%s4271 + $0x4] sm:$0x8] %vm3922, %v4269
    %4279 = vst.msk [vmem:[%s4271 + $0x5] sm:$0x8] %vm3922, %v4269
    %4280 = vst.msk [vmem:[%s4271 + $0x5] sm:$0x10] %vm3925, %v4269
    %4281 = vst.msk [vmem:[%s4271 + $0x6] sm:$0x10] %vm3925, %v4269
    %4282 = vst.msk [vmem:[%s4271 + $0x6] sm:$0x20] %vm3928, %v4269
    %4283 = vst.msk [vmem:[%s4271 + $0x7] sm:$0x20] %vm3928, %v4269
    %4284 = vst.msk [vmem:[%s4271 + $0x7] sm:$0x40] %vm3931, %v4269
    %4285 = vst.msk [vmem:[%s4271 + $0x8] sm:$0x40] %vm3931, %v4269
    %4286 = vst.msk [vmem:[%s4271 + $0x8] sm:$0x80] %vm3934, %v4269
    %4287 = vst.msk [vmem:[%s4271 + $0x9] sm:$0x80] %vm3934, %v4269
    %4288 = vst.msk [vmem:[%s4271 + $0x11] sm:$0x1] %vm377, %v4270
    %4289 = vst.msk [vmem:[%s4271 + $0x12] sm:$0x1] %vm377, %v4270
    %4290 = vst.msk [vmem:[%s4271 + $0x12] sm:$0x2] %vm3916, %v4270
    %4291 = vst.msk [vmem:[%s4271 + $0x13] sm:$0x2] %vm3916, %v4270
    %4292 = vst.msk [vmem:[%s4271 + $0x13] sm:$0x4] %vm3919, %v4270
    %4293 = vst.msk [vmem:[%s4271 + $0x14] sm:$0x4] %vm3919, %v4270
    %4294 = vst.msk [vmem:[%s4271 + $0x14] sm:$0x8] %vm3922, %v4270
    %4295 = vst.msk [vmem:[%s4271 + $0x15] sm:$0x8] %vm3922, %v4270
    %4296 = vst.msk [vmem:[%s4271 + $0x15] sm:$0x10] %vm3925, %v4270
    %4297 = vst.msk [vmem:[%s4271 + $0x16] sm:$0x10] %vm3925, %v4270
    %4298 = vst.msk [vmem:[%s4271 + $0x16] sm:$0x20] %vm3928, %v4270
    %4299 = vst.msk [vmem:[%s4271 + $0x17] sm:$0x20] %vm3928, %v4270
    %s4300 = smul.u32 %s382, 4
    %s4301 = smul.u32 %s4300, 1
    %s4302 = sshll.u32 %s4301, 4
    %4303 = dma.done %s302, %s4302
    %v4304 = vld [vmem:[#allocation15] sm:$0xff]
    %v4305 = vld [vmem:[#allocation15 + $0x8] sm:$0xff]
    %v4306 = vld [vmem:[#allocation15 + $0x10] sm:$0xff]
    %v4307 = vld [vmem:[#allocation15 + $0x18] sm:$0xf]
    %v4308 = vpack.c.bf16 %v4305, %v4304
    %v4309 = vpack.c.bf16 %v4307, %v4306
    %v4310 = vld [vmem:[#allocation8] sm:$0xf]
    %v4311 = vld [vmem:[#allocation8 + $0x4] sm:$0xf]
    %v4312 = vld [vmem:[#allocation8 + $0x8] sm:$0xf]
    %v4313 = vld [vmem:[#allocation8 + $0xc] sm:$0x3]
    %v4314 = vld [vmem:[#allocation15 + $0x1] sm:$0xff]
    %v4315 = vld [vmem:[#allocation15 + $0x9] sm:$0xff]
    %v4316 = vld [vmem:[#allocation15 + $0x11] sm:$0xff]
    %v4317 = vld [vmem:[#allocation15 + $0x19] sm:$0xf]
    %v4318 = vpack.c.bf16 %v4315, %v4314
    %v4319 = vpack.c.bf16 %v4317, %v4316
    %s4320 = scalar_lea.vmem [#allocation8], 16
    %v4321 = vld [vmem:[%s4320] sm:$0xf]
    %v4322 = vld [vmem:[%s4320 + $0x4] sm:$0xf]
    %v4323 = vld [vmem:[%s4320 + $0x8] sm:$0xf]
    %v4324 = vld [vmem:[%s4320 + $0xc] sm:$0x3]
    %v4329 = vunpack.c.l.b16 %v4321
    %v4330 = vunpack.c.l.b16 %v4322
    %v4331 = vunpack.c.l.b16 %v4323
    %v4332 = vunpack.c.l.b16 %v4324
    %v4333 = vpack.c.b16 %v4330, %v4329
    %v4334 = vpack.c.b16 %v4332, %v4331
    %vm4336 = vcmask 228352
    %v4338 = vsel %vm4336, %v4318, 0
    %v4341 = vsel %vm4336, %v4319, 0
    %vm4343 = vcmask 1045504
    %v4345 = vsel %vm4343, %v4334, 0
    %4347 = vmatprep.subr.bf16.mxu0 0
    %4348 = vmatpush1.bf16.msra.mxu0 0
    %4349 = vmatprep.subr.bf16.mxu0 0
    %4350 = vmatpush1.bf16.msra.mxu0 0
    %4351 = vmatprep.subr.bf16.mxu0 0
    %4352 = vmatpush1.bf16.msra.mxu0 0
    %4353 = vmatprep.subr.bf16.mxu0 0
    %4354 = vmatpush1.bf16.msra.mxu0 0
    %4355 = vmatprep.subr.bf16.mxu0 0
    %4356 = vmatpush1.bf16.msra.mxu0 0
    %4357 = vmatprep.subr.bf16.mxu0 0
    %4358 = vmatpush1.bf16.msra.mxu0 0
    %4359 = vmatprep.subr.bf16.mxu0 0
    %4360 = vmatpush1.bf16.msra.mxu0 %v4345
    %4361 = vmatprep.subr.bf16.mxu0 0
    %4362 = vmatpush1.bf16.msra.mxu0 %v4333
    %4363 = vmatprep.subr.bf16.mxu0 0
    %4364 = vmatpush2.bf16.msra.mxu0 0
    %4365 = vmatprep.subr.bf16.mxu0 0
    %4366 = vmatpush2.bf16.msra.mxu0 0
    %4367 = vmatprep.subr.bf16.mxu0 0
    %4368 = vmatpush2.bf16.msra.mxu0 0
    %4369 = vmatprep.subr.bf16.mxu0 0
    %4370 = vmatpush2.bf16.msra.mxu0 0
    %4371 = vmatprep.subr.bf16.mxu0 0
    %4372 = vmatpush2.bf16.msra.mxu0 0
    %4373 = vmatprep.subr.bf16.mxu0 0
    %4374 = vmatpush2.bf16.msra.mxu0 0
    %4375 = vmatprep.subr.bf16.mxu0 0
    %4376 = vmatpush2.bf16.msra.mxu0 0
    %4377 = vmatprep.subr.bf16.mxu0 0
    %4378 = vmatpush2.bf16.msra.mxu0 0
    %4379 = vmatprep.mubr.bf16.mxu0 0
    %4380 = vmatmul.mubr.bf16.gmra.mxu0 %v4338
    %v4381 = vpop.f32.mrf.mxu0
    %v4382 = vadd.f32 0.0, %v4381
    %v4383 = vpop.f32.mrf.mxu0
    %v4384 = vpop.f32.mrf.mxu0
    %v4385 = vadd.f32 0.0, %v4384
    %v4386 = vpop.f32.mrf.mxu0
    %4387 = vmatprep.mubr.bf16.mxu0 0
    %4388 = vmatmul.mubr.bf16.gmra.mxu0 %v4341
    %v4389 = vpop.f32.mrf.mxu0
    %v4390 = vadd.f32 0.0, %v4389
    %v4391 = vpop.f32.mrf.mxu0
    %v4392 = vpop.f32.mrf.mxu0
    %v4393 = vadd.f32 0.0, %v4392
    %v4394 = vpop.f32.mrf.mxu0
    %4395 = vdwg.mxu0
    %v4400 = vunpack.c.l.b16 %v4310
    %v4401 = vunpack.c.l.b16 %v4311
    %v4402 = vunpack.c.l.b16 %v4312
    %v4403 = vunpack.c.l.b16 %v4313
    %v4404 = vpack.c.b16 %v4401, %v4400
    %v4405 = vpack.c.b16 %v4403, %v4402
    %v4408 = vsel %vm4336, %v4308, 0
    %v4411 = vsel %vm4336, %v4309, 0
    %v4414 = vsel %vm4343, %v4405, 0
    %4416 = vmatprep.subr.bf16.mxu0 0
    %4417 = vmatpush1.bf16.msra.mxu0 0
    %4418 = vmatprep.subr.bf16.mxu0 0
    %4419 = vmatpush1.bf16.msra.mxu0 0
    %4420 = vmatprep.subr.bf16.mxu0 0
    %4421 = vmatpush1.bf16.msra.mxu0 0
    %4422 = vmatprep.subr.bf16.mxu0 0
    %4423 = vmatpush1.bf16.msra.mxu0 0
    %4424 = vmatprep.subr.bf16.mxu0 0
    %4425 = vmatpush1.bf16.msra.mxu0 0
    %4426 = vmatprep.subr.bf16.mxu0 0
    %4427 = vmatpush1.bf16.msra.mxu0 0
    %4428 = vmatprep.subr.bf16.mxu0 0
    %4429 = vmatpush1.bf16.msra.mxu0 %v4414
    %4430 = vmatprep.subr.bf16.mxu0 0
    %4431 = vmatpush1.bf16.msra.mxu0 %v4404
    %4432 = vmatprep.subr.bf16.mxu0 0
    %4433 = vmatpush2.bf16.msra.mxu0 0
    %4434 = vmatprep.subr.bf16.mxu0 0
    %4435 = vmatpush2.bf16.msra.mxu0 0
    %4436 = vmatprep.subr.bf16.mxu0 0
    %4437 = vmatpush2.bf16.msra.mxu0 0
    %4438 = vmatprep.subr.bf16.mxu0 0
    %4439 = vmatpush2.bf16.msra.mxu0 0
    %4440 = vmatprep.subr.bf16.mxu0 0
    %4441 = vmatpush2.bf16.msra.mxu0 0
    %4442 = vmatprep.subr.bf16.mxu0 0
    %4443 = vmatpush2.bf16.msra.mxu0 0
    %4444 = vmatprep.subr.bf16.mxu0 0
    %4445 = vmatpush2.bf16.msra.mxu0 0
    %4446 = vmatprep.subr.bf16.mxu0 0
    %4447 = vmatpush2.bf16.msra.mxu0 0
    %4448 = vmatprep.mubr.bf16.mxu0 0
    %4449 = vmatmul.mubr.bf16.gmra.mxu0 %v4408
    %v4450 = vpop.f32.mrf.mxu0
    %v4451 = vadd.f32 %v4382, %v4450
    %v4452 = vpop.f32.mrf.mxu0
    %v4453 = vpop.f32.mrf.mxu0
    %v4454 = vadd.f32 %v4385, %v4453
    %v4455 = vpop.f32.mrf.mxu0
    %4456 = vmatprep.mubr.bf16.mxu0 0
    %4457 = vmatmul.mubr.bf16.gmra.mxu0 %v4411
    %v4458 = vpop.f32.mrf.mxu0
    %v4459 = vadd.f32 %v4390, %v4458
    %v4460 = vpop.f32.mrf.mxu0
    %v4461 = vpop.f32.mrf.mxu0
    %v4462 = vadd.f32 %v4393, %v4461
    %v4463 = vpop.f32.mrf.mxu0
    %4464 = vdwg.mxu0
    %v4465 = vld [vmem:[#allocation15 + $0x2] sm:$0xff]
    %v4466 = vld [vmem:[#allocation15 + $0xa] sm:$0xff]
    %v4467 = vld [vmem:[#allocation15 + $0x12] sm:$0xff]
    %v4468 = vld [vmem:[#allocation15 + $0x1a] sm:$0xf]
    %v4469 = vpack.c.bf16 %v4466, %v4465
    %v4470 = vpack.c.bf16 %v4468, %v4467
    %s4471 = scalar_lea.vmem [#allocation8], 32
    %v4472 = vld [vmem:[%s4471] sm:$0xf]
    %v4473 = vld [vmem:[%s4471 + $0x4] sm:$0xf]
    %v4474 = vld [vmem:[%s4471 + $0x8] sm:$0xf]
    %v4475 = vld [vmem:[%s4471 + $0xc] sm:$0x3]
    %v4480 = vunpack.c.l.b16 %v4472
    %v4481 = vunpack.c.l.b16 %v4473
    %v4482 = vunpack.c.l.b16 %v4474
    %v4483 = vunpack.c.l.b16 %v4475
    %v4484 = vpack.c.b16 %v4481, %v4480
    %v4485 = vpack.c.b16 %v4483, %v4482
    %v4488 = vsel %vm4336, %v4469, 0
    %v4491 = vsel %vm4336, %v4470, 0
    %v4494 = vsel %vm4343, %v4485, 0
    %4496 = vmatprep.subr.bf16.mxu0 0
    %4497 = vmatpush1.bf16.msra.mxu0 0
    %4498 = vmatprep.subr.bf16.mxu0 0
    %4499 = vmatpush1.bf16.msra.mxu0 0
    %4500 = vmatprep.subr.bf16.mxu0 0
    %4501 = vmatpush1.bf16.msra.mxu0 0
    %4502 = vmatprep.subr.bf16.mxu0 0
    %4503 = vmatpush1.bf16.msra.mxu0 0
    %4504 = vmatprep.subr.bf16.mxu0 0
    %4505 = vmatpush1.bf16.msra.mxu0 0
    %4506 = vmatprep.subr.bf16.mxu0 0
    %4507 = vmatpush1.bf16.msra.mxu0 0
    %4508 = vmatprep.subr.bf16.mxu0 0
    %4509 = vmatpush1.bf16.msra.mxu0 %v4494
    %4510 = vmatprep.subr.bf16.mxu0 0
    %4511 = vmatpush1.bf16.msra.mxu0 %v4484
    %4512 = vmatprep.subr.bf16.mxu0 0
    %4513 = vmatpush2.bf16.msra.mxu0 0
    %4514 = vmatprep.subr.bf16.mxu0 0
    %4515 = vmatpush2.bf16.msra.mxu0 0
    %4516 = vmatprep.subr.bf16.mxu0 0
    %4517 = vmatpush2.bf16.msra.mxu0 0
    %4518 = vmatprep.subr.bf16.mxu0 0
    %4519 = vmatpush2.bf16.msra.mxu0 0
    %4520 = vmatprep.subr.bf16.mxu0 0
    %4521 = vmatpush2.bf16.msra.mxu0 0
    %4522 = vmatprep.subr.bf16.mxu0 0
    %4523 = vmatpush2.bf16.msra.mxu0 0
    %4524 = vmatprep.subr.bf16.mxu0 0
    %4525 = vmatpush2.bf16.msra.mxu0 0
    %4526 = vmatprep.subr.bf16.mxu0 0
    %4527 = vmatpush2.bf16.msra.mxu0 0
    %4528 = vmatprep.mubr.bf16.mxu0 0
    %4529 = vmatmul.mubr.bf16.gmra.mxu0 %v4488
    %v4530 = vpop.f32.mrf.mxu0
    %v4531 = vadd.f32 0.0, %v4530
    %v4532 = vpop.f32.mrf.mxu0
    %v4533 = vpop.f32.mrf.mxu0
    %v4534 = vadd.f32 0.0, %v4533
    %v4535 = vpop.f32.mrf.mxu0
    %4536 = vmatprep.mubr.bf16.mxu0 0
    %4537 = vmatmul.mubr.bf16.gmra.mxu0 %v4491
    %v4538 = vpop.f32.mrf.mxu0
    %v4539 = vadd.f32 0.0, %v4538
    %v4540 = vpop.f32.mrf.mxu0
    %v4541 = vpop.f32.mrf.mxu0
    %v4542 = vadd.f32 0.0, %v4541
    %v4543 = vpop.f32.mrf.mxu0
    %4544 = vdwg.mxu0
    %v4545 = vadd.f32 %v4451, %v4531
    %v4546 = vadd.f32 %v4454, %v4534
    %v4547 = vadd.f32 %v4459, %v4539
    %v4548 = vadd.f32 %v4462, %v4542
    %v4549 = vld [vmem:[#allocation22] sm:$0x1]
    %v4551 = vlaneseq
    %v4552 = vshrl.u32 %v4551, 7
    %v4553 = vsub.s32 0, %v4552
    %v4554 = vrot.slane %v4549, %v4553
    %v4556 = vadd.f32 %v4545, %v4554
    %v4557 = vadd.f32 %v4546, %v4554
    %v4558 = vadd.f32 %v4547, %v4554
    %v4559 = vadd.f32 %v4548, %v4554
    %v4560 = vmax.f32 %v4556, 0.0
    %v4561 = vmax.f32 %v4557, 0.0
    %v4562 = vmax.f32 %v4558, 0.0
    %v4563 = vmax.f32 %v4559, 0.0
    %4564 = vst.msk [vmem:[%s15] sm:$0xff] %vm4336, %v4560
    %4565 = vst.msk [vmem:[%s15 + $0x8] sm:$0xff] %vm4336, %v4561
    %4566 = vst.msk [vmem:[%s15 + $0x10] sm:$0xff] %vm4336, %v4562
    %vm4567 = vcmask 224256
    %4568 = vst.msk [vmem:[%s15 + $0x18] sm:$0xf] %vm4567, %v4563
    %v4569 = vld [vmem:[%s4271] sm:$0xff]
    %v4570 = vld [vmem:[%s4271 + $0x8] sm:$0xff]
    %v4571 = vld [vmem:[%s4271 + $0x10] sm:$0xff]
    %v4572 = vld [vmem:[%s4271 + $0x18] sm:$0xf]
    %v4573 = vpack.c.bf16 %v4570, %v4569
    %v4574 = vpack.c.bf16 %v4572, %v4571
    %v4575 = vld [vmem:[#allocation8] sm:$0xf]
    %v4576 = vld [vmem:[#allocation8 + $0x4] sm:$0xf]
    %v4577 = vld [vmem:[#allocation8 + $0x8] sm:$0xf]
    %v4578 = vld [vmem:[#allocation8 + $0xc] sm:$0x3]
    %v4579 = vld [vmem:[%s4271 + $0x1] sm:$0xff]
    %v4580 = vld [vmem:[%s4271 + $0x9] sm:$0xff]
    %v4581 = vld [vmem:[%s4271 + $0x11] sm:$0xff]
    %v4582 = vld [vmem:[%s4271 + $0x19] sm:$0xf]
    %v4583 = vpack.c.bf16 %v4580, %v4579
    %v4584 = vpack.c.bf16 %v4582, %v4581
    %v4585 = vld [vmem:[%s4320] sm:$0xf]
    %v4586 = vld [vmem:[%s4320 + $0x4] sm:$0xf]
    %v4587 = vld [vmem:[%s4320 + $0x8] sm:$0xf]
    %v4588 = vld [vmem:[%s4320 + $0xc] sm:$0x3]
    %v4593 = vunpack.c.l.b16 %v4585
    %v4594 = vunpack.c.l.b16 %v4586
    %v4595 = vunpack.c.l.b16 %v4587
    %v4596 = vunpack.c.l.b16 %v4588
    %v4597 = vpack.c.b16 %v4594, %v4593
    %v4598 = vpack.c.b16 %v4596, %v4595
    %v4601 = vsel %vm4336, %v4583, 0
    %v4604 = vsel %vm4336, %v4584, 0
    %v4607 = vsel %vm4343, %v4598, 0
    %4609 = vmatprep.subr.bf16.mxu0 0
    %4610 = vmatpush1.bf16.msra.mxu0 0
    %4611 = vmatprep.subr.bf16.mxu0 0
    %4612 = vmatpush1.bf16.msra.mxu0 0
    %4613 = vmatprep.subr.bf16.mxu0 0
    %4614 = vmatpush1.bf16.msra.mxu0 0
    %4615 = vmatprep.subr.bf16.mxu0 0
    %4616 = vmatpush1.bf16.msra.mxu0 0
    %4617 = vmatprep.subr.bf16.mxu0 0
    %4618 = vmatpush1.bf16.msra.mxu0 0
    %4619 = vmatprep.subr.bf16.mxu0 0
    %4620 = vmatpush1.bf16.msra.mxu0 0
    %4621 = vmatprep.subr.bf16.mxu0 0
    %4622 = vmatpush1.bf16.msra.mxu0 %v4607
    %4623 = vmatprep.subr.bf16.mxu0 0
    %4624 = vmatpush1.bf16.msra.mxu0 %v4597
    %4625 = vmatprep.subr.bf16.mxu0 0
    %4626 = vmatpush2.bf16.msra.mxu0 0
    %4627 = vmatprep.subr.bf16.mxu0 0
    %4628 = vmatpush2.bf16.msra.mxu0 0
    %4629 = vmatprep.subr.bf16.mxu0 0
    %4630 = vmatpush2.bf16.msra.mxu0 0
    %4631 = vmatprep.subr.bf16.mxu0 0
    %4632 = vmatpush2.bf16.msra.mxu0 0
    %4633 = vmatprep.subr.bf16.mxu0 0
    %4634 = vmatpush2.bf16.msra.mxu0 0
    %4635 = vmatprep.subr.bf16.mxu0 0
    %4636 = vmatpush2.bf16.msra.mxu0 0
    %4637 = vmatprep.subr.bf16.mxu0 0
    %4638 = vmatpush2.bf16.msra.mxu0 0
    %4639 = vmatprep.subr.bf16.mxu0 0
    %4640 = vmatpush2.bf16.msra.mxu0 0
    %4641 = vmatprep.mubr.bf16.mxu0 0
    %4642 = vmatmul.mubr.bf16.gmra.mxu0 %v4601
    %v4643 = vpop.f32.mrf.mxu0
    %v4644 = vadd.f32 0.0, %v4643
    %v4645 = vpop.f32.mrf.mxu0
    %v4646 = vpop.f32.mrf.mxu0
    %v4647 = vadd.f32 0.0, %v4646
    %v4648 = vpop.f32.mrf.mxu0
    %4649 = vmatprep.mubr.bf16.mxu0 0
    %4650 = vmatmul.mubr.bf16.gmra.mxu0 %v4604
    %v4651 = vpop.f32.mrf.mxu0
    %v4652 = vadd.f32 0.0, %v4651
    %v4653 = vpop.f32.mrf.mxu0
    %v4654 = vpop.f32.mrf.mxu0
    %v4655 = vadd.f32 0.0, %v4654
    %v4656 = vpop.f32.mrf.mxu0
    %4657 = vdwg.mxu0
    %v4662 = vunpack.c.l.b16 %v4575
    %v4663 = vunpack.c.l.b16 %v4576
    %v4664 = vunpack.c.l.b16 %v4577
    %v4665 = vunpack.c.l.b16 %v4578
    %v4666 = vpack.c.b16 %v4663, %v4662
    %v4667 = vpack.c.b16 %v4665, %v4664
    %v4670 = vsel %vm4336, %v4573, 0
    %v4673 = vsel %vm4336, %v4574, 0
    %v4676 = vsel %vm4343, %v4667, 0
    %4678 = vmatprep.subr.bf16.mxu0 0
    %4679 = vmatpush1.bf16.msra.mxu0 0
    %4680 = vmatprep.subr.bf16.mxu0 0
    %4681 = vmatpush1.bf16.msra.mxu0 0
    %4682 = vmatprep.subr.bf16.mxu0 0
    %4683 = vmatpush1.bf16.msra.mxu0 0
    %4684 = vmatprep.subr.bf16.mxu0 0
    %4685 = vmatpush1.bf16.msra.mxu0 0
    %4686 = vmatprep.subr.bf16.mxu0 0
    %4687 = vmatpush1.bf16.msra.mxu0 0
    %4688 = vmatprep.subr.bf16.mxu0 0
    %4689 = vmatpush1.bf16.msra.mxu0 0
    %4690 = vmatprep.subr.bf16.mxu0 0
    %4691 = vmatpush1.bf16.msra.mxu0 %v4676
    %4692 = vmatprep.subr.bf16.mxu0 0
    %4693 = vmatpush1.bf16.msra.mxu0 %v4666
    %4694 = vmatprep.subr.bf16.mxu0 0
    %4695 = vmatpush2.bf16.msra.mxu0 0
    %4696 = vmatprep.subr.bf16.mxu0 0
    %4697 = vmatpush2.bf16.msra.mxu0 0
    %4698 = vmatprep.subr.bf16.mxu0 0
    %4699 = vmatpush2.bf16.msra.mxu0 0
    %4700 = vmatprep.subr.bf16.mxu0 0
    %4701 = vmatpush2.bf16.msra.mxu0 0
    %4702 = vmatprep.subr.bf16.mxu0 0
    %4703 = vmatpush2.bf16.msra.mxu0 0
    %4704 = vmatprep.subr.bf16.mxu0 0
    %4705 = vmatpush2.bf16.msra.mxu0 0
    %4706 = vmatprep.subr.bf16.mxu0 0
    %4707 = vmatpush2.bf16.msra.mxu0 0
    %4708 = vmatprep.subr.bf16.mxu0 0
    %4709 = vmatpush2.bf16.msra.mxu0 0
    %4710 = vmatprep.mubr.bf16.mxu0 0
    %4711 = vmatmul.mubr.bf16.gmra.mxu0 %v4670
    %v4712 = vpop.f32.mrf.mxu0
    %v4713 = vadd.f32 %v4644, %v4712
    %v4714 = vpop.f32.mrf.mxu0
    %v4715 = vpop.f32.mrf.mxu0
    %v4716 = vadd.f32 %v4647, %v4715
    %v4717 = vpop.f32.mrf.mxu0
    %4718 = vmatprep.mubr.bf16.mxu0 0
    %4719 = vmatmul.mubr.bf16.gmra.mxu0 %v4673
    %v4720 = vpop.f32.mrf.mxu0
    %v4721 = vadd.f32 %v4652, %v4720
    %v4722 = vpop.f32.mrf.mxu0
    %v4723 = vpop.f32.mrf.mxu0
    %v4724 = vadd.f32 %v4655, %v4723
    %v4725 = vpop.f32.mrf.mxu0
    %4726 = vdwg.mxu0
    %v4727 = vld [vmem:[%s4271 + $0x2] sm:$0xff]
    %v4728 = vld [vmem:[%s4271 + $0xa] sm:$0xff]
    %v4729 = vld [vmem:[%s4271 + $0x12] sm:$0xff]
    %v4730 = vld [vmem:[%s4271 + $0x1a] sm:$0xf]
    %v4731 = vpack.c.bf16 %v4728, %v4727
    %v4732 = vpack.c.bf16 %v4730, %v4729
    %v4733 = vld [vmem:[%s4471] sm:$0xf]
    %v4734 = vld [vmem:[%s4471 + $0x4] sm:$0xf]
    %v4735 = vld [vmem:[%s4471 + $0x8] sm:$0xf]
    %v4736 = vld [vmem:[%s4471 + $0xc] sm:$0x3]
    %v4741 = vunpack.c.l.b16 %v4733
    %v4742 = vunpack.c.l.b16 %v4734
    %v4743 = vunpack.c.l.b16 %v4735
    %v4744 = vunpack.c.l.b16 %v4736
    %v4745 = vpack.c.b16 %v4742, %v4741
    %v4746 = vpack.c.b16 %v4744, %v4743
    %v4749 = vsel %vm4336, %v4731, 0
    %v4752 = vsel %vm4336, %v4732, 0
    %v4755 = vsel %vm4343, %v4746, 0
    %4757 = vmatprep.subr.bf16.mxu0 0
    %4758 = vmatpush1.bf16.msra.mxu0 0
    %4759 = vmatprep.subr.bf16.mxu0 0
    %4760 = vmatpush1.bf16.msra.mxu0 0
    %4761 = vmatprep.subr.bf16.mxu0 0
    %4762 = vmatpush1.bf16.msra.mxu0 0
    %4763 = vmatprep.subr.bf16.mxu0 0
    %4764 = vmatpush1.bf16.msra.mxu0 0
    %4765 = vmatprep.subr.bf16.mxu0 0
    %4766 = vmatpush1.bf16.msra.mxu0 0
    %4767 = vmatprep.subr.bf16.mxu0 0
    %4768 = vmatpush1.bf16.msra.mxu0 0
    %4769 = vmatprep.subr.bf16.mxu0 0
    %4770 = vmatpush1.bf16.msra.mxu0 %v4755
    %4771 = vmatprep.subr.bf16.mxu0 0
    %4772 = vmatpush1.bf16.msra.mxu0 %v4745
    %4773 = vmatprep.subr.bf16.mxu0 0
    %4774 = vmatpush2.bf16.msra.mxu0 0
    %4775 = vmatprep.subr.bf16.mxu0 0
    %4776 = vmatpush2.bf16.msra.mxu0 0
    %4777 = vmatprep.subr.bf16.mxu0 0
    %4778 = vmatpush2.bf16.msra.mxu0 0
    %4779 = vmatprep.subr.bf16.mxu0 0
    %4780 = vmatpush2.bf16.msra.mxu0 0
    %4781 = vmatprep.subr.bf16.mxu0 0
    %4782 = vmatpush2.bf16.msra.mxu0 0
    %4783 = vmatprep.subr.bf16.mxu0 0
    %4784 = vmatpush2.bf16.msra.mxu0 0
    %4785 = vmatprep.subr.bf16.mxu0 0
    %4786 = vmatpush2.bf16.msra.mxu0 0
    %4787 = vmatprep.subr.bf16.mxu0 0
    %4788 = vmatpush2.bf16.msra.mxu0 0
    %4789 = vmatprep.mubr.bf16.mxu0 0
    %4790 = vmatmul.mubr.bf16.gmra.mxu0 %v4749
    %v4791 = vpop.f32.mrf.mxu0
    %v4792 = vadd.f32 0.0, %v4791
    %v4793 = vpop.f32.mrf.mxu0
    %v4794 = vpop.f32.mrf.mxu0
    %v4795 = vadd.f32 0.0, %v4794
    %v4796 = vpop.f32.mrf.mxu0
    %4797 = vmatprep.mubr.bf16.mxu0 0
    %4798 = vmatmul.mubr.bf16.gmra.mxu0 %v4752
    %v4799 = vpop.f32.mrf.mxu0
    %v4800 = vadd.f32 0.0, %v4799
    %v4801 = vpop.f32.mrf.mxu0
    %v4802 = vpop.f32.mrf.mxu0
    %v4803 = vadd.f32 0.0, %v4802
    %v4804 = vpop.f32.mrf.mxu0
    %4805 = vdwg.mxu0
    %v4806 = vadd.f32 %v4713, %v4792
    %v4807 = vadd.f32 %v4716, %v4795
    %v4808 = vadd.f32 %v4721, %v4800
    %v4809 = vadd.f32 %v4724, %v4803
    %v4810 = vld [vmem:[#allocation22] sm:$0x1]
    %v4812 = vlaneseq
    %v4813 = vshrl.u32 %v4812, 7
    %v4814 = vsub.s32 0, %v4813
    %v4815 = vrot.slane %v4810, %v4814
    %v4817 = vadd.f32 %v4806, %v4815
    %v4818 = vadd.f32 %v4807, %v4815
    %v4819 = vadd.f32 %v4808, %v4815
    %v4820 = vadd.f32 %v4809, %v4815
    %v4821 = vmax.f32 %v4817, 0.0
    %v4822 = vmax.f32 %v4818, 0.0
    %v4823 = vmax.f32 %v4819, 0.0
    %v4824 = vmax.f32 %v4820, 0.0
    %s4825 = scalar_lea.vmem %s15, 32
    %4826 = vst.msk [vmem:[%s4825] sm:$0xff] %vm4336, %v4821
    %4827 = vst.msk [vmem:[%s4825 + $0x8] sm:$0xff] %vm4336, %v4822
    %4828 = vst.msk [vmem:[%s4825 + $0x10] sm:$0xff] %vm4336, %v4823
    %4829 = vst.msk [vmem:[%s4825 + $0x18] sm:$0xf] %vm4567, %v4824
    // Predicated region
    $region168: #{decoder_forward.1} parent=1 // pred_check
      _
    $region169: #{decoder_forward.1} parent=1 // pred_check_branch
      %4831 = sbr.rel (0) target = $region171
    $region170: #{decoder_forward.1} parent=1 // pred_region
      _
    $region171: #{decoder_forward.1} parent=1 // pred_fallthru
      _
    // Predicated region
    $region172: #{decoder_forward.1} parent=1 // pred_check
      _
    $region173: #{decoder_forward.1} parent=1 // pred_check_branch
      %4833 = sbr.rel (0) target = $region175
    $region174: #{decoder_forward.1} parent=1 // pred_region
      %s4835 = ssub.s32 224, 224
      %4836 = vsyncadd [#allocation18], %s4835
      %s4838 = sshll.u32 [#allocation24], 4
      %s4839 = int_to_ptr.vmem [resolvable:$true] %s4838
      %4841 = dma.vmem_to_hbm [thread:$0]  %s4839, 224, %s16, [#allocation18]
    $region175: #{decoder_forward.1} parent=1 // pred_fallthru
      _
    // Predicated region
    $region176: #{decoder_forward.1} parent=1 // pred_check
      _
    $region177: #{decoder_forward.1} parent=1 // pred_check_branch
      %4843 = sbr.rel (0) target = $region179
    $region178: #{decoder_forward.1} parent=1 // pred_region
      _
    $region179: #{decoder_forward.1} parent=1 // pred_fallthru
      _
    // Predicated region
    $region180: #{decoder_forward.1} parent=1 // pred_check
      _
    $region181: #{decoder_forward.1} parent=1 // pred_check_branch
      %4845 = sbr.rel (0) target = $region183
    $region182: #{decoder_forward.1} parent=1 // pred_region
      %4846 = dma.done [#allocation18], 224
    $region183: #{decoder_forward.1} parent=1 // pred_fallthru
      _
    %4847 = vsyncpa [#allocation17], 1
    %4848 = vsyncpa [#allocation20], 1
    %4849 = vsyncpa [#allocation23], 1
    %4850 = vsyncpa [#allocation18], 1
  %4851 = vsyncmov [#allocation9]
  %s4852 = vpop.sfrf %4851
  %p4853 = scmp.eq.s32.totalorder %s4852, 0
  %p4854 = pneg %p4853
  %4856 = shalt.err (%p4854)
  %s4857 = scalar_lea.sflag [#allocation9], 1
  %4858 = vsyncmov %s4857
  %s4859 = vpop.sfrf %4858
  %p4860 = scmp.eq.s32.totalorder %s4859, 0
  %p4861 = pneg %p4860
  %4863 = shalt.err (%p4861)
  %s4864 = scalar_lea.sflag [#allocation9], 2
  %4865 = vsyncmov %s4864
  %s4866 = vpop.sfrf %4865
  %p4867 = scmp.eq.s32.totalorder %s4866, 0
  %p4868 = pneg %p4867
  %4870 = shalt.err (%p4868)
  %s4871 = scalar_lea.sflag [#allocation9], 3
  %4872 = vsyncmov %s4871
  %s4873 = vpop.sfrf %4872
  %p4874 = scmp.eq.s32.totalorder %s4873, 0
  %p4875 = pneg %p4874
  %4877 = shalt.err (%p4875)
  %s4878 = scalar_lea.sflag [#allocation9], 4
  %4879 = vsyncmov %s4878
  %s4880 = vpop.sfrf %4879
  %p4881 = scmp.eq.s32.totalorder %s4880, 0
  %p4882 = pneg %p4881
  %4884 = shalt.err (%p4882)
  %s4885 = scalar_lea.sflag [#allocation9], 5
  %4886 = vsyncmov %s4885
  %s4887 = vpop.sfrf %4886
  %p4888 = scmp.eq.s32.totalorder %s4887, 0
  %p4889 = pneg %p4888
  %4891 = shalt.err (%p4889)
  %s4892 = scalar_lea.sflag [#allocation9], 6
  %4893 = vsyncmov %s4892
  %s4894 = vpop.sfrf %4893
  %p4895 = scmp.eq.s32.totalorder %s4894, 0
  %p4896 = pneg %p4895
  %4898 = shalt.err (%p4896)

</llo_original>
